<compile_context>
chip_gen: v6e
topology: v6e:2x2x1
jax: 0.10.0
libtpu: 0.0.40
codegen_flags: <defaults>
</compile_context>

<pallas_src>
import functools

import jax
import jax.numpy as jnp
from jax.experimental import pallas as pl
from jax.experimental.pallas import tpu as pltpu

KSIZE = 5
C1_COLS = 256      # conv1 pooled row slab: 14*16 = 224 -> padded to 256 lanes
C2_COLS = 256      # conv2 pooled row slab: 7*32  = 224 -> padded to 256 lanes
NCLS_PAD = 128     # 10 logits padded to 128 lanes


# ------------------------------- kernel ------------------------------------ #

def _fused_cnn_kernel(x4_ref, t1_ref, b1_ref, t2_ref, b2_ref, wl_ref, bo_ref,
                      o_ref, a1_ref, *, bt):
    """Whole network for one batch tile of `bt` images.

    x4_ref : [4, 8, bt, 28]  bf16  row-padded input, rows split mod 4 (x4[m,j,b,:] = xpad[b,4j+m,:])
    t1_ref : [5, 28, 512]    bf16  conv1 Toeplitz taps, col-parity blocks concatenated (2 x 256)
    b1_ref : [1, 256]        f32   conv1 bias tiled over output cols (zero in pad lanes)
    t2_ref : [5, 256, 512]   bf16  conv2 Toeplitz taps
    b2_ref : [1, 256]        f32
    wl_ref : [7, 256, 128]   bf16  Linear weight, one 256x128 block per conv2 output row
    bo_ref : [1, 128]        f32
    o_ref  : [bt, 128]       f32   logits (lane-padded)
    a1_ref : [2, 9, bt, 256] bf16  conv1 pooled output: [row-parity, padded-row, batch, w*c]
    """
    M = 7 * bt

    # Zero the two row-padding rows (padded rows 0 and 8) of each parity slab.
    zpad = jnp.zeros((2, 1, bt, C1_COLS), jnp.bfloat16)
    a1_ref[:, 0:1, :, :] = zpad
    a1_ref[:, 8:9, :, :] = zpad

    # ---------------- conv1 + bias + ReLU + 2x2 maxpool ----------------------
    # Hoist the 8 distinct row-shifted A operands (already bf16 -> no in-loop casts).
    a1in = [x4_ref[r % 4:r % 4 + 1, r // 4:r // 4 + 7, :, :].reshape(M, 28)
            for r in range(8)]
    for q in range(2):            # pooled-output-row parity
        mx = None
        for rp in range(2):       # row offset inside the 2x2 pool window
            acc = jnp.zeros((M, 2 * C1_COLS), jnp.float32)
            for kh in range(KSIZE):
                r = 2 * q + rp + kh
                t = t1_ref[kh:kh + 1, :, :].reshape(28, 2 * C1_COLS)
                acc = acc + jnp.dot(a1in[r], t, preferred_element_type=jnp.float32)
            half = jnp.maximum(acc[:, :C1_COLS], acc[:, C1_COLS:])   # column-parity max
            mx = half if mx is None else jnp.maximum(mx, half)       # row-parity max
        y = jnp.maximum(mx + b1_ref[...], 0.0)                       # bias + ReLU (monotone => safe after max)
        a1_ref[q:q + 1, 1:8, :, :] = y.reshape(1, 7, bt, C1_COLS).astype(jnp.bfloat16)

    # ---------------- conv2 + bias + ReLU + 2x2 maxpool ----------------------
    mx2 = None
    for rp in range(2):
        acc = jnp.zeros((M, 2 * C2_COLS), jnp.float32)
        for kh in range(KSIZE):
            r0 = rp + kh                      # padded-row offset = 2*h + r0
            p, s = r0 % 2, r0 // 2
            a = a1_ref[p:p + 1, s:s + 7, :, :].reshape(M, C1_COLS)   # bf16, no cast
            t = t2_ref[kh:kh + 1, :, :].reshape(C1_COLS, 2 * C2_COLS)
            acc = acc + jnp.dot(a, t, preferred_element_type=jnp.float32)
        half = jnp.maximum(acc[:, :C2_COLS], acc[:, C2_COLS:])
        mx2 = half if mx2 is None else jnp.maximum(mx2, half)
    y2 = jnp.maximum(mx2 + b2_ref[...], 0.0)                         # [7*bt, 256], rows (h, b)

    # ---------------- Linear --------------------------------------------------
    y2b = y2.astype(jnp.bfloat16).reshape(7, bt, C2_COLS)
    acc = jnp.zeros((bt, NCLS_PAD), jnp.float32)
    for h in range(7):
        w = wl_ref[h:h + 1, :, :].reshape(C2_COLS, NCLS_PAD)
        acc = acc + jnp.dot(y2b[h], w, preferred_element_type=jnp.float32)
    o_ref[...] = acc + bo_ref[...]


# ------------------------------ wrapper ------------------------------------- #

def cnn_forward(x_nchw, prep):
    B = x_nchw.shape[0]
    bt = 16 if B >= 16 else 8                       # multiple of 8 -> layout-trivial reshapes
    bpad = ((B + bt - 1) // bt) * bt

    x = x_nchw[:, 0].astype(jnp.float32)            # [B, 28, 28]
    if bpad != B:
        x = jnp.pad(x, ((0, bpad - B), (0, 0), (0, 0)))
    xp = jnp.pad(x, ((0, 0), (2, 2), (0, 0)))       # row 'same' padding -> 32 rows (cols folded into Toeplitz)
    # Split rows mod 4 so the kernel's stride-4 row accesses become contiguous slices.
    x4 = xp.reshape(bpad, 8, 4, 28).transpose(2, 1, 0, 3).astype(jnp.bfloat16)  # [4, 8, bpad, 28]

    kernel = functools.partial(_fused_cnn_kernel, bt=bt)
    logits = pl.pallas_call(
        kernel,
        out_shape=jax.ShapeDtypeStruct((bpad, NCLS_PAD), jnp.float32),
        grid=(bpad // bt,),
        in_specs=[
            pl.BlockSpec((4, 8, bt, 28), lambda i: (0, 0, i, 0)),
            pl.BlockSpec((KSIZE, 28, 2 * C1_COLS), lambda i: (0, 0, 0)),
            pl.BlockSpec((1, C1_COLS), lambda i: (0, 0)),
            pl.BlockSpec((KSIZE, C1_COLS, 2 * C2_COLS), lambda i: (0, 0, 0)),
            pl.BlockSpec((1, C2_COLS), lambda i: (0, 0)),
            pl.BlockSpec((7, C2_COLS, NCLS_PAD), lambda i: (0, 0, 0)),
            pl.BlockSpec((1, NCLS_PAD), lambda i: (0, 0)),
        ],
        out_specs=pl.BlockSpec((bt, NCLS_PAD), lambda i: (i, 0)),
        scratch_shapes=[pltpu.VMEM((2, 9, bt, C1_COLS), jnp.bfloat16)],
        compiler_params=pltpu.CompilerParams(dimension_semantics=("parallel",)),
    )(x4, prep["t1"], prep["b1"], prep["t2"], prep["b2"], prep["wl"], prep["bo"])
    return logits[:B, :10]


# ------------------------ one-time weight preprocessing --------------------- #

def _parity_toeplitz(w_oihw, width, pad, col_block, row_pad):
    """Per-tap banded ('same' conv) matrix with output columns split by x-parity.

    T[kh, xw*Cin+ci, cp*col_block + xo*Cout+co] = w[co, ci, kh, xw - (2*xo+cp) + pad]
    (zero outside the kernel support -> column padding is folded in here).
    """
    cout, cin, k, _ = w_oihw.shape
    w_k = jnp.transpose(w_oihw.astype(jnp.float32), (2, 3, 1, 0))        # [kh, kw, Cin, Cout]
    d = jnp.arange(width)[:, None] - jnp.arange(width)[None, :] + pad    # [xw, x] -> kw
    valid = (d >= 0) & (d < k)
    dc = jnp.clip(d, 0, k - 1)
    g = w_k[:, dc, :, :]                                                  # [kh, xw, x, Cin, Cout]
    g = jnp.where(valid[None, :, :, None, None], g, 0.0)
    t = jnp.transpose(g, (0, 1, 3, 2, 4))                                 # [kh, xw, Cin, x, Cout]
    wh = width // 2
    t = t.reshape(k, width * cin, wh, 2, cout)                            # x -> (xo, cp)
    blocks = []
    for cp in range(2):
        blk = t[:, :, :, cp, :].reshape(k, width * cin, wh * cout)
        blk = jnp.pad(blk, ((0, 0), (0, 0), (0, col_block - wh * cout)))
        blocks.append(blk)
    full = jnp.concatenate(blocks, axis=-1)                               # [K, width*Cin, 2*col_block]
    if row_pad > width * cin:
        full = jnp.pad(full, ((0, 0), (0, row_pad - width * cin), (0, 0)))
    return full.astype(jnp.bfloat16)


def prepare_params(params):
    t1 = _parity_toeplitz(params["w1"], width=28, pad=2, col_block=C1_COLS, row_pad=28)
    t2 = _parity_toeplitz(params["w2"], width=14, pad=2, col_block=C2_COLS, row_pad=C1_COLS)
    b1 = jnp.pad(jnp.tile(params["b1"], 14), (0, C1_COLS - 14 * 16)).reshape(1, C1_COLS).astype(jnp.float32)
    b2 = jnp.pad(jnp.tile(params["b2"], 7), (0, C2_COLS - 7 * 32)).reshape(1, C2_COLS).astype(jnp.float32)
    # PyTorch flattens NCHW (c*49 + h*7 + w); our conv2 slab is row h with lanes (w, c).
    wo = params["wo"].reshape(10, 32, 7, 7).transpose(2, 3, 1, 0).reshape(7, 7 * 32, 10)
    wl = jnp.zeros((7, C2_COLS, NCLS_PAD), jnp.float32).at[:, :7 * 32, :10].set(wo).astype(jnp.bfloat16)
    bo = jnp.zeros((1, NCLS_PAD), jnp.float32).at[0, :10].set(params["bo"])
    return {"t1": t1, "b1": b1, "t2": t2, "b2": b2, "wl": wl, "bo": bo}


# ------------------------------ init / reference ----------------------------- #

def init_params(key):
    """PyTorch-default-style uniform(+-1/sqrt(fan_in)) init."""
    ks = jax.random.split(key, 6)

    def u(k, shape, fan_in):
        bound = 1.0 / jnp.sqrt(float(fan_in))
        return jax.random.uniform(k, shape, jnp.float32, -bound, bound)

    return {
        "w1": u(ks[0], (16, 1, 5, 5), 1 * 25),
        "b1": u(ks[1], (16,), 1 * 25),
        "w2": u(ks[2], (32, 16, 5, 5), 16 * 25),
        "b2": u(ks[3], (32,), 16 * 25),
        "wo": u(ks[4], (10, 32 * 7 * 7), 32 * 7 * 7),
        "bo": u(ks[5], (10,), 32 * 7 * 7),
    }


def reference_forward(x_nchw, p):
    """Pure-JAX f32 reference mirroring the PyTorch module."""
    def conv(x, w, b):
        y = jax.lax.conv_general_dilated(
            x, w, (1, 1), ((2, 2), (2, 2)),
            dimension_numbers=("NCHW", "OIHW", "NCHW"))
        return jax.nn.relu(y + b[None, :, None, None])

    def pool(x):
        return jax.lax.reduce_window(
            x, -jnp.inf, jax.lax.max, (1, 1, 2, 2), (1, 1, 2, 2), "VALID")

    x = pool(conv(x_nchw, p["w1"], p["b1"]))
    x = pool(conv(x, p["w2"], p["b2"]))
    feat = x.reshape(x.shape[0], -1)
    return feat @ p["wo"].T + p["bo"][None, :]


if __name__ == "__main__":
    key = jax.random.PRNGKey(0)
    kx, kp = jax.random.split(key)
    # MNIST-shaped input: the Linear(32*7*7, 10) forces 1x28x28 images.
    x = jax.random.normal(kx, (2, 1, 28, 28), jnp.float32)
    params = init_params(kp)
    prep = prepare_params(params)

    fwd = jax.jit(cnn_forward)
    out = jax.block_until_ready(fwd(x, prep))

    ref = reference_forward(x, params)
    assert out.shape == (2, 10), out.shape
    assert jnp.allclose(out, ref, atol=3e-2, rtol=3e-2), (out, ref)
    print("KERNEL_OK")
</pallas_src>

<mosaic_0001>
module attributes {stable_mosaic.version = 11 : i64} {
  func.func @_fused_cnn_kernel(%arg0: i32, %arg1: memref<4x8x8x28xbf16, #tpu.memory_space<vmem>>, %arg2: memref<5x28x512xbf16, #tpu.memory_space<vmem>>, %arg3: memref<1x256xf32, #tpu.memory_space<vmem>>, %arg4: memref<5x256x512xbf16, #tpu.memory_space<vmem>>, %arg5: memref<1x256xf32, #tpu.memory_space<vmem>>, %arg6: memref<7x256x128xbf16, #tpu.memory_space<vmem>>, %arg7: memref<1x128xf32, #tpu.memory_space<vmem>>, %arg8: memref<8x128xf32, #tpu.memory_space<vmem>>, %arg9: memref<2x9x8x256xbf16, #tpu.memory_space<vmem>>) attributes {dimension_semantics = [#tpu.dimension_semantics<parallel>], iteration_bounds = array<i64: 1>, scalar_prefetch = 0 : i64, scratch_operands = 1 : i64, tpu.core_type = #tpu.core_type<tc>, window_params = [{transform_indices = @transform_0, window_bounds = array<i64: 4, 8, 8, 28>}, {pipeline_mode = #tpu.pipeline_mode<synchronous>, transform_indices = @transform_1, window_bounds = array<i64: 5, 28, 512>}, {pipeline_mode = #tpu.pipeline_mode<synchronous>, transform_indices = @transform_2, window_bounds = array<i64: 1, 256>}, {pipeline_mode = #tpu.pipeline_mode<synchronous>, transform_indices = @transform_3, window_bounds = array<i64: 5, 256, 512>}, {pipeline_mode = #tpu.pipeline_mode<synchronous>, transform_indices = @transform_4, window_bounds = array<i64: 1, 256>}, {pipeline_mode = #tpu.pipeline_mode<synchronous>, transform_indices = @transform_5, window_bounds = array<i64: 7, 256, 128>}, {pipeline_mode = #tpu.pipeline_mode<synchronous>, transform_indices = @transform_6, window_bounds = array<i64: 1, 128>}, {transform_indices = @transform_7, window_bounds = array<i64: 8, 128>}]} {
    %cst = arith.constant 0.000000e+00 : bf16
    %0 = vector.broadcast %cst : bf16 to vector<2x1x8x256xbf16>
    %c0 = arith.constant 0 : index
    %c0_0 = arith.constant 0 : index
    %c0_1 = arith.constant 0 : index
    %c0_2 = arith.constant 0 : index
    %1 = vector.load %arg9[%c0, %c0_0, %c0_1, %c0_2] : memref<2x9x8x256xbf16, #tpu.memory_space<vmem>>, vector<2x1x8x256xbf16>
    tpu.vector_store %arg9[%c0, %c0_0, %c0_1, %c0_2], %0 {strides = array<i32>} : memref<2x9x8x256xbf16, #tpu.memory_space<vmem>>, vector<2x1x8x256xbf16>,
    %c0_3 = arith.constant 0 : index
    %c8 = arith.constant 8 : index
    %c0_4 = arith.constant 0 : index
    %c0_5 = arith.constant 0 : index
    %2 = vector.load %arg9[%c0_3, %c8, %c0_4, %c0_5] : memref<2x9x8x256xbf16, #tpu.memory_space<vmem>>, vector<2x1x8x256xbf16>
    tpu.vector_store %arg9[%c0_3, %c8, %c0_4, %c0_5], %0 {strides = array<i32>} : memref<2x9x8x256xbf16, #tpu.memory_space<vmem>>, vector<2x1x8x256xbf16>,
    %c0_6 = arith.constant 0 : index
    %c0_7 = arith.constant 0 : index
    %c0_8 = arith.constant 0 : index
    %c0_9 = arith.constant 0 : index
    %3 = vector.load %arg1[%c0_6, %c0_7, %c0_8, %c0_9] : memref<4x8x8x28xbf16, #tpu.memory_space<vmem>>, vector<1x7x8x28xbf16>
    %4 = vector.shape_cast %3 : vector<1x7x8x28xbf16> to vector<56x28xbf16>
    %c1 = arith.constant 1 : index
    %c0_10 = arith.constant 0 : index
    %c0_11 = arith.constant 0 : index
    %c0_12 = arith.constant 0 : index
    %5 = vector.load %arg1[%c1, %c0_10, %c0_11, %c0_12] : memref<4x8x8x28xbf16, #tpu.memory_space<vmem>>, vector<1x7x8x28xbf16>
    %6 = vector.shape_cast %5 : vector<1x7x8x28xbf16> to vector<56x28xbf16>
    %c2 = arith.constant 2 : index
    %c0_13 = arith.constant 0 : index
    %c0_14 = arith.constant 0 : index
    %c0_15 = arith.constant 0 : index
    %7 = vector.load %arg1[%c2, %c0_13, %c0_14, %c0_15] : memref<4x8x8x28xbf16, #tpu.memory_space<vmem>>, vector<1x7x8x28xbf16>
    %8 = vector.shape_cast %7 : vector<1x7x8x28xbf16> to vector<56x28xbf16>
    %c3 = arith.constant 3 : index
    %c0_16 = arith.constant 0 : index
    %c0_17 = arith.constant 0 : index
    %c0_18 = arith.constant 0 : index
    %9 = vector.load %arg1[%c3, %c0_16, %c0_17, %c0_18] : memref<4x8x8x28xbf16, #tpu.memory_space<vmem>>, vector<1x7x8x28xbf16>
    %10 = vector.shape_cast %9 : vector<1x7x8x28xbf16> to vector<56x28xbf16>
    %c0_19 = arith.constant 0 : index
    %c1_20 = arith.constant 1 : index
    %c0_21 = arith.constant 0 : index
    %c0_22 = arith.constant 0 : index
    %11 = vector.load %arg1[%c0_19, %c1_20, %c0_21, %c0_22] : memref<4x8x8x28xbf16, #tpu.memory_space<vmem>>, vector<1x7x8x28xbf16>
    %12 = vector.shape_cast %11 : vector<1x7x8x28xbf16> to vector<56x28xbf16>
    %c1_23 = arith.constant 1 : index
    %c1_24 = arith.constant 1 : index
    %c0_25 = arith.constant 0 : index
    %c0_26 = arith.constant 0 : index
    %13 = vector.load %arg1[%c1_23, %c1_24, %c0_25, %c0_26] : memref<4x8x8x28xbf16, #tpu.memory_space<vmem>>, vector<1x7x8x28xbf16>
    %14 = vector.shape_cast %13 : vector<1x7x8x28xbf16> to vector<56x28xbf16>
    %c2_27 = arith.constant 2 : index
    %c1_28 = arith.constant 1 : index
    %c0_29 = arith.constant 0 : index
    %c0_30 = arith.constant 0 : index
    %15 = vector.load %arg1[%c2_27, %c1_28, %c0_29, %c0_30] : memref<4x8x8x28xbf16, #tpu.memory_space<vmem>>, vector<1x7x8x28xbf16>
    %16 = vector.shape_cast %15 : vector<1x7x8x28xbf16> to vector<56x28xbf16>
    %c3_31 = arith.constant 3 : index
    %c1_32 = arith.constant 1 : index
    %c0_33 = arith.constant 0 : index
    %c0_34 = arith.constant 0 : index
    %17 = vector.load %arg1[%c3_31, %c1_32, %c0_33, %c0_34] : memref<4x8x8x28xbf16, #tpu.memory_space<vmem>>, vector<1x7x8x28xbf16>
    %18 = vector.shape_cast %17 : vector<1x7x8x28xbf16> to vector<56x28xbf16>
    %cst_35 = arith.constant 0.000000e+00 : f32
    %19 = vector.broadcast %cst_35 : f32 to vector<56x512xf32>
    %c0_36 = arith.constant 0 : index
    %c0_37 = arith.constant 0 : index
    %c0_38 = arith.constant 0 : index
    %20 = vector.load %arg2[%c0_36, %c0_37, %c0_38] : memref<5x28x512xbf16, #tpu.memory_space<vmem>>, vector<1x28x512xbf16>
    %21 = vector.shape_cast %20 : vector<1x28x512xbf16> to vector<28x512xbf16>
    %cst_39 = arith.constant dense<0.000000e+00> : vector<56x512xf32>
    %22 = tpu.matmul %4, %21, %cst_39 {dimension_numbers = #tpu.dot_dimension_numbers<[1], [0], [0], [1], [0, 0, 1, 1], [], []>} : vector<56x28xbf16>, vector<28x512xbf16>, vector<56x512xf32> -> vector<56x512xf32>
    %23 = arith.addf %19, %22 : vector<56x512xf32>
    %c1_40 = arith.constant 1 : index
    %c0_41 = arith.constant 0 : index
    %c0_42 = arith.constant 0 : index
    %24 = vector.load %arg2[%c1_40, %c0_41, %c0_42] : memref<5x28x512xbf16, #tpu.memory_space<vmem>>, vector<1x28x512xbf16>
    %25 = vector.shape_cast %24 : vector<1x28x512xbf16> to vector<28x512xbf16>
    %cst_43 = arith.constant dense<0.000000e+00> : vector<56x512xf32>
    %26 = tpu.matmul %6, %25, %cst_43 {dimension_numbers = #tpu.dot_dimension_numbers<[1], [0], [0], [1], [0, 0, 1, 1], [], []>} : vector<56x28xbf16>, vector<28x512xbf16>, vector<56x512xf32> -> vector<56x512xf32>
    %27 = arith.addf %23, %26 : vector<56x512xf32>
    %c2_44 = arith.constant 2 : index
    %c0_45 = arith.constant 0 : index
    %c0_46 = arith.constant 0 : index
    %28 = vector.load %arg2[%c2_44, %c0_45, %c0_46] : memref<5x28x512xbf16, #tpu.memory_space<vmem>>, vector<1x28x512xbf16>
    %29 = vector.shape_cast %28 : vector<1x28x512xbf16> to vector<28x512xbf16>
    %cst_47 = arith.constant dense<0.000000e+00> : vector<56x512xf32>
    %30 = tpu.matmul %8, %29, %cst_47 {dimension_numbers = #tpu.dot_dimension_numbers<[1], [0], [0], [1], [0, 0, 1, 1], [], []>} : vector<56x28xbf16>, vector<28x512xbf16>, vector<56x512xf32> -> vector<56x512xf32>
    %31 = arith.addf %27, %30 : vector<56x512xf32>
    %c3_48 = arith.constant 3 : index
    %c0_49 = arith.constant 0 : index
    %c0_50 = arith.constant 0 : index
    %32 = vector.load %arg2[%c3_48, %c0_49, %c0_50] : memref<5x28x512xbf16, #tpu.memory_space<vmem>>, vector<1x28x512xbf16>
    %33 = vector.shape_cast %32 : vector<1x28x512xbf16> to vector<28x512xbf16>
    %cst_51 = arith.constant dense<0.000000e+00> : vector<56x512xf32>
    %34 = tpu.matmul %10, %33, %cst_51 {dimension_numbers = #tpu.dot_dimension_numbers<[1], [0], [0], [1], [0, 0, 1, 1], [], []>} : vector<56x28xbf16>, vector<28x512xbf16>, vector<56x512xf32> -> vector<56x512xf32>
    %35 = arith.addf %31, %34 : vector<56x512xf32>
    %c4 = arith.constant 4 : index
    %c0_52 = arith.constant 0 : index
    %c0_53 = arith.constant 0 : index
    %36 = vector.load %arg2[%c4, %c0_52, %c0_53] : memref<5x28x512xbf16, #tpu.memory_space<vmem>>, vector<1x28x512xbf16>
    %37 = vector.shape_cast %36 : vector<1x28x512xbf16> to vector<28x512xbf16>
    %cst_54 = arith.constant dense<0.000000e+00> : vector<56x512xf32>
    %38 = tpu.matmul %12, %37, %cst_54 {dimension_numbers = #tpu.dot_dimension_numbers<[1], [0], [0], [1], [0, 0, 1, 1], [], []>} : vector<56x28xbf16>, vector<28x512xbf16>, vector<56x512xf32> -> vector<56x512xf32>
    %39 = arith.addf %35, %38 : vector<56x512xf32>
    %40 = vector.extract_strided_slice %39 {offsets = [0, 0], sizes = [56, 256], strides = [1, 1]} : vector<56x512xf32> to vector<56x256xf32>
    %41 = vector.extract_strided_slice %39 {offsets = [0, 256], sizes = [56, 256], strides = [1, 1]} : vector<56x512xf32> to vector<56x256xf32>
    %42 = arith.maximumf %40, %41 : vector<56x256xf32>
    %cst_55 = arith.constant 0.000000e+00 : f32
    %43 = vector.broadcast %cst_55 : f32 to vector<56x512xf32>
    %c0_56 = arith.constant 0 : index
    %c0_57 = arith.constant 0 : index
    %c0_58 = arith.constant 0 : index
    %44 = vector.load %arg2[%c0_56, %c0_57, %c0_58] : memref<5x28x512xbf16, #tpu.memory_space<vmem>>, vector<1x28x512xbf16>
    %45 = vector.shape_cast %44 : vector<1x28x512xbf16> to vector<28x512xbf16>
    %cst_59 = arith.constant dense<0.000000e+00> : vector<56x512xf32>
    %46 = tpu.matmul %6, %45, %cst_59 {dimension_numbers = #tpu.dot_dimension_numbers<[1], [0], [0], [1], [0, 0, 1, 1], [], []>} : vector<56x28xbf16>, vector<28x512xbf16>, vector<56x512xf32> -> vector<56x512xf32>
    %47 = arith.addf %43, %46 : vector<56x512xf32>
    %c1_60 = arith.constant 1 : index
    %c0_61 = arith.constant 0 : index
    %c0_62 = arith.constant 0 : index
    %48 = vector.load %arg2[%c1_60, %c0_61, %c0_62] : memref<5x28x512xbf16, #tpu.memory_space<vmem>>, vector<1x28x512xbf16>
    %49 = vector.shape_cast %48 : vector<1x28x512xbf16> to vector<28x512xbf16>
    %cst_63 = arith.constant dense<0.000000e+00> : vector<56x512xf32>
    %50 = tpu.matmul %8, %49, %cst_63 {dimension_numbers = #tpu.dot_dimension_numbers<[1], [0], [0], [1], [0, 0, 1, 1], [], []>} : vector<56x28xbf16>, vector<28x512xbf16>, vector<56x512xf32> -> vector<56x512xf32>
    %51 = arith.addf %47, %50 : vector<56x512xf32>
    %c2_64 = arith.constant 2 : index
    %c0_65 = arith.constant 0 : index
    %c0_66 = arith.constant 0 : index
    %52 = vector.load %arg2[%c2_64, %c0_65, %c0_66] : memref<5x28x512xbf16, #tpu.memory_space<vmem>>, vector<1x28x512xbf16>
    %53 = vector.shape_cast %52 : vector<1x28x512xbf16> to vector<28x512xbf16>
    %cst_67 = arith.constant dense<0.000000e+00> : vector<56x512xf32>
    %54 = tpu.matmul %10, %53, %cst_67 {dimension_numbers = #tpu.dot_dimension_numbers<[1], [0], [0], [1], [0, 0, 1, 1], [], []>} : vector<56x28xbf16>, vector<28x512xbf16>, vector<56x512xf32> -> vector<56x512xf32>
    %55 = arith.addf %51, %54 : vector<56x512xf32>
    %c3_68 = arith.constant 3 : index
    %c0_69 = arith.constant 0 : index
    %c0_70 = arith.constant 0 : index
    %56 = vector.load %arg2[%c3_68, %c0_69, %c0_70] : memref<5x28x512xbf16, #tpu.memory_space<vmem>>, vector<1x28x512xbf16>
    %57 = vector.shape_cast %56 : vector<1x28x512xbf16> to vector<28x512xbf16>
    %cst_71 = arith.constant dense<0.000000e+00> : vector<56x512xf32>
    %58 = tpu.matmul %12, %57, %cst_71 {dimension_numbers = #tpu.dot_dimension_numbers<[1], [0], [0], [1], [0, 0, 1, 1], [], []>} : vector<56x28xbf16>, vector<28x512xbf16>, vector<56x512xf32> -> vector<56x512xf32>
    %59 = arith.addf %55, %58 : vector<56x512xf32>
    %c4_72 = arith.constant 4 : index
    %c0_73 = arith.constant 0 : index
    %c0_74 = arith.constant 0 : index
    %60 = vector.load %arg2[%c4_72, %c0_73, %c0_74] : memref<5x28x512xbf16, #tpu.memory_space<vmem>>, vector<1x28x512xbf16>
    %61 = vector.shape_cast %60 : vector<1x28x512xbf16> to vector<28x512xbf16>
    %cst_75 = arith.constant dense<0.000000e+00> : vector<56x512xf32>
    %62 = tpu.matmul %14, %61, %cst_75 {dimension_numbers = #tpu.dot_dimension_numbers<[1], [0], [0], [1], [0, 0, 1, 1], [], []>} : vector<56x28xbf16>, vector<28x512xbf16>, vector<56x512xf32> -> vector<56x512xf32>
    %63 = arith.addf %59, %62 : vector<56x512xf32>
    %64 = vector.extract_strided_slice %63 {offsets = [0, 0], sizes = [56, 256], strides = [1, 1]} : vector<56x512xf32> to vector<56x256xf32>
    %65 = vector.extract_strided_slice %63 {offsets = [0, 256], sizes = [56, 256], strides = [1, 1]} : vector<56x512xf32> to vector<56x256xf32>
    %66 = arith.maximumf %64, %65 : vector<56x256xf32>
    %67 = arith.maximumf %42, %66 : vector<56x256xf32>
    %c0_76 = arith.constant 0 : index
    %c0_77 = arith.constant 0 : index
    %68 = vector.load %arg3[%c0_76, %c0_77] : memref<1x256xf32, #tpu.memory_space<vmem>>, vector<1x256xf32>
    %69 = vector.broadcast %68 : vector<1x256xf32> to vector<56x256xf32>
    %70 = arith.addf %67, %69 : vector<56x256xf32>
    %cst_78 = arith.constant 0.000000e+00 : f32
    %71 = vector.broadcast %cst_78 : f32 to vector<56x256xf32>
    %72 = arith.maximumf %70, %71 : vector<56x256xf32>
    %73 = vector.shape_cast %72 : vector<56x256xf32> to vector<1x7x8x256xf32>
    %74 = arith.truncf %73 : vector<1x7x8x256xf32> to vector<1x7x8x256xbf16>
    %c0_79 = arith.constant 0 : index
    %c1_80 = arith.constant 1 : index
    %c0_81 = arith.constant 0 : index
    %c0_82 = arith.constant 0 : index
    %75 = vector.load %arg9[%c0_79, %c1_80, %c0_81, %c0_82] : memref<2x9x8x256xbf16, #tpu.memory_space<vmem>>, vector<1x7x8x256xbf16>
    tpu.vector_store %arg9[%c0_79, %c1_80, %c0_81, %c0_82], %74 {strides = array<i32>} : memref<2x9x8x256xbf16, #tpu.memory_space<vmem>>, vector<1x7x8x256xbf16>,
    %cst_83 = arith.constant 0.000000e+00 : f32
    %76 = vector.broadcast %cst_83 : f32 to vector<56x512xf32>
    %c0_84 = arith.constant 0 : index
    %c0_85 = arith.constant 0 : index
    %c0_86 = arith.constant 0 : index
    %77 = vector.load %arg2[%c0_84, %c0_85, %c0_86] : memref<5x28x512xbf16, #tpu.memory_space<vmem>>, vector<1x28x512xbf16>
    %78 = vector.shape_cast %77 : vector<1x28x512xbf16> to vector<28x512xbf16>
    %cst_87 = arith.constant dense<0.000000e+00> : vector<56x512xf32>
    %79 = tpu.matmul %8, %78, %cst_87 {dimension_numbers = #tpu.dot_dimension_numbers<[1], [0], [0], [1], [0, 0, 1, 1], [], []>} : vector<56x28xbf16>, vector<28x512xbf16>, vector<56x512xf32> -> vector<56x512xf32>
    %80 = arith.addf %76, %79 : vector<56x512xf32>
    %c1_88 = arith.constant 1 : index
    %c0_89 = arith.constant 0 : index
    %c0_90 = arith.constant 0 : index
    %81 = vector.load %arg2[%c1_88, %c0_89, %c0_90] : memref<5x28x512xbf16, #tpu.memory_space<vmem>>, vector<1x28x512xbf16>
    %82 = vector.shape_cast %81 : vector<1x28x512xbf16> to vector<28x512xbf16>
    %cst_91 = arith.constant dense<0.000000e+00> : vector<56x512xf32>
    %83 = tpu.matmul %10, %82, %cst_91 {dimension_numbers = #tpu.dot_dimension_numbers<[1], [0], [0], [1], [0, 0, 1, 1], [], []>} : vector<56x28xbf16>, vector<28x512xbf16>, vector<56x512xf32> -> vector<56x512xf32>
    %84 = arith.addf %80, %83 : vector<56x512xf32>
    %c2_92 = arith.constant 2 : index
    %c0_93 = arith.constant 0 : index
    %c0_94 = arith.constant 0 : index
    %85 = vector.load %arg2[%c2_92, %c0_93, %c0_94] : memref<5x28x512xbf16, #tpu.memory_space<vmem>>, vector<1x28x512xbf16>
    %86 = vector.shape_cast %85 : vector<1x28x512xbf16> to vector<28x512xbf16>
    %cst_95 = arith.constant dense<0.000000e+00> : vector<56x512xf32>
    %87 = tpu.matmul %12, %86, %cst_95 {dimension_numbers = #tpu.dot_dimension_numbers<[1], [0], [0], [1], [0, 0, 1, 1], [], []>} : vector<56x28xbf16>, vector<28x512xbf16>, vector<56x512xf32> -> vector<56x512xf32>
    %88 = arith.addf %84, %87 : vector<56x512xf32>
    %c3_96 = arith.constant 3 : index
    %c0_97 = arith.constant 0 : index
    %c0_98 = arith.constant 0 : index
    %89 = vector.load %arg2[%c3_96, %c0_97, %c0_98] : memref<5x28x512xbf16, #tpu.memory_space<vmem>>, vector<1x28x512xbf16>
    %90 = vector.shape_cast %89 : vector<1x28x512xbf16> to vector<28x512xbf16>
    %cst_99 = arith.constant dense<0.000000e+00> : vector<56x512xf32>
    %91 = tpu.matmul %14, %90, %cst_99 {dimension_numbers = #tpu.dot_dimension_numbers<[1], [0], [0], [1], [0, 0, 1, 1], [], []>} : vector<56x28xbf16>, vector<28x512xbf16>, vector<56x512xf32> -> vector<56x512xf32>
    %92 = arith.addf %88, %91 : vector<56x512xf32>
    %c4_100 = arith.constant 4 : index
    %c0_101 = arith.constant 0 : index
    %c0_102 = arith.constant 0 : index
    %93 = vector.load %arg2[%c4_100, %c0_101, %c0_102] : memref<5x28x512xbf16, #tpu.memory_space<vmem>>, vector<1x28x512xbf16>
    %94 = vector.shape_cast %93 : vector<1x28x512xbf16> to vector<28x512xbf16>
    %cst_103 = arith.constant dense<0.000000e+00> : vector<56x512xf32>
    %95 = tpu.matmul %16, %94, %cst_103 {dimension_numbers = #tpu.dot_dimension_numbers<[1], [0], [0], [1], [0, 0, 1, 1], [], []>} : vector<56x28xbf16>, vector<28x512xbf16>, vector<56x512xf32> -> vector<56x512xf32>
    %96 = arith.addf %92, %95 : vector<56x512xf32>
    %97 = vector.extract_strided_slice %96 {offsets = [0, 0], sizes = [56, 256], strides = [1, 1]} : vector<56x512xf32> to vector<56x256xf32>
    %98 = vector.extract_strided_slice %96 {offsets = [0, 256], sizes = [56, 256], strides = [1, 1]} : vector<56x512xf32> to vector<56x256xf32>
    %99 = arith.maximumf %97, %98 : vector<56x256xf32>
    %cst_104 = arith.constant 0.000000e+00 : f32
    %100 = vector.broadcast %cst_104 : f32 to vector<56x512xf32>
    %c0_105 = arith.constant 0 : index
    %c0_106 = arith.constant 0 : index
    %c0_107 = arith.constant 0 : index
    %101 = vector.load %arg2[%c0_105, %c0_106, %c0_107] : memref<5x28x512xbf16, #tpu.memory_space<vmem>>, vector<1x28x512xbf16>
    %102 = vector.shape_cast %101 : vector<1x28x512xbf16> to vector<28x512xbf16>
    %cst_108 = arith.constant dense<0.000000e+00> : vector<56x512xf32>
    %103 = tpu.matmul %10, %102, %cst_108 {dimension_numbers = #tpu.dot_dimension_numbers<[1], [0], [0], [1], [0, 0, 1, 1], [], []>} : vector<56x28xbf16>, vector<28x512xbf16>, vector<56x512xf32> -> vector<56x512xf32>
    %104 = arith.addf %100, %103 : vector<56x512xf32>
    %c1_109 = arith.constant 1 : index
    %c0_110 = arith.constant 0 : index
    %c0_111 = arith.constant 0 : index
    %105 = vector.load %arg2[%c1_109, %c0_110, %c0_111] : memref<5x28x512xbf16, #tpu.memory_space<vmem>>, vector<1x28x512xbf16>
    %106 = vector.shape_cast %105 : vector<1x28x512xbf16> to vector<28x512xbf16>
    %cst_112 = arith.constant dense<0.000000e+00> : vector<56x512xf32>
    %107 = tpu.matmul %12, %106, %cst_112 {dimension_numbers = #tpu.dot_dimension_numbers<[1], [0], [0], [1], [0, 0, 1, 1], [], []>} : vector<56x28xbf16>, vector<28x512xbf16>, vector<56x512xf32> -> vector<56x512xf32>
    %108 = arith.addf %104, %107 : vector<56x512xf32>
    %c2_113 = arith.constant 2 : index
    %c0_114 = arith.constant 0 : index
    %c0_115 = arith.constant 0 : index
    %109 = vector.load %arg2[%c2_113, %c0_114, %c0_115] : memref<5x28x512xbf16, #tpu.memory_space<vmem>>, vector<1x28x512xbf16>
    %110 = vector.shape_cast %109 : vector<1x28x512xbf16> to vector<28x512xbf16>
    %cst_116 = arith.constant dense<0.000000e+00> : vector<56x512xf32>
    %111 = tpu.matmul %14, %110, %cst_116 {dimension_numbers = #tpu.dot_dimension_numbers<[1], [0], [0], [1], [0, 0, 1, 1], [], []>} : vector<56x28xbf16>, vector<28x512xbf16>, vector<56x512xf32> -> vector<56x512xf32>
    %112 = arith.addf %108, %111 : vector<56x512xf32>
    %c3_117 = arith.constant 3 : index
    %c0_118 = arith.constant 0 : index
    %c0_119 = arith.constant 0 : index
    %113 = vector.load %arg2[%c3_117, %c0_118, %c0_119] : memref<5x28x512xbf16, #tpu.memory_space<vmem>>, vector<1x28x512xbf16>
    %114 = vector.shape_cast %113 : vector<1x28x512xbf16> to vector<28x512xbf16>
    %cst_120 = arith.constant dense<0.000000e+00> : vector<56x512xf32>
    %115 = tpu.matmul %16, %114, %cst_120 {dimension_numbers = #tpu.dot_dimension_numbers<[1], [0], [0], [1], [0, 0, 1, 1], [], []>} : vector<56x28xbf16>, vector<28x512xbf16>, vector<56x512xf32> -> vector<56x512xf32>
    %116 = arith.addf %112, %115 : vector<56x512xf32>
    %c4_121 = arith.constant 4 : index
    %c0_122 = arith.constant 0 : index
    %c0_123 = arith.constant 0 : index
    %117 = vector.load %arg2[%c4_121, %c0_122, %c0_123] : memref<5x28x512xbf16, #tpu.memory_space<vmem>>, vector<1x28x512xbf16>
    %118 = vector.shape_cast %117 : vector<1x28x512xbf16> to vector<28x512xbf16>
    %cst_124 = arith.constant dense<0.000000e+00> : vector<56x512xf32>
    %119 = tpu.matmul %18, %118, %cst_124 {dimension_numbers = #tpu.dot_dimension_numbers<[1], [0], [0], [1], [0, 0, 1, 1], [], []>} : vector<56x28xbf16>, vector<28x512xbf16>, vector<56x512xf32> -> vector<56x512xf32>
    %120 = arith.addf %116, %119 : vector<56x512xf32>
    %121 = vector.extract_strided_slice %120 {offsets = [0, 0], sizes = [56, 256], strides = [1, 1]} : vector<56x512xf32> to vector<56x256xf32>
    %122 = vector.extract_strided_slice %120 {offsets = [0, 256], sizes = [56, 256], strides = [1, 1]} : vector<56x512xf32> to vector<56x256xf32>
    %123 = arith.maximumf %121, %122 : vector<56x256xf32>
    %124 = arith.maximumf %99, %123 : vector<56x256xf32>
    %c0_125 = arith.constant 0 : index
    %c0_126 = arith.constant 0 : index
    %125 = vector.load %arg3[%c0_125, %c0_126] : memref<1x256xf32, #tpu.memory_space<vmem>>, vector<1x256xf32>
    %126 = vector.broadcast %125 : vector<1x256xf32> to vector<56x256xf32>
    %127 = arith.addf %124, %126 : vector<56x256xf32>
    %cst_127 = arith.constant 0.000000e+00 : f32
    %128 = vector.broadcast %cst_127 : f32 to vector<56x256xf32>
    %129 = arith.maximumf %127, %128 : vector<56x256xf32>
    %130 = vector.shape_cast %129 : vector<56x256xf32> to vector<1x7x8x256xf32>
    %131 = arith.truncf %130 : vector<1x7x8x256xf32> to vector<1x7x8x256xbf16>
    %c1_128 = arith.constant 1 : index
    %c1_129 = arith.constant 1 : index
    %c0_130 = arith.constant 0 : index
    %c0_131 = arith.constant 0 : index
    %132 = vector.load %arg9[%c1_128, %c1_129, %c0_130, %c0_131] : memref<2x9x8x256xbf16, #tpu.memory_space<vmem>>, vector<1x7x8x256xbf16>
    tpu.vector_store %arg9[%c1_128, %c1_129, %c0_130, %c0_131], %131 {strides = array<i32>} : memref<2x9x8x256xbf16, #tpu.memory_space<vmem>>, vector<1x7x8x256xbf16>,
    %cst_132 = arith.constant 0.000000e+00 : f32
    %133 = vector.broadcast %cst_132 : f32 to vector<56x512xf32>
    %c0_133 = arith.constant 0 : index
    %c0_134 = arith.constant 0 : index
    %c0_135 = arith.constant 0 : index
    %c0_136 = arith.constant 0 : index
    %134 = vector.load %arg9[%c0_133, %c0_134, %c0_135, %c0_136] : memref<2x9x8x256xbf16, #tpu.memory_space<vmem>>, vector<1x7x8x256xbf16>
    %135 = vector.shape_cast %134 : vector<1x7x8x256xbf16> to vector<56x256xbf16>
    %c0_137 = arith.constant 0 : index
    %c0_138 = arith.constant 0 : index
    %c0_139 = arith.constant 0 : index
    %136 = vector.load %arg4[%c0_137, %c0_138, %c0_139] : memref<5x256x512xbf16, #tpu.memory_space<vmem>>, vector<1x256x512xbf16>
    %137 = vector.shape_cast %136 : vector<1x256x512xbf16> to vector<256x512xbf16>
    %cst_140 = arith.constant dense<0.000000e+00> : vector<56x512xf32>
    %138 = tpu.matmul %135, %137, %cst_140 {dimension_numbers = #tpu.dot_dimension_numbers<[1], [0], [0], [1], [0, 0, 1, 1], [], []>} : vector<56x256xbf16>, vector<256x512xbf16>, vector<56x512xf32> -> vector<56x512xf32>
    %139 = arith.addf %133, %138 : vector<56x512xf32>
    %c1_141 = arith.constant 1 : index
    %c0_142 = arith.constant 0 : index
    %c0_143 = arith.constant 0 : index
    %c0_144 = arith.constant 0 : index
    %140 = vector.load %arg9[%c1_141, %c0_142, %c0_143, %c0_144] : memref<2x9x8x256xbf16, #tpu.memory_space<vmem>>, vector<1x7x8x256xbf16>
    %141 = vector.shape_cast %140 : vector<1x7x8x256xbf16> to vector<56x256xbf16>
    %c1_145 = arith.constant 1 : index
    %c0_146 = arith.constant 0 : index
    %c0_147 = arith.constant 0 : index
    %142 = vector.load %arg4[%c1_145, %c0_146, %c0_147] : memref<5x256x512xbf16, #tpu.memory_space<vmem>>, vector<1x256x512xbf16>
    %143 = vector.shape_cast %142 : vector<1x256x512xbf16> to vector<256x512xbf16>
    %cst_148 = arith.constant dense<0.000000e+00> : vector<56x512xf32>
    %144 = tpu.matmul %141, %143, %cst_148 {dimension_numbers = #tpu.dot_dimension_numbers<[1], [0], [0], [1], [0, 0, 1, 1], [], []>} : vector<56x256xbf16>, vector<256x512xbf16>, vector<56x512xf32> -> vector<56x512xf32>
    %145 = arith.addf %139, %144 : vector<56x512xf32>
    %c0_149 = arith.constant 0 : index
    %c1_150 = arith.constant 1 : index
    %c0_151 = arith.constant 0 : index
    %c0_152 = arith.constant 0 : index
    %146 = vector.load %arg9[%c0_149, %c1_150, %c0_151, %c0_152] : memref<2x9x8x256xbf16, #tpu.memory_space<vmem>>, vector<1x7x8x256xbf16>
    %147 = vector.shape_cast %146 : vector<1x7x8x256xbf16> to vector<56x256xbf16>
    %c2_153 = arith.constant 2 : index
    %c0_154 = arith.constant 0 : index
    %c0_155 = arith.constant 0 : index
    %148 = vector.load %arg4[%c2_153, %c0_154, %c0_155] : memref<5x256x512xbf16, #tpu.memory_space<vmem>>, vector<1x256x512xbf16>
    %149 = vector.shape_cast %148 : vector<1x256x512xbf16> to vector<256x512xbf16>
    %cst_156 = arith.constant dense<0.000000e+00> : vector<56x512xf32>
    %150 = tpu.matmul %147, %149, %cst_156 {dimension_numbers = #tpu.dot_dimension_numbers<[1], [0], [0], [1], [0, 0, 1, 1], [], []>} : vector<56x256xbf16>, vector<256x512xbf16>, vector<56x512xf32> -> vector<56x512xf32>
    %151 = arith.addf %145, %150 : vector<56x512xf32>
    %c1_157 = arith.constant 1 : index
    %c1_158 = arith.constant 1 : index
    %c0_159 = arith.constant 0 : index
    %c0_160 = arith.constant 0 : index
    %152 = vector.load %arg9[%c1_157, %c1_158, %c0_159, %c0_160] : memref<2x9x8x256xbf16, #tpu.memory_space<vmem>>, vector<1x7x8x256xbf16>
    %153 = vector.shape_cast %152 : vector<1x7x8x256xbf16> to vector<56x256xbf16>
    %c3_161 = arith.constant 3 : index
    %c0_162 = arith.constant 0 : index
    %c0_163 = arith.constant 0 : index
    %154 = vector.load %arg4[%c3_161, %c0_162, %c0_163] : memref<5x256x512xbf16, #tpu.memory_space<vmem>>, vector<1x256x512xbf16>
    %155 = vector.shape_cast %154 : vector<1x256x512xbf16> to vector<256x512xbf16>
    %cst_164 = arith.constant dense<0.000000e+00> : vector<56x512xf32>
    %156 = tpu.matmul %153, %155, %cst_164 {dimension_numbers = #tpu.dot_dimension_numbers<[1], [0], [0], [1], [0, 0, 1, 1], [], []>} : vector<56x256xbf16>, vector<256x512xbf16>, vector<56x512xf32> -> vector<56x512xf32>
    %157 = arith.addf %151, %156 : vector<56x512xf32>
    %c0_165 = arith.constant 0 : index
    %c2_166 = arith.constant 2 : index
    %c0_167 = arith.constant 0 : index
    %c0_168 = arith.constant 0 : index
    %158 = vector.load %arg9[%c0_165, %c2_166, %c0_167, %c0_168] : memref<2x9x8x256xbf16, #tpu.memory_space<vmem>>, vector<1x7x8x256xbf16>
    %159 = vector.shape_cast %158 : vector<1x7x8x256xbf16> to vector<56x256xbf16>
    %c4_169 = arith.constant 4 : index
    %c0_170 = arith.constant 0 : index
    %c0_171 = arith.constant 0 : index
    %160 = vector.load %arg4[%c4_169, %c0_170, %c0_171] : memref<5x256x512xbf16, #tpu.memory_space<vmem>>, vector<1x256x512xbf16>
    %161 = vector.shape_cast %160 : vector<1x256x512xbf16> to vector<256x512xbf16>
    %cst_172 = arith.constant dense<0.000000e+00> : vector<56x512xf32>
    %162 = tpu.matmul %159, %161, %cst_172 {dimension_numbers = #tpu.dot_dimension_numbers<[1], [0], [0], [1], [0, 0, 1, 1], [], []>} : vector<56x256xbf16>, vector<256x512xbf16>, vector<56x512xf32> -> vector<56x512xf32>
    %163 = arith.addf %157, %162 : vector<56x512xf32>
    %164 = vector.extract_strided_slice %163 {offsets = [0, 0], sizes = [56, 256], strides = [1, 1]} : vector<56x512xf32> to vector<56x256xf32>
    %165 = vector.extract_strided_slice %163 {offsets = [0, 256], sizes = [56, 256], strides = [1, 1]} : vector<56x512xf32> to vector<56x256xf32>
    %166 = arith.maximumf %164, %165 : vector<56x256xf32>
    %cst_173 = arith.constant 0.000000e+00 : f32
    %167 = vector.broadcast %cst_173 : f32 to vector<56x512xf32>
    %c1_174 = arith.constant 1 : index
    %c0_175 = arith.constant 0 : index
    %c0_176 = arith.constant 0 : index
    %c0_177 = arith.constant 0 : index
    %168 = vector.load %arg9[%c1_174, %c0_175, %c0_176, %c0_177] : memref<2x9x8x256xbf16, #tpu.memory_space<vmem>>, vector<1x7x8x256xbf16>
    %169 = vector.shape_cast %168 : vector<1x7x8x256xbf16> to vector<56x256xbf16>
    %c0_178 = arith.constant 0 : index
    %c0_179 = arith.constant 0 : index
    %c0_180 = arith.constant 0 : index
    %170 = vector.load %arg4[%c0_178, %c0_179, %c0_180] : memref<5x256x512xbf16, #tpu.memory_space<vmem>>, vector<1x256x512xbf16>
    %171 = vector.shape_cast %170 : vector<1x256x512xbf16> to vector<256x512xbf16>
    %cst_181 = arith.constant dense<0.000000e+00> : vector<56x512xf32>
    %172 = tpu.matmul %169, %171, %cst_181 {dimension_numbers = #tpu.dot_dimension_numbers<[1], [0], [0], [1], [0, 0, 1, 1], [], []>} : vector<56x256xbf16>, vector<256x512xbf16>, vector<56x512xf32> -> vector<56x512xf32>
    %173 = arith.addf %167, %172 : vector<56x512xf32>
    %c0_182 = arith.constant 0 : index
    %c1_183 = arith.constant 1 : index
    %c0_184 = arith.constant 0 : index
    %c0_185 = arith.constant 0 : index
    %174 = vector.load %arg9[%c0_182, %c1_183, %c0_184, %c0_185] : memref<2x9x8x256xbf16, #tpu.memory_space<vmem>>, vector<1x7x8x256xbf16>
    %175 = vector.shape_cast %174 : vector<1x7x8x256xbf16> to vector<56x256xbf16>
    %c1_186 = arith.constant 1 : index
    %c0_187 = arith.constant 0 : index
    %c0_188 = arith.constant 0 : index
    %176 = vector.load %arg4[%c1_186, %c0_187, %c0_188] : memref<5x256x512xbf16, #tpu.memory_space<vmem>>, vector<1x256x512xbf16>
    %177 = vector.shape_cast %176 : vector<1x256x512xbf16> to vector<256x512xbf16>
    %cst_189 = arith.constant dense<0.000000e+00> : vector<56x512xf32>
    %178 = tpu.matmul %175, %177, %cst_189 {dimension_numbers = #tpu.dot_dimension_numbers<[1], [0], [0], [1], [0, 0, 1, 1], [], []>} : vector<56x256xbf16>, vector<256x512xbf16>, vector<56x512xf32> -> vector<56x512xf32>
    %179 = arith.addf %173, %178 : vector<56x512xf32>
    %c1_190 = arith.constant 1 : index
    %c1_191 = arith.constant 1 : index
    %c0_192 = arith.constant 0 : index
    %c0_193 = arith.constant 0 : index
    %180 = vector.load %arg9[%c1_190, %c1_191, %c0_192, %c0_193] : memref<2x9x8x256xbf16, #tpu.memory_space<vmem>>, vector<1x7x8x256xbf16>
    %181 = vector.shape_cast %180 : vector<1x7x8x256xbf16> to vector<56x256xbf16>
    %c2_194 = arith.constant 2 : index
    %c0_195 = arith.constant 0 : index
    %c0_196 = arith.constant 0 : index
    %182 = vector.load %arg4[%c2_194, %c0_195, %c0_196] : memref<5x256x512xbf16, #tpu.memory_space<vmem>>, vector<1x256x512xbf16>
    %183 = vector.shape_cast %182 : vector<1x256x512xbf16> to vector<256x512xbf16>
    %cst_197 = arith.constant dense<0.000000e+00> : vector<56x512xf32>
    %184 = tpu.matmul %181, %183, %cst_197 {dimension_numbers = #tpu.dot_dimension_numbers<[1], [0], [0], [1], [0, 0, 1, 1], [], []>} : vector<56x256xbf16>, vector<256x512xbf16>, vector<56x512xf32> -> vector<56x512xf32>
    %185 = arith.addf %179, %184 : vector<56x512xf32>
    %c0_198 = arith.constant 0 : index
    %c2_199 = arith.constant 2 : index
    %c0_200 = arith.constant 0 : index
    %c0_201 = arith.constant 0 : index
    %186 = vector.load %arg9[%c0_198, %c2_199, %c0_200, %c0_201] : memref<2x9x8x256xbf16, #tpu.memory_space<vmem>>, vector<1x7x8x256xbf16>
    %187 = vector.shape_cast %186 : vector<1x7x8x256xbf16> to vector<56x256xbf16>
    %c3_202 = arith.constant 3 : index
    %c0_203 = arith.constant 0 : index
    %c0_204 = arith.constant 0 : index
    %188 = vector.load %arg4[%c3_202, %c0_203, %c0_204] : memref<5x256x512xbf16, #tpu.memory_space<vmem>>, vector<1x256x512xbf16>
    %189 = vector.shape_cast %188 : vector<1x256x512xbf16> to vector<256x512xbf16>
    %cst_205 = arith.constant dense<0.000000e+00> : vector<56x512xf32>
    %190 = tpu.matmul %187, %189, %cst_205 {dimension_numbers = #tpu.dot_dimension_numbers<[1], [0], [0], [1], [0, 0, 1, 1], [], []>} : vector<56x256xbf16>, vector<256x512xbf16>, vector<56x512xf32> -> vector<56x512xf32>
    %191 = arith.addf %185, %190 : vector<56x512xf32>
    %c1_206 = arith.constant 1 : index
    %c2_207 = arith.constant 2 : index
    %c0_208 = arith.constant 0 : index
    %c0_209 = arith.constant 0 : index
    %192 = vector.load %arg9[%c1_206, %c2_207, %c0_208, %c0_209] : memref<2x9x8x256xbf16, #tpu.memory_space<vmem>>, vector<1x7x8x256xbf16>
    %193 = vector.shape_cast %192 : vector<1x7x8x256xbf16> to vector<56x256xbf16>
    %c4_210 = arith.constant 4 : index
    %c0_211 = arith.constant 0 : index
    %c0_212 = arith.constant 0 : index
    %194 = vector.load %arg4[%c4_210, %c0_211, %c0_212] : memref<5x256x512xbf16, #tpu.memory_space<vmem>>, vector<1x256x512xbf16>
    %195 = vector.shape_cast %194 : vector<1x256x512xbf16> to vector<256x512xbf16>
    %cst_213 = arith.constant dense<0.000000e+00> : vector<56x512xf32>
    %196 = tpu.matmul %193, %195, %cst_213 {dimension_numbers = #tpu.dot_dimension_numbers<[1], [0], [0], [1], [0, 0, 1, 1], [], []>} : vector<56x256xbf16>, vector<256x512xbf16>, vector<56x512xf32> -> vector<56x512xf32>
    %197 = arith.addf %191, %196 : vector<56x512xf32>
    %198 = vector.extract_strided_slice %197 {offsets = [0, 0], sizes = [56, 256], strides = [1, 1]} : vector<56x512xf32> to vector<56x256xf32>
    %199 = vector.extract_strided_slice %197 {offsets = [0, 256], sizes = [56, 256], strides = [1, 1]} : vector<56x512xf32> to vector<56x256xf32>
    %200 = arith.maximumf %198, %199 : vector<56x256xf32>
    %201 = arith.maximumf %166, %200 : vector<56x256xf32>
    %c0_214 = arith.constant 0 : index
    %c0_215 = arith.constant 0 : index
    %202 = vector.load %arg5[%c0_214, %c0_215] : memref<1x256xf32, #tpu.memory_space<vmem>>, vector<1x256xf32>
    %203 = vector.broadcast %202 : vector<1x256xf32> to vector<56x256xf32>
    %204 = arith.addf %201, %203 : vector<56x256xf32>
    %cst_216 = arith.constant 0.000000e+00 : f32
    %205 = vector.broadcast %cst_216 : f32 to vector<56x256xf32>
    %206 = arith.maximumf %204, %205 : vector<56x256xf32>
    %207 = arith.truncf %206 : vector<56x256xf32> to vector<56x256xbf16>
    %208 = vector.shape_cast %207 : vector<56x256xbf16> to vector<7x8x256xbf16>
    %cst_217 = arith.constant 0.000000e+00 : f32
    %209 = vector.broadcast %cst_217 : f32 to vector<8x128xf32>
    %c0_218 = arith.constant 0 : index
    %c0_219 = arith.constant 0 : index
    %c0_220 = arith.constant 0 : index
    %210 = vector.load %arg6[%c0_218, %c0_219, %c0_220] : memref<7x256x128xbf16, #tpu.memory_space<vmem>>, vector<1x256x128xbf16>
    %211 = vector.shape_cast %210 : vector<1x256x128xbf16> to vector<256x128xbf16>
    %212 = vector.extract_strided_slice %208 {offsets = [0, 0, 0], sizes = [1, 8, 256], strides = [1, 1, 1]} : vector<7x8x256xbf16> to vector<1x8x256xbf16>
    %213 = vector.shape_cast %212 : vector<1x8x256xbf16> to vector<8x256xbf16>
    %cst_221 = arith.constant dense<0.000000e+00> : vector<8x128xf32>
    %214 = tpu.matmul %213, %211, %cst_221 {dimension_numbers = #tpu.dot_dimension_numbers<[1], [0], [0], [1], [0, 0, 1, 1], [], []>} : vector<8x256xbf16>, vector<256x128xbf16>, vector<8x128xf32> -> vector<8x128xf32>
    %215 = arith.addf %209, %214 : vector<8x128xf32>
    %c1_222 = arith.constant 1 : index
    %c0_223 = arith.constant 0 : index
    %c0_224 = arith.constant 0 : index
    %216 = vector.load %arg6[%c1_222, %c0_223, %c0_224] : memref<7x256x128xbf16, #tpu.memory_space<vmem>>, vector<1x256x128xbf16>
    %217 = vector.shape_cast %216 : vector<1x256x128xbf16> to vector<256x128xbf16>
    %218 = vector.extract_strided_slice %208 {offsets = [1, 0, 0], sizes = [1, 8, 256], strides = [1, 1, 1]} : vector<7x8x256xbf16> to vector<1x8x256xbf16>
    %219 = vector.shape_cast %218 : vector<1x8x256xbf16> to vector<8x256xbf16>
    %cst_225 = arith.constant dense<0.000000e+00> : vector<8x128xf32>
    %220 = tpu.matmul %219, %217, %cst_225 {dimension_numbers = #tpu.dot_dimension_numbers<[1], [0], [0], [1], [0, 0, 1, 1], [], []>} : vector<8x256xbf16>, vector<256x128xbf16>, vector<8x128xf32> -> vector<8x128xf32>
    %221 = arith.addf %215, %220 : vector<8x128xf32>
    %c2_226 = arith.constant 2 : index
    %c0_227 = arith.constant 0 : index
    %c0_228 = arith.constant 0 : index
    %222 = vector.load %arg6[%c2_226, %c0_227, %c0_228] : memref<7x256x128xbf16, #tpu.memory_space<vmem>>, vector<1x256x128xbf16>
    %223 = vector.shape_cast %222 : vector<1x256x128xbf16> to vector<256x128xbf16>
    %224 = vector.extract_strided_slice %208 {offsets = [2, 0, 0], sizes = [1, 8, 256], strides = [1, 1, 1]} : vector<7x8x256xbf16> to vector<1x8x256xbf16>
    %225 = vector.shape_cast %224 : vector<1x8x256xbf16> to vector<8x256xbf16>
    %cst_229 = arith.constant dense<0.000000e+00> : vector<8x128xf32>
    %226 = tpu.matmul %225, %223, %cst_229 {dimension_numbers = #tpu.dot_dimension_numbers<[1], [0], [0], [1], [0, 0, 1, 1], [], []>} : vector<8x256xbf16>, vector<256x128xbf16>, vector<8x128xf32> -> vector<8x128xf32>
    %227 = arith.addf %221, %226 : vector<8x128xf32>
    %c3_230 = arith.constant 3 : index
    %c0_231 = arith.constant 0 : index
    %c0_232 = arith.constant 0 : index
    %228 = vector.load %arg6[%c3_230, %c0_231, %c0_232] : memref<7x256x128xbf16, #tpu.memory_space<vmem>>, vector<1x256x128xbf16>
    %229 = vector.shape_cast %228 : vector<1x256x128xbf16> to vector<256x128xbf16>
    %230 = vector.extract_strided_slice %208 {offsets = [3, 0, 0], sizes = [1, 8, 256], strides = [1, 1, 1]} : vector<7x8x256xbf16> to vector<1x8x256xbf16>
    %231 = vector.shape_cast %230 : vector<1x8x256xbf16> to vector<8x256xbf16>
    %cst_233 = arith.constant dense<0.000000e+00> : vector<8x128xf32>
    %232 = tpu.matmul %231, %229, %cst_233 {dimension_numbers = #tpu.dot_dimension_numbers<[1], [0], [0], [1], [0, 0, 1, 1], [], []>} : vector<8x256xbf16>, vector<256x128xbf16>, vector<8x128xf32> -> vector<8x128xf32>
    %233 = arith.addf %227, %232 : vector<8x128xf32>
    %c4_234 = arith.constant 4 : index
    %c0_235 = arith.constant 0 : index
    %c0_236 = arith.constant 0 : index
    %234 = vector.load %arg6[%c4_234, %c0_235, %c0_236] : memref<7x256x128xbf16, #tpu.memory_space<vmem>>, vector<1x256x128xbf16>
    %235 = vector.shape_cast %234 : vector<1x256x128xbf16> to vector<256x128xbf16>
    %236 = vector.extract_strided_slice %208 {offsets = [4, 0, 0], sizes = [1, 8, 256], strides = [1, 1, 1]} : vector<7x8x256xbf16> to vector<1x8x256xbf16>
    %237 = vector.shape_cast %236 : vector<1x8x256xbf16> to vector<8x256xbf16>
    %cst_237 = arith.constant dense<0.000000e+00> : vector<8x128xf32>
    %238 = tpu.matmul %237, %235, %cst_237 {dimension_numbers = #tpu.dot_dimension_numbers<[1], [0], [0], [1], [0, 0, 1, 1], [], []>} : vector<8x256xbf16>, vector<256x128xbf16>, vector<8x128xf32> -> vector<8x128xf32>
    %239 = arith.addf %233, %238 : vector<8x128xf32>
    %c5 = arith.constant 5 : index
    %c0_238 = arith.constant 0 : index
    %c0_239 = arith.constant 0 : index
    %240 = vector.load %arg6[%c5, %c0_238, %c0_239] : memref<7x256x128xbf16, #tpu.memory_space<vmem>>, vector<1x256x128xbf16>
    %241 = vector.shape_cast %240 : vector<1x256x128xbf16> to vector<256x128xbf16>
    %242 = vector.extract_strided_slice %208 {offsets = [5, 0, 0], sizes = [1, 8, 256], strides = [1, 1, 1]} : vector<7x8x256xbf16> to vector<1x8x256xbf16>
    %243 = vector.shape_cast %242 : vector<1x8x256xbf16> to vector<8x256xbf16>
    %cst_240 = arith.constant dense<0.000000e+00> : vector<8x128xf32>
    %244 = tpu.matmul %243, %241, %cst_240 {dimension_numbers = #tpu.dot_dimension_numbers<[1], [0], [0], [1], [0, 0, 1, 1], [], []>} : vector<8x256xbf16>, vector<256x128xbf16>, vector<8x128xf32> -> vector<8x128xf32>
    %245 = arith.addf %239, %244 : vector<8x128xf32>
    %c6 = arith.constant 6 : index
    %c0_241 = arith.constant 0 : index
    %c0_242 = arith.constant 0 : index
    %246 = vector.load %arg6[%c6, %c0_241, %c0_242] : memref<7x256x128xbf16, #tpu.memory_space<vmem>>, vector<1x256x128xbf16>
    %247 = vector.shape_cast %246 : vector<1x256x128xbf16> to vector<256x128xbf16>
    %248 = vector.extract_strided_slice %208 {offsets = [6, 0, 0], sizes = [1, 8, 256], strides = [1, 1, 1]} : vector<7x8x256xbf16> to vector<1x8x256xbf16>
    %249 = vector.shape_cast %248 : vector<1x8x256xbf16> to vector<8x256xbf16>
    %cst_243 = arith.constant dense<0.000000e+00> : vector<8x128xf32>
    %250 = tpu.matmul %249, %247, %cst_243 {dimension_numbers = #tpu.dot_dimension_numbers<[1], [0], [0], [1], [0, 0, 1, 1], [], []>} : vector<8x256xbf16>, vector<256x128xbf16>, vector<8x128xf32> -> vector<8x128xf32>
    %251 = arith.addf %245, %250 : vector<8x128xf32>
    %c0_244 = arith.constant 0 : index
    %c0_245 = arith.constant 0 : index
    %252 = vector.load %arg7[%c0_244, %c0_245] : memref<1x128xf32, #tpu.memory_space<vmem>>, vector<1x128xf32>
    %253 = vector.broadcast %252 : vector<1x128xf32> to vector<8x128xf32>
    %254 = arith.addf %251, %253 : vector<8x128xf32>
    %c0_246 = arith.constant 0 : index
    %c0_247 = arith.constant 0 : index
    %255 = vector.load %arg8[%c0_246, %c0_247] : memref<8x128xf32, #tpu.memory_space<vmem>>, vector<8x128xf32>
    tpu.vector_store %arg8[%c0_246, %c0_247], %254 {strides = array<i32>} : memref<8x128xf32, #tpu.memory_space<vmem>>, vector<8x128xf32>,
    return
  }
  func.func @transform_0(%arg0: i32) -> (i32, i32, i32, i32) {
    %c0_i32 = arith.constant 0 : i32
    %c0_i32_0 = arith.constant 0 : i32
    %c0_i32_1 = arith.constant 0 : i32
    %c0_i32_2 = arith.constant 0 : i32
    return %c0_i32, %c0_i32_0, %arg0, %c0_i32_1 : i32, i32, i32, i32
  }
  func.func @transform_1(%arg0: i32) -> (i32, i32, i32) {
    %c0_i32 = arith.constant 0 : i32
    %c0_i32_0 = arith.constant 0 : i32
    %c0_i32_1 = arith.constant 0 : i32
    %c0_i32_2 = arith.constant 0 : i32
    return %c0_i32, %c0_i32_0, %c0_i32_1 : i32, i32, i32
  }
  func.func @transform_2(%arg0: i32) -> (i32, i32) {
    %c0_i32 = arith.constant 0 : i32
    %c0_i32_0 = arith.constant 0 : i32
    %c0_i32_1 = arith.constant 0 : i32
    return %c0_i32, %c0_i32_0 : i32, i32
  }
  func.func @transform_3(%arg0: i32) -> (i32, i32, i32) {
    %c0_i32 = arith.constant 0 : i32
    %c0_i32_0 = arith.constant 0 : i32
    %c0_i32_1 = arith.constant 0 : i32
    %c0_i32_2 = arith.constant 0 : i32
    return %c0_i32, %c0_i32_0, %c0_i32_1 : i32, i32, i32
  }
  func.func @transform_4(%arg0: i32) -> (i32, i32) {
    %c0_i32 = arith.constant 0 : i32
    %c0_i32_0 = arith.constant 0 : i32
    %c0_i32_1 = arith.constant 0 : i32
    return %c0_i32, %c0_i32_0 : i32, i32
  }
  func.func @transform_5(%arg0: i32) -> (i32, i32, i32) {
    %c0_i32 = arith.constant 0 : i32
    %c0_i32_0 = arith.constant 0 : i32
    %c0_i32_1 = arith.constant 0 : i32
    %c0_i32_2 = arith.constant 0 : i32
    return %c0_i32, %c0_i32_0, %c0_i32_1 : i32, i32, i32
  }
  func.func @transform_6(%arg0: i32) -> (i32, i32) {
    %c0_i32 = arith.constant 0 : i32
    %c0_i32_0 = arith.constant 0 : i32
    %c0_i32_1 = arith.constant 0 : i32
    return %c0_i32, %c0_i32_0 : i32, i32
  }
  func.func @transform_7(%arg0: i32) -> (i32, i32) {
    %c0_i32 = arith.constant 0 : i32
    %c0_i32_0 = arith.constant 0 : i32
    return %arg0, %c0_i32 : i32, i32
  }
}

</mosaic_0001>

<llo_original>
// kernel: cnn_forward.1
$region0: #{cnn_forward.1}
  #allocation0 [shape = 'u32[]', space=smem, size = 0x4, offset = 0x4, fixed_abs, tag = 'smem constant byte address 0x4 - core index']
  #allocation1 [shape = 'u32[144,128]{1,0:T(1,128)}', space=vmem, size = 0x12000, scoped, tag = 'internal scratch']
  #allocation2 [shape = 'bf16[2,9,8,256]{3,2,1,0:T(8,128)(2,1)}', space=vmem, size = 0x12000, scoped, tag = 'scratch operand']
  %s0 = inlined_call_operand.vmem [shape: bf16[4,8,8,28], index: 0, kind: input, shape index: {}]
  %s1 = inlined_call_operand.hbm [shape: bf16[5,28,512], index: 1, kind: input, shape index: {}]
  %s2 = inlined_call_operand.hbm [shape: f32[1,256], index: 2, kind: input, shape index: {}]
  %s3 = inlined_call_operand.hbm [shape: bf16[5,256,512], index: 3, kind: input, shape index: {}]
  %s4 = inlined_call_operand.hbm [shape: f32[1,256], index: 4, kind: input, shape index: {}]
  %s5 = inlined_call_operand.hbm [shape: bf16[7,256,128], index: 5, kind: input, shape index: {}]
  %s6 = inlined_call_operand.hbm [shape: f32[1,128], index: 6, kind: input, shape index: {}]
  %s7 = inlined_call_operand.vmem [shape: f32[8,128], index: 7, kind: output, shape index: {}]
  %s8 = sld [smem:[#allocation0]]
  $region62: #{cnn_forward.1} parent=0
    _
  %s10 = ssub.s32 1, %s8
  %s11 = scalar_select 0, %s10, %s8
  $region1: #{cnn_forward.1} parent=0
    #allocation3 [shape = 'u8[163840]{0}', space=vmem, size = 0x28000, scoped, tag = 'input window, operand 1, single buffered']
    #allocation4 [shape = 's32[1]{0}', space=sflag, size = 0x4, scoped, tag = 'scoped memory for cnn_forward.1']
    #allocation5 [shape = 'u8[1024]{0}', space=vmem, size = 0x400, scoped, tag = 'input window, operand 2, single buffered']
    #allocation6 [shape = 's32[1]{0}', space=sflag, size = 0x4, scoped, tag = 'scoped memory for cnn_forward.1']
    #allocation7 [shape = 'u8[1310720]{0}', space=vmem, size = 0x140000, scoped, tag = 'input window, operand 3, single buffered']
    #allocation8 [shape = 'u8[1024]{0}', space=vmem, size = 0x400, scoped, tag = 'input window, operand 4, single buffered']
    #allocation9 [shape = 's32[1]{0}', space=sflag, size = 0x4, scoped, tag = 'scoped memory for cnn_forward.1']
    #allocation10 [shape = 'u8[458752]{0}', space=vmem, size = 0x70000, scoped, tag = 'input window, operand 5, single buffered']
    #allocation11 [shape = 'u8[512]{0}', space=vmem, size = 0x400, scoped, tag = 'input window, operand 6, single buffered']
    #allocation12 [shape = 's32[1]{0}', space=sflag, size = 0x4, scoped, tag = 'scoped memory for cnn_forward.1']
    %12 = vsyncpa [#allocation4], 0
    %13 = vsyncpa [#allocation6], 0
    %14 = vsyncpa [#allocation9], 0
    %15 = vsyncpa [#allocation12], 0
    // Predicated region
    $region2: #{cnn_forward.1} parent=1 // pred_check
      _
    $region3: #{cnn_forward.1} parent=1 // pred_check_branch
      %17 = sbr.rel (0) target = $region5
    $region4: #{cnn_forward.1} parent=1 // pred_region
      _
    $region5: #{cnn_forward.1} parent=1 // pred_fallthru
      _
    // Predicated region
    $region6: #{cnn_forward.1} parent=1 // pred_check
      _
    $region7: #{cnn_forward.1} parent=1 // pred_check_branch
      %19 = sbr.rel (0) target = $region9
    $region8: #{cnn_forward.1} parent=1 // pred_region
      %s21 = ssub.s32 5120, 5120
      %22 = vsyncadd [#allocation4], %s21
      %s23 = sshll.u32 [#allocation3], 4
      %s24 = int_to_ptr.vmem [resolvable:$true] %s23
      %29 = dma.hbm_to_vmem [thread:$0]  %s1, 5120, %s24, [#allocation4], 256, 256, 16
    $region9: #{cnn_forward.1} parent=1 // pred_fallthru
      _
    // Predicated region
    $region10: #{cnn_forward.1} parent=1 // pred_check
      _
    $region11: #{cnn_forward.1} parent=1 // pred_check_branch
      %31 = sbr.rel (0) target = $region13
    $region12: #{cnn_forward.1} parent=1 // pred_region
      %s33 = ssub.s32 32, 32
      %34 = vsyncadd [#allocation6], %s33
      %s36 = sshll.u32 [#allocation5], 4
      %s37 = int_to_ptr.vmem [resolvable:$true] %s36
      %39 = dma.hbm_to_vmem [thread:$0]  %s2, 32, %s37, [#allocation6]
    $region13: #{cnn_forward.1} parent=1 // pred_fallthru
      _
    // Predicated region
    $region14: #{cnn_forward.1} parent=1 // pred_check
      _
    $region15: #{cnn_forward.1} parent=1 // pred_check_branch
      %41 = sbr.rel (0) target = $region17
    $region16: #{cnn_forward.1} parent=1 // pred_region
      %s43 = ssub.s32 40960, 40960
      %44 = vsyncadd [#allocation6], %s43
      %s45 = sshll.u32 [#allocation7], 4
      %s46 = int_to_ptr.vmem [resolvable:$true] %s45
      %51 = dma.hbm_to_vmem [thread:$0]  %s3, 40960, %s46, [#allocation6], 256, 256, 16
    $region17: #{cnn_forward.1} parent=1 // pred_fallthru
      _
    // Predicated region
    $region18: #{cnn_forward.1} parent=1 // pred_check
      _
    $region19: #{cnn_forward.1} parent=1 // pred_check_branch
      %53 = sbr.rel (0) target = $region21
    $region20: #{cnn_forward.1} parent=1 // pred_region
      %s55 = ssub.s32 32, 32
      %56 = vsyncadd [#allocation9], %s55
      %s58 = sshll.u32 [#allocation8], 4
      %s59 = int_to_ptr.vmem [resolvable:$true] %s58
      %61 = dma.hbm_to_vmem [thread:$0]  %s4, 32, %s59, [#allocation9]
    $region21: #{cnn_forward.1} parent=1 // pred_fallthru
      _
    // Predicated region
    $region22: #{cnn_forward.1} parent=1 // pred_check
      _
    $region23: #{cnn_forward.1} parent=1 // pred_check_branch
      %63 = sbr.rel (0) target = $region25
    $region24: #{cnn_forward.1} parent=1 // pred_region
      %s65 = ssub.s32 14336, 14336
      %66 = vsyncadd [#allocation9], %s65
      %s67 = sshll.u32 [#allocation10], 4
      %s68 = int_to_ptr.vmem [resolvable:$true] %s67
      %73 = dma.hbm_to_vmem [thread:$0]  %s5, 14336, %s68, [#allocation9], 64, 64, 4
    $region25: #{cnn_forward.1} parent=1 // pred_fallthru
      _
    // Predicated region
    $region26: #{cnn_forward.1} parent=1 // pred_check
      _
    $region27: #{cnn_forward.1} parent=1 // pred_check_branch
      %75 = sbr.rel (0) target = $region29
    $region28: #{cnn_forward.1} parent=1 // pred_region
      %s77 = ssub.s32 16, 16
      %78 = vsyncadd [#allocation12], %s77
      %s80 = sshll.u32 [#allocation11], 4
      %s81 = int_to_ptr.vmem [resolvable:$true] %s80
      %83 = dma.hbm_to_vmem [thread:$0]  %s6, 16, %s81, [#allocation12]
    $region29: #{cnn_forward.1} parent=1 // pred_fallthru
      _
    // Predicated region
    $region30: #{cnn_forward.1} parent=1 // pred_check
      _
    $region31: #{cnn_forward.1} parent=1 // pred_check_branch
      %85 = sbr.rel (0) target = $region33
    $region32: #{cnn_forward.1} parent=1 // pred_region
      %86 = dma.done [#allocation4], 5120
    $region33: #{cnn_forward.1} parent=1 // pred_fallthru
      _
    // Predicated region
    $region34: #{cnn_forward.1} parent=1 // pred_check
      _
    $region35: #{cnn_forward.1} parent=1 // pred_check_branch
      %88 = sbr.rel (0) target = $region37
    $region36: #{cnn_forward.1} parent=1 // pred_region
      %89 = dma.done [#allocation6], 32
    $region37: #{cnn_forward.1} parent=1 // pred_fallthru
      _
    // Predicated region
    $region38: #{cnn_forward.1} parent=1 // pred_check
      _
    $region39: #{cnn_forward.1} parent=1 // pred_check_branch
      %91 = sbr.rel (0) target = $region41
    $region40: #{cnn_forward.1} parent=1 // pred_region
      %92 = dma.done [#allocation6], 40960
    $region41: #{cnn_forward.1} parent=1 // pred_fallthru
      _
    // Predicated region
    $region42: #{cnn_forward.1} parent=1 // pred_check
      _
    $region43: #{cnn_forward.1} parent=1 // pred_check_branch
      %94 = sbr.rel (0) target = $region45
    $region44: #{cnn_forward.1} parent=1 // pred_region
      %95 = dma.done [#allocation9], 32
    $region45: #{cnn_forward.1} parent=1 // pred_fallthru
      _
    // Predicated region
    $region46: #{cnn_forward.1} parent=1 // pred_check
      _
    $region47: #{cnn_forward.1} parent=1 // pred_check_branch
      %97 = sbr.rel (0) target = $region49
    $region48: #{cnn_forward.1} parent=1 // pred_region
      %98 = dma.done [#allocation9], 14336
    $region49: #{cnn_forward.1} parent=1 // pred_fallthru
      _
    // Predicated region
    $region50: #{cnn_forward.1} parent=1 // pred_check
      _
    $region51: #{cnn_forward.1} parent=1 // pred_check_branch
      %100 = sbr.rel (0) target = $region53
    $region52: #{cnn_forward.1} parent=1 // pred_region
      %101 = dma.done [#allocation12], 16
    $region53: #{cnn_forward.1} parent=1 // pred_fallthru
      _
    %103 = vst [vmem:[#allocation2] sm:$0xff] 0
    %104 = vst [vmem:[#allocation2 + $0x48] sm:$0xff] 0
    %s105 = scalar_lea.vmem [#allocation2], 64
    %106 = vst [vmem:[%s105] sm:$0xff] 0
    %107 = vst [vmem:[%s105 + $0x48] sm:$0xff] 0
    %v108 = vld [vmem:[%s0] sm:$0xf]
    %v109 = vld [vmem:[%s0 + $0x4] sm:$0xf]
    %v110 = vld [vmem:[%s0 + $0x8] sm:$0xf]
    %v111 = vld [vmem:[%s0 + $0xc] sm:$0xf]
    %v112 = vld [vmem:[%s0 + $0x10] sm:$0xf]
    %v113 = vld [vmem:[%s0 + $0x14] sm:$0xf]
    %v114 = vld [vmem:[%s0 + $0x18] sm:$0xf]
    %s115 = scalar_lea.vmem %s0, 32
    %v116 = vld [vmem:[%s115] sm:$0xf]
    %v117 = vld [vmem:[%s115 + $0x4] sm:$0xf]
    %v118 = vld [vmem:[%s115 + $0x8] sm:$0xf]
    %v119 = vld [vmem:[%s115 + $0xc] sm:$0xf]
    %v120 = vld [vmem:[%s115 + $0x10] sm:$0xf]
    %v121 = vld [vmem:[%s115 + $0x14] sm:$0xf]
    %v122 = vld [vmem:[%s115 + $0x18] sm:$0xf]
    %s123 = scalar_lea.vmem %s0, 64
    %v124 = vld [vmem:[%s123] sm:$0xf]
    %v125 = vld [vmem:[%s123 + $0x4] sm:$0xf]
    %v126 = vld [vmem:[%s123 + $0x8] sm:$0xf]
    %v127 = vld [vmem:[%s123 + $0xc] sm:$0xf]
    %v128 = vld [vmem:[%s123 + $0x10] sm:$0xf]
    %v129 = vld [vmem:[%s123 + $0x14] sm:$0xf]
    %v130 = vld [vmem:[%s123 + $0x18] sm:$0xf]
    %s131 = scalar_lea.vmem %s0, 96
    %v132 = vld [vmem:[%s131] sm:$0xf]
    %v133 = vld [vmem:[%s131 + $0x4] sm:$0xf]
    %v134 = vld [vmem:[%s131 + $0x8] sm:$0xf]
    %v135 = vld [vmem:[%s131 + $0xc] sm:$0xf]
    %v136 = vld [vmem:[%s131 + $0x10] sm:$0xf]
    %v137 = vld [vmem:[%s131 + $0x14] sm:$0xf]
    %v138 = vld [vmem:[%s131 + $0x18] sm:$0xf]
    %s139 = scalar_lea.vmem %s0, 4
    %v140 = vld [vmem:[%s139] sm:$0xf]
    %v141 = vld [vmem:[%s139 + $0x4] sm:$0xf]
    %v142 = vld [vmem:[%s139 + $0x8] sm:$0xf]
    %v143 = vld [vmem:[%s139 + $0xc] sm:$0xf]
    %v144 = vld [vmem:[%s139 + $0x10] sm:$0xf]
    %v145 = vld [vmem:[%s139 + $0x14] sm:$0xf]
    %v146 = vld [vmem:[%s139 + $0x18] sm:$0xf]
    %s147 = scalar_lea.vmem %s0, 36
    %v148 = vld [vmem:[%s147] sm:$0xf]
    %v149 = vld [vmem:[%s147 + $0x4] sm:$0xf]
    %v150 = vld [vmem:[%s147 + $0x8] sm:$0xf]
    %v151 = vld [vmem:[%s147 + $0xc] sm:$0xf]
    %v152 = vld [vmem:[%s147 + $0x10] sm:$0xf]
    %v153 = vld [vmem:[%s147 + $0x14] sm:$0xf]
    %v154 = vld [vmem:[%s147 + $0x18] sm:$0xf]
    %s155 = scalar_lea.vmem %s0, 68
    %v156 = vld [vmem:[%s155] sm:$0xf]
    %v157 = vld [vmem:[%s155 + $0x4] sm:$0xf]
    %v158 = vld [vmem:[%s155 + $0x8] sm:$0xf]
    %v159 = vld [vmem:[%s155 + $0xc] sm:$0xf]
    %v160 = vld [vmem:[%s155 + $0x10] sm:$0xf]
    %v161 = vld [vmem:[%s155 + $0x14] sm:$0xf]
    %v162 = vld [vmem:[%s155 + $0x18] sm:$0xf]
    %s163 = scalar_lea.vmem %s0, 100
    %v164 = vld [vmem:[%s163] sm:$0xf]
    %v165 = vld [vmem:[%s163 + $0x4] sm:$0xf]
    %v166 = vld [vmem:[%s163 + $0x8] sm:$0xf]
    %v167 = vld [vmem:[%s163 + $0xc] sm:$0xf]
    %v168 = vld [vmem:[%s163 + $0x10] sm:$0xf]
    %v169 = vld [vmem:[%s163 + $0x14] sm:$0xf]
    %v170 = vld [vmem:[%s163 + $0x18] sm:$0xf]
    %v171 = vld [vmem:[#allocation3] sm:$0xff]
    %v172 = vld [vmem:[#allocation3 + $0x8] sm:$0xff]
    %v173 = vld [vmem:[#allocation3 + $0x10] sm:$0xff]
    %v174 = vld [vmem:[#allocation3 + $0x18] sm:$0xff]
    %v175 = vld [vmem:[#allocation3 + $0x20] sm:$0xff]
    %v176 = vld [vmem:[#allocation3 + $0x28] sm:$0xff]
    %v177 = vld [vmem:[#allocation3 + $0x30] sm:$0x33]
    %v178 = vld [vmem:[#allocation3 + $0x38] sm:$0x33]
    %s179 = scalar_lea.vmem [#allocation3], 64
    %v180 = vld [vmem:[%s179] sm:$0xff]
    %v181 = vld [vmem:[%s179 + $0x8] sm:$0xff]
    %v182 = vld [vmem:[%s179 + $0x10] sm:$0xff]
    %v183 = vld [vmem:[%s179 + $0x18] sm:$0xff]
    %v184 = vld [vmem:[%s179 + $0x20] sm:$0xff]
    %v185 = vld [vmem:[%s179 + $0x28] sm:$0xff]
    %v186 = vld [vmem:[%s179 + $0x30] sm:$0x33]
    %v187 = vld [vmem:[%s179 + $0x38] sm:$0x33]
    %v195 = vunpack.c.l.b16 %v116
    %v196 = vunpack.c.l.b16 %v117
    %v197 = vunpack.c.l.b16 %v118
    %v198 = vunpack.c.l.b16 %v119
    %v199 = vunpack.c.l.b16 %v120
    %v200 = vunpack.c.l.b16 %v121
    %v201 = vunpack.c.l.b16 %v122
    %v202 = vpack.c.b16 %v196, %v195
    %v203 = vpack.c.b16 %v198, %v197
    %v204 = vpack.c.b16 %v200, %v199
    %v205 = vpack.c.b16 %v201, %v201
    %v214 = vunpack.c.l.b16 %v180
    %v215 = vunpack.c.h.b16 %v180
    %v216 = vunpack.c.l.b16 %v181
    %v217 = vunpack.c.h.b16 %v181
    %v218 = vunpack.c.l.b16 %v182
    %v219 = vunpack.c.h.b16 %v182
    %v220 = vunpack.c.l.b16 %v183
    %v221 = vunpack.c.h.b16 %v183
    %v222 = vunpack.c.l.b16 %v184
    %v223 = vunpack.c.h.b16 %v184
    %v224 = vunpack.c.l.b16 %v185
    %v225 = vunpack.c.h.b16 %v185
    %v226 = vunpack.c.l.b16 %v186
    %v227 = vunpack.c.h.b16 %v186
    %v228 = vunpack.c.l.b16 %v187
    %v229 = vunpack.c.h.b16 %v187
    %v230 = vpack.c.b16 %v218, %v214
    %v231 = vpack.c.b16 %v219, %v215
    %v232 = vpack.c.b16 %v220, %v216
    %v233 = vpack.c.b16 %v221, %v217
    %v234 = vpack.c.b16 %v226, %v222
    %v235 = vpack.c.b16 %v227, %v223
    %v236 = vpack.c.b16 %v228, %v224
    %v237 = vpack.c.b16 %v229, %v225
    %vm242 = vcmask 228352
    %v244 = vsel %vm242, %v202, 0
    %v247 = vsel %vm242, %v203, 0
    %v250 = vsel %vm242, %v204, 0
    %v253 = vsel %vm242, %v205, 0
    %vm255 = vcmask 1045504
    %v257 = vsel %vm255, %v234, 0
    %v260 = vsel %vm255, %v235, 0
    %v263 = vsel %vm255, %v236, 0
    %v266 = vsel %vm255, %v237, 0
    %268 = vmatprep.subr.bf16.mxu0 0
    %269 = vmatpush1.bf16.msra.mxu0 0
    %270 = vmatprep.subr.bf16.mxu0 0
    %271 = vmatpush1.bf16.msra.mxu0 0
    %272 = vmatprep.subr.bf16.mxu0 0
    %273 = vmatpush1.bf16.msra.mxu0 0
    %274 = vmatprep.subr.bf16.mxu0 0
    %275 = vmatpush1.bf16.msra.mxu0 0
    %276 = vmatprep.subr.bf16.mxu0 0
    %277 = vmatpush1.bf16.msra.mxu0 0
    %278 = vmatprep.subr.bf16.mxu0 0
    %279 = vmatpush1.bf16.msra.mxu0 0
    %280 = vmatprep.subr.bf16.mxu0 %v260
    %281 = vmatpush1.bf16.msra.mxu0 %v257
    %282 = vmatprep.subr.bf16.mxu0 %v231
    %283 = vmatpush1.bf16.msra.mxu0 %v230
    %284 = vmatprep.subr.bf16.mxu0 0
    %285 = vmatpush2.bf16.msra.mxu0 0
    %286 = vmatprep.subr.bf16.mxu0 0
    %287 = vmatpush2.bf16.msra.mxu0 0
    %288 = vmatprep.subr.bf16.mxu0 0
    %289 = vmatpush2.bf16.msra.mxu0 0
    %290 = vmatprep.subr.bf16.mxu0 0
    %291 = vmatpush2.bf16.msra.mxu0 0
    %292 = vmatprep.subr.bf16.mxu0 0
    %293 = vmatpush2.bf16.msra.mxu0 0
    %294 = vmatprep.subr.bf16.mxu0 0
    %295 = vmatpush2.bf16.msra.mxu0 0
    %296 = vmatprep.subr.bf16.mxu0 0
    %297 = vmatpush2.bf16.msra.mxu0 0
    %298 = vmatprep.subr.bf16.mxu0 0
    %299 = vmatpush2.bf16.msra.mxu0 0
    %300 = vmatprep.mubr.bf16.mxu0 0
    %301 = vmatmul.mubr.bf16.gmra.mxu0 %v244
    %v302 = vpop.f32.mrf.mxu0
    %v303 = vadd.f32 0.0, %v302
    %v304 = vpop.f32.mrf.mxu0
    %v305 = vadd.f32 0.0, %v304
    %v306 = vpop.f32.mrf.mxu0
    %v307 = vadd.f32 0.0, %v306
    %v308 = vpop.f32.mrf.mxu0
    %v309 = vadd.f32 0.0, %v308
    %310 = vmatprep.mubr.bf16.mxu0 0
    %311 = vmatmul.mubr.bf16.gmra.mxu0 %v247
    %v312 = vpop.f32.mrf.mxu0
    %v313 = vadd.f32 0.0, %v312
    %v314 = vpop.f32.mrf.mxu0
    %v315 = vadd.f32 0.0, %v314
    %v316 = vpop.f32.mrf.mxu0
    %v317 = vadd.f32 0.0, %v316
    %v318 = vpop.f32.mrf.mxu0
    %v319 = vadd.f32 0.0, %v318
    %320 = vmatprep.mubr.bf16.mxu0 0
    %321 = vmatmul.mubr.bf16.gmra.mxu0 %v250
    %v322 = vpop.f32.mrf.mxu0
    %v323 = vadd.f32 0.0, %v322
    %v324 = vpop.f32.mrf.mxu0
    %v325 = vadd.f32 0.0, %v324
    %v326 = vpop.f32.mrf.mxu0
    %v327 = vadd.f32 0.0, %v326
    %v328 = vpop.f32.mrf.mxu0
    %v329 = vadd.f32 0.0, %v328
    %330 = vmatprep.mubr.bf16.mxu0 0
    %331 = vmatmul.mubr.bf16.gmra.mxu0 %v253
    %v332 = vpop.f32.mrf.mxu0
    %v333 = vadd.f32 0.0, %v332
    %v334 = vpop.f32.mrf.mxu0
    %v335 = vadd.f32 0.0, %v334
    %v336 = vpop.f32.mrf.mxu0
    %v337 = vpop.f32.mrf.mxu0
    %338 = vdwg.mxu0
    %339 = vmatprep.subr.bf16.mxu0 0
    %340 = vmatpush1.bf16.msra.mxu0 0
    %341 = vmatprep.subr.bf16.mxu0 0
    %342 = vmatpush1.bf16.msra.mxu0 0
    %343 = vmatprep.subr.bf16.mxu0 0
    %344 = vmatpush1.bf16.msra.mxu0 0
    %345 = vmatprep.subr.bf16.mxu0 0
    %346 = vmatpush1.bf16.msra.mxu0 0
    %347 = vmatprep.subr.bf16.mxu0 0
    %348 = vmatpush1.bf16.msra.mxu0 0
    %349 = vmatprep.subr.bf16.mxu0 0
    %350 = vmatpush1.bf16.msra.mxu0 0
    %351 = vmatprep.subr.bf16.mxu0 %v266
    %352 = vmatpush1.bf16.msra.mxu0 %v263
    %353 = vmatprep.subr.bf16.mxu0 %v233
    %354 = vmatpush1.bf16.msra.mxu0 %v232
    %355 = vmatprep.subr.bf16.mxu0 0
    %356 = vmatpush2.bf16.msra.mxu0 0
    %357 = vmatprep.subr.bf16.mxu0 0
    %358 = vmatpush2.bf16.msra.mxu0 0
    %359 = vmatprep.subr.bf16.mxu0 0
    %360 = vmatpush2.bf16.msra.mxu0 0
    %361 = vmatprep.subr.bf16.mxu0 0
    %362 = vmatpush2.bf16.msra.mxu0 0
    %363 = vmatprep.subr.bf16.mxu0 0
    %364 = vmatpush2.bf16.msra.mxu0 0
    %365 = vmatprep.subr.bf16.mxu0 0
    %366 = vmatpush2.bf16.msra.mxu0 0
    %367 = vmatprep.subr.bf16.mxu0 0
    %368 = vmatpush2.bf16.msra.mxu0 0
    %369 = vmatprep.subr.bf16.mxu0 0
    %370 = vmatpush2.bf16.msra.mxu0 0
    %371 = vmatprep.mubr.bf16.mxu0 0
    %372 = vmatmul.mubr.bf16.gmra.mxu0 %v244
    %v373 = vpop.f32.mrf.mxu0
    %v374 = vadd.f32 0.0, %v373
    %v375 = vpop.f32.mrf.mxu0
    %v376 = vadd.f32 0.0, %v375
    %v377 = vpop.f32.mrf.mxu0
    %v378 = vadd.f32 0.0, %v377
    %v379 = vpop.f32.mrf.mxu0
    %v380 = vadd.f32 0.0, %v379
    %381 = vmatprep.mubr.bf16.mxu0 0
    %382 = vmatmul.mubr.bf16.gmra.mxu0 %v247
    %v383 = vpop.f32.mrf.mxu0
    %v384 = vadd.f32 0.0, %v383
    %v385 = vpop.f32.mrf.mxu0
    %v386 = vadd.f32 0.0, %v385
    %v387 = vpop.f32.mrf.mxu0
    %v388 = vadd.f32 0.0, %v387
    %v389 = vpop.f32.mrf.mxu0
    %v390 = vadd.f32 0.0, %v389
    %391 = vmatprep.mubr.bf16.mxu0 0
    %392 = vmatmul.mubr.bf16.gmra.mxu0 %v250
    %v393 = vpop.f32.mrf.mxu0
    %v394 = vadd.f32 0.0, %v393
    %v395 = vpop.f32.mrf.mxu0
    %v396 = vadd.f32 0.0, %v395
    %v397 = vpop.f32.mrf.mxu0
    %v398 = vadd.f32 0.0, %v397
    %v399 = vpop.f32.mrf.mxu0
    %v400 = vadd.f32 0.0, %v399
    %401 = vmatprep.mubr.bf16.mxu0 0
    %402 = vmatmul.mubr.bf16.gmra.mxu0 %v253
    %v403 = vpop.f32.mrf.mxu0
    %v404 = vadd.f32 0.0, %v403
    %v405 = vpop.f32.mrf.mxu0
    %v406 = vadd.f32 0.0, %v405
    %v407 = vpop.f32.mrf.mxu0
    %v408 = vpop.f32.mrf.mxu0
    %409 = vdwg.mxu0
    %v417 = vunpack.c.l.b16 %v108
    %v418 = vunpack.c.l.b16 %v109
    %v419 = vunpack.c.l.b16 %v110
    %v420 = vunpack.c.l.b16 %v111
    %v421 = vunpack.c.l.b16 %v112
    %v422 = vunpack.c.l.b16 %v113
    %v423 = vunpack.c.l.b16 %v114
    %v424 = vpack.c.b16 %v418, %v417
    %v425 = vpack.c.b16 %v420, %v419
    %v426 = vpack.c.b16 %v422, %v421
    %v427 = vpack.c.b16 %v423, %v423
    %v436 = vunpack.c.l.b16 %v171
    %v437 = vunpack.c.h.b16 %v171
    %v438 = vunpack.c.l.b16 %v172
    %v439 = vunpack.c.h.b16 %v172
    %v440 = vunpack.c.l.b16 %v173
    %v441 = vunpack.c.h.b16 %v173
    %v442 = vunpack.c.l.b16 %v174
    %v443 = vunpack.c.h.b16 %v174
    %v444 = vunpack.c.l.b16 %v175
    %v445 = vunpack.c.h.b16 %v175
    %v446 = vunpack.c.l.b16 %v176
    %v447 = vunpack.c.h.b16 %v176
    %v448 = vunpack.c.l.b16 %v177
    %v449 = vunpack.c.h.b16 %v177
    %v450 = vunpack.c.l.b16 %v178
    %v451 = vunpack.c.h.b16 %v178
    %v452 = vpack.c.b16 %v440, %v436
    %v453 = vpack.c.b16 %v441, %v437
    %v454 = vpack.c.b16 %v442, %v438
    %v455 = vpack.c.b16 %v443, %v439
    %v456 = vpack.c.b16 %v448, %v444
    %v457 = vpack.c.b16 %v449, %v445
    %v458 = vpack.c.b16 %v450, %v446
    %v459 = vpack.c.b16 %v451, %v447
    %v465 = vsel %vm242, %v424, 0
    %v468 = vsel %vm242, %v425, 0
    %v471 = vsel %vm242, %v426, 0
    %v474 = vsel %vm242, %v427, 0
    %v477 = vsel %vm255, %v456, 0
    %v480 = vsel %vm255, %v457, 0
    %v483 = vsel %vm255, %v458, 0
    %v486 = vsel %vm255, %v459, 0
    %488 = vmatprep.subr.bf16.mxu0 0
    %489 = vmatpush1.bf16.msra.mxu0 0
    %490 = vmatprep.subr.bf16.mxu0 0
    %491 = vmatpush1.bf16.msra.mxu0 0
    %492 = vmatprep.subr.bf16.mxu0 0
    %493 = vmatpush1.bf16.msra.mxu0 0
    %494 = vmatprep.subr.bf16.mxu0 0
    %495 = vmatpush1.bf16.msra.mxu0 0
    %496 = vmatprep.subr.bf16.mxu0 0
    %497 = vmatpush1.bf16.msra.mxu0 0
    %498 = vmatprep.subr.bf16.mxu0 0
    %499 = vmatpush1.bf16.msra.mxu0 0
    %500 = vmatprep.subr.bf16.mxu0 %v480
    %501 = vmatpush1.bf16.msra.mxu0 %v477
    %502 = vmatprep.subr.bf16.mxu0 %v453
    %503 = vmatpush1.bf16.msra.mxu0 %v452
    %504 = vmatprep.subr.bf16.mxu0 0
    %505 = vmatpush2.bf16.msra.mxu0 0
    %506 = vmatprep.subr.bf16.mxu0 0
    %507 = vmatpush2.bf16.msra.mxu0 0
    %508 = vmatprep.subr.bf16.mxu0 0
    %509 = vmatpush2.bf16.msra.mxu0 0
    %510 = vmatprep.subr.bf16.mxu0 0
    %511 = vmatpush2.bf16.msra.mxu0 0
    %512 = vmatprep.subr.bf16.mxu0 0
    %513 = vmatpush2.bf16.msra.mxu0 0
    %514 = vmatprep.subr.bf16.mxu0 0
    %515 = vmatpush2.bf16.msra.mxu0 0
    %516 = vmatprep.subr.bf16.mxu0 0
    %517 = vmatpush2.bf16.msra.mxu0 0
    %518 = vmatprep.subr.bf16.mxu0 0
    %519 = vmatpush2.bf16.msra.mxu0 0
    %520 = vmatprep.mubr.bf16.mxu0 0
    %521 = vmatmul.mubr.bf16.gmra.mxu0 %v465
    %v522 = vpop.f32.mrf.mxu0
    %v523 = vadd.f32 %v303, %v522
    %v524 = vpop.f32.mrf.mxu0
    %v525 = vadd.f32 %v305, %v524
    %v526 = vpop.f32.mrf.mxu0
    %v527 = vadd.f32 %v307, %v526
    %v528 = vpop.f32.mrf.mxu0
    %v529 = vadd.f32 %v309, %v528
    %530 = vmatprep.mubr.bf16.mxu0 0
    %531 = vmatmul.mubr.bf16.gmra.mxu0 %v468
    %v532 = vpop.f32.mrf.mxu0
    %v533 = vadd.f32 %v313, %v532
    %v534 = vpop.f32.mrf.mxu0
    %v535 = vadd.f32 %v315, %v534
    %v536 = vpop.f32.mrf.mxu0
    %v537 = vadd.f32 %v317, %v536
    %v538 = vpop.f32.mrf.mxu0
    %v539 = vadd.f32 %v319, %v538
    %540 = vmatprep.mubr.bf16.mxu0 0
    %541 = vmatmul.mubr.bf16.gmra.mxu0 %v471
    %v542 = vpop.f32.mrf.mxu0
    %v543 = vadd.f32 %v323, %v542
    %v544 = vpop.f32.mrf.mxu0
    %v545 = vadd.f32 %v325, %v544
    %v546 = vpop.f32.mrf.mxu0
    %v547 = vadd.f32 %v327, %v546
    %v548 = vpop.f32.mrf.mxu0
    %v549 = vadd.f32 %v329, %v548
    %550 = vmatprep.mubr.bf16.mxu0 0
    %551 = vmatmul.mubr.bf16.gmra.mxu0 %v474
    %v552 = vpop.f32.mrf.mxu0
    %v553 = vadd.f32 %v333, %v552
    %v554 = vpop.f32.mrf.mxu0
    %v555 = vadd.f32 %v335, %v554
    %v556 = vpop.f32.mrf.mxu0
    %v557 = vpop.f32.mrf.mxu0
    %558 = vdwg.mxu0
    %559 = vmatprep.subr.bf16.mxu0 0
    %560 = vmatpush1.bf16.msra.mxu0 0
    %561 = vmatprep.subr.bf16.mxu0 0
    %562 = vmatpush1.bf16.msra.mxu0 0
    %563 = vmatprep.subr.bf16.mxu0 0
    %564 = vmatpush1.bf16.msra.mxu0 0
    %565 = vmatprep.subr.bf16.mxu0 0
    %566 = vmatpush1.bf16.msra.mxu0 0
    %567 = vmatprep.subr.bf16.mxu0 0
    %568 = vmatpush1.bf16.msra.mxu0 0
    %569 = vmatprep.subr.bf16.mxu0 0
    %570 = vmatpush1.bf16.msra.mxu0 0
    %571 = vmatprep.subr.bf16.mxu0 %v486
    %572 = vmatpush1.bf16.msra.mxu0 %v483
    %573 = vmatprep.subr.bf16.mxu0 %v455
    %574 = vmatpush1.bf16.msra.mxu0 %v454
    %575 = vmatprep.subr.bf16.mxu0 0
    %576 = vmatpush2.bf16.msra.mxu0 0
    %577 = vmatprep.subr.bf16.mxu0 0
    %578 = vmatpush2.bf16.msra.mxu0 0
    %579 = vmatprep.subr.bf16.mxu0 0
    %580 = vmatpush2.bf16.msra.mxu0 0
    %581 = vmatprep.subr.bf16.mxu0 0
    %582 = vmatpush2.bf16.msra.mxu0 0
    %583 = vmatprep.subr.bf16.mxu0 0
    %584 = vmatpush2.bf16.msra.mxu0 0
    %585 = vmatprep.subr.bf16.mxu0 0
    %586 = vmatpush2.bf16.msra.mxu0 0
    %587 = vmatprep.subr.bf16.mxu0 0
    %588 = vmatpush2.bf16.msra.mxu0 0
    %589 = vmatprep.subr.bf16.mxu0 0
    %590 = vmatpush2.bf16.msra.mxu0 0
    %591 = vmatprep.mubr.bf16.mxu0 0
    %592 = vmatmul.mubr.bf16.gmra.mxu0 %v465
    %v593 = vpop.f32.mrf.mxu0
    %v594 = vadd.f32 %v374, %v593
    %v595 = vpop.f32.mrf.mxu0
    %v596 = vadd.f32 %v376, %v595
    %v597 = vpop.f32.mrf.mxu0
    %v598 = vadd.f32 %v378, %v597
    %v599 = vpop.f32.mrf.mxu0
    %v600 = vadd.f32 %v380, %v599
    %601 = vmatprep.mubr.bf16.mxu0 0
    %602 = vmatmul.mubr.bf16.gmra.mxu0 %v468
    %v603 = vpop.f32.mrf.mxu0
    %v604 = vadd.f32 %v384, %v603
    %v605 = vpop.f32.mrf.mxu0
    %v606 = vadd.f32 %v386, %v605
    %v607 = vpop.f32.mrf.mxu0
    %v608 = vadd.f32 %v388, %v607
    %v609 = vpop.f32.mrf.mxu0
    %v610 = vadd.f32 %v390, %v609
    %611 = vmatprep.mubr.bf16.mxu0 0
    %612 = vmatmul.mubr.bf16.gmra.mxu0 %v471
    %v613 = vpop.f32.mrf.mxu0
    %v614 = vadd.f32 %v394, %v613
    %v615 = vpop.f32.mrf.mxu0
    %v616 = vadd.f32 %v396, %v615
    %v617 = vpop.f32.mrf.mxu0
    %v618 = vadd.f32 %v398, %v617
    %v619 = vpop.f32.mrf.mxu0
    %v620 = vadd.f32 %v400, %v619
    %621 = vmatprep.mubr.bf16.mxu0 0
    %622 = vmatmul.mubr.bf16.gmra.mxu0 %v474
    %v623 = vpop.f32.mrf.mxu0
    %v624 = vadd.f32 %v404, %v623
    %v625 = vpop.f32.mrf.mxu0
    %v626 = vadd.f32 %v406, %v625
    %v627 = vpop.f32.mrf.mxu0
    %v628 = vpop.f32.mrf.mxu0
    %629 = vdwg.mxu0
    %s630 = scalar_lea.vmem [#allocation3], 128
    %v631 = vld [vmem:[%s630] sm:$0xff]
    %v632 = vld [vmem:[%s630 + $0x8] sm:$0xff]
    %v633 = vld [vmem:[%s630 + $0x10] sm:$0xff]
    %v634 = vld [vmem:[%s630 + $0x18] sm:$0xff]
    %v635 = vld [vmem:[%s630 + $0x20] sm:$0xff]
    %v636 = vld [vmem:[%s630 + $0x28] sm:$0xff]
    %v637 = vld [vmem:[%s630 + $0x30] sm:$0x33]
    %v638 = vld [vmem:[%s630 + $0x38] sm:$0x33]
    %v646 = vunpack.c.l.b16 %v124
    %v647 = vunpack.c.l.b16 %v125
    %v648 = vunpack.c.l.b16 %v126
    %v649 = vunpack.c.l.b16 %v127
    %v650 = vunpack.c.l.b16 %v128
    %v651 = vunpack.c.l.b16 %v129
    %v652 = vunpack.c.l.b16 %v130
    %v653 = vpack.c.b16 %v647, %v646
    %v654 = vpack.c.b16 %v649, %v648
    %v655 = vpack.c.b16 %v651, %v650
    %v656 = vpack.c.b16 %v652, %v652
    %v665 = vunpack.c.l.b16 %v631
    %v666 = vunpack.c.h.b16 %v631
    %v667 = vunpack.c.l.b16 %v632
    %v668 = vunpack.c.h.b16 %v632
    %v669 = vunpack.c.l.b16 %v633
    %v670 = vunpack.c.h.b16 %v633
    %v671 = vunpack.c.l.b16 %v634
    %v672 = vunpack.c.h.b16 %v634
    %v673 = vunpack.c.l.b16 %v635
    %v674 = vunpack.c.h.b16 %v635
    %v675 = vunpack.c.l.b16 %v636
    %v676 = vunpack.c.h.b16 %v636
    %v677 = vunpack.c.l.b16 %v637
    %v678 = vunpack.c.h.b16 %v637
    %v679 = vunpack.c.l.b16 %v638
    %v680 = vunpack.c.h.b16 %v638
    %v681 = vpack.c.b16 %v669, %v665
    %v682 = vpack.c.b16 %v670, %v666
    %v683 = vpack.c.b16 %v671, %v667
    %v684 = vpack.c.b16 %v672, %v668
    %v685 = vpack.c.b16 %v677, %v673
    %v686 = vpack.c.b16 %v678, %v674
    %v687 = vpack.c.b16 %v679, %v675
    %v688 = vpack.c.b16 %v680, %v676
    %v694 = vsel %vm242, %v653, 0
    %v697 = vsel %vm242, %v654, 0
    %v700 = vsel %vm242, %v655, 0
    %v703 = vsel %vm242, %v656, 0
    %v706 = vsel %vm255, %v685, 0
    %v709 = vsel %vm255, %v686, 0
    %v712 = vsel %vm255, %v687, 0
    %v715 = vsel %vm255, %v688, 0
    %717 = vmatprep.subr.bf16.mxu0 0
    %718 = vmatpush1.bf16.msra.mxu0 0
    %719 = vmatprep.subr.bf16.mxu0 0
    %720 = vmatpush1.bf16.msra.mxu0 0
    %721 = vmatprep.subr.bf16.mxu0 0
    %722 = vmatpush1.bf16.msra.mxu0 0
    %723 = vmatprep.subr.bf16.mxu0 0
    %724 = vmatpush1.bf16.msra.mxu0 0
    %725 = vmatprep.subr.bf16.mxu0 0
    %726 = vmatpush1.bf16.msra.mxu0 0
    %727 = vmatprep.subr.bf16.mxu0 0
    %728 = vmatpush1.bf16.msra.mxu0 0
    %729 = vmatprep.subr.bf16.mxu0 %v709
    %730 = vmatpush1.bf16.msra.mxu0 %v706
    %731 = vmatprep.subr.bf16.mxu0 %v682
    %732 = vmatpush1.bf16.msra.mxu0 %v681
    %733 = vmatprep.subr.bf16.mxu0 0
    %734 = vmatpush2.bf16.msra.mxu0 0
    %735 = vmatprep.subr.bf16.mxu0 0
    %736 = vmatpush2.bf16.msra.mxu0 0
    %737 = vmatprep.subr.bf16.mxu0 0
    %738 = vmatpush2.bf16.msra.mxu0 0
    %739 = vmatprep.subr.bf16.mxu0 0
    %740 = vmatpush2.bf16.msra.mxu0 0
    %741 = vmatprep.subr.bf16.mxu0 0
    %742 = vmatpush2.bf16.msra.mxu0 0
    %743 = vmatprep.subr.bf16.mxu0 0
    %744 = vmatpush2.bf16.msra.mxu0 0
    %745 = vmatprep.subr.bf16.mxu0 0
    %746 = vmatpush2.bf16.msra.mxu0 0
    %747 = vmatprep.subr.bf16.mxu0 0
    %748 = vmatpush2.bf16.msra.mxu0 0
    %749 = vmatprep.mubr.bf16.mxu0 0
    %750 = vmatmul.mubr.bf16.gmra.mxu0 %v694
    %v751 = vpop.f32.mrf.mxu0
    %v752 = vadd.f32 0.0, %v751
    %v753 = vpop.f32.mrf.mxu0
    %v754 = vadd.f32 0.0, %v753
    %v755 = vpop.f32.mrf.mxu0
    %v756 = vadd.f32 0.0, %v755
    %v757 = vpop.f32.mrf.mxu0
    %v758 = vadd.f32 0.0, %v757
    %759 = vmatprep.mubr.bf16.mxu0 0
    %760 = vmatmul.mubr.bf16.gmra.mxu0 %v697
    %v761 = vpop.f32.mrf.mxu0
    %v762 = vadd.f32 0.0, %v761
    %v763 = vpop.f32.mrf.mxu0
    %v764 = vadd.f32 0.0, %v763
    %v765 = vpop.f32.mrf.mxu0
    %v766 = vadd.f32 0.0, %v765
    %v767 = vpop.f32.mrf.mxu0
    %v768 = vadd.f32 0.0, %v767
    %769 = vmatprep.mubr.bf16.mxu0 0
    %770 = vmatmul.mubr.bf16.gmra.mxu0 %v700
    %v771 = vpop.f32.mrf.mxu0
    %v772 = vadd.f32 0.0, %v771
    %v773 = vpop.f32.mrf.mxu0
    %v774 = vadd.f32 0.0, %v773
    %v775 = vpop.f32.mrf.mxu0
    %v776 = vadd.f32 0.0, %v775
    %v777 = vpop.f32.mrf.mxu0
    %v778 = vadd.f32 0.0, %v777
    %779 = vmatprep.mubr.bf16.mxu0 0
    %780 = vmatmul.mubr.bf16.gmra.mxu0 %v703
    %v781 = vpop.f32.mrf.mxu0
    %v782 = vadd.f32 0.0, %v781
    %v783 = vpop.f32.mrf.mxu0
    %v784 = vadd.f32 0.0, %v783
    %v785 = vpop.f32.mrf.mxu0
    %v786 = vpop.f32.mrf.mxu0
    %787 = vdwg.mxu0
    %788 = vmatprep.subr.bf16.mxu0 0
    %789 = vmatpush1.bf16.msra.mxu0 0
    %790 = vmatprep.subr.bf16.mxu0 0
    %791 = vmatpush1.bf16.msra.mxu0 0
    %792 = vmatprep.subr.bf16.mxu0 0
    %793 = vmatpush1.bf16.msra.mxu0 0
    %794 = vmatprep.subr.bf16.mxu0 0
    %795 = vmatpush1.bf16.msra.mxu0 0
    %796 = vmatprep.subr.bf16.mxu0 0
    %797 = vmatpush1.bf16.msra.mxu0 0
    %798 = vmatprep.subr.bf16.mxu0 0
    %799 = vmatpush1.bf16.msra.mxu0 0
    %800 = vmatprep.subr.bf16.mxu0 %v715
    %801 = vmatpush1.bf16.msra.mxu0 %v712
    %802 = vmatprep.subr.bf16.mxu0 %v684
    %803 = vmatpush1.bf16.msra.mxu0 %v683
    %804 = vmatprep.subr.bf16.mxu0 0
    %805 = vmatpush2.bf16.msra.mxu0 0
    %806 = vmatprep.subr.bf16.mxu0 0
    %807 = vmatpush2.bf16.msra.mxu0 0
    %808 = vmatprep.subr.bf16.mxu0 0
    %809 = vmatpush2.bf16.msra.mxu0 0
    %810 = vmatprep.subr.bf16.mxu0 0
    %811 = vmatpush2.bf16.msra.mxu0 0
    %812 = vmatprep.subr.bf16.mxu0 0
    %813 = vmatpush2.bf16.msra.mxu0 0
    %814 = vmatprep.subr.bf16.mxu0 0
    %815 = vmatpush2.bf16.msra.mxu0 0
    %816 = vmatprep.subr.bf16.mxu0 0
    %817 = vmatpush2.bf16.msra.mxu0 0
    %818 = vmatprep.subr.bf16.mxu0 0
    %819 = vmatpush2.bf16.msra.mxu0 0
    %820 = vmatprep.mubr.bf16.mxu0 0
    %821 = vmatmul.mubr.bf16.gmra.mxu0 %v694
    %v822 = vpop.f32.mrf.mxu0
    %v823 = vadd.f32 0.0, %v822
    %v824 = vpop.f32.mrf.mxu0
    %v825 = vadd.f32 0.0, %v824
    %v826 = vpop.f32.mrf.mxu0
    %v827 = vadd.f32 0.0, %v826
    %v828 = vpop.f32.mrf.mxu0
    %v829 = vadd.f32 0.0, %v828
    %830 = vmatprep.mubr.bf16.mxu0 0
    %831 = vmatmul.mubr.bf16.gmra.mxu0 %v697
    %v832 = vpop.f32.mrf.mxu0
    %v833 = vadd.f32 0.0, %v832
    %v834 = vpop.f32.mrf.mxu0
    %v835 = vadd.f32 0.0, %v834
    %v836 = vpop.f32.mrf.mxu0
    %v837 = vadd.f32 0.0, %v836
    %v838 = vpop.f32.mrf.mxu0
    %v839 = vadd.f32 0.0, %v838
    %840 = vmatprep.mubr.bf16.mxu0 0
    %841 = vmatmul.mubr.bf16.gmra.mxu0 %v700
    %v842 = vpop.f32.mrf.mxu0
    %v843 = vadd.f32 0.0, %v842
    %v844 = vpop.f32.mrf.mxu0
    %v845 = vadd.f32 0.0, %v844
    %v846 = vpop.f32.mrf.mxu0
    %v847 = vadd.f32 0.0, %v846
    %v848 = vpop.f32.mrf.mxu0
    %v849 = vadd.f32 0.0, %v848
    %850 = vmatprep.mubr.bf16.mxu0 0
    %851 = vmatmul.mubr.bf16.gmra.mxu0 %v703
    %v852 = vpop.f32.mrf.mxu0
    %v853 = vadd.f32 0.0, %v852
    %v854 = vpop.f32.mrf.mxu0
    %v855 = vadd.f32 0.0, %v854
    %v856 = vpop.f32.mrf.mxu0
    %v857 = vpop.f32.mrf.mxu0
    %858 = vdwg.mxu0
    %v859 = vadd.f32 %v523, %v752
    %v860 = vadd.f32 %v525, %v754
    %v861 = vadd.f32 %v594, %v823
    %v862 = vadd.f32 %v596, %v825
    %v863 = vadd.f32 %v527, %v756
    %v864 = vadd.f32 %v529, %v758
    %v865 = vadd.f32 %v598, %v827
    %v866 = vadd.f32 %v600, %v829
    %v867 = vadd.f32 %v533, %v762
    %v868 = vadd.f32 %v535, %v764
    %v869 = vadd.f32 %v604, %v833
    %v870 = vadd.f32 %v606, %v835
    %v871 = vadd.f32 %v537, %v766
    %v872 = vadd.f32 %v539, %v768
    %v873 = vadd.f32 %v608, %v837
    %v874 = vadd.f32 %v610, %v839
    %v875 = vadd.f32 %v543, %v772
    %v876 = vadd.f32 %v545, %v774
    %v877 = vadd.f32 %v614, %v843
    %v878 = vadd.f32 %v616, %v845
    %v879 = vadd.f32 %v547, %v776
    %v880 = vadd.f32 %v549, %v778
    %v881 = vadd.f32 %v618, %v847
    %v882 = vadd.f32 %v620, %v849
    %v883 = vadd.f32 %v553, %v782
    %v884 = vadd.f32 %v555, %v784
    %v885 = vadd.f32 %v624, %v853
    %v886 = vadd.f32 %v626, %v855
    %s887 = scalar_lea.vmem [#allocation3], 192
    %v888 = vld [vmem:[%s887] sm:$0xff]
    %v889 = vld [vmem:[%s887 + $0x8] sm:$0xff]
    %v890 = vld [vmem:[%s887 + $0x10] sm:$0xff]
    %v891 = vld [vmem:[%s887 + $0x18] sm:$0xff]
    %v892 = vld [vmem:[%s887 + $0x20] sm:$0xff]
    %v893 = vld [vmem:[%s887 + $0x28] sm:$0xff]
    %v894 = vld [vmem:[%s887 + $0x30] sm:$0x33]
    %v895 = vld [vmem:[%s887 + $0x38] sm:$0x33]
    %v903 = vunpack.c.l.b16 %v132
    %v904 = vunpack.c.l.b16 %v133
    %v905 = vunpack.c.l.b16 %v134
    %v906 = vunpack.c.l.b16 %v135
    %v907 = vunpack.c.l.b16 %v136
    %v908 = vunpack.c.l.b16 %v137
    %v909 = vunpack.c.l.b16 %v138
    %v910 = vpack.c.b16 %v904, %v903
    %v911 = vpack.c.b16 %v906, %v905
    %v912 = vpack.c.b16 %v908, %v907
    %v913 = vpack.c.b16 %v909, %v909
    %v922 = vunpack.c.l.b16 %v888
    %v923 = vunpack.c.h.b16 %v888
    %v924 = vunpack.c.l.b16 %v889
    %v925 = vunpack.c.h.b16 %v889
    %v926 = vunpack.c.l.b16 %v890
    %v927 = vunpack.c.h.b16 %v890
    %v928 = vunpack.c.l.b16 %v891
    %v929 = vunpack.c.h.b16 %v891
    %v930 = vunpack.c.l.b16 %v892
    %v931 = vunpack.c.h.b16 %v892
    %v932 = vunpack.c.l.b16 %v893
    %v933 = vunpack.c.h.b16 %v893
    %v934 = vunpack.c.l.b16 %v894
    %v935 = vunpack.c.h.b16 %v894
    %v936 = vunpack.c.l.b16 %v895
    %v937 = vunpack.c.h.b16 %v895
    %v938 = vpack.c.b16 %v926, %v922
    %v939 = vpack.c.b16 %v927, %v923
    %v940 = vpack.c.b16 %v928, %v924
    %v941 = vpack.c.b16 %v929, %v925
    %v942 = vpack.c.b16 %v934, %v930
    %v943 = vpack.c.b16 %v935, %v931
    %v944 = vpack.c.b16 %v936, %v932
    %v945 = vpack.c.b16 %v937, %v933
    %v951 = vsel %vm242, %v910, 0
    %v954 = vsel %vm242, %v911, 0
    %v957 = vsel %vm242, %v912, 0
    %v960 = vsel %vm242, %v913, 0
    %v963 = vsel %vm255, %v942, 0
    %v966 = vsel %vm255, %v943, 0
    %v969 = vsel %vm255, %v944, 0
    %v972 = vsel %vm255, %v945, 0
    %974 = vmatprep.subr.bf16.mxu0 0
    %975 = vmatpush1.bf16.msra.mxu0 0
    %976 = vmatprep.subr.bf16.mxu0 0
    %977 = vmatpush1.bf16.msra.mxu0 0
    %978 = vmatprep.subr.bf16.mxu0 0
    %979 = vmatpush1.bf16.msra.mxu0 0
    %980 = vmatprep.subr.bf16.mxu0 0
    %981 = vmatpush1.bf16.msra.mxu0 0
    %982 = vmatprep.subr.bf16.mxu0 0
    %983 = vmatpush1.bf16.msra.mxu0 0
    %984 = vmatprep.subr.bf16.mxu0 0
    %985 = vmatpush1.bf16.msra.mxu0 0
    %986 = vmatprep.subr.bf16.mxu0 %v966
    %987 = vmatpush1.bf16.msra.mxu0 %v963
    %988 = vmatprep.subr.bf16.mxu0 %v939
    %989 = vmatpush1.bf16.msra.mxu0 %v938
    %990 = vmatprep.subr.bf16.mxu0 0
    %991 = vmatpush2.bf16.msra.mxu0 0
    %992 = vmatprep.subr.bf16.mxu0 0
    %993 = vmatpush2.bf16.msra.mxu0 0
    %994 = vmatprep.subr.bf16.mxu0 0
    %995 = vmatpush2.bf16.msra.mxu0 0
    %996 = vmatprep.subr.bf16.mxu0 0
    %997 = vmatpush2.bf16.msra.mxu0 0
    %998 = vmatprep.subr.bf16.mxu0 0
    %999 = vmatpush2.bf16.msra.mxu0 0
    %1000 = vmatprep.subr.bf16.mxu0 0
    %1001 = vmatpush2.bf16.msra.mxu0 0
    %1002 = vmatprep.subr.bf16.mxu0 0
    %1003 = vmatpush2.bf16.msra.mxu0 0
    %1004 = vmatprep.subr.bf16.mxu0 0
    %1005 = vmatpush2.bf16.msra.mxu0 0
    %1006 = vmatprep.mubr.bf16.mxu0 0
    %1007 = vmatmul.mubr.bf16.gmra.mxu0 %v951
    %v1008 = vpop.f32.mrf.mxu0
    %v1009 = vadd.f32 0.0, %v1008
    %v1010 = vpop.f32.mrf.mxu0
    %v1011 = vadd.f32 0.0, %v1010
    %v1012 = vpop.f32.mrf.mxu0
    %v1013 = vadd.f32 0.0, %v1012
    %v1014 = vpop.f32.mrf.mxu0
    %v1015 = vadd.f32 0.0, %v1014
    %1016 = vmatprep.mubr.bf16.mxu0 0
    %1017 = vmatmul.mubr.bf16.gmra.mxu0 %v954
    %v1018 = vpop.f32.mrf.mxu0
    %v1019 = vadd.f32 0.0, %v1018
    %v1020 = vpop.f32.mrf.mxu0
    %v1021 = vadd.f32 0.0, %v1020
    %v1022 = vpop.f32.mrf.mxu0
    %v1023 = vadd.f32 0.0, %v1022
    %v1024 = vpop.f32.mrf.mxu0
    %v1025 = vadd.f32 0.0, %v1024
    %1026 = vmatprep.mubr.bf16.mxu0 0
    %1027 = vmatmul.mubr.bf16.gmra.mxu0 %v957
    %v1028 = vpop.f32.mrf.mxu0
    %v1029 = vadd.f32 0.0, %v1028
    %v1030 = vpop.f32.mrf.mxu0
    %v1031 = vadd.f32 0.0, %v1030
    %v1032 = vpop.f32.mrf.mxu0
    %v1033 = vadd.f32 0.0, %v1032
    %v1034 = vpop.f32.mrf.mxu0
    %v1035 = vadd.f32 0.0, %v1034
    %1036 = vmatprep.mubr.bf16.mxu0 0
    %1037 = vmatmul.mubr.bf16.gmra.mxu0 %v960
    %v1038 = vpop.f32.mrf.mxu0
    %v1039 = vadd.f32 0.0, %v1038
    %v1040 = vpop.f32.mrf.mxu0
    %v1041 = vadd.f32 0.0, %v1040
    %v1042 = vpop.f32.mrf.mxu0
    %v1043 = vpop.f32.mrf.mxu0
    %1044 = vdwg.mxu0
    %1045 = vmatprep.subr.bf16.mxu0 0
    %1046 = vmatpush1.bf16.msra.mxu0 0
    %1047 = vmatprep.subr.bf16.mxu0 0
    %1048 = vmatpush1.bf16.msra.mxu0 0
    %1049 = vmatprep.subr.bf16.mxu0 0
    %1050 = vmatpush1.bf16.msra.mxu0 0
    %1051 = vmatprep.subr.bf16.mxu0 0
    %1052 = vmatpush1.bf16.msra.mxu0 0
    %1053 = vmatprep.subr.bf16.mxu0 0
    %1054 = vmatpush1.bf16.msra.mxu0 0
    %1055 = vmatprep.subr.bf16.mxu0 0
    %1056 = vmatpush1.bf16.msra.mxu0 0
    %1057 = vmatprep.subr.bf16.mxu0 %v972
    %1058 = vmatpush1.bf16.msra.mxu0 %v969
    %1059 = vmatprep.subr.bf16.mxu0 %v941
    %1060 = vmatpush1.bf16.msra.mxu0 %v940
    %1061 = vmatprep.subr.bf16.mxu0 0
    %1062 = vmatpush2.bf16.msra.mxu0 0
    %1063 = vmatprep.subr.bf16.mxu0 0
    %1064 = vmatpush2.bf16.msra.mxu0 0
    %1065 = vmatprep.subr.bf16.mxu0 0
    %1066 = vmatpush2.bf16.msra.mxu0 0
    %1067 = vmatprep.subr.bf16.mxu0 0
    %1068 = vmatpush2.bf16.msra.mxu0 0
    %1069 = vmatprep.subr.bf16.mxu0 0
    %1070 = vmatpush2.bf16.msra.mxu0 0
    %1071 = vmatprep.subr.bf16.mxu0 0
    %1072 = vmatpush2.bf16.msra.mxu0 0
    %1073 = vmatprep.subr.bf16.mxu0 0
    %1074 = vmatpush2.bf16.msra.mxu0 0
    %1075 = vmatprep.subr.bf16.mxu0 0
    %1076 = vmatpush2.bf16.msra.mxu0 0
    %1077 = vmatprep.mubr.bf16.mxu0 0
    %1078 = vmatmul.mubr.bf16.gmra.mxu0 %v951
    %v1079 = vpop.f32.mrf.mxu0
    %v1080 = vadd.f32 0.0, %v1079
    %v1081 = vpop.f32.mrf.mxu0
    %v1082 = vadd.f32 0.0, %v1081
    %v1083 = vpop.f32.mrf.mxu0
    %v1084 = vadd.f32 0.0, %v1083
    %v1085 = vpop.f32.mrf.mxu0
    %v1086 = vadd.f32 0.0, %v1085
    %1087 = vmatprep.mubr.bf16.mxu0 0
    %1088 = vmatmul.mubr.bf16.gmra.mxu0 %v954
    %v1089 = vpop.f32.mrf.mxu0
    %v1090 = vadd.f32 0.0, %v1089
    %v1091 = vpop.f32.mrf.mxu0
    %v1092 = vadd.f32 0.0, %v1091
    %v1093 = vpop.f32.mrf.mxu0
    %v1094 = vadd.f32 0.0, %v1093
    %v1095 = vpop.f32.mrf.mxu0
    %v1096 = vadd.f32 0.0, %v1095
    %1097 = vmatprep.mubr.bf16.mxu0 0
    %1098 = vmatmul.mubr.bf16.gmra.mxu0 %v957
    %v1099 = vpop.f32.mrf.mxu0
    %v1100 = vadd.f32 0.0, %v1099
    %v1101 = vpop.f32.mrf.mxu0
    %v1102 = vadd.f32 0.0, %v1101
    %v1103 = vpop.f32.mrf.mxu0
    %v1104 = vadd.f32 0.0, %v1103
    %v1105 = vpop.f32.mrf.mxu0
    %v1106 = vadd.f32 0.0, %v1105
    %1107 = vmatprep.mubr.bf16.mxu0 0
    %1108 = vmatmul.mubr.bf16.gmra.mxu0 %v960
    %v1109 = vpop.f32.mrf.mxu0
    %v1110 = vadd.f32 0.0, %v1109
    %v1111 = vpop.f32.mrf.mxu0
    %v1112 = vadd.f32 0.0, %v1111
    %v1113 = vpop.f32.mrf.mxu0
    %v1114 = vpop.f32.mrf.mxu0
    %1115 = vdwg.mxu0
    %v1116 = vadd.f32 %v859, %v1009
    %v1117 = vadd.f32 %v860, %v1011
    %v1118 = vadd.f32 %v861, %v1080
    %v1119 = vadd.f32 %v862, %v1082
    %v1120 = vadd.f32 %v863, %v1013
    %v1121 = vadd.f32 %v864, %v1015
    %v1122 = vadd.f32 %v865, %v1084
    %v1123 = vadd.f32 %v866, %v1086
    %v1124 = vadd.f32 %v867, %v1019
    %v1125 = vadd.f32 %v868, %v1021
    %v1126 = vadd.f32 %v869, %v1090
    %v1127 = vadd.f32 %v870, %v1092
    %v1128 = vadd.f32 %v871, %v1023
    %v1129 = vadd.f32 %v872, %v1025
    %v1130 = vadd.f32 %v873, %v1094
    %v1131 = vadd.f32 %v874, %v1096
    %v1132 = vadd.f32 %v875, %v1029
    %v1133 = vadd.f32 %v876, %v1031
    %v1134 = vadd.f32 %v877, %v1100
    %v1135 = vadd.f32 %v878, %v1102
    %v1136 = vadd.f32 %v879, %v1033
    %v1137 = vadd.f32 %v880, %v1035
    %v1138 = vadd.f32 %v881, %v1104
    %v1139 = vadd.f32 %v882, %v1106
    %v1140 = vadd.f32 %v883, %v1039
    %v1141 = vadd.f32 %v884, %v1041
    %v1142 = vadd.f32 %v885, %v1110
    %v1143 = vadd.f32 %v886, %v1112
    %s1144 = scalar_lea.vmem [#allocation3], 256
    %v1145 = vld [vmem:[%s1144] sm:$0xff]
    %v1146 = vld [vmem:[%s1144 + $0x8] sm:$0xff]
    %v1147 = vld [vmem:[%s1144 + $0x10] sm:$0xff]
    %v1148 = vld [vmem:[%s1144 + $0x18] sm:$0xff]
    %v1149 = vld [vmem:[%s1144 + $0x20] sm:$0xff]
    %v1150 = vld [vmem:[%s1144 + $0x28] sm:$0xff]
    %v1151 = vld [vmem:[%s1144 + $0x30] sm:$0x33]
    %v1152 = vld [vmem:[%s1144 + $0x38] sm:$0x33]
    %v1160 = vunpack.c.l.b16 %v140
    %v1161 = vunpack.c.l.b16 %v141
    %v1162 = vunpack.c.l.b16 %v142
    %v1163 = vunpack.c.l.b16 %v143
    %v1164 = vunpack.c.l.b16 %v144
    %v1165 = vunpack.c.l.b16 %v145
    %v1166 = vunpack.c.l.b16 %v146
    %v1167 = vpack.c.b16 %v1161, %v1160
    %v1168 = vpack.c.b16 %v1163, %v1162
    %v1169 = vpack.c.b16 %v1165, %v1164
    %v1170 = vpack.c.b16 %v1166, %v1166
    %v1179 = vunpack.c.l.b16 %v1145
    %v1180 = vunpack.c.h.b16 %v1145
    %v1181 = vunpack.c.l.b16 %v1146
    %v1182 = vunpack.c.h.b16 %v1146
    %v1183 = vunpack.c.l.b16 %v1147
    %v1184 = vunpack.c.h.b16 %v1147
    %v1185 = vunpack.c.l.b16 %v1148
    %v1186 = vunpack.c.h.b16 %v1148
    %v1187 = vunpack.c.l.b16 %v1149
    %v1188 = vunpack.c.h.b16 %v1149
    %v1189 = vunpack.c.l.b16 %v1150
    %v1190 = vunpack.c.h.b16 %v1150
    %v1191 = vunpack.c.l.b16 %v1151
    %v1192 = vunpack.c.h.b16 %v1151
    %v1193 = vunpack.c.l.b16 %v1152
    %v1194 = vunpack.c.h.b16 %v1152
    %v1195 = vpack.c.b16 %v1183, %v1179
    %v1196 = vpack.c.b16 %v1184, %v1180
    %v1197 = vpack.c.b16 %v1185, %v1181
    %v1198 = vpack.c.b16 %v1186, %v1182
    %v1199 = vpack.c.b16 %v1191, %v1187
    %v1200 = vpack.c.b16 %v1192, %v1188
    %v1201 = vpack.c.b16 %v1193, %v1189
    %v1202 = vpack.c.b16 %v1194, %v1190
    %v1208 = vsel %vm242, %v1167, 0
    %v1211 = vsel %vm242, %v1168, 0
    %v1214 = vsel %vm242, %v1169, 0
    %v1217 = vsel %vm242, %v1170, 0
    %v1220 = vsel %vm255, %v1199, 0
    %v1223 = vsel %vm255, %v1200, 0
    %v1226 = vsel %vm255, %v1201, 0
    %v1229 = vsel %vm255, %v1202, 0
    %1231 = vmatprep.subr.bf16.mxu0 0
    %1232 = vmatpush1.bf16.msra.mxu0 0
    %1233 = vmatprep.subr.bf16.mxu0 0
    %1234 = vmatpush1.bf16.msra.mxu0 0
    %1235 = vmatprep.subr.bf16.mxu0 0
    %1236 = vmatpush1.bf16.msra.mxu0 0
    %1237 = vmatprep.subr.bf16.mxu0 0
    %1238 = vmatpush1.bf16.msra.mxu0 0
    %1239 = vmatprep.subr.bf16.mxu0 0
    %1240 = vmatpush1.bf16.msra.mxu0 0
    %1241 = vmatprep.subr.bf16.mxu0 0
    %1242 = vmatpush1.bf16.msra.mxu0 0
    %1243 = vmatprep.subr.bf16.mxu0 %v1223
    %1244 = vmatpush1.bf16.msra.mxu0 %v1220
    %1245 = vmatprep.subr.bf16.mxu0 %v1196
    %1246 = vmatpush1.bf16.msra.mxu0 %v1195
    %1247 = vmatprep.subr.bf16.mxu0 0
    %1248 = vmatpush2.bf16.msra.mxu0 0
    %1249 = vmatprep.subr.bf16.mxu0 0
    %1250 = vmatpush2.bf16.msra.mxu0 0
    %1251 = vmatprep.subr.bf16.mxu0 0
    %1252 = vmatpush2.bf16.msra.mxu0 0
    %1253 = vmatprep.subr.bf16.mxu0 0
    %1254 = vmatpush2.bf16.msra.mxu0 0
    %1255 = vmatprep.subr.bf16.mxu0 0
    %1256 = vmatpush2.bf16.msra.mxu0 0
    %1257 = vmatprep.subr.bf16.mxu0 0
    %1258 = vmatpush2.bf16.msra.mxu0 0
    %1259 = vmatprep.subr.bf16.mxu0 0
    %1260 = vmatpush2.bf16.msra.mxu0 0
    %1261 = vmatprep.subr.bf16.mxu0 0
    %1262 = vmatpush2.bf16.msra.mxu0 0
    %1263 = vmatprep.mubr.bf16.mxu0 0
    %1264 = vmatmul.mubr.bf16.gmra.mxu0 %v1208
    %v1265 = vpop.f32.mrf.mxu0
    %v1266 = vadd.f32 0.0, %v1265
    %v1267 = vpop.f32.mrf.mxu0
    %v1268 = vadd.f32 0.0, %v1267
    %v1269 = vpop.f32.mrf.mxu0
    %v1270 = vadd.f32 0.0, %v1269
    %v1271 = vpop.f32.mrf.mxu0
    %v1272 = vadd.f32 0.0, %v1271
    %1273 = vmatprep.mubr.bf16.mxu0 0
    %1274 = vmatmul.mubr.bf16.gmra.mxu0 %v1211
    %v1275 = vpop.f32.mrf.mxu0
    %v1276 = vadd.f32 0.0, %v1275
    %v1277 = vpop.f32.mrf.mxu0
    %v1278 = vadd.f32 0.0, %v1277
    %v1279 = vpop.f32.mrf.mxu0
    %v1280 = vadd.f32 0.0, %v1279
    %v1281 = vpop.f32.mrf.mxu0
    %v1282 = vadd.f32 0.0, %v1281
    %1283 = vmatprep.mubr.bf16.mxu0 0
    %1284 = vmatmul.mubr.bf16.gmra.mxu0 %v1214
    %v1285 = vpop.f32.mrf.mxu0
    %v1286 = vadd.f32 0.0, %v1285
    %v1287 = vpop.f32.mrf.mxu0
    %v1288 = vadd.f32 0.0, %v1287
    %v1289 = vpop.f32.mrf.mxu0
    %v1290 = vadd.f32 0.0, %v1289
    %v1291 = vpop.f32.mrf.mxu0
    %v1292 = vadd.f32 0.0, %v1291
    %1293 = vmatprep.mubr.bf16.mxu0 0
    %1294 = vmatmul.mubr.bf16.gmra.mxu0 %v1217
    %v1295 = vpop.f32.mrf.mxu0
    %v1296 = vadd.f32 0.0, %v1295
    %v1297 = vpop.f32.mrf.mxu0
    %v1298 = vadd.f32 0.0, %v1297
    %v1299 = vpop.f32.mrf.mxu0
    %v1300 = vpop.f32.mrf.mxu0
    %1301 = vdwg.mxu0
    %1302 = vmatprep.subr.bf16.mxu0 0
    %1303 = vmatpush1.bf16.msra.mxu0 0
    %1304 = vmatprep.subr.bf16.mxu0 0
    %1305 = vmatpush1.bf16.msra.mxu0 0
    %1306 = vmatprep.subr.bf16.mxu0 0
    %1307 = vmatpush1.bf16.msra.mxu0 0
    %1308 = vmatprep.subr.bf16.mxu0 0
    %1309 = vmatpush1.bf16.msra.mxu0 0
    %1310 = vmatprep.subr.bf16.mxu0 0
    %1311 = vmatpush1.bf16.msra.mxu0 0
    %1312 = vmatprep.subr.bf16.mxu0 0
    %1313 = vmatpush1.bf16.msra.mxu0 0
    %1314 = vmatprep.subr.bf16.mxu0 %v1229
    %1315 = vmatpush1.bf16.msra.mxu0 %v1226
    %1316 = vmatprep.subr.bf16.mxu0 %v1198
    %1317 = vmatpush1.bf16.msra.mxu0 %v1197
    %1318 = vmatprep.subr.bf16.mxu0 0
    %1319 = vmatpush2.bf16.msra.mxu0 0
    %1320 = vmatprep.subr.bf16.mxu0 0
    %1321 = vmatpush2.bf16.msra.mxu0 0
    %1322 = vmatprep.subr.bf16.mxu0 0
    %1323 = vmatpush2.bf16.msra.mxu0 0
    %1324 = vmatprep.subr.bf16.mxu0 0
    %1325 = vmatpush2.bf16.msra.mxu0 0
    %1326 = vmatprep.subr.bf16.mxu0 0
    %1327 = vmatpush2.bf16.msra.mxu0 0
    %1328 = vmatprep.subr.bf16.mxu0 0
    %1329 = vmatpush2.bf16.msra.mxu0 0
    %1330 = vmatprep.subr.bf16.mxu0 0
    %1331 = vmatpush2.bf16.msra.mxu0 0
    %1332 = vmatprep.subr.bf16.mxu0 0
    %1333 = vmatpush2.bf16.msra.mxu0 0
    %1334 = vmatprep.mubr.bf16.mxu0 0
    %1335 = vmatmul.mubr.bf16.gmra.mxu0 %v1208
    %v1336 = vpop.f32.mrf.mxu0
    %v1337 = vadd.f32 0.0, %v1336
    %v1338 = vpop.f32.mrf.mxu0
    %v1339 = vadd.f32 0.0, %v1338
    %v1340 = vpop.f32.mrf.mxu0
    %v1341 = vadd.f32 0.0, %v1340
    %v1342 = vpop.f32.mrf.mxu0
    %v1343 = vadd.f32 0.0, %v1342
    %1344 = vmatprep.mubr.bf16.mxu0 0
    %1345 = vmatmul.mubr.bf16.gmra.mxu0 %v1211
    %v1346 = vpop.f32.mrf.mxu0
    %v1347 = vadd.f32 0.0, %v1346
    %v1348 = vpop.f32.mrf.mxu0
    %v1349 = vadd.f32 0.0, %v1348
    %v1350 = vpop.f32.mrf.mxu0
    %v1351 = vadd.f32 0.0, %v1350
    %v1352 = vpop.f32.mrf.mxu0
    %v1353 = vadd.f32 0.0, %v1352
    %1354 = vmatprep.mubr.bf16.mxu0 0
    %1355 = vmatmul.mubr.bf16.gmra.mxu0 %v1214
    %v1356 = vpop.f32.mrf.mxu0
    %v1357 = vadd.f32 0.0, %v1356
    %v1358 = vpop.f32.mrf.mxu0
    %v1359 = vadd.f32 0.0, %v1358
    %v1360 = vpop.f32.mrf.mxu0
    %v1361 = vadd.f32 0.0, %v1360
    %v1362 = vpop.f32.mrf.mxu0
    %v1363 = vadd.f32 0.0, %v1362
    %1364 = vmatprep.mubr.bf16.mxu0 0
    %1365 = vmatmul.mubr.bf16.gmra.mxu0 %v1217
    %v1366 = vpop.f32.mrf.mxu0
    %v1367 = vadd.f32 0.0, %v1366
    %v1368 = vpop.f32.mrf.mxu0
    %v1369 = vadd.f32 0.0, %v1368
    %v1370 = vpop.f32.mrf.mxu0
    %v1371 = vpop.f32.mrf.mxu0
    %1372 = vdwg.mxu0
    %v1373 = vadd.f32 %v1116, %v1266
    %v1374 = vadd.f32 %v1117, %v1268
    %v1375 = vadd.f32 %v1118, %v1337
    %v1376 = vadd.f32 %v1119, %v1339
    %v1377 = vadd.f32 %v1120, %v1270
    %v1378 = vadd.f32 %v1121, %v1272
    %v1379 = vadd.f32 %v1122, %v1341
    %v1380 = vadd.f32 %v1123, %v1343
    %v1381 = vadd.f32 %v1124, %v1276
    %v1382 = vadd.f32 %v1125, %v1278
    %v1383 = vadd.f32 %v1126, %v1347
    %v1384 = vadd.f32 %v1127, %v1349
    %v1385 = vadd.f32 %v1128, %v1280
    %v1386 = vadd.f32 %v1129, %v1282
    %v1387 = vadd.f32 %v1130, %v1351
    %v1388 = vadd.f32 %v1131, %v1353
    %v1389 = vadd.f32 %v1132, %v1286
    %v1390 = vadd.f32 %v1133, %v1288
    %v1391 = vadd.f32 %v1134, %v1357
    %v1392 = vadd.f32 %v1135, %v1359
    %v1393 = vadd.f32 %v1136, %v1290
    %v1394 = vadd.f32 %v1137, %v1292
    %v1395 = vadd.f32 %v1138, %v1361
    %v1396 = vadd.f32 %v1139, %v1363
    %v1397 = vadd.f32 %v1140, %v1296
    %v1398 = vadd.f32 %v1141, %v1298
    %v1399 = vadd.f32 %v1142, %v1367
    %v1400 = vadd.f32 %v1143, %v1369
    %v1401 = vmax.f32 %v1373, %v1375
    %v1402 = vmax.f32 %v1374, %v1376
    %v1403 = vmax.f32 %v1377, %v1379
    %v1404 = vmax.f32 %v1378, %v1380
    %v1405 = vmax.f32 %v1381, %v1383
    %v1406 = vmax.f32 %v1382, %v1384
    %v1407 = vmax.f32 %v1385, %v1387
    %v1408 = vmax.f32 %v1386, %v1388
    %v1409 = vmax.f32 %v1389, %v1391
    %v1410 = vmax.f32 %v1390, %v1392
    %v1411 = vmax.f32 %v1393, %v1395
    %v1412 = vmax.f32 %v1394, %v1396
    %v1413 = vmax.f32 %v1397, %v1399
    %v1414 = vmax.f32 %v1398, %v1400
    %1415 = vmatprep.subr.bf16.mxu0 0
    %1416 = vmatpush1.bf16.msra.mxu0 0
    %1417 = vmatprep.subr.bf16.mxu0 0
    %1418 = vmatpush1.bf16.msra.mxu0 0
    %1419 = vmatprep.subr.bf16.mxu0 0
    %1420 = vmatpush1.bf16.msra.mxu0 0
    %1421 = vmatprep.subr.bf16.mxu0 0
    %1422 = vmatpush1.bf16.msra.mxu0 0
    %1423 = vmatprep.subr.bf16.mxu0 0
    %1424 = vmatpush1.bf16.msra.mxu0 0
    %1425 = vmatprep.subr.bf16.mxu0 0
    %1426 = vmatpush1.bf16.msra.mxu0 0
    %1427 = vmatprep.subr.bf16.mxu0 %v260
    %1428 = vmatpush1.bf16.msra.mxu0 %v257
    %1429 = vmatprep.subr.bf16.mxu0 %v231
    %1430 = vmatpush1.bf16.msra.mxu0 %v230
    %1431 = vmatprep.subr.bf16.mxu0 0
    %1432 = vmatpush2.bf16.msra.mxu0 0
    %1433 = vmatprep.subr.bf16.mxu0 0
    %1434 = vmatpush2.bf16.msra.mxu0 0
    %1435 = vmatprep.subr.bf16.mxu0 0
    %1436 = vmatpush2.bf16.msra.mxu0 0
    %1437 = vmatprep.subr.bf16.mxu0 0
    %1438 = vmatpush2.bf16.msra.mxu0 0
    %1439 = vmatprep.subr.bf16.mxu0 0
    %1440 = vmatpush2.bf16.msra.mxu0 0
    %1441 = vmatprep.subr.bf16.mxu0 0
    %1442 = vmatpush2.bf16.msra.mxu0 0
    %1443 = vmatprep.subr.bf16.mxu0 0
    %1444 = vmatpush2.bf16.msra.mxu0 0
    %1445 = vmatprep.subr.bf16.mxu0 0
    %1446 = vmatpush2.bf16.msra.mxu0 0
    %1447 = vmatprep.mubr.bf16.mxu0 0
    %1448 = vmatmul.mubr.bf16.gmra.mxu0 %v694
    %v1449 = vpop.f32.mrf.mxu0
    %v1450 = vadd.f32 0.0, %v1449
    %v1451 = vpop.f32.mrf.mxu0
    %v1452 = vadd.f32 0.0, %v1451
    %v1453 = vpop.f32.mrf.mxu0
    %v1454 = vadd.f32 0.0, %v1453
    %v1455 = vpop.f32.mrf.mxu0
    %v1456 = vadd.f32 0.0, %v1455
    %1457 = vmatprep.mubr.bf16.mxu0 0
    %1458 = vmatmul.mubr.bf16.gmra.mxu0 %v697
    %v1459 = vpop.f32.mrf.mxu0
    %v1460 = vadd.f32 0.0, %v1459
    %v1461 = vpop.f32.mrf.mxu0
    %v1462 = vadd.f32 0.0, %v1461
    %v1463 = vpop.f32.mrf.mxu0
    %v1464 = vadd.f32 0.0, %v1463
    %v1465 = vpop.f32.mrf.mxu0
    %v1466 = vadd.f32 0.0, %v1465
    %1467 = vmatprep.mubr.bf16.mxu0 0
    %1468 = vmatmul.mubr.bf16.gmra.mxu0 %v700
    %v1469 = vpop.f32.mrf.mxu0
    %v1470 = vadd.f32 0.0, %v1469
    %v1471 = vpop.f32.mrf.mxu0
    %v1472 = vadd.f32 0.0, %v1471
    %v1473 = vpop.f32.mrf.mxu0
    %v1474 = vadd.f32 0.0, %v1473
    %v1475 = vpop.f32.mrf.mxu0
    %v1476 = vadd.f32 0.0, %v1475
    %1477 = vmatprep.mubr.bf16.mxu0 0
    %1478 = vmatmul.mubr.bf16.gmra.mxu0 %v703
    %v1479 = vpop.f32.mrf.mxu0
    %v1480 = vadd.f32 0.0, %v1479
    %v1481 = vpop.f32.mrf.mxu0
    %v1482 = vadd.f32 0.0, %v1481
    %v1483 = vpop.f32.mrf.mxu0
    %v1484 = vpop.f32.mrf.mxu0
    %1485 = vdwg.mxu0
    %1486 = vmatprep.subr.bf16.mxu0 0
    %1487 = vmatpush1.bf16.msra.mxu0 0
    %1488 = vmatprep.subr.bf16.mxu0 0
    %1489 = vmatpush1.bf16.msra.mxu0 0
    %1490 = vmatprep.subr.bf16.mxu0 0
    %1491 = vmatpush1.bf16.msra.mxu0 0
    %1492 = vmatprep.subr.bf16.mxu0 0
    %1493 = vmatpush1.bf16.msra.mxu0 0
    %1494 = vmatprep.subr.bf16.mxu0 0
    %1495 = vmatpush1.bf16.msra.mxu0 0
    %1496 = vmatprep.subr.bf16.mxu0 0
    %1497 = vmatpush1.bf16.msra.mxu0 0
    %1498 = vmatprep.subr.bf16.mxu0 %v266
    %1499 = vmatpush1.bf16.msra.mxu0 %v263
    %1500 = vmatprep.subr.bf16.mxu0 %v233
    %1501 = vmatpush1.bf16.msra.mxu0 %v232
    %1502 = vmatprep.subr.bf16.mxu0 0
    %1503 = vmatpush2.bf16.msra.mxu0 0
    %1504 = vmatprep.subr.bf16.mxu0 0
    %1505 = vmatpush2.bf16.msra.mxu0 0
    %1506 = vmatprep.subr.bf16.mxu0 0
    %1507 = vmatpush2.bf16.msra.mxu0 0
    %1508 = vmatprep.subr.bf16.mxu0 0
    %1509 = vmatpush2.bf16.msra.mxu0 0
    %1510 = vmatprep.subr.bf16.mxu0 0
    %1511 = vmatpush2.bf16.msra.mxu0 0
    %1512 = vmatprep.subr.bf16.mxu0 0
    %1513 = vmatpush2.bf16.msra.mxu0 0
    %1514 = vmatprep.subr.bf16.mxu0 0
    %1515 = vmatpush2.bf16.msra.mxu0 0
    %1516 = vmatprep.subr.bf16.mxu0 0
    %1517 = vmatpush2.bf16.msra.mxu0 0
    %1518 = vmatprep.mubr.bf16.mxu0 0
    %1519 = vmatmul.mubr.bf16.gmra.mxu0 %v694
    %v1520 = vpop.f32.mrf.mxu0
    %v1521 = vadd.f32 0.0, %v1520
    %v1522 = vpop.f32.mrf.mxu0
    %v1523 = vadd.f32 0.0, %v1522
    %v1524 = vpop.f32.mrf.mxu0
    %v1525 = vadd.f32 0.0, %v1524
    %v1526 = vpop.f32.mrf.mxu0
    %v1527 = vadd.f32 0.0, %v1526
    %1528 = vmatprep.mubr.bf16.mxu0 0
    %1529 = vmatmul.mubr.bf16.gmra.mxu0 %v697
    %v1530 = vpop.f32.mrf.mxu0
    %v1531 = vadd.f32 0.0, %v1530
    %v1532 = vpop.f32.mrf.mxu0
    %v1533 = vadd.f32 0.0, %v1532
    %v1534 = vpop.f32.mrf.mxu0
    %v1535 = vadd.f32 0.0, %v1534
    %v1536 = vpop.f32.mrf.mxu0
    %v1537 = vadd.f32 0.0, %v1536
    %1538 = vmatprep.mubr.bf16.mxu0 0
    %1539 = vmatmul.mubr.bf16.gmra.mxu0 %v700
    %v1540 = vpop.f32.mrf.mxu0
    %v1541 = vadd.f32 0.0, %v1540
    %v1542 = vpop.f32.mrf.mxu0
    %v1543 = vadd.f32 0.0, %v1542
    %v1544 = vpop.f32.mrf.mxu0
    %v1545 = vadd.f32 0.0, %v1544
    %v1546 = vpop.f32.mrf.mxu0
    %v1547 = vadd.f32 0.0, %v1546
    %1548 = vmatprep.mubr.bf16.mxu0 0
    %1549 = vmatmul.mubr.bf16.gmra.mxu0 %v703
    %v1550 = vpop.f32.mrf.mxu0
    %v1551 = vadd.f32 0.0, %v1550
    %v1552 = vpop.f32.mrf.mxu0
    %v1553 = vadd.f32 0.0, %v1552
    %v1554 = vpop.f32.mrf.mxu0
    %v1555 = vpop.f32.mrf.mxu0
    %1556 = vdwg.mxu0
    %1557 = vmatprep.subr.bf16.mxu0 0
    %1558 = vmatpush1.bf16.msra.mxu0 0
    %1559 = vmatprep.subr.bf16.mxu0 0
    %1560 = vmatpush1.bf16.msra.mxu0 0
    %1561 = vmatprep.subr.bf16.mxu0 0
    %1562 = vmatpush1.bf16.msra.mxu0 0
    %1563 = vmatprep.subr.bf16.mxu0 0
    %1564 = vmatpush1.bf16.msra.mxu0 0
    %1565 = vmatprep.subr.bf16.mxu0 0
    %1566 = vmatpush1.bf16.msra.mxu0 0
    %1567 = vmatprep.subr.bf16.mxu0 0
    %1568 = vmatpush1.bf16.msra.mxu0 0
    %1569 = vmatprep.subr.bf16.mxu0 %v480
    %1570 = vmatpush1.bf16.msra.mxu0 %v477
    %1571 = vmatprep.subr.bf16.mxu0 %v453
    %1572 = vmatpush1.bf16.msra.mxu0 %v452
    %1573 = vmatprep.subr.bf16.mxu0 0
    %1574 = vmatpush2.bf16.msra.mxu0 0
    %1575 = vmatprep.subr.bf16.mxu0 0
    %1576 = vmatpush2.bf16.msra.mxu0 0
    %1577 = vmatprep.subr.bf16.mxu0 0
    %1578 = vmatpush2.bf16.msra.mxu0 0
    %1579 = vmatprep.subr.bf16.mxu0 0
    %1580 = vmatpush2.bf16.msra.mxu0 0
    %1581 = vmatprep.subr.bf16.mxu0 0
    %1582 = vmatpush2.bf16.msra.mxu0 0
    %1583 = vmatprep.subr.bf16.mxu0 0
    %1584 = vmatpush2.bf16.msra.mxu0 0
    %1585 = vmatprep.subr.bf16.mxu0 0
    %1586 = vmatpush2.bf16.msra.mxu0 0
    %1587 = vmatprep.subr.bf16.mxu0 0
    %1588 = vmatpush2.bf16.msra.mxu0 0
    %1589 = vmatprep.mubr.bf16.mxu0 0
    %1590 = vmatmul.mubr.bf16.gmra.mxu0 %v244
    %v1591 = vpop.f32.mrf.mxu0
    %v1592 = vadd.f32 %v1450, %v1591
    %v1593 = vpop.f32.mrf.mxu0
    %v1594 = vadd.f32 %v1452, %v1593
    %v1595 = vpop.f32.mrf.mxu0
    %v1596 = vadd.f32 %v1454, %v1595
    %v1597 = vpop.f32.mrf.mxu0
    %v1598 = vadd.f32 %v1456, %v1597
    %1599 = vmatprep.mubr.bf16.mxu0 0
    %1600 = vmatmul.mubr.bf16.gmra.mxu0 %v247
    %v1601 = vpop.f32.mrf.mxu0
    %v1602 = vadd.f32 %v1460, %v1601
    %v1603 = vpop.f32.mrf.mxu0
    %v1604 = vadd.f32 %v1462, %v1603
    %v1605 = vpop.f32.mrf.mxu0
    %v1606 = vadd.f32 %v1464, %v1605
    %v1607 = vpop.f32.mrf.mxu0
    %v1608 = vadd.f32 %v1466, %v1607
    %1609 = vmatprep.mubr.bf16.mxu0 0
    %1610 = vmatmul.mubr.bf16.gmra.mxu0 %v250
    %v1611 = vpop.f32.mrf.mxu0
    %v1612 = vadd.f32 %v1470, %v1611
    %v1613 = vpop.f32.mrf.mxu0
    %v1614 = vadd.f32 %v1472, %v1613
    %v1615 = vpop.f32.mrf.mxu0
    %v1616 = vadd.f32 %v1474, %v1615
    %v1617 = vpop.f32.mrf.mxu0
    %v1618 = vadd.f32 %v1476, %v1617
    %1619 = vmatprep.mubr.bf16.mxu0 0
    %1620 = vmatmul.mubr.bf16.gmra.mxu0 %v253
    %v1621 = vpop.f32.mrf.mxu0
    %v1622 = vadd.f32 %v1480, %v1621
    %v1623 = vpop.f32.mrf.mxu0
    %v1624 = vadd.f32 %v1482, %v1623
    %v1625 = vpop.f32.mrf.mxu0
    %v1626 = vpop.f32.mrf.mxu0
    %1627 = vdwg.mxu0
    %1628 = vmatprep.subr.bf16.mxu0 0
    %1629 = vmatpush1.bf16.msra.mxu0 0
    %1630 = vmatprep.subr.bf16.mxu0 0
    %1631 = vmatpush1.bf16.msra.mxu0 0
    %1632 = vmatprep.subr.bf16.mxu0 0
    %1633 = vmatpush1.bf16.msra.mxu0 0
    %1634 = vmatprep.subr.bf16.mxu0 0
    %1635 = vmatpush1.bf16.msra.mxu0 0
    %1636 = vmatprep.subr.bf16.mxu0 0
    %1637 = vmatpush1.bf16.msra.mxu0 0
    %1638 = vmatprep.subr.bf16.mxu0 0
    %1639 = vmatpush1.bf16.msra.mxu0 0
    %1640 = vmatprep.subr.bf16.mxu0 %v486
    %1641 = vmatpush1.bf16.msra.mxu0 %v483
    %1642 = vmatprep.subr.bf16.mxu0 %v455
    %1643 = vmatpush1.bf16.msra.mxu0 %v454
    %1644 = vmatprep.subr.bf16.mxu0 0
    %1645 = vmatpush2.bf16.msra.mxu0 0
    %1646 = vmatprep.subr.bf16.mxu0 0
    %1647 = vmatpush2.bf16.msra.mxu0 0
    %1648 = vmatprep.subr.bf16.mxu0 0
    %1649 = vmatpush2.bf16.msra.mxu0 0
    %1650 = vmatprep.subr.bf16.mxu0 0
    %1651 = vmatpush2.bf16.msra.mxu0 0
    %1652 = vmatprep.subr.bf16.mxu0 0
    %1653 = vmatpush2.bf16.msra.mxu0 0
    %1654 = vmatprep.subr.bf16.mxu0 0
    %1655 = vmatpush2.bf16.msra.mxu0 0
    %1656 = vmatprep.subr.bf16.mxu0 0
    %1657 = vmatpush2.bf16.msra.mxu0 0
    %1658 = vmatprep.subr.bf16.mxu0 0
    %1659 = vmatpush2.bf16.msra.mxu0 0
    %1660 = vmatprep.mubr.bf16.mxu0 0
    %1661 = vmatmul.mubr.bf16.gmra.mxu0 %v244
    %v1662 = vpop.f32.mrf.mxu0
    %v1663 = vadd.f32 %v1521, %v1662
    %v1664 = vpop.f32.mrf.mxu0
    %v1665 = vadd.f32 %v1523, %v1664
    %v1666 = vpop.f32.mrf.mxu0
    %v1667 = vadd.f32 %v1525, %v1666
    %v1668 = vpop.f32.mrf.mxu0
    %v1669 = vadd.f32 %v1527, %v1668
    %1670 = vmatprep.mubr.bf16.mxu0 0
    %1671 = vmatmul.mubr.bf16.gmra.mxu0 %v247
    %v1672 = vpop.f32.mrf.mxu0
    %v1673 = vadd.f32 %v1531, %v1672
    %v1674 = vpop.f32.mrf.mxu0
    %v1675 = vadd.f32 %v1533, %v1674
    %v1676 = vpop.f32.mrf.mxu0
    %v1677 = vadd.f32 %v1535, %v1676
    %v1678 = vpop.f32.mrf.mxu0
    %v1679 = vadd.f32 %v1537, %v1678
    %1680 = vmatprep.mubr.bf16.mxu0 0
    %1681 = vmatmul.mubr.bf16.gmra.mxu0 %v250
    %v1682 = vpop.f32.mrf.mxu0
    %v1683 = vadd.f32 %v1541, %v1682
    %v1684 = vpop.f32.mrf.mxu0
    %v1685 = vadd.f32 %v1543, %v1684
    %v1686 = vpop.f32.mrf.mxu0
    %v1687 = vadd.f32 %v1545, %v1686
    %v1688 = vpop.f32.mrf.mxu0
    %v1689 = vadd.f32 %v1547, %v1688
    %1690 = vmatprep.mubr.bf16.mxu0 0
    %1691 = vmatmul.mubr.bf16.gmra.mxu0 %v253
    %v1692 = vpop.f32.mrf.mxu0
    %v1693 = vadd.f32 %v1551, %v1692
    %v1694 = vpop.f32.mrf.mxu0
    %v1695 = vadd.f32 %v1553, %v1694
    %v1696 = vpop.f32.mrf.mxu0
    %v1697 = vpop.f32.mrf.mxu0
    %1698 = vdwg.mxu0
    %1699 = vmatprep.subr.bf16.mxu0 0
    %1700 = vmatpush1.bf16.msra.mxu0 0
    %1701 = vmatprep.subr.bf16.mxu0 0
    %1702 = vmatpush1.bf16.msra.mxu0 0
    %1703 = vmatprep.subr.bf16.mxu0 0
    %1704 = vmatpush1.bf16.msra.mxu0 0
    %1705 = vmatprep.subr.bf16.mxu0 0
    %1706 = vmatpush1.bf16.msra.mxu0 0
    %1707 = vmatprep.subr.bf16.mxu0 0
    %1708 = vmatpush1.bf16.msra.mxu0 0
    %1709 = vmatprep.subr.bf16.mxu0 0
    %1710 = vmatpush1.bf16.msra.mxu0 0
    %1711 = vmatprep.subr.bf16.mxu0 %v709
    %1712 = vmatpush1.bf16.msra.mxu0 %v706
    %1713 = vmatprep.subr.bf16.mxu0 %v682
    %1714 = vmatpush1.bf16.msra.mxu0 %v681
    %1715 = vmatprep.subr.bf16.mxu0 0
    %1716 = vmatpush2.bf16.msra.mxu0 0
    %1717 = vmatprep.subr.bf16.mxu0 0
    %1718 = vmatpush2.bf16.msra.mxu0 0
    %1719 = vmatprep.subr.bf16.mxu0 0
    %1720 = vmatpush2.bf16.msra.mxu0 0
    %1721 = vmatprep.subr.bf16.mxu0 0
    %1722 = vmatpush2.bf16.msra.mxu0 0
    %1723 = vmatprep.subr.bf16.mxu0 0
    %1724 = vmatpush2.bf16.msra.mxu0 0
    %1725 = vmatprep.subr.bf16.mxu0 0
    %1726 = vmatpush2.bf16.msra.mxu0 0
    %1727 = vmatprep.subr.bf16.mxu0 0
    %1728 = vmatpush2.bf16.msra.mxu0 0
    %1729 = vmatprep.subr.bf16.mxu0 0
    %1730 = vmatpush2.bf16.msra.mxu0 0
    %1731 = vmatprep.mubr.bf16.mxu0 0
    %1732 = vmatmul.mubr.bf16.gmra.mxu0 %v951
    %v1733 = vpop.f32.mrf.mxu0
    %v1734 = vadd.f32 0.0, %v1733
    %v1735 = vpop.f32.mrf.mxu0
    %v1736 = vadd.f32 0.0, %v1735
    %v1737 = vpop.f32.mrf.mxu0
    %v1738 = vadd.f32 0.0, %v1737
    %v1739 = vpop.f32.mrf.mxu0
    %v1740 = vadd.f32 0.0, %v1739
    %1741 = vmatprep.mubr.bf16.mxu0 0
    %1742 = vmatmul.mubr.bf16.gmra.mxu0 %v954
    %v1743 = vpop.f32.mrf.mxu0
    %v1744 = vadd.f32 0.0, %v1743
    %v1745 = vpop.f32.mrf.mxu0
    %v1746 = vadd.f32 0.0, %v1745
    %v1747 = vpop.f32.mrf.mxu0
    %v1748 = vadd.f32 0.0, %v1747
    %v1749 = vpop.f32.mrf.mxu0
    %v1750 = vadd.f32 0.0, %v1749
    %1751 = vmatprep.mubr.bf16.mxu0 0
    %1752 = vmatmul.mubr.bf16.gmra.mxu0 %v957
    %v1753 = vpop.f32.mrf.mxu0
    %v1754 = vadd.f32 0.0, %v1753
    %v1755 = vpop.f32.mrf.mxu0
    %v1756 = vadd.f32 0.0, %v1755
    %v1757 = vpop.f32.mrf.mxu0
    %v1758 = vadd.f32 0.0, %v1757
    %v1759 = vpop.f32.mrf.mxu0
    %v1760 = vadd.f32 0.0, %v1759
    %1761 = vmatprep.mubr.bf16.mxu0 0
    %1762 = vmatmul.mubr.bf16.gmra.mxu0 %v960
    %v1763 = vpop.f32.mrf.mxu0
    %v1764 = vadd.f32 0.0, %v1763
    %v1765 = vpop.f32.mrf.mxu0
    %v1766 = vadd.f32 0.0, %v1765
    %v1767 = vpop.f32.mrf.mxu0
    %v1768 = vpop.f32.mrf.mxu0
    %1769 = vdwg.mxu0
    %1770 = vmatprep.subr.bf16.mxu0 0
    %1771 = vmatpush1.bf16.msra.mxu0 0
    %1772 = vmatprep.subr.bf16.mxu0 0
    %1773 = vmatpush1.bf16.msra.mxu0 0
    %1774 = vmatprep.subr.bf16.mxu0 0
    %1775 = vmatpush1.bf16.msra.mxu0 0
    %1776 = vmatprep.subr.bf16.mxu0 0
    %1777 = vmatpush1.bf16.msra.mxu0 0
    %1778 = vmatprep.subr.bf16.mxu0 0
    %1779 = vmatpush1.bf16.msra.mxu0 0
    %1780 = vmatprep.subr.bf16.mxu0 0
    %1781 = vmatpush1.bf16.msra.mxu0 0
    %1782 = vmatprep.subr.bf16.mxu0 %v715
    %1783 = vmatpush1.bf16.msra.mxu0 %v712
    %1784 = vmatprep.subr.bf16.mxu0 %v684
    %1785 = vmatpush1.bf16.msra.mxu0 %v683
    %1786 = vmatprep.subr.bf16.mxu0 0
    %1787 = vmatpush2.bf16.msra.mxu0 0
    %1788 = vmatprep.subr.bf16.mxu0 0
    %1789 = vmatpush2.bf16.msra.mxu0 0
    %1790 = vmatprep.subr.bf16.mxu0 0
    %1791 = vmatpush2.bf16.msra.mxu0 0
    %1792 = vmatprep.subr.bf16.mxu0 0
    %1793 = vmatpush2.bf16.msra.mxu0 0
    %1794 = vmatprep.subr.bf16.mxu0 0
    %1795 = vmatpush2.bf16.msra.mxu0 0
    %1796 = vmatprep.subr.bf16.mxu0 0
    %1797 = vmatpush2.bf16.msra.mxu0 0
    %1798 = vmatprep.subr.bf16.mxu0 0
    %1799 = vmatpush2.bf16.msra.mxu0 0
    %1800 = vmatprep.subr.bf16.mxu0 0
    %1801 = vmatpush2.bf16.msra.mxu0 0
    %1802 = vmatprep.mubr.bf16.mxu0 0
    %1803 = vmatmul.mubr.bf16.gmra.mxu0 %v951
    %v1804 = vpop.f32.mrf.mxu0
    %v1805 = vadd.f32 0.0, %v1804
    %v1806 = vpop.f32.mrf.mxu0
    %v1807 = vadd.f32 0.0, %v1806
    %v1808 = vpop.f32.mrf.mxu0
    %v1809 = vadd.f32 0.0, %v1808
    %v1810 = vpop.f32.mrf.mxu0
    %v1811 = vadd.f32 0.0, %v1810
    %1812 = vmatprep.mubr.bf16.mxu0 0
    %1813 = vmatmul.mubr.bf16.gmra.mxu0 %v954
    %v1814 = vpop.f32.mrf.mxu0
    %v1815 = vadd.f32 0.0, %v1814
    %v1816 = vpop.f32.mrf.mxu0
    %v1817 = vadd.f32 0.0, %v1816
    %v1818 = vpop.f32.mrf.mxu0
    %v1819 = vadd.f32 0.0, %v1818
    %v1820 = vpop.f32.mrf.mxu0
    %v1821 = vadd.f32 0.0, %v1820
    %1822 = vmatprep.mubr.bf16.mxu0 0
    %1823 = vmatmul.mubr.bf16.gmra.mxu0 %v957
    %v1824 = vpop.f32.mrf.mxu0
    %v1825 = vadd.f32 0.0, %v1824
    %v1826 = vpop.f32.mrf.mxu0
    %v1827 = vadd.f32 0.0, %v1826
    %v1828 = vpop.f32.mrf.mxu0
    %v1829 = vadd.f32 0.0, %v1828
    %v1830 = vpop.f32.mrf.mxu0
    %v1831 = vadd.f32 0.0, %v1830
    %1832 = vmatprep.mubr.bf16.mxu0 0
    %1833 = vmatmul.mubr.bf16.gmra.mxu0 %v960
    %v1834 = vpop.f32.mrf.mxu0
    %v1835 = vadd.f32 0.0, %v1834
    %v1836 = vpop.f32.mrf.mxu0
    %v1837 = vadd.f32 0.0, %v1836
    %v1838 = vpop.f32.mrf.mxu0
    %v1839 = vpop.f32.mrf.mxu0
    %1840 = vdwg.mxu0
    %v1841 = vadd.f32 %v1592, %v1734
    %v1842 = vadd.f32 %v1594, %v1736
    %v1843 = vadd.f32 %v1663, %v1805
    %v1844 = vadd.f32 %v1665, %v1807
    %v1845 = vadd.f32 %v1596, %v1738
    %v1846 = vadd.f32 %v1598, %v1740
    %v1847 = vadd.f32 %v1667, %v1809
    %v1848 = vadd.f32 %v1669, %v1811
    %v1849 = vadd.f32 %v1602, %v1744
    %v1850 = vadd.f32 %v1604, %v1746
    %v1851 = vadd.f32 %v1673, %v1815
    %v1852 = vadd.f32 %v1675, %v1817
    %v1853 = vadd.f32 %v1606, %v1748
    %v1854 = vadd.f32 %v1608, %v1750
    %v1855 = vadd.f32 %v1677, %v1819
    %v1856 = vadd.f32 %v1679, %v1821
    %v1857 = vadd.f32 %v1612, %v1754
    %v1858 = vadd.f32 %v1614, %v1756
    %v1859 = vadd.f32 %v1683, %v1825
    %v1860 = vadd.f32 %v1685, %v1827
    %v1861 = vadd.f32 %v1616, %v1758
    %v1862 = vadd.f32 %v1618, %v1760
    %v1863 = vadd.f32 %v1687, %v1829
    %v1864 = vadd.f32 %v1689, %v1831
    %v1865 = vadd.f32 %v1622, %v1764
    %v1866 = vadd.f32 %v1624, %v1766
    %v1867 = vadd.f32 %v1693, %v1835
    %v1868 = vadd.f32 %v1695, %v1837
    %1869 = vmatprep.subr.bf16.mxu0 0
    %1870 = vmatpush1.bf16.msra.mxu0 0
    %1871 = vmatprep.subr.bf16.mxu0 0
    %1872 = vmatpush1.bf16.msra.mxu0 0
    %1873 = vmatprep.subr.bf16.mxu0 0
    %1874 = vmatpush1.bf16.msra.mxu0 0
    %1875 = vmatprep.subr.bf16.mxu0 0
    %1876 = vmatpush1.bf16.msra.mxu0 0
    %1877 = vmatprep.subr.bf16.mxu0 0
    %1878 = vmatpush1.bf16.msra.mxu0 0
    %1879 = vmatprep.subr.bf16.mxu0 0
    %1880 = vmatpush1.bf16.msra.mxu0 0
    %1881 = vmatprep.subr.bf16.mxu0 %v966
    %1882 = vmatpush1.bf16.msra.mxu0 %v963
    %1883 = vmatprep.subr.bf16.mxu0 %v939
    %1884 = vmatpush1.bf16.msra.mxu0 %v938
    %1885 = vmatprep.subr.bf16.mxu0 0
    %1886 = vmatpush2.bf16.msra.mxu0 0
    %1887 = vmatprep.subr.bf16.mxu0 0
    %1888 = vmatpush2.bf16.msra.mxu0 0
    %1889 = vmatprep.subr.bf16.mxu0 0
    %1890 = vmatpush2.bf16.msra.mxu0 0
    %1891 = vmatprep.subr.bf16.mxu0 0
    %1892 = vmatpush2.bf16.msra.mxu0 0
    %1893 = vmatprep.subr.bf16.mxu0 0
    %1894 = vmatpush2.bf16.msra.mxu0 0
    %1895 = vmatprep.subr.bf16.mxu0 0
    %1896 = vmatpush2.bf16.msra.mxu0 0
    %1897 = vmatprep.subr.bf16.mxu0 0
    %1898 = vmatpush2.bf16.msra.mxu0 0
    %1899 = vmatprep.subr.bf16.mxu0 0
    %1900 = vmatpush2.bf16.msra.mxu0 0
    %1901 = vmatprep.mubr.bf16.mxu0 0
    %1902 = vmatmul.mubr.bf16.gmra.mxu0 %v1208
    %v1903 = vpop.f32.mrf.mxu0
    %v1904 = vadd.f32 0.0, %v1903
    %v1905 = vpop.f32.mrf.mxu0
    %v1906 = vadd.f32 0.0, %v1905
    %v1907 = vpop.f32.mrf.mxu0
    %v1908 = vadd.f32 0.0, %v1907
    %v1909 = vpop.f32.mrf.mxu0
    %v1910 = vadd.f32 0.0, %v1909
    %1911 = vmatprep.mubr.bf16.mxu0 0
    %1912 = vmatmul.mubr.bf16.gmra.mxu0 %v1211
    %v1913 = vpop.f32.mrf.mxu0
    %v1914 = vadd.f32 0.0, %v1913
    %v1915 = vpop.f32.mrf.mxu0
    %v1916 = vadd.f32 0.0, %v1915
    %v1917 = vpop.f32.mrf.mxu0
    %v1918 = vadd.f32 0.0, %v1917
    %v1919 = vpop.f32.mrf.mxu0
    %v1920 = vadd.f32 0.0, %v1919
    %1921 = vmatprep.mubr.bf16.mxu0 0
    %1922 = vmatmul.mubr.bf16.gmra.mxu0 %v1214
    %v1923 = vpop.f32.mrf.mxu0
    %v1924 = vadd.f32 0.0, %v1923
    %v1925 = vpop.f32.mrf.mxu0
    %v1926 = vadd.f32 0.0, %v1925
    %v1927 = vpop.f32.mrf.mxu0
    %v1928 = vadd.f32 0.0, %v1927
    %v1929 = vpop.f32.mrf.mxu0
    %v1930 = vadd.f32 0.0, %v1929
    %1931 = vmatprep.mubr.bf16.mxu0 0
    %1932 = vmatmul.mubr.bf16.gmra.mxu0 %v1217
    %v1933 = vpop.f32.mrf.mxu0
    %v1934 = vadd.f32 0.0, %v1933
    %v1935 = vpop.f32.mrf.mxu0
    %v1936 = vadd.f32 0.0, %v1935
    %v1937 = vpop.f32.mrf.mxu0
    %v1938 = vpop.f32.mrf.mxu0
    %1939 = vdwg.mxu0
    %1940 = vmatprep.subr.bf16.mxu0 0
    %1941 = vmatpush1.bf16.msra.mxu0 0
    %1942 = vmatprep.subr.bf16.mxu0 0
    %1943 = vmatpush1.bf16.msra.mxu0 0
    %1944 = vmatprep.subr.bf16.mxu0 0
    %1945 = vmatpush1.bf16.msra.mxu0 0
    %1946 = vmatprep.subr.bf16.mxu0 0
    %1947 = vmatpush1.bf16.msra.mxu0 0
    %1948 = vmatprep.subr.bf16.mxu0 0
    %1949 = vmatpush1.bf16.msra.mxu0 0
    %1950 = vmatprep.subr.bf16.mxu0 0
    %1951 = vmatpush1.bf16.msra.mxu0 0
    %1952 = vmatprep.subr.bf16.mxu0 %v972
    %1953 = vmatpush1.bf16.msra.mxu0 %v969
    %1954 = vmatprep.subr.bf16.mxu0 %v941
    %1955 = vmatpush1.bf16.msra.mxu0 %v940
    %1956 = vmatprep.subr.bf16.mxu0 0
    %1957 = vmatpush2.bf16.msra.mxu0 0
    %1958 = vmatprep.subr.bf16.mxu0 0
    %1959 = vmatpush2.bf16.msra.mxu0 0
    %1960 = vmatprep.subr.bf16.mxu0 0
    %1961 = vmatpush2.bf16.msra.mxu0 0
    %1962 = vmatprep.subr.bf16.mxu0 0
    %1963 = vmatpush2.bf16.msra.mxu0 0
    %1964 = vmatprep.subr.bf16.mxu0 0
    %1965 = vmatpush2.bf16.msra.mxu0 0
    %1966 = vmatprep.subr.bf16.mxu0 0
    %1967 = vmatpush2.bf16.msra.mxu0 0
    %1968 = vmatprep.subr.bf16.mxu0 0
    %1969 = vmatpush2.bf16.msra.mxu0 0
    %1970 = vmatprep.subr.bf16.mxu0 0
    %1971 = vmatpush2.bf16.msra.mxu0 0
    %1972 = vmatprep.mubr.bf16.mxu0 0
    %1973 = vmatmul.mubr.bf16.gmra.mxu0 %v1208
    %v1974 = vpop.f32.mrf.mxu0
    %v1975 = vadd.f32 0.0, %v1974
    %v1976 = vpop.f32.mrf.mxu0
    %v1977 = vadd.f32 0.0, %v1976
    %v1978 = vpop.f32.mrf.mxu0
    %v1979 = vadd.f32 0.0, %v1978
    %v1980 = vpop.f32.mrf.mxu0
    %v1981 = vadd.f32 0.0, %v1980
    %1982 = vmatprep.mubr.bf16.mxu0 0
    %1983 = vmatmul.mubr.bf16.gmra.mxu0 %v1211
    %v1984 = vpop.f32.mrf.mxu0
    %v1985 = vadd.f32 0.0, %v1984
    %v1986 = vpop.f32.mrf.mxu0
    %v1987 = vadd.f32 0.0, %v1986
    %v1988 = vpop.f32.mrf.mxu0
    %v1989 = vadd.f32 0.0, %v1988
    %v1990 = vpop.f32.mrf.mxu0
    %v1991 = vadd.f32 0.0, %v1990
    %1992 = vmatprep.mubr.bf16.mxu0 0
    %1993 = vmatmul.mubr.bf16.gmra.mxu0 %v1214
    %v1994 = vpop.f32.mrf.mxu0
    %v1995 = vadd.f32 0.0, %v1994
    %v1996 = vpop.f32.mrf.mxu0
    %v1997 = vadd.f32 0.0, %v1996
    %v1998 = vpop.f32.mrf.mxu0
    %v1999 = vadd.f32 0.0, %v1998
    %v2000 = vpop.f32.mrf.mxu0
    %v2001 = vadd.f32 0.0, %v2000
    %2002 = vmatprep.mubr.bf16.mxu0 0
    %2003 = vmatmul.mubr.bf16.gmra.mxu0 %v1217
    %v2004 = vpop.f32.mrf.mxu0
    %v2005 = vadd.f32 0.0, %v2004
    %v2006 = vpop.f32.mrf.mxu0
    %v2007 = vadd.f32 0.0, %v2006
    %v2008 = vpop.f32.mrf.mxu0
    %v2009 = vpop.f32.mrf.mxu0
    %2010 = vdwg.mxu0
    %v2011 = vadd.f32 %v1841, %v1904
    %v2012 = vadd.f32 %v1842, %v1906
    %v2013 = vadd.f32 %v1843, %v1975
    %v2014 = vadd.f32 %v1844, %v1977
    %v2015 = vadd.f32 %v1845, %v1908
    %v2016 = vadd.f32 %v1846, %v1910
    %v2017 = vadd.f32 %v1847, %v1979
    %v2018 = vadd.f32 %v1848, %v1981
    %v2019 = vadd.f32 %v1849, %v1914
    %v2020 = vadd.f32 %v1850, %v1916
    %v2021 = vadd.f32 %v1851, %v1985
    %v2022 = vadd.f32 %v1852, %v1987
    %v2023 = vadd.f32 %v1853, %v1918
    %v2024 = vadd.f32 %v1854, %v1920
    %v2025 = vadd.f32 %v1855, %v1989
    %v2026 = vadd.f32 %v1856, %v1991
    %v2027 = vadd.f32 %v1857, %v1924
    %v2028 = vadd.f32 %v1858, %v1926
    %v2029 = vadd.f32 %v1859, %v1995
    %v2030 = vadd.f32 %v1860, %v1997
    %v2031 = vadd.f32 %v1861, %v1928
    %v2032 = vadd.f32 %v1862, %v1930
    %v2033 = vadd.f32 %v1863, %v1999
    %v2034 = vadd.f32 %v1864, %v2001
    %v2035 = vadd.f32 %v1865, %v1934
    %v2036 = vadd.f32 %v1866, %v1936
    %v2037 = vadd.f32 %v1867, %v2005
    %v2038 = vadd.f32 %v1868, %v2007
    %v2046 = vunpack.c.l.b16 %v148
    %v2047 = vunpack.c.l.b16 %v149
    %v2048 = vunpack.c.l.b16 %v150
    %v2049 = vunpack.c.l.b16 %v151
    %v2050 = vunpack.c.l.b16 %v152
    %v2051 = vunpack.c.l.b16 %v153
    %v2052 = vunpack.c.l.b16 %v154
    %v2053 = vpack.c.b16 %v2047, %v2046
    %v2054 = vpack.c.b16 %v2049, %v2048
    %v2055 = vpack.c.b16 %v2051, %v2050
    %v2056 = vpack.c.b16 %v2052, %v2052
    %v2058 = vsel %vm242, %v2053, 0
    %v2061 = vsel %vm242, %v2054, 0
    %v2064 = vsel %vm242, %v2055, 0
    %v2067 = vsel %vm242, %v2056, 0
    %2069 = vmatprep.subr.bf16.mxu0 0
    %2070 = vmatpush1.bf16.msra.mxu0 0
    %2071 = vmatprep.subr.bf16.mxu0 0
    %2072 = vmatpush1.bf16.msra.mxu0 0
    %2073 = vmatprep.subr.bf16.mxu0 0
    %2074 = vmatpush1.bf16.msra.mxu0 0
    %2075 = vmatprep.subr.bf16.mxu0 0
    %2076 = vmatpush1.bf16.msra.mxu0 0
    %2077 = vmatprep.subr.bf16.mxu0 0
    %2078 = vmatpush1.bf16.msra.mxu0 0
    %2079 = vmatprep.subr.bf16.mxu0 0
    %2080 = vmatpush1.bf16.msra.mxu0 0
    %2081 = vmatprep.subr.bf16.mxu0 %v1223
    %2082 = vmatpush1.bf16.msra.mxu0 %v1220
    %2083 = vmatprep.subr.bf16.mxu0 %v1196
    %2084 = vmatpush1.bf16.msra.mxu0 %v1195
    %2085 = vmatprep.subr.bf16.mxu0 0
    %2086 = vmatpush2.bf16.msra.mxu0 0
    %2087 = vmatprep.subr.bf16.mxu0 0
    %2088 = vmatpush2.bf16.msra.mxu0 0
    %2089 = vmatprep.subr.bf16.mxu0 0
    %2090 = vmatpush2.bf16.msra.mxu0 0
    %2091 = vmatprep.subr.bf16.mxu0 0
    %2092 = vmatpush2.bf16.msra.mxu0 0
    %2093 = vmatprep.subr.bf16.mxu0 0
    %2094 = vmatpush2.bf16.msra.mxu0 0
    %2095 = vmatprep.subr.bf16.mxu0 0
    %2096 = vmatpush2.bf16.msra.mxu0 0
    %2097 = vmatprep.subr.bf16.mxu0 0
    %2098 = vmatpush2.bf16.msra.mxu0 0
    %2099 = vmatprep.subr.bf16.mxu0 0
    %2100 = vmatpush2.bf16.msra.mxu0 0
    %2101 = vmatprep.mubr.bf16.mxu0 0
    %2102 = vmatmul.mubr.bf16.gmra.mxu0 %v2058
    %v2103 = vpop.f32.mrf.mxu0
    %v2104 = vadd.f32 0.0, %v2103
    %v2105 = vpop.f32.mrf.mxu0
    %v2106 = vadd.f32 0.0, %v2105
    %v2107 = vpop.f32.mrf.mxu0
    %v2108 = vadd.f32 0.0, %v2107
    %v2109 = vpop.f32.mrf.mxu0
    %v2110 = vadd.f32 0.0, %v2109
    %2111 = vmatprep.mubr.bf16.mxu0 0
    %2112 = vmatmul.mubr.bf16.gmra.mxu0 %v2061
    %v2113 = vpop.f32.mrf.mxu0
    %v2114 = vadd.f32 0.0, %v2113
    %v2115 = vpop.f32.mrf.mxu0
    %v2116 = vadd.f32 0.0, %v2115
    %v2117 = vpop.f32.mrf.mxu0
    %v2118 = vadd.f32 0.0, %v2117
    %v2119 = vpop.f32.mrf.mxu0
    %v2120 = vadd.f32 0.0, %v2119
    %2121 = vmatprep.mubr.bf16.mxu0 0
    %2122 = vmatmul.mubr.bf16.gmra.mxu0 %v2064
    %v2123 = vpop.f32.mrf.mxu0
    %v2124 = vadd.f32 0.0, %v2123
    %v2125 = vpop.f32.mrf.mxu0
    %v2126 = vadd.f32 0.0, %v2125
    %v2127 = vpop.f32.mrf.mxu0
    %v2128 = vadd.f32 0.0, %v2127
    %v2129 = vpop.f32.mrf.mxu0
    %v2130 = vadd.f32 0.0, %v2129
    %2131 = vmatprep.mubr.bf16.mxu0 0
    %2132 = vmatmul.mubr.bf16.gmra.mxu0 %v2067
    %v2133 = vpop.f32.mrf.mxu0
    %v2134 = vadd.f32 0.0, %v2133
    %v2135 = vpop.f32.mrf.mxu0
    %v2136 = vadd.f32 0.0, %v2135
    %v2137 = vpop.f32.mrf.mxu0
    %v2138 = vpop.f32.mrf.mxu0
    %2139 = vdwg.mxu0
    %2140 = vmatprep.subr.bf16.mxu0 0
    %2141 = vmatpush1.bf16.msra.mxu0 0
    %2142 = vmatprep.subr.bf16.mxu0 0
    %2143 = vmatpush1.bf16.msra.mxu0 0
    %2144 = vmatprep.subr.bf16.mxu0 0
    %2145 = vmatpush1.bf16.msra.mxu0 0
    %2146 = vmatprep.subr.bf16.mxu0 0
    %2147 = vmatpush1.bf16.msra.mxu0 0
    %2148 = vmatprep.subr.bf16.mxu0 0
    %2149 = vmatpush1.bf16.msra.mxu0 0
    %2150 = vmatprep.subr.bf16.mxu0 0
    %2151 = vmatpush1.bf16.msra.mxu0 0
    %2152 = vmatprep.subr.bf16.mxu0 %v1229
    %2153 = vmatpush1.bf16.msra.mxu0 %v1226
    %2154 = vmatprep.subr.bf16.mxu0 %v1198
    %2155 = vmatpush1.bf16.msra.mxu0 %v1197
    %2156 = vmatprep.subr.bf16.mxu0 0
    %2157 = vmatpush2.bf16.msra.mxu0 0
    %2158 = vmatprep.subr.bf16.mxu0 0
    %2159 = vmatpush2.bf16.msra.mxu0 0
    %2160 = vmatprep.subr.bf16.mxu0 0
    %2161 = vmatpush2.bf16.msra.mxu0 0
    %2162 = vmatprep.subr.bf16.mxu0 0
    %2163 = vmatpush2.bf16.msra.mxu0 0
    %2164 = vmatprep.subr.bf16.mxu0 0
    %2165 = vmatpush2.bf16.msra.mxu0 0
    %2166 = vmatprep.subr.bf16.mxu0 0
    %2167 = vmatpush2.bf16.msra.mxu0 0
    %2168 = vmatprep.subr.bf16.mxu0 0
    %2169 = vmatpush2.bf16.msra.mxu0 0
    %2170 = vmatprep.subr.bf16.mxu0 0
    %2171 = vmatpush2.bf16.msra.mxu0 0
    %2172 = vmatprep.mubr.bf16.mxu0 0
    %2173 = vmatmul.mubr.bf16.gmra.mxu0 %v2058
    %v2174 = vpop.f32.mrf.mxu0
    %v2175 = vadd.f32 0.0, %v2174
    %v2176 = vpop.f32.mrf.mxu0
    %v2177 = vadd.f32 0.0, %v2176
    %v2178 = vpop.f32.mrf.mxu0
    %v2179 = vadd.f32 0.0, %v2178
    %v2180 = vpop.f32.mrf.mxu0
    %v2181 = vadd.f32 0.0, %v2180
    %2182 = vmatprep.mubr.bf16.mxu0 0
    %2183 = vmatmul.mubr.bf16.gmra.mxu0 %v2061
    %v2184 = vpop.f32.mrf.mxu0
    %v2185 = vadd.f32 0.0, %v2184
    %v2186 = vpop.f32.mrf.mxu0
    %v2187 = vadd.f32 0.0, %v2186
    %v2188 = vpop.f32.mrf.mxu0
    %v2189 = vadd.f32 0.0, %v2188
    %v2190 = vpop.f32.mrf.mxu0
    %v2191 = vadd.f32 0.0, %v2190
    %2192 = vmatprep.mubr.bf16.mxu0 0
    %2193 = vmatmul.mubr.bf16.gmra.mxu0 %v2064
    %v2194 = vpop.f32.mrf.mxu0
    %v2195 = vadd.f32 0.0, %v2194
    %v2196 = vpop.f32.mrf.mxu0
    %v2197 = vadd.f32 0.0, %v2196
    %v2198 = vpop.f32.mrf.mxu0
    %v2199 = vadd.f32 0.0, %v2198
    %v2200 = vpop.f32.mrf.mxu0
    %v2201 = vadd.f32 0.0, %v2200
    %2202 = vmatprep.mubr.bf16.mxu0 0
    %2203 = vmatmul.mubr.bf16.gmra.mxu0 %v2067
    %v2204 = vpop.f32.mrf.mxu0
    %v2205 = vadd.f32 0.0, %v2204
    %v2206 = vpop.f32.mrf.mxu0
    %v2207 = vadd.f32 0.0, %v2206
    %v2208 = vpop.f32.mrf.mxu0
    %v2209 = vpop.f32.mrf.mxu0
    %2210 = vdwg.mxu0
    %v2211 = vadd.f32 %v2011, %v2104
    %v2212 = vadd.f32 %v2012, %v2106
    %v2213 = vadd.f32 %v2013, %v2175
    %v2214 = vadd.f32 %v2014, %v2177
    %v2215 = vadd.f32 %v2015, %v2108
    %v2216 = vadd.f32 %v2016, %v2110
    %v2217 = vadd.f32 %v2017, %v2179
    %v2218 = vadd.f32 %v2018, %v2181
    %v2219 = vadd.f32 %v2019, %v2114
    %v2220 = vadd.f32 %v2020, %v2116
    %v2221 = vadd.f32 %v2021, %v2185
    %v2222 = vadd.f32 %v2022, %v2187
    %v2223 = vadd.f32 %v2023, %v2118
    %v2224 = vadd.f32 %v2024, %v2120
    %v2225 = vadd.f32 %v2025, %v2189
    %v2226 = vadd.f32 %v2026, %v2191
    %v2227 = vadd.f32 %v2027, %v2124
    %v2228 = vadd.f32 %v2028, %v2126
    %v2229 = vadd.f32 %v2029, %v2195
    %v2230 = vadd.f32 %v2030, %v2197
    %v2231 = vadd.f32 %v2031, %v2128
    %v2232 = vadd.f32 %v2032, %v2130
    %v2233 = vadd.f32 %v2033, %v2199
    %v2234 = vadd.f32 %v2034, %v2201
    %v2235 = vadd.f32 %v2035, %v2134
    %v2236 = vadd.f32 %v2036, %v2136
    %v2237 = vadd.f32 %v2037, %v2205
    %v2238 = vadd.f32 %v2038, %v2207
    %v2239 = vmax.f32 %v2211, %v2213
    %v2240 = vmax.f32 %v2212, %v2214
    %v2241 = vmax.f32 %v2215, %v2217
    %v2242 = vmax.f32 %v2216, %v2218
    %v2243 = vmax.f32 %v2219, %v2221
    %v2244 = vmax.f32 %v2220, %v2222
    %v2245 = vmax.f32 %v2223, %v2225
    %v2246 = vmax.f32 %v2224, %v2226
    %v2247 = vmax.f32 %v2227, %v2229
    %v2248 = vmax.f32 %v2228, %v2230
    %v2249 = vmax.f32 %v2231, %v2233
    %v2250 = vmax.f32 %v2232, %v2234
    %v2251 = vmax.f32 %v2235, %v2237
    %v2252 = vmax.f32 %v2236, %v2238
    %v2253 = vmax.f32 %v1401, %v2239
    %v2254 = vmax.f32 %v1402, %v2240
    %v2255 = vmax.f32 %v1403, %v2241
    %v2256 = vmax.f32 %v1404, %v2242
    %v2257 = vmax.f32 %v1405, %v2243
    %v2258 = vmax.f32 %v1406, %v2244
    %v2259 = vmax.f32 %v1407, %v2245
    %v2260 = vmax.f32 %v1408, %v2246
    %v2261 = vmax.f32 %v1409, %v2247
    %v2262 = vmax.f32 %v1410, %v2248
    %v2263 = vmax.f32 %v1411, %v2249
    %v2264 = vmax.f32 %v1412, %v2250
    %v2265 = vmax.f32 %v1413, %v2251
    %v2266 = vmax.f32 %v1414, %v2252
    %v2267 = vld [vmem:[#allocation5] sm:$0x3]
    %v2269 = vlaneseq
    %v2270 = vshrl.u32 %v2269, 7
    %v2271 = vsub.s32 0, %v2270
    %v2272 = vrot.slane %v2267, %v2271
    %v2273 = vlaneseq
    %v2274 = vshrl.u32 %v2273, 7
    %v2275 = vsub.s32 1, %v2274
    %v2276 = vrot.slane %v2267, %v2275
    %v2279 = vadd.f32 %v2253, %v2272
    %v2280 = vadd.f32 %v2254, %v2276
    %v2281 = vadd.f32 %v2255, %v2272
    %v2282 = vadd.f32 %v2256, %v2276
    %v2283 = vadd.f32 %v2257, %v2272
    %v2284 = vadd.f32 %v2258, %v2276
    %v2285 = vadd.f32 %v2259, %v2272
    %v2286 = vadd.f32 %v2260, %v2276
    %v2287 = vadd.f32 %v2261, %v2272
    %v2288 = vadd.f32 %v2262, %v2276
    %v2289 = vadd.f32 %v2263, %v2272
    %v2290 = vadd.f32 %v2264, %v2276
    %v2291 = vadd.f32 %v2265, %v2272
    %v2292 = vadd.f32 %v2266, %v2276
    %v2293 = vmax.f32 %v2279, 0.0
    %v2294 = vmax.f32 %v2280, 0.0
    %v2295 = vmax.f32 %v2281, 0.0
    %v2296 = vmax.f32 %v2282, 0.0
    %v2297 = vmax.f32 %v2283, 0.0
    %v2298 = vmax.f32 %v2284, 0.0
    %v2299 = vmax.f32 %v2285, 0.0
    %v2300 = vmax.f32 %v2286, 0.0
    %v2301 = vmax.f32 %v2287, 0.0
    %v2302 = vmax.f32 %v2288, 0.0
    %v2303 = vmax.f32 %v2289, 0.0
    %v2304 = vmax.f32 %v2290, 0.0
    %v2305 = vmax.f32 %v2291, 0.0
    %v2306 = vmax.f32 %v2292, 0.0
    %v2307 = vpack.c.bf16 %v2293, %v2293
    %v2308 = vpack.c.bf16 %v2294, %v2294
    %v2309 = vpack.c.bf16 %v2295, %v2295
    %v2310 = vpack.c.bf16 %v2296, %v2296
    %v2311 = vpack.c.bf16 %v2297, %v2297
    %v2312 = vpack.c.bf16 %v2298, %v2298
    %v2313 = vpack.c.bf16 %v2299, %v2299
    %v2314 = vpack.c.bf16 %v2300, %v2300
    %v2315 = vpack.c.bf16 %v2301, %v2301
    %v2316 = vpack.c.bf16 %v2302, %v2302
    %v2317 = vpack.c.bf16 %v2303, %v2303
    %v2318 = vpack.c.bf16 %v2304, %v2304
    %v2319 = vpack.c.bf16 %v2305, %v2305
    %v2320 = vpack.c.bf16 %v2306, %v2306
    %v2335 = vunpack.c.l.b16 %v2307
    %v2336 = vunpack.c.l.b16 %v2308
    %v2337 = vunpack.c.l.b16 %v2309
    %v2338 = vunpack.c.l.b16 %v2310
    %v2339 = vunpack.c.l.b16 %v2311
    %v2340 = vunpack.c.l.b16 %v2312
    %v2341 = vunpack.c.l.b16 %v2313
    %v2342 = vunpack.c.l.b16 %v2314
    %v2343 = vunpack.c.l.b16 %v2315
    %v2344 = vunpack.c.l.b16 %v2316
    %v2345 = vunpack.c.l.b16 %v2317
    %v2346 = vunpack.c.l.b16 %v2318
    %v2347 = vunpack.c.l.b16 %v2319
    %v2348 = vunpack.c.l.b16 %v2320
    %v2349 = vpack.c.b16 %v2336, %v2335
    %v2350 = vpack.c.b16 %v2338, %v2337
    %v2351 = vpack.c.b16 %v2340, %v2339
    %v2352 = vpack.c.b16 %v2342, %v2341
    %v2353 = vpack.c.b16 %v2344, %v2343
    %v2354 = vpack.c.b16 %v2346, %v2345
    %v2355 = vpack.c.b16 %v2348, %v2347
    %s2363 = scalar_lea.vmem [#allocation2], 8
    %2364 = vst [vmem:[%s2363] sm:$0xff] %v2349
    %2365 = vst [vmem:[%s2363 + $0x8] sm:$0xff] %v2350
    %2366 = vst [vmem:[%s2363 + $0x10] sm:$0xff] %v2351
    %2367 = vst [vmem:[%s2363 + $0x18] sm:$0xff] %v2352
    %2368 = vst [vmem:[%s2363 + $0x20] sm:$0xff] %v2353
    %2369 = vst [vmem:[%s2363 + $0x28] sm:$0xff] %v2354
    %2370 = vst [vmem:[%s2363 + $0x30] sm:$0xff] %v2355
    %v2371 = vld [vmem:[#allocation3] sm:$0xff]
    %v2372 = vld [vmem:[#allocation3 + $0x8] sm:$0xff]
    %v2373 = vld [vmem:[#allocation3 + $0x10] sm:$0xff]
    %v2374 = vld [vmem:[#allocation3 + $0x18] sm:$0xff]
    %v2375 = vld [vmem:[#allocation3 + $0x20] sm:$0xff]
    %v2376 = vld [vmem:[#allocation3 + $0x28] sm:$0xff]
    %v2377 = vld [vmem:[#allocation3 + $0x30] sm:$0x33]
    %v2378 = vld [vmem:[#allocation3 + $0x38] sm:$0x33]
    %v2379 = vld [vmem:[%s179] sm:$0xff]
    %v2380 = vld [vmem:[%s179 + $0x8] sm:$0xff]
    %v2381 = vld [vmem:[%s179 + $0x10] sm:$0xff]
    %v2382 = vld [vmem:[%s179 + $0x18] sm:$0xff]
    %v2383 = vld [vmem:[%s179 + $0x20] sm:$0xff]
    %v2384 = vld [vmem:[%s179 + $0x28] sm:$0xff]
    %v2385 = vld [vmem:[%s179 + $0x30] sm:$0x33]
    %v2386 = vld [vmem:[%s179 + $0x38] sm:$0x33]
    %v2395 = vunpack.c.l.b16 %v2379
    %v2396 = vunpack.c.h.b16 %v2379
    %v2397 = vunpack.c.l.b16 %v2380
    %v2398 = vunpack.c.h.b16 %v2380
    %v2399 = vunpack.c.l.b16 %v2381
    %v2400 = vunpack.c.h.b16 %v2381
    %v2401 = vunpack.c.l.b16 %v2382
    %v2402 = vunpack.c.h.b16 %v2382
    %v2403 = vunpack.c.l.b16 %v2383
    %v2404 = vunpack.c.h.b16 %v2383
    %v2405 = vunpack.c.l.b16 %v2384
    %v2406 = vunpack.c.h.b16 %v2384
    %v2407 = vunpack.c.l.b16 %v2385
    %v2408 = vunpack.c.h.b16 %v2385
    %v2409 = vunpack.c.l.b16 %v2386
    %v2410 = vunpack.c.h.b16 %v2386
    %v2411 = vpack.c.b16 %v2399, %v2395
    %v2412 = vpack.c.b16 %v2400, %v2396
    %v2413 = vpack.c.b16 %v2401, %v2397
    %v2414 = vpack.c.b16 %v2402, %v2398
    %v2415 = vpack.c.b16 %v2407, %v2403
    %v2416 = vpack.c.b16 %v2408, %v2404
    %v2417 = vpack.c.b16 %v2409, %v2405
    %v2418 = vpack.c.b16 %v2410, %v2406
    %v2424 = vsel %vm255, %v2415, 0
    %v2427 = vsel %vm255, %v2416, 0
    %v2430 = vsel %vm255, %v2417, 0
    %v2433 = vsel %vm255, %v2418, 0
    %2435 = vmatprep.subr.bf16.mxu0 0
    %2436 = vmatpush1.bf16.msra.mxu0 0
    %2437 = vmatprep.subr.bf16.mxu0 0
    %2438 = vmatpush1.bf16.msra.mxu0 0
    %2439 = vmatprep.subr.bf16.mxu0 0
    %2440 = vmatpush1.bf16.msra.mxu0 0
    %2441 = vmatprep.subr.bf16.mxu0 0
    %2442 = vmatpush1.bf16.msra.mxu0 0
    %2443 = vmatprep.subr.bf16.mxu0 0
    %2444 = vmatpush1.bf16.msra.mxu0 0
    %2445 = vmatprep.subr.bf16.mxu0 0
    %2446 = vmatpush1.bf16.msra.mxu0 0
    %2447 = vmatprep.subr.bf16.mxu0 %v2427
    %2448 = vmatpush1.bf16.msra.mxu0 %v2424
    %2449 = vmatprep.subr.bf16.mxu0 %v2412
    %2450 = vmatpush1.bf16.msra.mxu0 %v2411
    %2451 = vmatprep.subr.bf16.mxu0 0
    %2452 = vmatpush2.bf16.msra.mxu0 0
    %2453 = vmatprep.subr.bf16.mxu0 0
    %2454 = vmatpush2.bf16.msra.mxu0 0
    %2455 = vmatprep.subr.bf16.mxu0 0
    %2456 = vmatpush2.bf16.msra.mxu0 0
    %2457 = vmatprep.subr.bf16.mxu0 0
    %2458 = vmatpush2.bf16.msra.mxu0 0
    %2459 = vmatprep.subr.bf16.mxu0 0
    %2460 = vmatpush2.bf16.msra.mxu0 0
    %2461 = vmatprep.subr.bf16.mxu0 0
    %2462 = vmatpush2.bf16.msra.mxu0 0
    %2463 = vmatprep.subr.bf16.mxu0 0
    %2464 = vmatpush2.bf16.msra.mxu0 0
    %2465 = vmatprep.subr.bf16.mxu0 0
    %2466 = vmatpush2.bf16.msra.mxu0 0
    %2467 = vmatprep.mubr.bf16.mxu0 0
    %2468 = vmatmul.mubr.bf16.gmra.mxu0 %v951
    %v2469 = vpop.f32.mrf.mxu0
    %v2470 = vadd.f32 0.0, %v2469
    %v2471 = vpop.f32.mrf.mxu0
    %v2472 = vadd.f32 0.0, %v2471
    %v2473 = vpop.f32.mrf.mxu0
    %v2474 = vadd.f32 0.0, %v2473
    %v2475 = vpop.f32.mrf.mxu0
    %v2476 = vadd.f32 0.0, %v2475
    %2477 = vmatprep.mubr.bf16.mxu0 0
    %2478 = vmatmul.mubr.bf16.gmra.mxu0 %v954
    %v2479 = vpop.f32.mrf.mxu0
    %v2480 = vadd.f32 0.0, %v2479
    %v2481 = vpop.f32.mrf.mxu0
    %v2482 = vadd.f32 0.0, %v2481
    %v2483 = vpop.f32.mrf.mxu0
    %v2484 = vadd.f32 0.0, %v2483
    %v2485 = vpop.f32.mrf.mxu0
    %v2486 = vadd.f32 0.0, %v2485
    %2487 = vmatprep.mubr.bf16.mxu0 0
    %2488 = vmatmul.mubr.bf16.gmra.mxu0 %v957
    %v2489 = vpop.f32.mrf.mxu0
    %v2490 = vadd.f32 0.0, %v2489
    %v2491 = vpop.f32.mrf.mxu0
    %v2492 = vadd.f32 0.0, %v2491
    %v2493 = vpop.f32.mrf.mxu0
    %v2494 = vadd.f32 0.0, %v2493
    %v2495 = vpop.f32.mrf.mxu0
    %v2496 = vadd.f32 0.0, %v2495
    %2497 = vmatprep.mubr.bf16.mxu0 0
    %2498 = vmatmul.mubr.bf16.gmra.mxu0 %v960
    %v2499 = vpop.f32.mrf.mxu0
    %v2500 = vadd.f32 0.0, %v2499
    %v2501 = vpop.f32.mrf.mxu0
    %v2502 = vadd.f32 0.0, %v2501
    %v2503 = vpop.f32.mrf.mxu0
    %v2504 = vpop.f32.mrf.mxu0
    %2505 = vdwg.mxu0
    %2506 = vmatprep.subr.bf16.mxu0 0
    %2507 = vmatpush1.bf16.msra.mxu0 0
    %2508 = vmatprep.subr.bf16.mxu0 0
    %2509 = vmatpush1.bf16.msra.mxu0 0
    %2510 = vmatprep.subr.bf16.mxu0 0
    %2511 = vmatpush1.bf16.msra.mxu0 0
    %2512 = vmatprep.subr.bf16.mxu0 0
    %2513 = vmatpush1.bf16.msra.mxu0 0
    %2514 = vmatprep.subr.bf16.mxu0 0
    %2515 = vmatpush1.bf16.msra.mxu0 0
    %2516 = vmatprep.subr.bf16.mxu0 0
    %2517 = vmatpush1.bf16.msra.mxu0 0
    %2518 = vmatprep.subr.bf16.mxu0 %v2433
    %2519 = vmatpush1.bf16.msra.mxu0 %v2430
    %2520 = vmatprep.subr.bf16.mxu0 %v2414
    %2521 = vmatpush1.bf16.msra.mxu0 %v2413
    %2522 = vmatprep.subr.bf16.mxu0 0
    %2523 = vmatpush2.bf16.msra.mxu0 0
    %2524 = vmatprep.subr.bf16.mxu0 0
    %2525 = vmatpush2.bf16.msra.mxu0 0
    %2526 = vmatprep.subr.bf16.mxu0 0
    %2527 = vmatpush2.bf16.msra.mxu0 0
    %2528 = vmatprep.subr.bf16.mxu0 0
    %2529 = vmatpush2.bf16.msra.mxu0 0
    %2530 = vmatprep.subr.bf16.mxu0 0
    %2531 = vmatpush2.bf16.msra.mxu0 0
    %2532 = vmatprep.subr.bf16.mxu0 0
    %2533 = vmatpush2.bf16.msra.mxu0 0
    %2534 = vmatprep.subr.bf16.mxu0 0
    %2535 = vmatpush2.bf16.msra.mxu0 0
    %2536 = vmatprep.subr.bf16.mxu0 0
    %2537 = vmatpush2.bf16.msra.mxu0 0
    %2538 = vmatprep.mubr.bf16.mxu0 0
    %2539 = vmatmul.mubr.bf16.gmra.mxu0 %v951
    %v2540 = vpop.f32.mrf.mxu0
    %v2541 = vadd.f32 0.0, %v2540
    %v2542 = vpop.f32.mrf.mxu0
    %v2543 = vadd.f32 0.0, %v2542
    %v2544 = vpop.f32.mrf.mxu0
    %v2545 = vadd.f32 0.0, %v2544
    %v2546 = vpop.f32.mrf.mxu0
    %v2547 = vadd.f32 0.0, %v2546
    %2548 = vmatprep.mubr.bf16.mxu0 0
    %2549 = vmatmul.mubr.bf16.gmra.mxu0 %v954
    %v2550 = vpop.f32.mrf.mxu0
    %v2551 = vadd.f32 0.0, %v2550
    %v2552 = vpop.f32.mrf.mxu0
    %v2553 = vadd.f32 0.0, %v2552
    %v2554 = vpop.f32.mrf.mxu0
    %v2555 = vadd.f32 0.0, %v2554
    %v2556 = vpop.f32.mrf.mxu0
    %v2557 = vadd.f32 0.0, %v2556
    %2558 = vmatprep.mubr.bf16.mxu0 0
    %2559 = vmatmul.mubr.bf16.gmra.mxu0 %v957
    %v2560 = vpop.f32.mrf.mxu0
    %v2561 = vadd.f32 0.0, %v2560
    %v2562 = vpop.f32.mrf.mxu0
    %v2563 = vadd.f32 0.0, %v2562
    %v2564 = vpop.f32.mrf.mxu0
    %v2565 = vadd.f32 0.0, %v2564
    %v2566 = vpop.f32.mrf.mxu0
    %v2567 = vadd.f32 0.0, %v2566
    %2568 = vmatprep.mubr.bf16.mxu0 0
    %2569 = vmatmul.mubr.bf16.gmra.mxu0 %v960
    %v2570 = vpop.f32.mrf.mxu0
    %v2571 = vadd.f32 0.0, %v2570
    %v2572 = vpop.f32.mrf.mxu0
    %v2573 = vadd.f32 0.0, %v2572
    %v2574 = vpop.f32.mrf.mxu0
    %v2575 = vpop.f32.mrf.mxu0
    %2576 = vdwg.mxu0
    %v2585 = vunpack.c.l.b16 %v2371
    %v2586 = vunpack.c.h.b16 %v2371
    %v2587 = vunpack.c.l.b16 %v2372
    %v2588 = vunpack.c.h.b16 %v2372
    %v2589 = vunpack.c.l.b16 %v2373
    %v2590 = vunpack.c.h.b16 %v2373
    %v2591 = vunpack.c.l.b16 %v2374
    %v2592 = vunpack.c.h.b16 %v2374
    %v2593 = vunpack.c.l.b16 %v2375
    %v2594 = vunpack.c.h.b16 %v2375
    %v2595 = vunpack.c.l.b16 %v2376
    %v2596 = vunpack.c.h.b16 %v2376
    %v2597 = vunpack.c.l.b16 %v2377
    %v2598 = vunpack.c.h.b16 %v2377
    %v2599 = vunpack.c.l.b16 %v2378
    %v2600 = vunpack.c.h.b16 %v2378
    %v2601 = vpack.c.b16 %v2589, %v2585
    %v2602 = vpack.c.b16 %v2590, %v2586
    %v2603 = vpack.c.b16 %v2591, %v2587
    %v2604 = vpack.c.b16 %v2592, %v2588
    %v2605 = vpack.c.b16 %v2597, %v2593
    %v2606 = vpack.c.b16 %v2598, %v2594
    %v2607 = vpack.c.b16 %v2599, %v2595
    %v2608 = vpack.c.b16 %v2600, %v2596
    %v2614 = vsel %vm255, %v2605, 0
    %v2617 = vsel %vm255, %v2606, 0
    %v2620 = vsel %vm255, %v2607, 0
    %v2623 = vsel %vm255, %v2608, 0
    %2625 = vmatprep.subr.bf16.mxu0 0
    %2626 = vmatpush1.bf16.msra.mxu0 0
    %2627 = vmatprep.subr.bf16.mxu0 0
    %2628 = vmatpush1.bf16.msra.mxu0 0
    %2629 = vmatprep.subr.bf16.mxu0 0
    %2630 = vmatpush1.bf16.msra.mxu0 0
    %2631 = vmatprep.subr.bf16.mxu0 0
    %2632 = vmatpush1.bf16.msra.mxu0 0
    %2633 = vmatprep.subr.bf16.mxu0 0
    %2634 = vmatpush1.bf16.msra.mxu0 0
    %2635 = vmatprep.subr.bf16.mxu0 0
    %2636 = vmatpush1.bf16.msra.mxu0 0
    %2637 = vmatprep.subr.bf16.mxu0 %v2617
    %2638 = vmatpush1.bf16.msra.mxu0 %v2614
    %2639 = vmatprep.subr.bf16.mxu0 %v2602
    %2640 = vmatpush1.bf16.msra.mxu0 %v2601
    %2641 = vmatprep.subr.bf16.mxu0 0
    %2642 = vmatpush2.bf16.msra.mxu0 0
    %2643 = vmatprep.subr.bf16.mxu0 0
    %2644 = vmatpush2.bf16.msra.mxu0 0
    %2645 = vmatprep.subr.bf16.mxu0 0
    %2646 = vmatpush2.bf16.msra.mxu0 0
    %2647 = vmatprep.subr.bf16.mxu0 0
    %2648 = vmatpush2.bf16.msra.mxu0 0
    %2649 = vmatprep.subr.bf16.mxu0 0
    %2650 = vmatpush2.bf16.msra.mxu0 0
    %2651 = vmatprep.subr.bf16.mxu0 0
    %2652 = vmatpush2.bf16.msra.mxu0 0
    %2653 = vmatprep.subr.bf16.mxu0 0
    %2654 = vmatpush2.bf16.msra.mxu0 0
    %2655 = vmatprep.subr.bf16.mxu0 0
    %2656 = vmatpush2.bf16.msra.mxu0 0
    %2657 = vmatprep.mubr.bf16.mxu0 0
    %2658 = vmatmul.mubr.bf16.gmra.mxu0 %v694
    %v2659 = vpop.f32.mrf.mxu0
    %v2660 = vadd.f32 %v2470, %v2659
    %v2661 = vpop.f32.mrf.mxu0
    %v2662 = vadd.f32 %v2472, %v2661
    %v2663 = vpop.f32.mrf.mxu0
    %v2664 = vadd.f32 %v2474, %v2663
    %v2665 = vpop.f32.mrf.mxu0
    %v2666 = vadd.f32 %v2476, %v2665
    %2667 = vmatprep.mubr.bf16.mxu0 0
    %2668 = vmatmul.mubr.bf16.gmra.mxu0 %v697
    %v2669 = vpop.f32.mrf.mxu0
    %v2670 = vadd.f32 %v2480, %v2669
    %v2671 = vpop.f32.mrf.mxu0
    %v2672 = vadd.f32 %v2482, %v2671
    %v2673 = vpop.f32.mrf.mxu0
    %v2674 = vadd.f32 %v2484, %v2673
    %v2675 = vpop.f32.mrf.mxu0
    %v2676 = vadd.f32 %v2486, %v2675
    %2677 = vmatprep.mubr.bf16.mxu0 0
    %2678 = vmatmul.mubr.bf16.gmra.mxu0 %v700
    %v2679 = vpop.f32.mrf.mxu0
    %v2680 = vadd.f32 %v2490, %v2679
    %v2681 = vpop.f32.mrf.mxu0
    %v2682 = vadd.f32 %v2492, %v2681
    %v2683 = vpop.f32.mrf.mxu0
    %v2684 = vadd.f32 %v2494, %v2683
    %v2685 = vpop.f32.mrf.mxu0
    %v2686 = vadd.f32 %v2496, %v2685
    %2687 = vmatprep.mubr.bf16.mxu0 0
    %2688 = vmatmul.mubr.bf16.gmra.mxu0 %v703
    %v2689 = vpop.f32.mrf.mxu0
    %v2690 = vadd.f32 %v2500, %v2689
    %v2691 = vpop.f32.mrf.mxu0
    %v2692 = vadd.f32 %v2502, %v2691
    %v2693 = vpop.f32.mrf.mxu0
    %v2694 = vpop.f32.mrf.mxu0
    %2695 = vdwg.mxu0
    %2696 = vmatprep.subr.bf16.mxu0 0
    %2697 = vmatpush1.bf16.msra.mxu0 0
    %2698 = vmatprep.subr.bf16.mxu0 0
    %2699 = vmatpush1.bf16.msra.mxu0 0
    %2700 = vmatprep.subr.bf16.mxu0 0
    %2701 = vmatpush1.bf16.msra.mxu0 0
    %2702 = vmatprep.subr.bf16.mxu0 0
    %2703 = vmatpush1.bf16.msra.mxu0 0
    %2704 = vmatprep.subr.bf16.mxu0 0
    %2705 = vmatpush1.bf16.msra.mxu0 0
    %2706 = vmatprep.subr.bf16.mxu0 0
    %2707 = vmatpush1.bf16.msra.mxu0 0
    %2708 = vmatprep.subr.bf16.mxu0 %v2623
    %2709 = vmatpush1.bf16.msra.mxu0 %v2620
    %2710 = vmatprep.subr.bf16.mxu0 %v2604
    %2711 = vmatpush1.bf16.msra.mxu0 %v2603
    %2712 = vmatprep.subr.bf16.mxu0 0
    %2713 = vmatpush2.bf16.msra.mxu0 0
    %2714 = vmatprep.subr.bf16.mxu0 0
    %2715 = vmatpush2.bf16.msra.mxu0 0
    %2716 = vmatprep.subr.bf16.mxu0 0
    %2717 = vmatpush2.bf16.msra.mxu0 0
    %2718 = vmatprep.subr.bf16.mxu0 0
    %2719 = vmatpush2.bf16.msra.mxu0 0
    %2720 = vmatprep.subr.bf16.mxu0 0
    %2721 = vmatpush2.bf16.msra.mxu0 0
    %2722 = vmatprep.subr.bf16.mxu0 0
    %2723 = vmatpush2.bf16.msra.mxu0 0
    %2724 = vmatprep.subr.bf16.mxu0 0
    %2725 = vmatpush2.bf16.msra.mxu0 0
    %2726 = vmatprep.subr.bf16.mxu0 0
    %2727 = vmatpush2.bf16.msra.mxu0 0
    %2728 = vmatprep.mubr.bf16.mxu0 0
    %2729 = vmatmul.mubr.bf16.gmra.mxu0 %v694
    %v2730 = vpop.f32.mrf.mxu0
    %v2731 = vadd.f32 %v2541, %v2730
    %v2732 = vpop.f32.mrf.mxu0
    %v2733 = vadd.f32 %v2543, %v2732
    %v2734 = vpop.f32.mrf.mxu0
    %v2735 = vadd.f32 %v2545, %v2734
    %v2736 = vpop.f32.mrf.mxu0
    %v2737 = vadd.f32 %v2547, %v2736
    %2738 = vmatprep.mubr.bf16.mxu0 0
    %2739 = vmatmul.mubr.bf16.gmra.mxu0 %v697
    %v2740 = vpop.f32.mrf.mxu0
    %v2741 = vadd.f32 %v2551, %v2740
    %v2742 = vpop.f32.mrf.mxu0
    %v2743 = vadd.f32 %v2553, %v2742
    %v2744 = vpop.f32.mrf.mxu0
    %v2745 = vadd.f32 %v2555, %v2744
    %v2746 = vpop.f32.mrf.mxu0
    %v2747 = vadd.f32 %v2557, %v2746
    %2748 = vmatprep.mubr.bf16.mxu0 0
    %2749 = vmatmul.mubr.bf16.gmra.mxu0 %v700
    %v2750 = vpop.f32.mrf.mxu0
    %v2751 = vadd.f32 %v2561, %v2750
    %v2752 = vpop.f32.mrf.mxu0
    %v2753 = vadd.f32 %v2563, %v2752
    %v2754 = vpop.f32.mrf.mxu0
    %v2755 = vadd.f32 %v2565, %v2754
    %v2756 = vpop.f32.mrf.mxu0
    %v2757 = vadd.f32 %v2567, %v2756
    %2758 = vmatprep.mubr.bf16.mxu0 0
    %2759 = vmatmul.mubr.bf16.gmra.mxu0 %v703
    %v2760 = vpop.f32.mrf.mxu0
    %v2761 = vadd.f32 %v2571, %v2760
    %v2762 = vpop.f32.mrf.mxu0
    %v2763 = vadd.f32 %v2573, %v2762
    %v2764 = vpop.f32.mrf.mxu0
    %v2765 = vpop.f32.mrf.mxu0
    %2766 = vdwg.mxu0
    %v2767 = vld [vmem:[%s630] sm:$0xff]
    %v2768 = vld [vmem:[%s630 + $0x8] sm:$0xff]
    %v2769 = vld [vmem:[%s630 + $0x10] sm:$0xff]
    %v2770 = vld [vmem:[%s630 + $0x18] sm:$0xff]
    %v2771 = vld [vmem:[%s630 + $0x20] sm:$0xff]
    %v2772 = vld [vmem:[%s630 + $0x28] sm:$0xff]
    %v2773 = vld [vmem:[%s630 + $0x30] sm:$0x33]
    %v2774 = vld [vmem:[%s630 + $0x38] sm:$0x33]
    %v2783 = vunpack.c.l.b16 %v2767
    %v2784 = vunpack.c.h.b16 %v2767
    %v2785 = vunpack.c.l.b16 %v2768
    %v2786 = vunpack.c.h.b16 %v2768
    %v2787 = vunpack.c.l.b16 %v2769
    %v2788 = vunpack.c.h.b16 %v2769
    %v2789 = vunpack.c.l.b16 %v2770
    %v2790 = vunpack.c.h.b16 %v2770
    %v2791 = vunpack.c.l.b16 %v2771
    %v2792 = vunpack.c.h.b16 %v2771
    %v2793 = vunpack.c.l.b16 %v2772
    %v2794 = vunpack.c.h.b16 %v2772
    %v2795 = vunpack.c.l.b16 %v2773
    %v2796 = vunpack.c.h.b16 %v2773
    %v2797 = vunpack.c.l.b16 %v2774
    %v2798 = vunpack.c.h.b16 %v2774
    %v2799 = vpack.c.b16 %v2787, %v2783
    %v2800 = vpack.c.b16 %v2788, %v2784
    %v2801 = vpack.c.b16 %v2789, %v2785
    %v2802 = vpack.c.b16 %v2790, %v2786
    %v2803 = vpack.c.b16 %v2795, %v2791
    %v2804 = vpack.c.b16 %v2796, %v2792
    %v2805 = vpack.c.b16 %v2797, %v2793
    %v2806 = vpack.c.b16 %v2798, %v2794
    %v2812 = vsel %vm255, %v2803, 0
    %v2815 = vsel %vm255, %v2804, 0
    %v2818 = vsel %vm255, %v2805, 0
    %v2821 = vsel %vm255, %v2806, 0
    %2823 = vmatprep.subr.bf16.mxu0 0
    %2824 = vmatpush1.bf16.msra.mxu0 0
    %2825 = vmatprep.subr.bf16.mxu0 0
    %2826 = vmatpush1.bf16.msra.mxu0 0
    %2827 = vmatprep.subr.bf16.mxu0 0
    %2828 = vmatpush1.bf16.msra.mxu0 0
    %2829 = vmatprep.subr.bf16.mxu0 0
    %2830 = vmatpush1.bf16.msra.mxu0 0
    %2831 = vmatprep.subr.bf16.mxu0 0
    %2832 = vmatpush1.bf16.msra.mxu0 0
    %2833 = vmatprep.subr.bf16.mxu0 0
    %2834 = vmatpush1.bf16.msra.mxu0 0
    %2835 = vmatprep.subr.bf16.mxu0 %v2815
    %2836 = vmatpush1.bf16.msra.mxu0 %v2812
    %2837 = vmatprep.subr.bf16.mxu0 %v2800
    %2838 = vmatpush1.bf16.msra.mxu0 %v2799
    %2839 = vmatprep.subr.bf16.mxu0 0
    %2840 = vmatpush2.bf16.msra.mxu0 0
    %2841 = vmatprep.subr.bf16.mxu0 0
    %2842 = vmatpush2.bf16.msra.mxu0 0
    %2843 = vmatprep.subr.bf16.mxu0 0
    %2844 = vmatpush2.bf16.msra.mxu0 0
    %2845 = vmatprep.subr.bf16.mxu0 0
    %2846 = vmatpush2.bf16.msra.mxu0 0
    %2847 = vmatprep.subr.bf16.mxu0 0
    %2848 = vmatpush2.bf16.msra.mxu0 0
    %2849 = vmatprep.subr.bf16.mxu0 0
    %2850 = vmatpush2.bf16.msra.mxu0 0
    %2851 = vmatprep.subr.bf16.mxu0 0
    %2852 = vmatpush2.bf16.msra.mxu0 0
    %2853 = vmatprep.subr.bf16.mxu0 0
    %2854 = vmatpush2.bf16.msra.mxu0 0
    %2855 = vmatprep.mubr.bf16.mxu0 0
    %2856 = vmatmul.mubr.bf16.gmra.mxu0 %v1208
    %v2857 = vpop.f32.mrf.mxu0
    %v2858 = vadd.f32 0.0, %v2857
    %v2859 = vpop.f32.mrf.mxu0
    %v2860 = vadd.f32 0.0, %v2859
    %v2861 = vpop.f32.mrf.mxu0
    %v2862 = vadd.f32 0.0, %v2861
    %v2863 = vpop.f32.mrf.mxu0
    %v2864 = vadd.f32 0.0, %v2863
    %2865 = vmatprep.mubr.bf16.mxu0 0
    %2866 = vmatmul.mubr.bf16.gmra.mxu0 %v1211
    %v2867 = vpop.f32.mrf.mxu0
    %v2868 = vadd.f32 0.0, %v2867
    %v2869 = vpop.f32.mrf.mxu0
    %v2870 = vadd.f32 0.0, %v2869
    %v2871 = vpop.f32.mrf.mxu0
    %v2872 = vadd.f32 0.0, %v2871
    %v2873 = vpop.f32.mrf.mxu0
    %v2874 = vadd.f32 0.0, %v2873
    %2875 = vmatprep.mubr.bf16.mxu0 0
    %2876 = vmatmul.mubr.bf16.gmra.mxu0 %v1214
    %v2877 = vpop.f32.mrf.mxu0
    %v2878 = vadd.f32 0.0, %v2877
    %v2879 = vpop.f32.mrf.mxu0
    %v2880 = vadd.f32 0.0, %v2879
    %v2881 = vpop.f32.mrf.mxu0
    %v2882 = vadd.f32 0.0, %v2881
    %v2883 = vpop.f32.mrf.mxu0
    %v2884 = vadd.f32 0.0, %v2883
    %2885 = vmatprep.mubr.bf16.mxu0 0
    %2886 = vmatmul.mubr.bf16.gmra.mxu0 %v1217
    %v2887 = vpop.f32.mrf.mxu0
    %v2888 = vadd.f32 0.0, %v2887
    %v2889 = vpop.f32.mrf.mxu0
    %v2890 = vadd.f32 0.0, %v2889
    %v2891 = vpop.f32.mrf.mxu0
    %v2892 = vpop.f32.mrf.mxu0
    %2893 = vdwg.mxu0
    %2894 = vmatprep.subr.bf16.mxu0 0
    %2895 = vmatpush1.bf16.msra.mxu0 0
    %2896 = vmatprep.subr.bf16.mxu0 0
    %2897 = vmatpush1.bf16.msra.mxu0 0
    %2898 = vmatprep.subr.bf16.mxu0 0
    %2899 = vmatpush1.bf16.msra.mxu0 0
    %2900 = vmatprep.subr.bf16.mxu0 0
    %2901 = vmatpush1.bf16.msra.mxu0 0
    %2902 = vmatprep.subr.bf16.mxu0 0
    %2903 = vmatpush1.bf16.msra.mxu0 0
    %2904 = vmatprep.subr.bf16.mxu0 0
    %2905 = vmatpush1.bf16.msra.mxu0 0
    %2906 = vmatprep.subr.bf16.mxu0 %v2821
    %2907 = vmatpush1.bf16.msra.mxu0 %v2818
    %2908 = vmatprep.subr.bf16.mxu0 %v2802
    %2909 = vmatpush1.bf16.msra.mxu0 %v2801
    %2910 = vmatprep.subr.bf16.mxu0 0
    %2911 = vmatpush2.bf16.msra.mxu0 0
    %2912 = vmatprep.subr.bf16.mxu0 0
    %2913 = vmatpush2.bf16.msra.mxu0 0
    %2914 = vmatprep.subr.bf16.mxu0 0
    %2915 = vmatpush2.bf16.msra.mxu0 0
    %2916 = vmatprep.subr.bf16.mxu0 0
    %2917 = vmatpush2.bf16.msra.mxu0 0
    %2918 = vmatprep.subr.bf16.mxu0 0
    %2919 = vmatpush2.bf16.msra.mxu0 0
    %2920 = vmatprep.subr.bf16.mxu0 0
    %2921 = vmatpush2.bf16.msra.mxu0 0
    %2922 = vmatprep.subr.bf16.mxu0 0
    %2923 = vmatpush2.bf16.msra.mxu0 0
    %2924 = vmatprep.subr.bf16.mxu0 0
    %2925 = vmatpush2.bf16.msra.mxu0 0
    %2926 = vmatprep.mubr.bf16.mxu0 0
    %2927 = vmatmul.mubr.bf16.gmra.mxu0 %v1208
    %v2928 = vpop.f32.mrf.mxu0
    %v2929 = vadd.f32 0.0, %v2928
    %v2930 = vpop.f32.mrf.mxu0
    %v2931 = vadd.f32 0.0, %v2930
    %v2932 = vpop.f32.mrf.mxu0
    %v2933 = vadd.f32 0.0, %v2932
    %v2934 = vpop.f32.mrf.mxu0
    %v2935 = vadd.f32 0.0, %v2934
    %2936 = vmatprep.mubr.bf16.mxu0 0
    %2937 = vmatmul.mubr.bf16.gmra.mxu0 %v1211
    %v2938 = vpop.f32.mrf.mxu0
    %v2939 = vadd.f32 0.0, %v2938
    %v2940 = vpop.f32.mrf.mxu0
    %v2941 = vadd.f32 0.0, %v2940
    %v2942 = vpop.f32.mrf.mxu0
    %v2943 = vadd.f32 0.0, %v2942
    %v2944 = vpop.f32.mrf.mxu0
    %v2945 = vadd.f32 0.0, %v2944
    %2946 = vmatprep.mubr.bf16.mxu0 0
    %2947 = vmatmul.mubr.bf16.gmra.mxu0 %v1214
    %v2948 = vpop.f32.mrf.mxu0
    %v2949 = vadd.f32 0.0, %v2948
    %v2950 = vpop.f32.mrf.mxu0
    %v2951 = vadd.f32 0.0, %v2950
    %v2952 = vpop.f32.mrf.mxu0
    %v2953 = vadd.f32 0.0, %v2952
    %v2954 = vpop.f32.mrf.mxu0
    %v2955 = vadd.f32 0.0, %v2954
    %2956 = vmatprep.mubr.bf16.mxu0 0
    %2957 = vmatmul.mubr.bf16.gmra.mxu0 %v1217
    %v2958 = vpop.f32.mrf.mxu0
    %v2959 = vadd.f32 0.0, %v2958
    %v2960 = vpop.f32.mrf.mxu0
    %v2961 = vadd.f32 0.0, %v2960
    %v2962 = vpop.f32.mrf.mxu0
    %v2963 = vpop.f32.mrf.mxu0
    %2964 = vdwg.mxu0
    %v2965 = vadd.f32 %v2660, %v2858
    %v2966 = vadd.f32 %v2662, %v2860
    %v2967 = vadd.f32 %v2731, %v2929
    %v2968 = vadd.f32 %v2733, %v2931
    %v2969 = vadd.f32 %v2664, %v2862
    %v2970 = vadd.f32 %v2666, %v2864
    %v2971 = vadd.f32 %v2735, %v2933
    %v2972 = vadd.f32 %v2737, %v2935
    %v2973 = vadd.f32 %v2670, %v2868
    %v2974 = vadd.f32 %v2672, %v2870
    %v2975 = vadd.f32 %v2741, %v2939
    %v2976 = vadd.f32 %v2743, %v2941
    %v2977 = vadd.f32 %v2674, %v2872
    %v2978 = vadd.f32 %v2676, %v2874
    %v2979 = vadd.f32 %v2745, %v2943
    %v2980 = vadd.f32 %v2747, %v2945
    %v2981 = vadd.f32 %v2680, %v2878
    %v2982 = vadd.f32 %v2682, %v2880
    %v2983 = vadd.f32 %v2751, %v2949
    %v2984 = vadd.f32 %v2753, %v2951
    %v2985 = vadd.f32 %v2684, %v2882
    %v2986 = vadd.f32 %v2686, %v2884
    %v2987 = vadd.f32 %v2755, %v2953
    %v2988 = vadd.f32 %v2757, %v2955
    %v2989 = vadd.f32 %v2690, %v2888
    %v2990 = vadd.f32 %v2692, %v2890
    %v2991 = vadd.f32 %v2761, %v2959
    %v2992 = vadd.f32 %v2763, %v2961
    %v2993 = vld [vmem:[%s887] sm:$0xff]
    %v2994 = vld [vmem:[%s887 + $0x8] sm:$0xff]
    %v2995 = vld [vmem:[%s887 + $0x10] sm:$0xff]
    %v2996 = vld [vmem:[%s887 + $0x18] sm:$0xff]
    %v2997 = vld [vmem:[%s887 + $0x20] sm:$0xff]
    %v2998 = vld [vmem:[%s887 + $0x28] sm:$0xff]
    %v2999 = vld [vmem:[%s887 + $0x30] sm:$0x33]
    %v3000 = vld [vmem:[%s887 + $0x38] sm:$0x33]
    %v3009 = vunpack.c.l.b16 %v2993
    %v3010 = vunpack.c.h.b16 %v2993
    %v3011 = vunpack.c.l.b16 %v2994
    %v3012 = vunpack.c.h.b16 %v2994
    %v3013 = vunpack.c.l.b16 %v2995
    %v3014 = vunpack.c.h.b16 %v2995
    %v3015 = vunpack.c.l.b16 %v2996
    %v3016 = vunpack.c.h.b16 %v2996
    %v3017 = vunpack.c.l.b16 %v2997
    %v3018 = vunpack.c.h.b16 %v2997
    %v3019 = vunpack.c.l.b16 %v2998
    %v3020 = vunpack.c.h.b16 %v2998
    %v3021 = vunpack.c.l.b16 %v2999
    %v3022 = vunpack.c.h.b16 %v2999
    %v3023 = vunpack.c.l.b16 %v3000
    %v3024 = vunpack.c.h.b16 %v3000
    %v3025 = vpack.c.b16 %v3013, %v3009
    %v3026 = vpack.c.b16 %v3014, %v3010
    %v3027 = vpack.c.b16 %v3015, %v3011
    %v3028 = vpack.c.b16 %v3016, %v3012
    %v3029 = vpack.c.b16 %v3021, %v3017
    %v3030 = vpack.c.b16 %v3022, %v3018
    %v3031 = vpack.c.b16 %v3023, %v3019
    %v3032 = vpack.c.b16 %v3024, %v3020
    %v3038 = vsel %vm255, %v3029, 0
    %v3041 = vsel %vm255, %v3030, 0
    %v3044 = vsel %vm255, %v3031, 0
    %v3047 = vsel %vm255, %v3032, 0
    %3049 = vmatprep.subr.bf16.mxu0 0
    %3050 = vmatpush1.bf16.msra.mxu0 0
    %3051 = vmatprep.subr.bf16.mxu0 0
    %3052 = vmatpush1.bf16.msra.mxu0 0
    %3053 = vmatprep.subr.bf16.mxu0 0
    %3054 = vmatpush1.bf16.msra.mxu0 0
    %3055 = vmatprep.subr.bf16.mxu0 0
    %3056 = vmatpush1.bf16.msra.mxu0 0
    %3057 = vmatprep.subr.bf16.mxu0 0
    %3058 = vmatpush1.bf16.msra.mxu0 0
    %3059 = vmatprep.subr.bf16.mxu0 0
    %3060 = vmatpush1.bf16.msra.mxu0 0
    %3061 = vmatprep.subr.bf16.mxu0 %v3041
    %3062 = vmatpush1.bf16.msra.mxu0 %v3038
    %3063 = vmatprep.subr.bf16.mxu0 %v3026
    %3064 = vmatpush1.bf16.msra.mxu0 %v3025
    %3065 = vmatprep.subr.bf16.mxu0 0
    %3066 = vmatpush2.bf16.msra.mxu0 0
    %3067 = vmatprep.subr.bf16.mxu0 0
    %3068 = vmatpush2.bf16.msra.mxu0 0
    %3069 = vmatprep.subr.bf16.mxu0 0
    %3070 = vmatpush2.bf16.msra.mxu0 0
    %3071 = vmatprep.subr.bf16.mxu0 0
    %3072 = vmatpush2.bf16.msra.mxu0 0
    %3073 = vmatprep.subr.bf16.mxu0 0
    %3074 = vmatpush2.bf16.msra.mxu0 0
    %3075 = vmatprep.subr.bf16.mxu0 0
    %3076 = vmatpush2.bf16.msra.mxu0 0
    %3077 = vmatprep.subr.bf16.mxu0 0
    %3078 = vmatpush2.bf16.msra.mxu0 0
    %3079 = vmatprep.subr.bf16.mxu0 0
    %3080 = vmatpush2.bf16.msra.mxu0 0
    %3081 = vmatprep.mubr.bf16.mxu0 0
    %3082 = vmatmul.mubr.bf16.gmra.mxu0 %v2058
    %v3083 = vpop.f32.mrf.mxu0
    %v3084 = vadd.f32 0.0, %v3083
    %v3085 = vpop.f32.mrf.mxu0
    %v3086 = vadd.f32 0.0, %v3085
    %v3087 = vpop.f32.mrf.mxu0
    %v3088 = vadd.f32 0.0, %v3087
    %v3089 = vpop.f32.mrf.mxu0
    %v3090 = vadd.f32 0.0, %v3089
    %3091 = vmatprep.mubr.bf16.mxu0 0
    %3092 = vmatmul.mubr.bf16.gmra.mxu0 %v2061
    %v3093 = vpop.f32.mrf.mxu0
    %v3094 = vadd.f32 0.0, %v3093
    %v3095 = vpop.f32.mrf.mxu0
    %v3096 = vadd.f32 0.0, %v3095
    %v3097 = vpop.f32.mrf.mxu0
    %v3098 = vadd.f32 0.0, %v3097
    %v3099 = vpop.f32.mrf.mxu0
    %v3100 = vadd.f32 0.0, %v3099
    %3101 = vmatprep.mubr.bf16.mxu0 0
    %3102 = vmatmul.mubr.bf16.gmra.mxu0 %v2064
    %v3103 = vpop.f32.mrf.mxu0
    %v3104 = vadd.f32 0.0, %v3103
    %v3105 = vpop.f32.mrf.mxu0
    %v3106 = vadd.f32 0.0, %v3105
    %v3107 = vpop.f32.mrf.mxu0
    %v3108 = vadd.f32 0.0, %v3107
    %v3109 = vpop.f32.mrf.mxu0
    %v3110 = vadd.f32 0.0, %v3109
    %3111 = vmatprep.mubr.bf16.mxu0 0
    %3112 = vmatmul.mubr.bf16.gmra.mxu0 %v2067
    %v3113 = vpop.f32.mrf.mxu0
    %v3114 = vadd.f32 0.0, %v3113
    %v3115 = vpop.f32.mrf.mxu0
    %v3116 = vadd.f32 0.0, %v3115
    %v3117 = vpop.f32.mrf.mxu0
    %v3118 = vpop.f32.mrf.mxu0
    %3119 = vdwg.mxu0
    %3120 = vmatprep.subr.bf16.mxu0 0
    %3121 = vmatpush1.bf16.msra.mxu0 0
    %3122 = vmatprep.subr.bf16.mxu0 0
    %3123 = vmatpush1.bf16.msra.mxu0 0
    %3124 = vmatprep.subr.bf16.mxu0 0
    %3125 = vmatpush1.bf16.msra.mxu0 0
    %3126 = vmatprep.subr.bf16.mxu0 0
    %3127 = vmatpush1.bf16.msra.mxu0 0
    %3128 = vmatprep.subr.bf16.mxu0 0
    %3129 = vmatpush1.bf16.msra.mxu0 0
    %3130 = vmatprep.subr.bf16.mxu0 0
    %3131 = vmatpush1.bf16.msra.mxu0 0
    %3132 = vmatprep.subr.bf16.mxu0 %v3047
    %3133 = vmatpush1.bf16.msra.mxu0 %v3044
    %3134 = vmatprep.subr.bf16.mxu0 %v3028
    %3135 = vmatpush1.bf16.msra.mxu0 %v3027
    %3136 = vmatprep.subr.bf16.mxu0 0
    %3137 = vmatpush2.bf16.msra.mxu0 0
    %3138 = vmatprep.subr.bf16.mxu0 0
    %3139 = vmatpush2.bf16.msra.mxu0 0
    %3140 = vmatprep.subr.bf16.mxu0 0
    %3141 = vmatpush2.bf16.msra.mxu0 0
    %3142 = vmatprep.subr.bf16.mxu0 0
    %3143 = vmatpush2.bf16.msra.mxu0 0
    %3144 = vmatprep.subr.bf16.mxu0 0
    %3145 = vmatpush2.bf16.msra.mxu0 0
    %3146 = vmatprep.subr.bf16.mxu0 0
    %3147 = vmatpush2.bf16.msra.mxu0 0
    %3148 = vmatprep.subr.bf16.mxu0 0
    %3149 = vmatpush2.bf16.msra.mxu0 0
    %3150 = vmatprep.subr.bf16.mxu0 0
    %3151 = vmatpush2.bf16.msra.mxu0 0
    %3152 = vmatprep.mubr.bf16.mxu0 0
    %3153 = vmatmul.mubr.bf16.gmra.mxu0 %v2058
    %v3154 = vpop.f32.mrf.mxu0
    %v3155 = vadd.f32 0.0, %v3154
    %v3156 = vpop.f32.mrf.mxu0
    %v3157 = vadd.f32 0.0, %v3156
    %v3158 = vpop.f32.mrf.mxu0
    %v3159 = vadd.f32 0.0, %v3158
    %v3160 = vpop.f32.mrf.mxu0
    %v3161 = vadd.f32 0.0, %v3160
    %3162 = vmatprep.mubr.bf16.mxu0 0
    %3163 = vmatmul.mubr.bf16.gmra.mxu0 %v2061
    %v3164 = vpop.f32.mrf.mxu0
    %v3165 = vadd.f32 0.0, %v3164
    %v3166 = vpop.f32.mrf.mxu0
    %v3167 = vadd.f32 0.0, %v3166
    %v3168 = vpop.f32.mrf.mxu0
    %v3169 = vadd.f32 0.0, %v3168
    %v3170 = vpop.f32.mrf.mxu0
    %v3171 = vadd.f32 0.0, %v3170
    %3172 = vmatprep.mubr.bf16.mxu0 0
    %3173 = vmatmul.mubr.bf16.gmra.mxu0 %v2064
    %v3174 = vpop.f32.mrf.mxu0
    %v3175 = vadd.f32 0.0, %v3174
    %v3176 = vpop.f32.mrf.mxu0
    %v3177 = vadd.f32 0.0, %v3176
    %v3178 = vpop.f32.mrf.mxu0
    %v3179 = vadd.f32 0.0, %v3178
    %v3180 = vpop.f32.mrf.mxu0
    %v3181 = vadd.f32 0.0, %v3180
    %3182 = vmatprep.mubr.bf16.mxu0 0
    %3183 = vmatmul.mubr.bf16.gmra.mxu0 %v2067
    %v3184 = vpop.f32.mrf.mxu0
    %v3185 = vadd.f32 0.0, %v3184
    %v3186 = vpop.f32.mrf.mxu0
    %v3187 = vadd.f32 0.0, %v3186
    %v3188 = vpop.f32.mrf.mxu0
    %v3189 = vpop.f32.mrf.mxu0
    %3190 = vdwg.mxu0
    %v3191 = vadd.f32 %v2965, %v3084
    %v3192 = vadd.f32 %v2966, %v3086
    %v3193 = vadd.f32 %v2967, %v3155
    %v3194 = vadd.f32 %v2968, %v3157
    %v3195 = vadd.f32 %v2969, %v3088
    %v3196 = vadd.f32 %v2970, %v3090
    %v3197 = vadd.f32 %v2971, %v3159
    %v3198 = vadd.f32 %v2972, %v3161
    %v3199 = vadd.f32 %v2973, %v3094
    %v3200 = vadd.f32 %v2974, %v3096
    %v3201 = vadd.f32 %v2975, %v3165
    %v3202 = vadd.f32 %v2976, %v3167
    %v3203 = vadd.f32 %v2977, %v3098
    %v3204 = vadd.f32 %v2978, %v3100
    %v3205 = vadd.f32 %v2979, %v3169
    %v3206 = vadd.f32 %v2980, %v3171
    %v3207 = vadd.f32 %v2981, %v3104
    %v3208 = vadd.f32 %v2982, %v3106
    %v3209 = vadd.f32 %v2983, %v3175
    %v3210 = vadd.f32 %v2984, %v3177
    %v3211 = vadd.f32 %v2985, %v3108
    %v3212 = vadd.f32 %v2986, %v3110
    %v3213 = vadd.f32 %v2987, %v3179
    %v3214 = vadd.f32 %v2988, %v3181
    %v3215 = vadd.f32 %v2989, %v3114
    %v3216 = vadd.f32 %v2990, %v3116
    %v3217 = vadd.f32 %v2991, %v3185
    %v3218 = vadd.f32 %v2992, %v3187
    %v3219 = vld [vmem:[%s1144] sm:$0xff]
    %v3220 = vld [vmem:[%s1144 + $0x8] sm:$0xff]
    %v3221 = vld [vmem:[%s1144 + $0x10] sm:$0xff]
    %v3222 = vld [vmem:[%s1144 + $0x18] sm:$0xff]
    %v3223 = vld [vmem:[%s1144 + $0x20] sm:$0xff]
    %v3224 = vld [vmem:[%s1144 + $0x28] sm:$0xff]
    %v3225 = vld [vmem:[%s1144 + $0x30] sm:$0x33]
    %v3226 = vld [vmem:[%s1144 + $0x38] sm:$0x33]
    %v3234 = vunpack.c.l.b16 %v156
    %v3235 = vunpack.c.l.b16 %v157
    %v3236 = vunpack.c.l.b16 %v158
    %v3237 = vunpack.c.l.b16 %v159
    %v3238 = vunpack.c.l.b16 %v160
    %v3239 = vunpack.c.l.b16 %v161
    %v3240 = vunpack.c.l.b16 %v162
    %v3241 = vpack.c.b16 %v3235, %v3234
    %v3242 = vpack.c.b16 %v3237, %v3236
    %v3243 = vpack.c.b16 %v3239, %v3238
    %v3244 = vpack.c.b16 %v3240, %v3240
    %v3253 = vunpack.c.l.b16 %v3219
    %v3254 = vunpack.c.h.b16 %v3219
    %v3255 = vunpack.c.l.b16 %v3220
    %v3256 = vunpack.c.h.b16 %v3220
    %v3257 = vunpack.c.l.b16 %v3221
    %v3258 = vunpack.c.h.b16 %v3221
    %v3259 = vunpack.c.l.b16 %v3222
    %v3260 = vunpack.c.h.b16 %v3222
    %v3261 = vunpack.c.l.b16 %v3223
    %v3262 = vunpack.c.h.b16 %v3223
    %v3263 = vunpack.c.l.b16 %v3224
    %v3264 = vunpack.c.h.b16 %v3224
    %v3265 = vunpack.c.l.b16 %v3225
    %v3266 = vunpack.c.h.b16 %v3225
    %v3267 = vunpack.c.l.b16 %v3226
    %v3268 = vunpack.c.h.b16 %v3226
    %v3269 = vpack.c.b16 %v3257, %v3253
    %v3270 = vpack.c.b16 %v3258, %v3254
    %v3271 = vpack.c.b16 %v3259, %v3255
    %v3272 = vpack.c.b16 %v3260, %v3256
    %v3273 = vpack.c.b16 %v3265, %v3261
    %v3274 = vpack.c.b16 %v3266, %v3262
    %v3275 = vpack.c.b16 %v3267, %v3263
    %v3276 = vpack.c.b16 %v3268, %v3264
    %v3282 = vsel %vm242, %v3241, 0
    %v3285 = vsel %vm242, %v3242, 0
    %v3288 = vsel %vm242, %v3243, 0
    %v3291 = vsel %vm242, %v3244, 0
    %v3294 = vsel %vm255, %v3273, 0
    %v3297 = vsel %vm255, %v3274, 0
    %v3300 = vsel %vm255, %v3275, 0
    %v3303 = vsel %vm255, %v3276, 0
    %3305 = vmatprep.subr.bf16.mxu0 0
    %3306 = vmatpush1.bf16.msra.mxu0 0
    %3307 = vmatprep.subr.bf16.mxu0 0
    %3308 = vmatpush1.bf16.msra.mxu0 0
    %3309 = vmatprep.subr.bf16.mxu0 0
    %3310 = vmatpush1.bf16.msra.mxu0 0
    %3311 = vmatprep.subr.bf16.mxu0 0
    %3312 = vmatpush1.bf16.msra.mxu0 0
    %3313 = vmatprep.subr.bf16.mxu0 0
    %3314 = vmatpush1.bf16.msra.mxu0 0
    %3315 = vmatprep.subr.bf16.mxu0 0
    %3316 = vmatpush1.bf16.msra.mxu0 0
    %3317 = vmatprep.subr.bf16.mxu0 %v3297
    %3318 = vmatpush1.bf16.msra.mxu0 %v3294
    %3319 = vmatprep.subr.bf16.mxu0 %v3270
    %3320 = vmatpush1.bf16.msra.mxu0 %v3269
    %3321 = vmatprep.subr.bf16.mxu0 0
    %3322 = vmatpush2.bf16.msra.mxu0 0
    %3323 = vmatprep.subr.bf16.mxu0 0
    %3324 = vmatpush2.bf16.msra.mxu0 0
    %3325 = vmatprep.subr.bf16.mxu0 0
    %3326 = vmatpush2.bf16.msra.mxu0 0
    %3327 = vmatprep.subr.bf16.mxu0 0
    %3328 = vmatpush2.bf16.msra.mxu0 0
    %3329 = vmatprep.subr.bf16.mxu0 0
    %3330 = vmatpush2.bf16.msra.mxu0 0
    %3331 = vmatprep.subr.bf16.mxu0 0
    %3332 = vmatpush2.bf16.msra.mxu0 0
    %3333 = vmatprep.subr.bf16.mxu0 0
    %3334 = vmatpush2.bf16.msra.mxu0 0
    %3335 = vmatprep.subr.bf16.mxu0 0
    %3336 = vmatpush2.bf16.msra.mxu0 0
    %3337 = vmatprep.mubr.bf16.mxu0 0
    %3338 = vmatmul.mubr.bf16.gmra.mxu0 %v3282
    %v3339 = vpop.f32.mrf.mxu0
    %v3340 = vadd.f32 0.0, %v3339
    %v3341 = vpop.f32.mrf.mxu0
    %v3342 = vadd.f32 0.0, %v3341
    %v3343 = vpop.f32.mrf.mxu0
    %v3344 = vadd.f32 0.0, %v3343
    %v3345 = vpop.f32.mrf.mxu0
    %v3346 = vadd.f32 0.0, %v3345
    %3347 = vmatprep.mubr.bf16.mxu0 0
    %3348 = vmatmul.mubr.bf16.gmra.mxu0 %v3285
    %v3349 = vpop.f32.mrf.mxu0
    %v3350 = vadd.f32 0.0, %v3349
    %v3351 = vpop.f32.mrf.mxu0
    %v3352 = vadd.f32 0.0, %v3351
    %v3353 = vpop.f32.mrf.mxu0
    %v3354 = vadd.f32 0.0, %v3353
    %v3355 = vpop.f32.mrf.mxu0
    %v3356 = vadd.f32 0.0, %v3355
    %3357 = vmatprep.mubr.bf16.mxu0 0
    %3358 = vmatmul.mubr.bf16.gmra.mxu0 %v3288
    %v3359 = vpop.f32.mrf.mxu0
    %v3360 = vadd.f32 0.0, %v3359
    %v3361 = vpop.f32.mrf.mxu0
    %v3362 = vadd.f32 0.0, %v3361
    %v3363 = vpop.f32.mrf.mxu0
    %v3364 = vadd.f32 0.0, %v3363
    %v3365 = vpop.f32.mrf.mxu0
    %v3366 = vadd.f32 0.0, %v3365
    %3367 = vmatprep.mubr.bf16.mxu0 0
    %3368 = vmatmul.mubr.bf16.gmra.mxu0 %v3291
    %v3369 = vpop.f32.mrf.mxu0
    %v3370 = vadd.f32 0.0, %v3369
    %v3371 = vpop.f32.mrf.mxu0
    %v3372 = vadd.f32 0.0, %v3371
    %v3373 = vpop.f32.mrf.mxu0
    %v3374 = vpop.f32.mrf.mxu0
    %3375 = vdwg.mxu0
    %3376 = vmatprep.subr.bf16.mxu0 0
    %3377 = vmatpush1.bf16.msra.mxu0 0
    %3378 = vmatprep.subr.bf16.mxu0 0
    %3379 = vmatpush1.bf16.msra.mxu0 0
    %3380 = vmatprep.subr.bf16.mxu0 0
    %3381 = vmatpush1.bf16.msra.mxu0 0
    %3382 = vmatprep.subr.bf16.mxu0 0
    %3383 = vmatpush1.bf16.msra.mxu0 0
    %3384 = vmatprep.subr.bf16.mxu0 0
    %3385 = vmatpush1.bf16.msra.mxu0 0
    %3386 = vmatprep.subr.bf16.mxu0 0
    %3387 = vmatpush1.bf16.msra.mxu0 0
    %3388 = vmatprep.subr.bf16.mxu0 %v3303
    %3389 = vmatpush1.bf16.msra.mxu0 %v3300
    %3390 = vmatprep.subr.bf16.mxu0 %v3272
    %3391 = vmatpush1.bf16.msra.mxu0 %v3271
    %3392 = vmatprep.subr.bf16.mxu0 0
    %3393 = vmatpush2.bf16.msra.mxu0 0
    %3394 = vmatprep.subr.bf16.mxu0 0
    %3395 = vmatpush2.bf16.msra.mxu0 0
    %3396 = vmatprep.subr.bf16.mxu0 0
    %3397 = vmatpush2.bf16.msra.mxu0 0
    %3398 = vmatprep.subr.bf16.mxu0 0
    %3399 = vmatpush2.bf16.msra.mxu0 0
    %3400 = vmatprep.subr.bf16.mxu0 0
    %3401 = vmatpush2.bf16.msra.mxu0 0
    %3402 = vmatprep.subr.bf16.mxu0 0
    %3403 = vmatpush2.bf16.msra.mxu0 0
    %3404 = vmatprep.subr.bf16.mxu0 0
    %3405 = vmatpush2.bf16.msra.mxu0 0
    %3406 = vmatprep.subr.bf16.mxu0 0
    %3407 = vmatpush2.bf16.msra.mxu0 0
    %3408 = vmatprep.mubr.bf16.mxu0 0
    %3409 = vmatmul.mubr.bf16.gmra.mxu0 %v3282
    %v3410 = vpop.f32.mrf.mxu0
    %v3411 = vadd.f32 0.0, %v3410
    %v3412 = vpop.f32.mrf.mxu0
    %v3413 = vadd.f32 0.0, %v3412
    %v3414 = vpop.f32.mrf.mxu0
    %v3415 = vadd.f32 0.0, %v3414
    %v3416 = vpop.f32.mrf.mxu0
    %v3417 = vadd.f32 0.0, %v3416
    %3418 = vmatprep.mubr.bf16.mxu0 0
    %3419 = vmatmul.mubr.bf16.gmra.mxu0 %v3285
    %v3420 = vpop.f32.mrf.mxu0
    %v3421 = vadd.f32 0.0, %v3420
    %v3422 = vpop.f32.mrf.mxu0
    %v3423 = vadd.f32 0.0, %v3422
    %v3424 = vpop.f32.mrf.mxu0
    %v3425 = vadd.f32 0.0, %v3424
    %v3426 = vpop.f32.mrf.mxu0
    %v3427 = vadd.f32 0.0, %v3426
    %3428 = vmatprep.mubr.bf16.mxu0 0
    %3429 = vmatmul.mubr.bf16.gmra.mxu0 %v3288
    %v3430 = vpop.f32.mrf.mxu0
    %v3431 = vadd.f32 0.0, %v3430
    %v3432 = vpop.f32.mrf.mxu0
    %v3433 = vadd.f32 0.0, %v3432
    %v3434 = vpop.f32.mrf.mxu0
    %v3435 = vadd.f32 0.0, %v3434
    %v3436 = vpop.f32.mrf.mxu0
    %v3437 = vadd.f32 0.0, %v3436
    %3438 = vmatprep.mubr.bf16.mxu0 0
    %3439 = vmatmul.mubr.bf16.gmra.mxu0 %v3291
    %v3440 = vpop.f32.mrf.mxu0
    %v3441 = vadd.f32 0.0, %v3440
    %v3442 = vpop.f32.mrf.mxu0
    %v3443 = vadd.f32 0.0, %v3442
    %v3444 = vpop.f32.mrf.mxu0
    %v3445 = vpop.f32.mrf.mxu0
    %3446 = vdwg.mxu0
    %v3447 = vadd.f32 %v3191, %v3340
    %v3448 = vadd.f32 %v3192, %v3342
    %v3449 = vadd.f32 %v3193, %v3411
    %v3450 = vadd.f32 %v3194, %v3413
    %v3451 = vadd.f32 %v3195, %v3344
    %v3452 = vadd.f32 %v3196, %v3346
    %v3453 = vadd.f32 %v3197, %v3415
    %v3454 = vadd.f32 %v3198, %v3417
    %v3455 = vadd.f32 %v3199, %v3350
    %v3456 = vadd.f32 %v3200, %v3352
    %v3457 = vadd.f32 %v3201, %v3421
    %v3458 = vadd.f32 %v3202, %v3423
    %v3459 = vadd.f32 %v3203, %v3354
    %v3460 = vadd.f32 %v3204, %v3356
    %v3461 = vadd.f32 %v3205, %v3425
    %v3462 = vadd.f32 %v3206, %v3427
    %v3463 = vadd.f32 %v3207, %v3360
    %v3464 = vadd.f32 %v3208, %v3362
    %v3465 = vadd.f32 %v3209, %v3431
    %v3466 = vadd.f32 %v3210, %v3433
    %v3467 = vadd.f32 %v3211, %v3364
    %v3468 = vadd.f32 %v3212, %v3366
    %v3469 = vadd.f32 %v3213, %v3435
    %v3470 = vadd.f32 %v3214, %v3437
    %v3471 = vadd.f32 %v3215, %v3370
    %v3472 = vadd.f32 %v3216, %v3372
    %v3473 = vadd.f32 %v3217, %v3441
    %v3474 = vadd.f32 %v3218, %v3443
    %v3475 = vmax.f32 %v3447, %v3449
    %v3476 = vmax.f32 %v3448, %v3450
    %v3477 = vmax.f32 %v3451, %v3453
    %v3478 = vmax.f32 %v3452, %v3454
    %v3479 = vmax.f32 %v3455, %v3457
    %v3480 = vmax.f32 %v3456, %v3458
    %v3481 = vmax.f32 %v3459, %v3461
    %v3482 = vmax.f32 %v3460, %v3462
    %v3483 = vmax.f32 %v3463, %v3465
    %v3484 = vmax.f32 %v3464, %v3466
    %v3485 = vmax.f32 %v3467, %v3469
    %v3486 = vmax.f32 %v3468, %v3470
    %v3487 = vmax.f32 %v3471, %v3473
    %v3488 = vmax.f32 %v3472, %v3474
    %3489 = vmatprep.subr.bf16.mxu0 0
    %3490 = vmatpush1.bf16.msra.mxu0 0
    %3491 = vmatprep.subr.bf16.mxu0 0
    %3492 = vmatpush1.bf16.msra.mxu0 0
    %3493 = vmatprep.subr.bf16.mxu0 0
    %3494 = vmatpush1.bf16.msra.mxu0 0
    %3495 = vmatprep.subr.bf16.mxu0 0
    %3496 = vmatpush1.bf16.msra.mxu0 0
    %3497 = vmatprep.subr.bf16.mxu0 0
    %3498 = vmatpush1.bf16.msra.mxu0 0
    %3499 = vmatprep.subr.bf16.mxu0 0
    %3500 = vmatpush1.bf16.msra.mxu0 0
    %3501 = vmatprep.subr.bf16.mxu0 %v2427
    %3502 = vmatpush1.bf16.msra.mxu0 %v2424
    %3503 = vmatprep.subr.bf16.mxu0 %v2412
    %3504 = vmatpush1.bf16.msra.mxu0 %v2411
    %3505 = vmatprep.subr.bf16.mxu0 0
    %3506 = vmatpush2.bf16.msra.mxu0 0
    %3507 = vmatprep.subr.bf16.mxu0 0
    %3508 = vmatpush2.bf16.msra.mxu0 0
    %3509 = vmatprep.subr.bf16.mxu0 0
    %3510 = vmatpush2.bf16.msra.mxu0 0
    %3511 = vmatprep.subr.bf16.mxu0 0
    %3512 = vmatpush2.bf16.msra.mxu0 0
    %3513 = vmatprep.subr.bf16.mxu0 0
    %3514 = vmatpush2.bf16.msra.mxu0 0
    %3515 = vmatprep.subr.bf16.mxu0 0
    %3516 = vmatpush2.bf16.msra.mxu0 0
    %3517 = vmatprep.subr.bf16.mxu0 0
    %3518 = vmatpush2.bf16.msra.mxu0 0
    %3519 = vmatprep.subr.bf16.mxu0 0
    %3520 = vmatpush2.bf16.msra.mxu0 0
    %3521 = vmatprep.mubr.bf16.mxu0 0
    %3522 = vmatmul.mubr.bf16.gmra.mxu0 %v1208
    %v3523 = vpop.f32.mrf.mxu0
    %v3524 = vadd.f32 0.0, %v3523
    %v3525 = vpop.f32.mrf.mxu0
    %v3526 = vadd.f32 0.0, %v3525
    %v3527 = vpop.f32.mrf.mxu0
    %v3528 = vadd.f32 0.0, %v3527
    %v3529 = vpop.f32.mrf.mxu0
    %v3530 = vadd.f32 0.0, %v3529
    %3531 = vmatprep.mubr.bf16.mxu0 0
    %3532 = vmatmul.mubr.bf16.gmra.mxu0 %v1211
    %v3533 = vpop.f32.mrf.mxu0
    %v3534 = vadd.f32 0.0, %v3533
    %v3535 = vpop.f32.mrf.mxu0
    %v3536 = vadd.f32 0.0, %v3535
    %v3537 = vpop.f32.mrf.mxu0
    %v3538 = vadd.f32 0.0, %v3537
    %v3539 = vpop.f32.mrf.mxu0
    %v3540 = vadd.f32 0.0, %v3539
    %3541 = vmatprep.mubr.bf16.mxu0 0
    %3542 = vmatmul.mubr.bf16.gmra.mxu0 %v1214
    %v3543 = vpop.f32.mrf.mxu0
    %v3544 = vadd.f32 0.0, %v3543
    %v3545 = vpop.f32.mrf.mxu0
    %v3546 = vadd.f32 0.0, %v3545
    %v3547 = vpop.f32.mrf.mxu0
    %v3548 = vadd.f32 0.0, %v3547
    %v3549 = vpop.f32.mrf.mxu0
    %v3550 = vadd.f32 0.0, %v3549
    %3551 = vmatprep.mubr.bf16.mxu0 0
    %3552 = vmatmul.mubr.bf16.gmra.mxu0 %v1217
    %v3553 = vpop.f32.mrf.mxu0
    %v3554 = vadd.f32 0.0, %v3553
    %v3555 = vpop.f32.mrf.mxu0
    %v3556 = vadd.f32 0.0, %v3555
    %v3557 = vpop.f32.mrf.mxu0
    %v3558 = vpop.f32.mrf.mxu0
    %3559 = vdwg.mxu0
    %3560 = vmatprep.subr.bf16.mxu0 0
    %3561 = vmatpush1.bf16.msra.mxu0 0
    %3562 = vmatprep.subr.bf16.mxu0 0
    %3563 = vmatpush1.bf16.msra.mxu0 0
    %3564 = vmatprep.subr.bf16.mxu0 0
    %3565 = vmatpush1.bf16.msra.mxu0 0
    %3566 = vmatprep.subr.bf16.mxu0 0
    %3567 = vmatpush1.bf16.msra.mxu0 0
    %3568 = vmatprep.subr.bf16.mxu0 0
    %3569 = vmatpush1.bf16.msra.mxu0 0
    %3570 = vmatprep.subr.bf16.mxu0 0
    %3571 = vmatpush1.bf16.msra.mxu0 0
    %3572 = vmatprep.subr.bf16.mxu0 %v2433
    %3573 = vmatpush1.bf16.msra.mxu0 %v2430
    %3574 = vmatprep.subr.bf16.mxu0 %v2414
    %3575 = vmatpush1.bf16.msra.mxu0 %v2413
    %3576 = vmatprep.subr.bf16.mxu0 0
    %3577 = vmatpush2.bf16.msra.mxu0 0
    %3578 = vmatprep.subr.bf16.mxu0 0
    %3579 = vmatpush2.bf16.msra.mxu0 0
    %3580 = vmatprep.subr.bf16.mxu0 0
    %3581 = vmatpush2.bf16.msra.mxu0 0
    %3582 = vmatprep.subr.bf16.mxu0 0
    %3583 = vmatpush2.bf16.msra.mxu0 0
    %3584 = vmatprep.subr.bf16.mxu0 0
    %3585 = vmatpush2.bf16.msra.mxu0 0
    %3586 = vmatprep.subr.bf16.mxu0 0
    %3587 = vmatpush2.bf16.msra.mxu0 0
    %3588 = vmatprep.subr.bf16.mxu0 0
    %3589 = vmatpush2.bf16.msra.mxu0 0
    %3590 = vmatprep.subr.bf16.mxu0 0
    %3591 = vmatpush2.bf16.msra.mxu0 0
    %3592 = vmatprep.mubr.bf16.mxu0 0
    %3593 = vmatmul.mubr.bf16.gmra.mxu0 %v1208
    %v3594 = vpop.f32.mrf.mxu0
    %v3595 = vadd.f32 0.0, %v3594
    %v3596 = vpop.f32.mrf.mxu0
    %v3597 = vadd.f32 0.0, %v3596
    %v3598 = vpop.f32.mrf.mxu0
    %v3599 = vadd.f32 0.0, %v3598
    %v3600 = vpop.f32.mrf.mxu0
    %v3601 = vadd.f32 0.0, %v3600
    %3602 = vmatprep.mubr.bf16.mxu0 0
    %3603 = vmatmul.mubr.bf16.gmra.mxu0 %v1211
    %v3604 = vpop.f32.mrf.mxu0
    %v3605 = vadd.f32 0.0, %v3604
    %v3606 = vpop.f32.mrf.mxu0
    %v3607 = vadd.f32 0.0, %v3606
    %v3608 = vpop.f32.mrf.mxu0
    %v3609 = vadd.f32 0.0, %v3608
    %v3610 = vpop.f32.mrf.mxu0
    %v3611 = vadd.f32 0.0, %v3610
    %3612 = vmatprep.mubr.bf16.mxu0 0
    %3613 = vmatmul.mubr.bf16.gmra.mxu0 %v1214
    %v3614 = vpop.f32.mrf.mxu0
    %v3615 = vadd.f32 0.0, %v3614
    %v3616 = vpop.f32.mrf.mxu0
    %v3617 = vadd.f32 0.0, %v3616
    %v3618 = vpop.f32.mrf.mxu0
    %v3619 = vadd.f32 0.0, %v3618
    %v3620 = vpop.f32.mrf.mxu0
    %v3621 = vadd.f32 0.0, %v3620
    %3622 = vmatprep.mubr.bf16.mxu0 0
    %3623 = vmatmul.mubr.bf16.gmra.mxu0 %v1217
    %v3624 = vpop.f32.mrf.mxu0
    %v3625 = vadd.f32 0.0, %v3624
    %v3626 = vpop.f32.mrf.mxu0
    %v3627 = vadd.f32 0.0, %v3626
    %v3628 = vpop.f32.mrf.mxu0
    %v3629 = vpop.f32.mrf.mxu0
    %3630 = vdwg.mxu0
    %3631 = vmatprep.subr.bf16.mxu0 0
    %3632 = vmatpush1.bf16.msra.mxu0 0
    %3633 = vmatprep.subr.bf16.mxu0 0
    %3634 = vmatpush1.bf16.msra.mxu0 0
    %3635 = vmatprep.subr.bf16.mxu0 0
    %3636 = vmatpush1.bf16.msra.mxu0 0
    %3637 = vmatprep.subr.bf16.mxu0 0
    %3638 = vmatpush1.bf16.msra.mxu0 0
    %3639 = vmatprep.subr.bf16.mxu0 0
    %3640 = vmatpush1.bf16.msra.mxu0 0
    %3641 = vmatprep.subr.bf16.mxu0 0
    %3642 = vmatpush1.bf16.msra.mxu0 0
    %3643 = vmatprep.subr.bf16.mxu0 %v2617
    %3644 = vmatpush1.bf16.msra.mxu0 %v2614
    %3645 = vmatprep.subr.bf16.mxu0 %v2602
    %3646 = vmatpush1.bf16.msra.mxu0 %v2601
    %3647 = vmatprep.subr.bf16.mxu0 0
    %3648 = vmatpush2.bf16.msra.mxu0 0
    %3649 = vmatprep.subr.bf16.mxu0 0
    %3650 = vmatpush2.bf16.msra.mxu0 0
    %3651 = vmatprep.subr.bf16.mxu0 0
    %3652 = vmatpush2.bf16.msra.mxu0 0
    %3653 = vmatprep.subr.bf16.mxu0 0
    %3654 = vmatpush2.bf16.msra.mxu0 0
    %3655 = vmatprep.subr.bf16.mxu0 0
    %3656 = vmatpush2.bf16.msra.mxu0 0
    %3657 = vmatprep.subr.bf16.mxu0 0
    %3658 = vmatpush2.bf16.msra.mxu0 0
    %3659 = vmatprep.subr.bf16.mxu0 0
    %3660 = vmatpush2.bf16.msra.mxu0 0
    %3661 = vmatprep.subr.bf16.mxu0 0
    %3662 = vmatpush2.bf16.msra.mxu0 0
    %3663 = vmatprep.mubr.bf16.mxu0 0
    %3664 = vmatmul.mubr.bf16.gmra.mxu0 %v951
    %v3665 = vpop.f32.mrf.mxu0
    %v3666 = vadd.f32 %v3524, %v3665
    %v3667 = vpop.f32.mrf.mxu0
    %v3668 = vadd.f32 %v3526, %v3667
    %v3669 = vpop.f32.mrf.mxu0
    %v3670 = vadd.f32 %v3528, %v3669
    %v3671 = vpop.f32.mrf.mxu0
    %v3672 = vadd.f32 %v3530, %v3671
    %3673 = vmatprep.mubr.bf16.mxu0 0
    %3674 = vmatmul.mubr.bf16.gmra.mxu0 %v954
    %v3675 = vpop.f32.mrf.mxu0
    %v3676 = vadd.f32 %v3534, %v3675
    %v3677 = vpop.f32.mrf.mxu0
    %v3678 = vadd.f32 %v3536, %v3677
    %v3679 = vpop.f32.mrf.mxu0
    %v3680 = vadd.f32 %v3538, %v3679
    %v3681 = vpop.f32.mrf.mxu0
    %v3682 = vadd.f32 %v3540, %v3681
    %3683 = vmatprep.mubr.bf16.mxu0 0
    %3684 = vmatmul.mubr.bf16.gmra.mxu0 %v957
    %v3685 = vpop.f32.mrf.mxu0
    %v3686 = vadd.f32 %v3544, %v3685
    %v3687 = vpop.f32.mrf.mxu0
    %v3688 = vadd.f32 %v3546, %v3687
    %v3689 = vpop.f32.mrf.mxu0
    %v3690 = vadd.f32 %v3548, %v3689
    %v3691 = vpop.f32.mrf.mxu0
    %v3692 = vadd.f32 %v3550, %v3691
    %3693 = vmatprep.mubr.bf16.mxu0 0
    %3694 = vmatmul.mubr.bf16.gmra.mxu0 %v960
    %v3695 = vpop.f32.mrf.mxu0
    %v3696 = vadd.f32 %v3554, %v3695
    %v3697 = vpop.f32.mrf.mxu0
    %v3698 = vadd.f32 %v3556, %v3697
    %v3699 = vpop.f32.mrf.mxu0
    %v3700 = vpop.f32.mrf.mxu0
    %3701 = vdwg.mxu0
    %3702 = vmatprep.subr.bf16.mxu0 0
    %3703 = vmatpush1.bf16.msra.mxu0 0
    %3704 = vmatprep.subr.bf16.mxu0 0
    %3705 = vmatpush1.bf16.msra.mxu0 0
    %3706 = vmatprep.subr.bf16.mxu0 0
    %3707 = vmatpush1.bf16.msra.mxu0 0
    %3708 = vmatprep.subr.bf16.mxu0 0
    %3709 = vmatpush1.bf16.msra.mxu0 0
    %3710 = vmatprep.subr.bf16.mxu0 0
    %3711 = vmatpush1.bf16.msra.mxu0 0
    %3712 = vmatprep.subr.bf16.mxu0 0
    %3713 = vmatpush1.bf16.msra.mxu0 0
    %3714 = vmatprep.subr.bf16.mxu0 %v2623
    %3715 = vmatpush1.bf16.msra.mxu0 %v2620
    %3716 = vmatprep.subr.bf16.mxu0 %v2604
    %3717 = vmatpush1.bf16.msra.mxu0 %v2603
    %3718 = vmatprep.subr.bf16.mxu0 0
    %3719 = vmatpush2.bf16.msra.mxu0 0
    %3720 = vmatprep.subr.bf16.mxu0 0
    %3721 = vmatpush2.bf16.msra.mxu0 0
    %3722 = vmatprep.subr.bf16.mxu0 0
    %3723 = vmatpush2.bf16.msra.mxu0 0
    %3724 = vmatprep.subr.bf16.mxu0 0
    %3725 = vmatpush2.bf16.msra.mxu0 0
    %3726 = vmatprep.subr.bf16.mxu0 0
    %3727 = vmatpush2.bf16.msra.mxu0 0
    %3728 = vmatprep.subr.bf16.mxu0 0
    %3729 = vmatpush2.bf16.msra.mxu0 0
    %3730 = vmatprep.subr.bf16.mxu0 0
    %3731 = vmatpush2.bf16.msra.mxu0 0
    %3732 = vmatprep.subr.bf16.mxu0 0
    %3733 = vmatpush2.bf16.msra.mxu0 0
    %3734 = vmatprep.mubr.bf16.mxu0 0
    %3735 = vmatmul.mubr.bf16.gmra.mxu0 %v951
    %v3736 = vpop.f32.mrf.mxu0
    %v3737 = vadd.f32 %v3595, %v3736
    %v3738 = vpop.f32.mrf.mxu0
    %v3739 = vadd.f32 %v3597, %v3738
    %v3740 = vpop.f32.mrf.mxu0
    %v3741 = vadd.f32 %v3599, %v3740
    %v3742 = vpop.f32.mrf.mxu0
    %v3743 = vadd.f32 %v3601, %v3742
    %3744 = vmatprep.mubr.bf16.mxu0 0
    %3745 = vmatmul.mubr.bf16.gmra.mxu0 %v954
    %v3746 = vpop.f32.mrf.mxu0
    %v3747 = vadd.f32 %v3605, %v3746
    %v3748 = vpop.f32.mrf.mxu0
    %v3749 = vadd.f32 %v3607, %v3748
    %v3750 = vpop.f32.mrf.mxu0
    %v3751 = vadd.f32 %v3609, %v3750
    %v3752 = vpop.f32.mrf.mxu0
    %v3753 = vadd.f32 %v3611, %v3752
    %3754 = vmatprep.mubr.bf16.mxu0 0
    %3755 = vmatmul.mubr.bf16.gmra.mxu0 %v957
    %v3756 = vpop.f32.mrf.mxu0
    %v3757 = vadd.f32 %v3615, %v3756
    %v3758 = vpop.f32.mrf.mxu0
    %v3759 = vadd.f32 %v3617, %v3758
    %v3760 = vpop.f32.mrf.mxu0
    %v3761 = vadd.f32 %v3619, %v3760
    %v3762 = vpop.f32.mrf.mxu0
    %v3763 = vadd.f32 %v3621, %v3762
    %3764 = vmatprep.mubr.bf16.mxu0 0
    %3765 = vmatmul.mubr.bf16.gmra.mxu0 %v960
    %v3766 = vpop.f32.mrf.mxu0
    %v3767 = vadd.f32 %v3625, %v3766
    %v3768 = vpop.f32.mrf.mxu0
    %v3769 = vadd.f32 %v3627, %v3768
    %v3770 = vpop.f32.mrf.mxu0
    %v3771 = vpop.f32.mrf.mxu0
    %3772 = vdwg.mxu0
    %3773 = vmatprep.subr.bf16.mxu0 0
    %3774 = vmatpush1.bf16.msra.mxu0 0
    %3775 = vmatprep.subr.bf16.mxu0 0
    %3776 = vmatpush1.bf16.msra.mxu0 0
    %3777 = vmatprep.subr.bf16.mxu0 0
    %3778 = vmatpush1.bf16.msra.mxu0 0
    %3779 = vmatprep.subr.bf16.mxu0 0
    %3780 = vmatpush1.bf16.msra.mxu0 0
    %3781 = vmatprep.subr.bf16.mxu0 0
    %3782 = vmatpush1.bf16.msra.mxu0 0
    %3783 = vmatprep.subr.bf16.mxu0 0
    %3784 = vmatpush1.bf16.msra.mxu0 0
    %3785 = vmatprep.subr.bf16.mxu0 %v2815
    %3786 = vmatpush1.bf16.msra.mxu0 %v2812
    %3787 = vmatprep.subr.bf16.mxu0 %v2800
    %3788 = vmatpush1.bf16.msra.mxu0 %v2799
    %3789 = vmatprep.subr.bf16.mxu0 0
    %3790 = vmatpush2.bf16.msra.mxu0 0
    %3791 = vmatprep.subr.bf16.mxu0 0
    %3792 = vmatpush2.bf16.msra.mxu0 0
    %3793 = vmatprep.subr.bf16.mxu0 0
    %3794 = vmatpush2.bf16.msra.mxu0 0
    %3795 = vmatprep.subr.bf16.mxu0 0
    %3796 = vmatpush2.bf16.msra.mxu0 0
    %3797 = vmatprep.subr.bf16.mxu0 0
    %3798 = vmatpush2.bf16.msra.mxu0 0
    %3799 = vmatprep.subr.bf16.mxu0 0
    %3800 = vmatpush2.bf16.msra.mxu0 0
    %3801 = vmatprep.subr.bf16.mxu0 0
    %3802 = vmatpush2.bf16.msra.mxu0 0
    %3803 = vmatprep.subr.bf16.mxu0 0
    %3804 = vmatpush2.bf16.msra.mxu0 0
    %3805 = vmatprep.mubr.bf16.mxu0 0
    %3806 = vmatmul.mubr.bf16.gmra.mxu0 %v2058
    %v3807 = vpop.f32.mrf.mxu0
    %v3808 = vadd.f32 0.0, %v3807
    %v3809 = vpop.f32.mrf.mxu0
    %v3810 = vadd.f32 0.0, %v3809
    %v3811 = vpop.f32.mrf.mxu0
    %v3812 = vadd.f32 0.0, %v3811
    %v3813 = vpop.f32.mrf.mxu0
    %v3814 = vadd.f32 0.0, %v3813
    %3815 = vmatprep.mubr.bf16.mxu0 0
    %3816 = vmatmul.mubr.bf16.gmra.mxu0 %v2061
    %v3817 = vpop.f32.mrf.mxu0
    %v3818 = vadd.f32 0.0, %v3817
    %v3819 = vpop.f32.mrf.mxu0
    %v3820 = vadd.f32 0.0, %v3819
    %v3821 = vpop.f32.mrf.mxu0
    %v3822 = vadd.f32 0.0, %v3821
    %v3823 = vpop.f32.mrf.mxu0
    %v3824 = vadd.f32 0.0, %v3823
    %3825 = vmatprep.mubr.bf16.mxu0 0
    %3826 = vmatmul.mubr.bf16.gmra.mxu0 %v2064
    %v3827 = vpop.f32.mrf.mxu0
    %v3828 = vadd.f32 0.0, %v3827
    %v3829 = vpop.f32.mrf.mxu0
    %v3830 = vadd.f32 0.0, %v3829
    %v3831 = vpop.f32.mrf.mxu0
    %v3832 = vadd.f32 0.0, %v3831
    %v3833 = vpop.f32.mrf.mxu0
    %v3834 = vadd.f32 0.0, %v3833
    %3835 = vmatprep.mubr.bf16.mxu0 0
    %3836 = vmatmul.mubr.bf16.gmra.mxu0 %v2067
    %v3837 = vpop.f32.mrf.mxu0
    %v3838 = vadd.f32 0.0, %v3837
    %v3839 = vpop.f32.mrf.mxu0
    %v3840 = vadd.f32 0.0, %v3839
    %v3841 = vpop.f32.mrf.mxu0
    %v3842 = vpop.f32.mrf.mxu0
    %3843 = vdwg.mxu0
    %3844 = vmatprep.subr.bf16.mxu0 0
    %3845 = vmatpush1.bf16.msra.mxu0 0
    %3846 = vmatprep.subr.bf16.mxu0 0
    %3847 = vmatpush1.bf16.msra.mxu0 0
    %3848 = vmatprep.subr.bf16.mxu0 0
    %3849 = vmatpush1.bf16.msra.mxu0 0
    %3850 = vmatprep.subr.bf16.mxu0 0
    %3851 = vmatpush1.bf16.msra.mxu0 0
    %3852 = vmatprep.subr.bf16.mxu0 0
    %3853 = vmatpush1.bf16.msra.mxu0 0
    %3854 = vmatprep.subr.bf16.mxu0 0
    %3855 = vmatpush1.bf16.msra.mxu0 0
    %3856 = vmatprep.subr.bf16.mxu0 %v2821
    %3857 = vmatpush1.bf16.msra.mxu0 %v2818
    %3858 = vmatprep.subr.bf16.mxu0 %v2802
    %3859 = vmatpush1.bf16.msra.mxu0 %v2801
    %3860 = vmatprep.subr.bf16.mxu0 0
    %3861 = vmatpush2.bf16.msra.mxu0 0
    %3862 = vmatprep.subr.bf16.mxu0 0
    %3863 = vmatpush2.bf16.msra.mxu0 0
    %3864 = vmatprep.subr.bf16.mxu0 0
    %3865 = vmatpush2.bf16.msra.mxu0 0
    %3866 = vmatprep.subr.bf16.mxu0 0
    %3867 = vmatpush2.bf16.msra.mxu0 0
    %3868 = vmatprep.subr.bf16.mxu0 0
    %3869 = vmatpush2.bf16.msra.mxu0 0
    %3870 = vmatprep.subr.bf16.mxu0 0
    %3871 = vmatpush2.bf16.msra.mxu0 0
    %3872 = vmatprep.subr.bf16.mxu0 0
    %3873 = vmatpush2.bf16.msra.mxu0 0
    %3874 = vmatprep.subr.bf16.mxu0 0
    %3875 = vmatpush2.bf16.msra.mxu0 0
    %3876 = vmatprep.mubr.bf16.mxu0 0
    %3877 = vmatmul.mubr.bf16.gmra.mxu0 %v2058
    %v3878 = vpop.f32.mrf.mxu0
    %v3879 = vadd.f32 0.0, %v3878
    %v3880 = vpop.f32.mrf.mxu0
    %v3881 = vadd.f32 0.0, %v3880
    %v3882 = vpop.f32.mrf.mxu0
    %v3883 = vadd.f32 0.0, %v3882
    %v3884 = vpop.f32.mrf.mxu0
    %v3885 = vadd.f32 0.0, %v3884
    %3886 = vmatprep.mubr.bf16.mxu0 0
    %3887 = vmatmul.mubr.bf16.gmra.mxu0 %v2061
    %v3888 = vpop.f32.mrf.mxu0
    %v3889 = vadd.f32 0.0, %v3888
    %v3890 = vpop.f32.mrf.mxu0
    %v3891 = vadd.f32 0.0, %v3890
    %v3892 = vpop.f32.mrf.mxu0
    %v3893 = vadd.f32 0.0, %v3892
    %v3894 = vpop.f32.mrf.mxu0
    %v3895 = vadd.f32 0.0, %v3894
    %3896 = vmatprep.mubr.bf16.mxu0 0
    %3897 = vmatmul.mubr.bf16.gmra.mxu0 %v2064
    %v3898 = vpop.f32.mrf.mxu0
    %v3899 = vadd.f32 0.0, %v3898
    %v3900 = vpop.f32.mrf.mxu0
    %v3901 = vadd.f32 0.0, %v3900
    %v3902 = vpop.f32.mrf.mxu0
    %v3903 = vadd.f32 0.0, %v3902
    %v3904 = vpop.f32.mrf.mxu0
    %v3905 = vadd.f32 0.0, %v3904
    %3906 = vmatprep.mubr.bf16.mxu0 0
    %3907 = vmatmul.mubr.bf16.gmra.mxu0 %v2067
    %v3908 = vpop.f32.mrf.mxu0
    %v3909 = vadd.f32 0.0, %v3908
    %v3910 = vpop.f32.mrf.mxu0
    %v3911 = vadd.f32 0.0, %v3910
    %v3912 = vpop.f32.mrf.mxu0
    %v3913 = vpop.f32.mrf.mxu0
    %3914 = vdwg.mxu0
    %v3915 = vadd.f32 %v3666, %v3808
    %v3916 = vadd.f32 %v3668, %v3810
    %v3917 = vadd.f32 %v3737, %v3879
    %v3918 = vadd.f32 %v3739, %v3881
    %v3919 = vadd.f32 %v3670, %v3812
    %v3920 = vadd.f32 %v3672, %v3814
    %v3921 = vadd.f32 %v3741, %v3883
    %v3922 = vadd.f32 %v3743, %v3885
    %v3923 = vadd.f32 %v3676, %v3818
    %v3924 = vadd.f32 %v3678, %v3820
    %v3925 = vadd.f32 %v3747, %v3889
    %v3926 = vadd.f32 %v3749, %v3891
    %v3927 = vadd.f32 %v3680, %v3822
    %v3928 = vadd.f32 %v3682, %v3824
    %v3929 = vadd.f32 %v3751, %v3893
    %v3930 = vadd.f32 %v3753, %v3895
    %v3931 = vadd.f32 %v3686, %v3828
    %v3932 = vadd.f32 %v3688, %v3830
    %v3933 = vadd.f32 %v3757, %v3899
    %v3934 = vadd.f32 %v3759, %v3901
    %v3935 = vadd.f32 %v3690, %v3832
    %v3936 = vadd.f32 %v3692, %v3834
    %v3937 = vadd.f32 %v3761, %v3903
    %v3938 = vadd.f32 %v3763, %v3905
    %v3939 = vadd.f32 %v3696, %v3838
    %v3940 = vadd.f32 %v3698, %v3840
    %v3941 = vadd.f32 %v3767, %v3909
    %v3942 = vadd.f32 %v3769, %v3911
    %3943 = vmatprep.subr.bf16.mxu0 0
    %3944 = vmatpush1.bf16.msra.mxu0 0
    %3945 = vmatprep.subr.bf16.mxu0 0
    %3946 = vmatpush1.bf16.msra.mxu0 0
    %3947 = vmatprep.subr.bf16.mxu0 0
    %3948 = vmatpush1.bf16.msra.mxu0 0
    %3949 = vmatprep.subr.bf16.mxu0 0
    %3950 = vmatpush1.bf16.msra.mxu0 0
    %3951 = vmatprep.subr.bf16.mxu0 0
    %3952 = vmatpush1.bf16.msra.mxu0 0
    %3953 = vmatprep.subr.bf16.mxu0 0
    %3954 = vmatpush1.bf16.msra.mxu0 0
    %3955 = vmatprep.subr.bf16.mxu0 %v3041
    %3956 = vmatpush1.bf16.msra.mxu0 %v3038
    %3957 = vmatprep.subr.bf16.mxu0 %v3026
    %3958 = vmatpush1.bf16.msra.mxu0 %v3025
    %3959 = vmatprep.subr.bf16.mxu0 0
    %3960 = vmatpush2.bf16.msra.mxu0 0
    %3961 = vmatprep.subr.bf16.mxu0 0
    %3962 = vmatpush2.bf16.msra.mxu0 0
    %3963 = vmatprep.subr.bf16.mxu0 0
    %3964 = vmatpush2.bf16.msra.mxu0 0
    %3965 = vmatprep.subr.bf16.mxu0 0
    %3966 = vmatpush2.bf16.msra.mxu0 0
    %3967 = vmatprep.subr.bf16.mxu0 0
    %3968 = vmatpush2.bf16.msra.mxu0 0
    %3969 = vmatprep.subr.bf16.mxu0 0
    %3970 = vmatpush2.bf16.msra.mxu0 0
    %3971 = vmatprep.subr.bf16.mxu0 0
    %3972 = vmatpush2.bf16.msra.mxu0 0
    %3973 = vmatprep.subr.bf16.mxu0 0
    %3974 = vmatpush2.bf16.msra.mxu0 0
    %3975 = vmatprep.mubr.bf16.mxu0 0
    %3976 = vmatmul.mubr.bf16.gmra.mxu0 %v3282
    %v3977 = vpop.f32.mrf.mxu0
    %v3978 = vadd.f32 0.0, %v3977
    %v3979 = vpop.f32.mrf.mxu0
    %v3980 = vadd.f32 0.0, %v3979
    %v3981 = vpop.f32.mrf.mxu0
    %v3982 = vadd.f32 0.0, %v3981
    %v3983 = vpop.f32.mrf.mxu0
    %v3984 = vadd.f32 0.0, %v3983
    %3985 = vmatprep.mubr.bf16.mxu0 0
    %3986 = vmatmul.mubr.bf16.gmra.mxu0 %v3285
    %v3987 = vpop.f32.mrf.mxu0
    %v3988 = vadd.f32 0.0, %v3987
    %v3989 = vpop.f32.mrf.mxu0
    %v3990 = vadd.f32 0.0, %v3989
    %v3991 = vpop.f32.mrf.mxu0
    %v3992 = vadd.f32 0.0, %v3991
    %v3993 = vpop.f32.mrf.mxu0
    %v3994 = vadd.f32 0.0, %v3993
    %3995 = vmatprep.mubr.bf16.mxu0 0
    %3996 = vmatmul.mubr.bf16.gmra.mxu0 %v3288
    %v3997 = vpop.f32.mrf.mxu0
    %v3998 = vadd.f32 0.0, %v3997
    %v3999 = vpop.f32.mrf.mxu0
    %v4000 = vadd.f32 0.0, %v3999
    %v4001 = vpop.f32.mrf.mxu0
    %v4002 = vadd.f32 0.0, %v4001
    %v4003 = vpop.f32.mrf.mxu0
    %v4004 = vadd.f32 0.0, %v4003
    %4005 = vmatprep.mubr.bf16.mxu0 0
    %4006 = vmatmul.mubr.bf16.gmra.mxu0 %v3291
    %v4007 = vpop.f32.mrf.mxu0
    %v4008 = vadd.f32 0.0, %v4007
    %v4009 = vpop.f32.mrf.mxu0
    %v4010 = vadd.f32 0.0, %v4009
    %v4011 = vpop.f32.mrf.mxu0
    %v4012 = vpop.f32.mrf.mxu0
    %4013 = vdwg.mxu0
    %4014 = vmatprep.subr.bf16.mxu0 0
    %4015 = vmatpush1.bf16.msra.mxu0 0
    %4016 = vmatprep.subr.bf16.mxu0 0
    %4017 = vmatpush1.bf16.msra.mxu0 0
    %4018 = vmatprep.subr.bf16.mxu0 0
    %4019 = vmatpush1.bf16.msra.mxu0 0
    %4020 = vmatprep.subr.bf16.mxu0 0
    %4021 = vmatpush1.bf16.msra.mxu0 0
    %4022 = vmatprep.subr.bf16.mxu0 0
    %4023 = vmatpush1.bf16.msra.mxu0 0
    %4024 = vmatprep.subr.bf16.mxu0 0
    %4025 = vmatpush1.bf16.msra.mxu0 0
    %4026 = vmatprep.subr.bf16.mxu0 %v3047
    %4027 = vmatpush1.bf16.msra.mxu0 %v3044
    %4028 = vmatprep.subr.bf16.mxu0 %v3028
    %4029 = vmatpush1.bf16.msra.mxu0 %v3027
    %4030 = vmatprep.subr.bf16.mxu0 0
    %4031 = vmatpush2.bf16.msra.mxu0 0
    %4032 = vmatprep.subr.bf16.mxu0 0
    %4033 = vmatpush2.bf16.msra.mxu0 0
    %4034 = vmatprep.subr.bf16.mxu0 0
    %4035 = vmatpush2.bf16.msra.mxu0 0
    %4036 = vmatprep.subr.bf16.mxu0 0
    %4037 = vmatpush2.bf16.msra.mxu0 0
    %4038 = vmatprep.subr.bf16.mxu0 0
    %4039 = vmatpush2.bf16.msra.mxu0 0
    %4040 = vmatprep.subr.bf16.mxu0 0
    %4041 = vmatpush2.bf16.msra.mxu0 0
    %4042 = vmatprep.subr.bf16.mxu0 0
    %4043 = vmatpush2.bf16.msra.mxu0 0
    %4044 = vmatprep.subr.bf16.mxu0 0
    %4045 = vmatpush2.bf16.msra.mxu0 0
    %4046 = vmatprep.mubr.bf16.mxu0 0
    %4047 = vmatmul.mubr.bf16.gmra.mxu0 %v3282
    %v4048 = vpop.f32.mrf.mxu0
    %v4049 = vadd.f32 0.0, %v4048
    %v4050 = vpop.f32.mrf.mxu0
    %v4051 = vadd.f32 0.0, %v4050
    %v4052 = vpop.f32.mrf.mxu0
    %v4053 = vadd.f32 0.0, %v4052
    %v4054 = vpop.f32.mrf.mxu0
    %v4055 = vadd.f32 0.0, %v4054
    %4056 = vmatprep.mubr.bf16.mxu0 0
    %4057 = vmatmul.mubr.bf16.gmra.mxu0 %v3285
    %v4058 = vpop.f32.mrf.mxu0
    %v4059 = vadd.f32 0.0, %v4058
    %v4060 = vpop.f32.mrf.mxu0
    %v4061 = vadd.f32 0.0, %v4060
    %v4062 = vpop.f32.mrf.mxu0
    %v4063 = vadd.f32 0.0, %v4062
    %v4064 = vpop.f32.mrf.mxu0
    %v4065 = vadd.f32 0.0, %v4064
    %4066 = vmatprep.mubr.bf16.mxu0 0
    %4067 = vmatmul.mubr.bf16.gmra.mxu0 %v3288
    %v4068 = vpop.f32.mrf.mxu0
    %v4069 = vadd.f32 0.0, %v4068
    %v4070 = vpop.f32.mrf.mxu0
    %v4071 = vadd.f32 0.0, %v4070
    %v4072 = vpop.f32.mrf.mxu0
    %v4073 = vadd.f32 0.0, %v4072
    %v4074 = vpop.f32.mrf.mxu0
    %v4075 = vadd.f32 0.0, %v4074
    %4076 = vmatprep.mubr.bf16.mxu0 0
    %4077 = vmatmul.mubr.bf16.gmra.mxu0 %v3291
    %v4078 = vpop.f32.mrf.mxu0
    %v4079 = vadd.f32 0.0, %v4078
    %v4080 = vpop.f32.mrf.mxu0
    %v4081 = vadd.f32 0.0, %v4080
    %v4082 = vpop.f32.mrf.mxu0
    %v4083 = vpop.f32.mrf.mxu0
    %4084 = vdwg.mxu0
    %v4085 = vadd.f32 %v3915, %v3978
    %v4086 = vadd.f32 %v3916, %v3980
    %v4087 = vadd.f32 %v3917, %v4049
    %v4088 = vadd.f32 %v3918, %v4051
    %v4089 = vadd.f32 %v3919, %v3982
    %v4090 = vadd.f32 %v3920, %v3984
    %v4091 = vadd.f32 %v3921, %v4053
    %v4092 = vadd.f32 %v3922, %v4055
    %v4093 = vadd.f32 %v3923, %v3988
    %v4094 = vadd.f32 %v3924, %v3990
    %v4095 = vadd.f32 %v3925, %v4059
    %v4096 = vadd.f32 %v3926, %v4061
    %v4097 = vadd.f32 %v3927, %v3992
    %v4098 = vadd.f32 %v3928, %v3994
    %v4099 = vadd.f32 %v3929, %v4063
    %v4100 = vadd.f32 %v3930, %v4065
    %v4101 = vadd.f32 %v3931, %v3998
    %v4102 = vadd.f32 %v3932, %v4000
    %v4103 = vadd.f32 %v3933, %v4069
    %v4104 = vadd.f32 %v3934, %v4071
    %v4105 = vadd.f32 %v3935, %v4002
    %v4106 = vadd.f32 %v3936, %v4004
    %v4107 = vadd.f32 %v3937, %v4073
    %v4108 = vadd.f32 %v3938, %v4075
    %v4109 = vadd.f32 %v3939, %v4008
    %v4110 = vadd.f32 %v3940, %v4010
    %v4111 = vadd.f32 %v3941, %v4079
    %v4112 = vadd.f32 %v3942, %v4081
    %v4120 = vunpack.c.l.b16 %v164
    %v4121 = vunpack.c.l.b16 %v165
    %v4122 = vunpack.c.l.b16 %v166
    %v4123 = vunpack.c.l.b16 %v167
    %v4124 = vunpack.c.l.b16 %v168
    %v4125 = vunpack.c.l.b16 %v169
    %v4126 = vunpack.c.l.b16 %v170
    %v4127 = vpack.c.b16 %v4121, %v4120
    %v4128 = vpack.c.b16 %v4123, %v4122
    %v4129 = vpack.c.b16 %v4125, %v4124
    %v4130 = vpack.c.b16 %v4126, %v4126
    %v4132 = vsel %vm242, %v4127, 0
    %v4135 = vsel %vm242, %v4128, 0
    %v4138 = vsel %vm242, %v4129, 0
    %v4141 = vsel %vm242, %v4130, 0
    %4143 = vmatprep.subr.bf16.mxu0 0
    %4144 = vmatpush1.bf16.msra.mxu0 0
    %4145 = vmatprep.subr.bf16.mxu0 0
    %4146 = vmatpush1.bf16.msra.mxu0 0
    %4147 = vmatprep.subr.bf16.mxu0 0
    %4148 = vmatpush1.bf16.msra.mxu0 0
    %4149 = vmatprep.subr.bf16.mxu0 0
    %4150 = vmatpush1.bf16.msra.mxu0 0
    %4151 = vmatprep.subr.bf16.mxu0 0
    %4152 = vmatpush1.bf16.msra.mxu0 0
    %4153 = vmatprep.subr.bf16.mxu0 0
    %4154 = vmatpush1.bf16.msra.mxu0 0
    %4155 = vmatprep.subr.bf16.mxu0 %v3297
    %4156 = vmatpush1.bf16.msra.mxu0 %v3294
    %4157 = vmatprep.subr.bf16.mxu0 %v3270
    %4158 = vmatpush1.bf16.msra.mxu0 %v3269
    %4159 = vmatprep.subr.bf16.mxu0 0
    %4160 = vmatpush2.bf16.msra.mxu0 0
    %4161 = vmatprep.subr.bf16.mxu0 0
    %4162 = vmatpush2.bf16.msra.mxu0 0
    %4163 = vmatprep.subr.bf16.mxu0 0
    %4164 = vmatpush2.bf16.msra.mxu0 0
    %4165 = vmatprep.subr.bf16.mxu0 0
    %4166 = vmatpush2.bf16.msra.mxu0 0
    %4167 = vmatprep.subr.bf16.mxu0 0
    %4168 = vmatpush2.bf16.msra.mxu0 0
    %4169 = vmatprep.subr.bf16.mxu0 0
    %4170 = vmatpush2.bf16.msra.mxu0 0
    %4171 = vmatprep.subr.bf16.mxu0 0
    %4172 = vmatpush2.bf16.msra.mxu0 0
    %4173 = vmatprep.subr.bf16.mxu0 0
    %4174 = vmatpush2.bf16.msra.mxu0 0
    %4175 = vmatprep.mubr.bf16.mxu0 0
    %4176 = vmatmul.mubr.bf16.gmra.mxu0 %v4132
    %v4177 = vpop.f32.mrf.mxu0
    %v4178 = vadd.f32 0.0, %v4177
    %v4179 = vpop.f32.mrf.mxu0
    %v4180 = vadd.f32 0.0, %v4179
    %v4181 = vpop.f32.mrf.mxu0
    %v4182 = vadd.f32 0.0, %v4181
    %v4183 = vpop.f32.mrf.mxu0
    %v4184 = vadd.f32 0.0, %v4183
    %4185 = vmatprep.mubr.bf16.mxu0 0
    %4186 = vmatmul.mubr.bf16.gmra.mxu0 %v4135
    %v4187 = vpop.f32.mrf.mxu0
    %v4188 = vadd.f32 0.0, %v4187
    %v4189 = vpop.f32.mrf.mxu0
    %v4190 = vadd.f32 0.0, %v4189
    %v4191 = vpop.f32.mrf.mxu0
    %v4192 = vadd.f32 0.0, %v4191
    %v4193 = vpop.f32.mrf.mxu0
    %v4194 = vadd.f32 0.0, %v4193
    %4195 = vmatprep.mubr.bf16.mxu0 0
    %4196 = vmatmul.mubr.bf16.gmra.mxu0 %v4138
    %v4197 = vpop.f32.mrf.mxu0
    %v4198 = vadd.f32 0.0, %v4197
    %v4199 = vpop.f32.mrf.mxu0
    %v4200 = vadd.f32 0.0, %v4199
    %v4201 = vpop.f32.mrf.mxu0
    %v4202 = vadd.f32 0.0, %v4201
    %v4203 = vpop.f32.mrf.mxu0
    %v4204 = vadd.f32 0.0, %v4203
    %4205 = vmatprep.mubr.bf16.mxu0 0
    %4206 = vmatmul.mubr.bf16.gmra.mxu0 %v4141
    %v4207 = vpop.f32.mrf.mxu0
    %v4208 = vadd.f32 0.0, %v4207
    %v4209 = vpop.f32.mrf.mxu0
    %v4210 = vadd.f32 0.0, %v4209
    %v4211 = vpop.f32.mrf.mxu0
    %v4212 = vpop.f32.mrf.mxu0
    %4213 = vdwg.mxu0
    %4214 = vmatprep.subr.bf16.mxu0 0
    %4215 = vmatpush1.bf16.msra.mxu0 0
    %4216 = vmatprep.subr.bf16.mxu0 0
    %4217 = vmatpush1.bf16.msra.mxu0 0
    %4218 = vmatprep.subr.bf16.mxu0 0
    %4219 = vmatpush1.bf16.msra.mxu0 0
    %4220 = vmatprep.subr.bf16.mxu0 0
    %4221 = vmatpush1.bf16.msra.mxu0 0
    %4222 = vmatprep.subr.bf16.mxu0 0
    %4223 = vmatpush1.bf16.msra.mxu0 0
    %4224 = vmatprep.subr.bf16.mxu0 0
    %4225 = vmatpush1.bf16.msra.mxu0 0
    %4226 = vmatprep.subr.bf16.mxu0 %v3303
    %4227 = vmatpush1.bf16.msra.mxu0 %v3300
    %4228 = vmatprep.subr.bf16.mxu0 %v3272
    %4229 = vmatpush1.bf16.msra.mxu0 %v3271
    %4230 = vmatprep.subr.bf16.mxu0 0
    %4231 = vmatpush2.bf16.msra.mxu0 0
    %4232 = vmatprep.subr.bf16.mxu0 0
    %4233 = vmatpush2.bf16.msra.mxu0 0
    %4234 = vmatprep.subr.bf16.mxu0 0
    %4235 = vmatpush2.bf16.msra.mxu0 0
    %4236 = vmatprep.subr.bf16.mxu0 0
    %4237 = vmatpush2.bf16.msra.mxu0 0
    %4238 = vmatprep.subr.bf16.mxu0 0
    %4239 = vmatpush2.bf16.msra.mxu0 0
    %4240 = vmatprep.subr.bf16.mxu0 0
    %4241 = vmatpush2.bf16.msra.mxu0 0
    %4242 = vmatprep.subr.bf16.mxu0 0
    %4243 = vmatpush2.bf16.msra.mxu0 0
    %4244 = vmatprep.subr.bf16.mxu0 0
    %4245 = vmatpush2.bf16.msra.mxu0 0
    %4246 = vmatprep.mubr.bf16.mxu0 0
    %4247 = vmatmul.mubr.bf16.gmra.mxu0 %v4132
    %v4248 = vpop.f32.mrf.mxu0
    %v4249 = vadd.f32 0.0, %v4248
    %v4250 = vpop.f32.mrf.mxu0
    %v4251 = vadd.f32 0.0, %v4250
    %v4252 = vpop.f32.mrf.mxu0
    %v4253 = vadd.f32 0.0, %v4252
    %v4254 = vpop.f32.mrf.mxu0
    %v4255 = vadd.f32 0.0, %v4254
    %4256 = vmatprep.mubr.bf16.mxu0 0
    %4257 = vmatmul.mubr.bf16.gmra.mxu0 %v4135
    %v4258 = vpop.f32.mrf.mxu0
    %v4259 = vadd.f32 0.0, %v4258
    %v4260 = vpop.f32.mrf.mxu0
    %v4261 = vadd.f32 0.0, %v4260
    %v4262 = vpop.f32.mrf.mxu0
    %v4263 = vadd.f32 0.0, %v4262
    %v4264 = vpop.f32.mrf.mxu0
    %v4265 = vadd.f32 0.0, %v4264
    %4266 = vmatprep.mubr.bf16.mxu0 0
    %4267 = vmatmul.mubr.bf16.gmra.mxu0 %v4138
    %v4268 = vpop.f32.mrf.mxu0
    %v4269 = vadd.f32 0.0, %v4268
    %v4270 = vpop.f32.mrf.mxu0
    %v4271 = vadd.f32 0.0, %v4270
    %v4272 = vpop.f32.mrf.mxu0
    %v4273 = vadd.f32 0.0, %v4272
    %v4274 = vpop.f32.mrf.mxu0
    %v4275 = vadd.f32 0.0, %v4274
    %4276 = vmatprep.mubr.bf16.mxu0 0
    %4277 = vmatmul.mubr.bf16.gmra.mxu0 %v4141
    %v4278 = vpop.f32.mrf.mxu0
    %v4279 = vadd.f32 0.0, %v4278
    %v4280 = vpop.f32.mrf.mxu0
    %v4281 = vadd.f32 0.0, %v4280
    %v4282 = vpop.f32.mrf.mxu0
    %v4283 = vpop.f32.mrf.mxu0
    %4284 = vdwg.mxu0
    %v4285 = vadd.f32 %v4085, %v4178
    %v4286 = vadd.f32 %v4086, %v4180
    %v4287 = vadd.f32 %v4087, %v4249
    %v4288 = vadd.f32 %v4088, %v4251
    %v4289 = vadd.f32 %v4089, %v4182
    %v4290 = vadd.f32 %v4090, %v4184
    %v4291 = vadd.f32 %v4091, %v4253
    %v4292 = vadd.f32 %v4092, %v4255
    %v4293 = vadd.f32 %v4093, %v4188
    %v4294 = vadd.f32 %v4094, %v4190
    %v4295 = vadd.f32 %v4095, %v4259
    %v4296 = vadd.f32 %v4096, %v4261
    %v4297 = vadd.f32 %v4097, %v4192
    %v4298 = vadd.f32 %v4098, %v4194
    %v4299 = vadd.f32 %v4099, %v4263
    %v4300 = vadd.f32 %v4100, %v4265
    %v4301 = vadd.f32 %v4101, %v4198
    %v4302 = vadd.f32 %v4102, %v4200
    %v4303 = vadd.f32 %v4103, %v4269
    %v4304 = vadd.f32 %v4104, %v4271
    %v4305 = vadd.f32 %v4105, %v4202
    %v4306 = vadd.f32 %v4106, %v4204
    %v4307 = vadd.f32 %v4107, %v4273
    %v4308 = vadd.f32 %v4108, %v4275
    %v4309 = vadd.f32 %v4109, %v4208
    %v4310 = vadd.f32 %v4110, %v4210
    %v4311 = vadd.f32 %v4111, %v4279
    %v4312 = vadd.f32 %v4112, %v4281
    %v4313 = vmax.f32 %v4285, %v4287
    %v4314 = vmax.f32 %v4286, %v4288
    %v4315 = vmax.f32 %v4289, %v4291
    %v4316 = vmax.f32 %v4290, %v4292
    %v4317 = vmax.f32 %v4293, %v4295
    %v4318 = vmax.f32 %v4294, %v4296
    %v4319 = vmax.f32 %v4297, %v4299
    %v4320 = vmax.f32 %v4298, %v4300
    %v4321 = vmax.f32 %v4301, %v4303
    %v4322 = vmax.f32 %v4302, %v4304
    %v4323 = vmax.f32 %v4305, %v4307
    %v4324 = vmax.f32 %v4306, %v4308
    %v4325 = vmax.f32 %v4309, %v4311
    %v4326 = vmax.f32 %v4310, %v4312
    %v4327 = vmax.f32 %v3475, %v4313
    %v4328 = vmax.f32 %v3476, %v4314
    %v4329 = vmax.f32 %v3477, %v4315
    %v4330 = vmax.f32 %v3478, %v4316
    %v4331 = vmax.f32 %v3479, %v4317
    %v4332 = vmax.f32 %v3480, %v4318
    %v4333 = vmax.f32 %v3481, %v4319
    %v4334 = vmax.f32 %v3482, %v4320
    %v4335 = vmax.f32 %v3483, %v4321
    %v4336 = vmax.f32 %v3484, %v4322
    %v4337 = vmax.f32 %v3485, %v4323
    %v4338 = vmax.f32 %v3486, %v4324
    %v4339 = vmax.f32 %v3487, %v4325
    %v4340 = vmax.f32 %v3488, %v4326
    %v4341 = vld [vmem:[#allocation5] sm:$0x3]
    %v4343 = vlaneseq
    %v4344 = vshrl.u32 %v4343, 7
    %v4345 = vsub.s32 0, %v4344
    %v4346 = vrot.slane %v4341, %v4345
    %v4347 = vlaneseq
    %v4348 = vshrl.u32 %v4347, 7
    %v4349 = vsub.s32 1, %v4348
    %v4350 = vrot.slane %v4341, %v4349
    %v4353 = vadd.f32 %v4327, %v4346
    %v4354 = vadd.f32 %v4328, %v4350
    %v4355 = vadd.f32 %v4329, %v4346
    %v4356 = vadd.f32 %v4330, %v4350
    %v4357 = vadd.f32 %v4331, %v4346
    %v4358 = vadd.f32 %v4332, %v4350
    %v4359 = vadd.f32 %v4333, %v4346
    %v4360 = vadd.f32 %v4334, %v4350
    %v4361 = vadd.f32 %v4335, %v4346
    %v4362 = vadd.f32 %v4336, %v4350
    %v4363 = vadd.f32 %v4337, %v4346
    %v4364 = vadd.f32 %v4338, %v4350
    %v4365 = vadd.f32 %v4339, %v4346
    %v4366 = vadd.f32 %v4340, %v4350
    %v4367 = vmax.f32 %v4353, 0.0
    %v4368 = vmax.f32 %v4354, 0.0
    %v4369 = vmax.f32 %v4355, 0.0
    %v4370 = vmax.f32 %v4356, 0.0
    %v4371 = vmax.f32 %v4357, 0.0
    %v4372 = vmax.f32 %v4358, 0.0
    %v4373 = vmax.f32 %v4359, 0.0
    %v4374 = vmax.f32 %v4360, 0.0
    %v4375 = vmax.f32 %v4361, 0.0
    %v4376 = vmax.f32 %v4362, 0.0
    %v4377 = vmax.f32 %v4363, 0.0
    %v4378 = vmax.f32 %v4364, 0.0
    %v4379 = vmax.f32 %v4365, 0.0
    %v4380 = vmax.f32 %v4366, 0.0
    %v4381 = vpack.c.bf16 %v4367, %v4367
    %v4382 = vpack.c.bf16 %v4368, %v4368
    %v4383 = vpack.c.bf16 %v4369, %v4369
    %v4384 = vpack.c.bf16 %v4370, %v4370
    %v4385 = vpack.c.bf16 %v4371, %v4371
    %v4386 = vpack.c.bf16 %v4372, %v4372
    %v4387 = vpack.c.bf16 %v4373, %v4373
    %v4388 = vpack.c.bf16 %v4374, %v4374
    %v4389 = vpack.c.bf16 %v4375, %v4375
    %v4390 = vpack.c.bf16 %v4376, %v4376
    %v4391 = vpack.c.bf16 %v4377, %v4377
    %v4392 = vpack.c.bf16 %v4378, %v4378
    %v4393 = vpack.c.bf16 %v4379, %v4379
    %v4394 = vpack.c.bf16 %v4380, %v4380
    %v4409 = vunpack.c.l.b16 %v4381
    %v4410 = vunpack.c.l.b16 %v4382
    %v4411 = vunpack.c.l.b16 %v4383
    %v4412 = vunpack.c.l.b16 %v4384
    %v4413 = vunpack.c.l.b16 %v4385
    %v4414 = vunpack.c.l.b16 %v4386
    %v4415 = vunpack.c.l.b16 %v4387
    %v4416 = vunpack.c.l.b16 %v4388
    %v4417 = vunpack.c.l.b16 %v4389
    %v4418 = vunpack.c.l.b16 %v4390
    %v4419 = vunpack.c.l.b16 %v4391
    %v4420 = vunpack.c.l.b16 %v4392
    %v4421 = vunpack.c.l.b16 %v4393
    %v4422 = vunpack.c.l.b16 %v4394
    %v4423 = vpack.c.b16 %v4410, %v4409
    %v4424 = vpack.c.b16 %v4412, %v4411
    %v4425 = vpack.c.b16 %v4414, %v4413
    %v4426 = vpack.c.b16 %v4416, %v4415
    %v4427 = vpack.c.b16 %v4418, %v4417
    %v4428 = vpack.c.b16 %v4420, %v4419
    %v4429 = vpack.c.b16 %v4422, %v4421
    %s4437 = scalar_lea.vmem [#allocation2], 80
    %4438 = vst [vmem:[%s4437] sm:$0xff] %v4423
    %4439 = vst [vmem:[%s4437 + $0x8] sm:$0xff] %v4424
    %4440 = vst [vmem:[%s4437 + $0x10] sm:$0xff] %v4425
    %4441 = vst [vmem:[%s4437 + $0x18] sm:$0xff] %v4426
    %4442 = vst [vmem:[%s4437 + $0x20] sm:$0xff] %v4427
    %4443 = vst [vmem:[%s4437 + $0x28] sm:$0xff] %v4428
    %4444 = vst [vmem:[%s4437 + $0x30] sm:$0xff] %v4429
    %v4445 = vld [vmem:[#allocation2] sm:$0xff]
    %v4446 = vld [vmem:[#allocation2 + $0x8] sm:$0xff]
    %v4447 = vld [vmem:[#allocation2 + $0x10] sm:$0xff]
    %v4448 = vld [vmem:[#allocation2 + $0x18] sm:$0xff]
    %v4449 = vld [vmem:[#allocation2 + $0x20] sm:$0xff]
    %v4450 = vld [vmem:[#allocation2 + $0x28] sm:$0xff]
    %v4451 = vld [vmem:[#allocation2 + $0x30] sm:$0xff]
    %v4452 = vld [vmem:[#allocation7] sm:$0xff]
    %v4453 = vld [vmem:[#allocation7 + $0x8] sm:$0xff]
    %v4454 = vld [vmem:[#allocation7 + $0x10] sm:$0xff]
    %v4455 = vld [vmem:[#allocation7 + $0x18] sm:$0xff]
    %v4456 = vld [vmem:[#allocation7 + $0x20] sm:$0xff]
    %v4457 = vld [vmem:[#allocation7 + $0x28] sm:$0xff]
    %v4458 = vld [vmem:[#allocation7 + $0x30] sm:$0xff]
    %v4459 = vld [vmem:[#allocation7 + $0x38] sm:$0xff]
    %v4460 = vld [vmem:[#allocation7 + $0x40] sm:$0xff]
    %v4461 = vld [vmem:[#allocation7 + $0x48] sm:$0xff]
    %v4462 = vld [vmem:[#allocation7 + $0x50] sm:$0xff]
    %v4463 = vld [vmem:[#allocation7 + $0x58] sm:$0xff]
    %v4464 = vld [vmem:[#allocation7 + $0x60] sm:$0xff]
    %v4465 = vld [vmem:[#allocation7 + $0x68] sm:$0xff]
    %v4466 = vld [vmem:[#allocation7 + $0x70] sm:$0xff]
    %v4467 = vld [vmem:[#allocation7 + $0x78] sm:$0xff]
    %v4468 = vld [vmem:[#allocation7 + $0x80] sm:$0xff]
    %v4469 = vld [vmem:[#allocation7 + $0x88] sm:$0xff]
    %v4470 = vld [vmem:[#allocation7 + $0x90] sm:$0xff]
    %v4471 = vld [vmem:[#allocation7 + $0x98] sm:$0xff]
    %v4472 = vld [vmem:[#allocation7 + $0xa0] sm:$0xff]
    %v4473 = vld [vmem:[#allocation7 + $0xa8] sm:$0xff]
    %v4474 = vld [vmem:[#allocation7 + $0xb0] sm:$0xff]
    %v4475 = vld [vmem:[#allocation7 + $0xb8] sm:$0xff]
    %v4476 = vld [vmem:[#allocation7 + $0xc0] sm:$0xff]
    %v4477 = vld [vmem:[#allocation7 + $0xc8] sm:$0xff]
    %v4478 = vld [vmem:[#allocation7 + $0xd0] sm:$0xff]
    %v4479 = vld [vmem:[#allocation7 + $0xd8] sm:$0xff]
    %v4480 = vld [vmem:[#allocation7 + $0xe0] sm:$0xff]
    %v4481 = vld [vmem:[#allocation7 + $0xe8] sm:$0xff]
    %v4482 = vld [vmem:[#allocation7 + $0xf0] sm:$0xff]
    %v4483 = vld [vmem:[#allocation7 + $0xf8] sm:$0xff]
    %v4484 = vld [vmem:[#allocation7 + $0x100] sm:$0xff]
    %v4485 = vld [vmem:[#allocation7 + $0x108] sm:$0xff]
    %v4486 = vld [vmem:[#allocation7 + $0x110] sm:$0xff]
    %v4487 = vld [vmem:[#allocation7 + $0x118] sm:$0xff]
    %v4488 = vld [vmem:[#allocation7 + $0x120] sm:$0xff]
    %v4489 = vld [vmem:[#allocation7 + $0x128] sm:$0xff]
    %v4490 = vld [vmem:[#allocation7 + $0x130] sm:$0xff]
    %v4491 = vld [vmem:[#allocation7 + $0x138] sm:$0xff]
    %v4492 = vld [vmem:[#allocation7 + $0x140] sm:$0xff]
    %v4493 = vld [vmem:[#allocation7 + $0x148] sm:$0xff]
    %v4494 = vld [vmem:[#allocation7 + $0x150] sm:$0xff]
    %v4495 = vld [vmem:[#allocation7 + $0x158] sm:$0xff]
    %v4496 = vld [vmem:[#allocation7 + $0x160] sm:$0xff]
    %v4497 = vld [vmem:[#allocation7 + $0x168] sm:$0xff]
    %v4498 = vld [vmem:[#allocation7 + $0x170] sm:$0xff]
    %v4499 = vld [vmem:[#allocation7 + $0x178] sm:$0xff]
    %v4500 = vld [vmem:[#allocation7 + $0x180] sm:$0xff]
    %v4501 = vld [vmem:[#allocation7 + $0x188] sm:$0xff]
    %v4502 = vld [vmem:[#allocation7 + $0x190] sm:$0xff]
    %v4503 = vld [vmem:[#allocation7 + $0x198] sm:$0xff]
    %v4504 = vld [vmem:[#allocation7 + $0x1a0] sm:$0xff]
    %v4505 = vld [vmem:[#allocation7 + $0x1a8] sm:$0xff]
    %v4506 = vld [vmem:[#allocation7 + $0x1b0] sm:$0xff]
    %v4507 = vld [vmem:[#allocation7 + $0x1b8] sm:$0xff]
    %v4508 = vld [vmem:[#allocation7 + $0x1c0] sm:$0xff]
    %v4509 = vld [vmem:[#allocation7 + $0x1c8] sm:$0xff]
    %v4510 = vld [vmem:[#allocation7 + $0x1d0] sm:$0xff]
    %v4511 = vld [vmem:[#allocation7 + $0x1d8] sm:$0xff]
    %v4512 = vld [vmem:[#allocation7 + $0x1e0] sm:$0xff]
    %v4513 = vld [vmem:[#allocation7 + $0x1e8] sm:$0xff]
    %v4514 = vld [vmem:[#allocation7 + $0x1f0] sm:$0xff]
    %v4515 = vld [vmem:[#allocation7 + $0x1f8] sm:$0xff]
    %s4516 = scalar_lea.vmem [#allocation2], 72
    %v4517 = vld [vmem:[%s4516] sm:$0xff]
    %v4518 = vld [vmem:[%s4516 + $0x8] sm:$0xff]
    %v4519 = vld [vmem:[%s4516 + $0x10] sm:$0xff]
    %v4520 = vld [vmem:[%s4516 + $0x18] sm:$0xff]
    %v4521 = vld [vmem:[%s4516 + $0x20] sm:$0xff]
    %v4522 = vld [vmem:[%s4516 + $0x28] sm:$0xff]
    %v4523 = vld [vmem:[%s4516 + $0x30] sm:$0xff]
    %s4524 = scalar_lea.vmem [#allocation7], 512
    %v4525 = vld [vmem:[%s4524] sm:$0xff]
    %v4526 = vld [vmem:[%s4524 + $0x8] sm:$0xff]
    %v4527 = vld [vmem:[%s4524 + $0x10] sm:$0xff]
    %v4528 = vld [vmem:[%s4524 + $0x18] sm:$0xff]
    %v4529 = vld [vmem:[%s4524 + $0x20] sm:$0xff]
    %v4530 = vld [vmem:[%s4524 + $0x28] sm:$0xff]
    %v4531 = vld [vmem:[%s4524 + $0x30] sm:$0xff]
    %v4532 = vld [vmem:[%s4524 + $0x38] sm:$0xff]
    %v4533 = vld [vmem:[%s4524 + $0x40] sm:$0xff]
    %v4534 = vld [vmem:[%s4524 + $0x48] sm:$0xff]
    %v4535 = vld [vmem:[%s4524 + $0x50] sm:$0xff]
    %v4536 = vld [vmem:[%s4524 + $0x58] sm:$0xff]
    %v4537 = vld [vmem:[%s4524 + $0x60] sm:$0xff]
    %v4538 = vld [vmem:[%s4524 + $0x68] sm:$0xff]
    %v4539 = vld [vmem:[%s4524 + $0x70] sm:$0xff]
    %v4540 = vld [vmem:[%s4524 + $0x78] sm:$0xff]
    %v4541 = vld [vmem:[%s4524 + $0x80] sm:$0xff]
    %v4542 = vld [vmem:[%s4524 + $0x88] sm:$0xff]
    %v4543 = vld [vmem:[%s4524 + $0x90] sm:$0xff]
    %v4544 = vld [vmem:[%s4524 + $0x98] sm:$0xff]
    %v4545 = vld [vmem:[%s4524 + $0xa0] sm:$0xff]
    %v4546 = vld [vmem:[%s4524 + $0xa8] sm:$0xff]
    %v4547 = vld [vmem:[%s4524 + $0xb0] sm:$0xff]
    %v4548 = vld [vmem:[%s4524 + $0xb8] sm:$0xff]
    %v4549 = vld [vmem:[%s4524 + $0xc0] sm:$0xff]
    %v4550 = vld [vmem:[%s4524 + $0xc8] sm:$0xff]
    %v4551 = vld [vmem:[%s4524 + $0xd0] sm:$0xff]
    %v4552 = vld [vmem:[%s4524 + $0xd8] sm:$0xff]
    %v4553 = vld [vmem:[%s4524 + $0xe0] sm:$0xff]
    %v4554 = vld [vmem:[%s4524 + $0xe8] sm:$0xff]
    %v4555 = vld [vmem:[%s4524 + $0xf0] sm:$0xff]
    %v4556 = vld [vmem:[%s4524 + $0xf8] sm:$0xff]
    %v4557 = vld [vmem:[%s4524 + $0x100] sm:$0xff]
    %v4558 = vld [vmem:[%s4524 + $0x108] sm:$0xff]
    %v4559 = vld [vmem:[%s4524 + $0x110] sm:$0xff]
    %v4560 = vld [vmem:[%s4524 + $0x118] sm:$0xff]
    %v4561 = vld [vmem:[%s4524 + $0x120] sm:$0xff]
    %v4562 = vld [vmem:[%s4524 + $0x128] sm:$0xff]
    %v4563 = vld [vmem:[%s4524 + $0x130] sm:$0xff]
    %v4564 = vld [vmem:[%s4524 + $0x138] sm:$0xff]
    %v4565 = vld [vmem:[%s4524 + $0x140] sm:$0xff]
    %v4566 = vld [vmem:[%s4524 + $0x148] sm:$0xff]
    %v4567 = vld [vmem:[%s4524 + $0x150] sm:$0xff]
    %v4568 = vld [vmem:[%s4524 + $0x158] sm:$0xff]
    %v4569 = vld [vmem:[%s4524 + $0x160] sm:$0xff]
    %v4570 = vld [vmem:[%s4524 + $0x168] sm:$0xff]
    %v4571 = vld [vmem:[%s4524 + $0x170] sm:$0xff]
    %v4572 = vld [vmem:[%s4524 + $0x178] sm:$0xff]
    %v4573 = vld [vmem:[%s4524 + $0x180] sm:$0xff]
    %v4574 = vld [vmem:[%s4524 + $0x188] sm:$0xff]
    %v4575 = vld [vmem:[%s4524 + $0x190] sm:$0xff]
    %v4576 = vld [vmem:[%s4524 + $0x198] sm:$0xff]
    %v4577 = vld [vmem:[%s4524 + $0x1a0] sm:$0xff]
    %v4578 = vld [vmem:[%s4524 + $0x1a8] sm:$0xff]
    %v4579 = vld [vmem:[%s4524 + $0x1b0] sm:$0xff]
    %v4580 = vld [vmem:[%s4524 + $0x1b8] sm:$0xff]
    %v4581 = vld [vmem:[%s4524 + $0x1c0] sm:$0xff]
    %v4582 = vld [vmem:[%s4524 + $0x1c8] sm:$0xff]
    %v4583 = vld [vmem:[%s4524 + $0x1d0] sm:$0xff]
    %v4584 = vld [vmem:[%s4524 + $0x1d8] sm:$0xff]
    %v4585 = vld [vmem:[%s4524 + $0x1e0] sm:$0xff]
    %v4586 = vld [vmem:[%s4524 + $0x1e8] sm:$0xff]
    %v4587 = vld [vmem:[%s4524 + $0x1f0] sm:$0xff]
    %v4588 = vld [vmem:[%s4524 + $0x1f8] sm:$0xff]
    %v4596 = vunpack.c.l.b16 %v4517
    %v4597 = vunpack.c.h.b16 %v4517
    %v4598 = vunpack.c.l.b16 %v4518
    %v4599 = vunpack.c.h.b16 %v4518
    %v4600 = vunpack.c.l.b16 %v4519
    %v4601 = vunpack.c.h.b16 %v4519
    %v4602 = vunpack.c.l.b16 %v4520
    %v4603 = vunpack.c.h.b16 %v4520
    %v4604 = vunpack.c.l.b16 %v4521
    %v4605 = vunpack.c.h.b16 %v4521
    %v4606 = vunpack.c.l.b16 %v4522
    %v4607 = vunpack.c.h.b16 %v4522
    %v4608 = vunpack.c.l.b16 %v4523
    %v4609 = vunpack.c.h.b16 %v4523
    %v4610 = vpack.c.b16 %v4598, %v4596
    %v4611 = vpack.c.b16 %v4599, %v4597
    %v4612 = vpack.c.b16 %v4602, %v4600
    %v4613 = vpack.c.b16 %v4603, %v4601
    %v4614 = vpack.c.b16 %v4606, %v4604
    %v4615 = vpack.c.b16 %v4607, %v4605
    %v4616 = vpack.c.b16 %v4608, %v4608
    %v4617 = vpack.c.b16 %v4609, %v4609
    %v4690 = vunpack.c.l.b16 %v4525
    %v4691 = vunpack.c.h.b16 %v4525
    %v4692 = vunpack.c.l.b16 %v4526
    %v4693 = vunpack.c.h.b16 %v4526
    %v4694 = vunpack.c.l.b16 %v4527
    %v4695 = vunpack.c.h.b16 %v4527
    %v4696 = vunpack.c.l.b16 %v4528
    %v4697 = vunpack.c.h.b16 %v4528
    %v4698 = vunpack.c.l.b16 %v4529
    %v4699 = vunpack.c.h.b16 %v4529
    %v4700 = vunpack.c.l.b16 %v4530
    %v4701 = vunpack.c.h.b16 %v4530
    %v4702 = vunpack.c.l.b16 %v4531
    %v4703 = vunpack.c.h.b16 %v4531
    %v4704 = vunpack.c.l.b16 %v4532
    %v4705 = vunpack.c.h.b16 %v4532
    %v4706 = vunpack.c.l.b16 %v4533
    %v4707 = vunpack.c.h.b16 %v4533
    %v4708 = vunpack.c.l.b16 %v4534
    %v4709 = vunpack.c.h.b16 %v4534
    %v4710 = vunpack.c.l.b16 %v4535
    %v4711 = vunpack.c.h.b16 %v4535
    %v4712 = vunpack.c.l.b16 %v4536
    %v4713 = vunpack.c.h.b16 %v4536
    %v4714 = vunpack.c.l.b16 %v4537
    %v4715 = vunpack.c.h.b16 %v4537
    %v4716 = vunpack.c.l.b16 %v4538
    %v4717 = vunpack.c.h.b16 %v4538
    %v4718 = vunpack.c.l.b16 %v4539
    %v4719 = vunpack.c.h.b16 %v4539
    %v4720 = vunpack.c.l.b16 %v4540
    %v4721 = vunpack.c.h.b16 %v4540
    %v4722 = vunpack.c.l.b16 %v4541
    %v4723 = vunpack.c.h.b16 %v4541
    %v4724 = vunpack.c.l.b16 %v4542
    %v4725 = vunpack.c.h.b16 %v4542
    %v4726 = vunpack.c.l.b16 %v4543
    %v4727 = vunpack.c.h.b16 %v4543
    %v4728 = vunpack.c.l.b16 %v4544
    %v4729 = vunpack.c.h.b16 %v4544
    %v4730 = vunpack.c.l.b16 %v4545
    %v4731 = vunpack.c.h.b16 %v4545
    %v4732 = vunpack.c.l.b16 %v4546
    %v4733 = vunpack.c.h.b16 %v4546
    %v4734 = vunpack.c.l.b16 %v4547
    %v4735 = vunpack.c.h.b16 %v4547
    %v4736 = vunpack.c.l.b16 %v4548
    %v4737 = vunpack.c.h.b16 %v4548
    %v4738 = vunpack.c.l.b16 %v4549
    %v4739 = vunpack.c.h.b16 %v4549
    %v4740 = vunpack.c.l.b16 %v4550
    %v4741 = vunpack.c.h.b16 %v4550
    %v4742 = vunpack.c.l.b16 %v4551
    %v4743 = vunpack.c.h.b16 %v4551
    %v4744 = vunpack.c.l.b16 %v4552
    %v4745 = vunpack.c.h.b16 %v4552
    %v4746 = vunpack.c.l.b16 %v4553
    %v4747 = vunpack.c.h.b16 %v4553
    %v4748 = vunpack.c.l.b16 %v4554
    %v4749 = vunpack.c.h.b16 %v4554
    %v4750 = vunpack.c.l.b16 %v4555
    %v4751 = vunpack.c.h.b16 %v4555
    %v4752 = vunpack.c.l.b16 %v4556
    %v4753 = vunpack.c.h.b16 %v4556
    %v4754 = vunpack.c.l.b16 %v4557
    %v4755 = vunpack.c.h.b16 %v4557
    %v4756 = vunpack.c.l.b16 %v4558
    %v4757 = vunpack.c.h.b16 %v4558
    %v4758 = vunpack.c.l.b16 %v4559
    %v4759 = vunpack.c.h.b16 %v4559
    %v4760 = vunpack.c.l.b16 %v4560
    %v4761 = vunpack.c.h.b16 %v4560
    %v4762 = vunpack.c.l.b16 %v4561
    %v4763 = vunpack.c.h.b16 %v4561
    %v4764 = vunpack.c.l.b16 %v4562
    %v4765 = vunpack.c.h.b16 %v4562
    %v4766 = vunpack.c.l.b16 %v4563
    %v4767 = vunpack.c.h.b16 %v4563
    %v4768 = vunpack.c.l.b16 %v4564
    %v4769 = vunpack.c.h.b16 %v4564
    %v4770 = vunpack.c.l.b16 %v4565
    %v4771 = vunpack.c.h.b16 %v4565
    %v4772 = vunpack.c.l.b16 %v4566
    %v4773 = vunpack.c.h.b16 %v4566
    %v4774 = vunpack.c.l.b16 %v4567
    %v4775 = vunpack.c.h.b16 %v4567
    %v4776 = vunpack.c.l.b16 %v4568
    %v4777 = vunpack.c.h.b16 %v4568
    %v4778 = vunpack.c.l.b16 %v4569
    %v4779 = vunpack.c.h.b16 %v4569
    %v4780 = vunpack.c.l.b16 %v4570
    %v4781 = vunpack.c.h.b16 %v4570
    %v4782 = vunpack.c.l.b16 %v4571
    %v4783 = vunpack.c.h.b16 %v4571
    %v4784 = vunpack.c.l.b16 %v4572
    %v4785 = vunpack.c.h.b16 %v4572
    %v4786 = vunpack.c.l.b16 %v4573
    %v4787 = vunpack.c.h.b16 %v4573
    %v4788 = vunpack.c.l.b16 %v4574
    %v4789 = vunpack.c.h.b16 %v4574
    %v4790 = vunpack.c.l.b16 %v4575
    %v4791 = vunpack.c.h.b16 %v4575
    %v4792 = vunpack.c.l.b16 %v4576
    %v4793 = vunpack.c.h.b16 %v4576
    %v4794 = vunpack.c.l.b16 %v4577
    %v4795 = vunpack.c.h.b16 %v4577
    %v4796 = vunpack.c.l.b16 %v4578
    %v4797 = vunpack.c.h.b16 %v4578
    %v4798 = vunpack.c.l.b16 %v4579
    %v4799 = vunpack.c.h.b16 %v4579
    %v4800 = vunpack.c.l.b16 %v4580
    %v4801 = vunpack.c.h.b16 %v4580
    %v4802 = vunpack.c.l.b16 %v4581
    %v4803 = vunpack.c.h.b16 %v4581
    %v4804 = vunpack.c.l.b16 %v4582
    %v4805 = vunpack.c.h.b16 %v4582
    %v4806 = vunpack.c.l.b16 %v4583
    %v4807 = vunpack.c.h.b16 %v4583
    %v4808 = vunpack.c.l.b16 %v4584
    %v4809 = vunpack.c.h.b16 %v4584
    %v4810 = vunpack.c.l.b16 %v4585
    %v4811 = vunpack.c.h.b16 %v4585
    %v4812 = vunpack.c.l.b16 %v4586
    %v4813 = vunpack.c.h.b16 %v4586
    %v4814 = vunpack.c.l.b16 %v4587
    %v4815 = vunpack.c.h.b16 %v4587
    %v4816 = vunpack.c.l.b16 %v4588
    %v4817 = vunpack.c.h.b16 %v4588
    %v4818 = vpack.c.b16 %v4694, %v4690
    %v4819 = vpack.c.b16 %v4695, %v4691
    %v4820 = vpack.c.b16 %v4696, %v4692
    %v4821 = vpack.c.b16 %v4697, %v4693
    %v4822 = vpack.c.b16 %v4702, %v4698
    %v4823 = vpack.c.b16 %v4703, %v4699
    %v4824 = vpack.c.b16 %v4704, %v4700
    %v4825 = vpack.c.b16 %v4705, %v4701
    %v4826 = vpack.c.b16 %v4710, %v4706
    %v4827 = vpack.c.b16 %v4711, %v4707
    %v4828 = vpack.c.b16 %v4712, %v4708
    %v4829 = vpack.c.b16 %v4713, %v4709
    %v4830 = vpack.c.b16 %v4718, %v4714
    %v4831 = vpack.c.b16 %v4719, %v4715
    %v4832 = vpack.c.b16 %v4720, %v4716
    %v4833 = vpack.c.b16 %v4721, %v4717
    %v4834 = vpack.c.b16 %v4726, %v4722
    %v4835 = vpack.c.b16 %v4727, %v4723
    %v4836 = vpack.c.b16 %v4728, %v4724
    %v4837 = vpack.c.b16 %v4729, %v4725
    %v4838 = vpack.c.b16 %v4734, %v4730
    %v4839 = vpack.c.b16 %v4735, %v4731
    %v4840 = vpack.c.b16 %v4736, %v4732
    %v4841 = vpack.c.b16 %v4737, %v4733
    %v4842 = vpack.c.b16 %v4742, %v4738
    %v4843 = vpack.c.b16 %v4743, %v4739
    %v4844 = vpack.c.b16 %v4744, %v4740
    %v4845 = vpack.c.b16 %v4745, %v4741
    %v4846 = vpack.c.b16 %v4750, %v4746
    %v4847 = vpack.c.b16 %v4751, %v4747
    %v4848 = vpack.c.b16 %v4752, %v4748
    %v4849 = vpack.c.b16 %v4753, %v4749
    %v4850 = vpack.c.b16 %v4758, %v4754
    %v4851 = vpack.c.b16 %v4759, %v4755
    %v4852 = vpack.c.b16 %v4760, %v4756
    %v4853 = vpack.c.b16 %v4761, %v4757
    %v4854 = vpack.c.b16 %v4766, %v4762
    %v4855 = vpack.c.b16 %v4767, %v4763
    %v4856 = vpack.c.b16 %v4768, %v4764
    %v4857 = vpack.c.b16 %v4769, %v4765
    %v4858 = vpack.c.b16 %v4774, %v4770
    %v4859 = vpack.c.b16 %v4775, %v4771
    %v4860 = vpack.c.b16 %v4776, %v4772
    %v4861 = vpack.c.b16 %v4777, %v4773
    %v4862 = vpack.c.b16 %v4782, %v4778
    %v4863 = vpack.c.b16 %v4783, %v4779
    %v4864 = vpack.c.b16 %v4784, %v4780
    %v4865 = vpack.c.b16 %v4785, %v4781
    %v4866 = vpack.c.b16 %v4790, %v4786
    %v4867 = vpack.c.b16 %v4791, %v4787
    %v4868 = vpack.c.b16 %v4792, %v4788
    %v4869 = vpack.c.b16 %v4793, %v4789
    %v4870 = vpack.c.b16 %v4798, %v4794
    %v4871 = vpack.c.b16 %v4799, %v4795
    %v4872 = vpack.c.b16 %v4800, %v4796
    %v4873 = vpack.c.b16 %v4801, %v4797
    %v4874 = vpack.c.b16 %v4806, %v4802
    %v4875 = vpack.c.b16 %v4807, %v4803
    %v4876 = vpack.c.b16 %v4808, %v4804
    %v4877 = vpack.c.b16 %v4809, %v4805
    %v4878 = vpack.c.b16 %v4814, %v4810
    %v4879 = vpack.c.b16 %v4815, %v4811
    %v4880 = vpack.c.b16 %v4816, %v4812
    %v4881 = vpack.c.b16 %v4817, %v4813
    %4946 = vmatprep.subr.bf16.mxu0 %v4847
    %4947 = vmatpush1.bf16.msra.mxu0 %v4846
    %4948 = vmatprep.subr.bf16.mxu0 %v4843
    %4949 = vmatpush1.bf16.msra.mxu0 %v4842
    %4950 = vmatprep.subr.bf16.mxu0 %v4839
    %4951 = vmatpush1.bf16.msra.mxu0 %v4838
    %4952 = vmatprep.subr.bf16.mxu0 %v4835
    %4953 = vmatpush1.bf16.msra.mxu0 %v4834
    %4954 = vmatprep.subr.bf16.mxu0 %v4831
    %4955 = vmatpush1.bf16.msra.mxu0 %v4830
    %4956 = vmatprep.subr.bf16.mxu0 %v4827
    %4957 = vmatpush1.bf16.msra.mxu0 %v4826
    %4958 = vmatprep.subr.bf16.mxu0 %v4823
    %4959 = vmatpush1.bf16.msra.mxu0 %v4822
    %4960 = vmatprep.subr.bf16.mxu0 %v4819
    %4961 = vmatpush1.bf16.msra.mxu0 %v4818
    %4962 = vmatprep.subr.bf16.mxu0 %v4879
    %4963 = vmatpush2.bf16.msra.mxu0 %v4878
    %4964 = vmatprep.subr.bf16.mxu0 %v4875
    %4965 = vmatpush2.bf16.msra.mxu0 %v4874
    %4966 = vmatprep.subr.bf16.mxu0 %v4871
    %4967 = vmatpush2.bf16.msra.mxu0 %v4870
    %4968 = vmatprep.subr.bf16.mxu0 %v4867
    %4969 = vmatpush2.bf16.msra.mxu0 %v4866
    %4970 = vmatprep.subr.bf16.mxu0 %v4863
    %4971 = vmatpush2.bf16.msra.mxu0 %v4862
    %4972 = vmatprep.subr.bf16.mxu0 %v4859
    %4973 = vmatpush2.bf16.msra.mxu0 %v4858
    %4974 = vmatprep.subr.bf16.mxu0 %v4855
    %4975 = vmatpush2.bf16.msra.mxu0 %v4854
    %4976 = vmatprep.subr.bf16.mxu0 %v4851
    %4977 = vmatpush2.bf16.msra.mxu0 %v4850
    %4978 = vmatprep.mubr.bf16.mxu0 %v4611
    %4979 = vmatmul.mubr.bf16.gmra.mxu0 %v4610
    %v4980 = vpop.f32.mrf.mxu0
    %v4981 = vadd.f32 0.0, %v4980
    %v4982 = vpop.f32.mrf.mxu0
    %v4983 = vadd.f32 0.0, %v4982
    %v4984 = vpop.f32.mrf.mxu0
    %v4985 = vadd.f32 0.0, %v4984
    %v4986 = vpop.f32.mrf.mxu0
    %v4987 = vadd.f32 0.0, %v4986
    %4988 = vmatprep.mubr.bf16.mxu0 %v4613
    %4989 = vmatmul.mubr.bf16.gmra.mxu0 %v4612
    %v4990 = vpop.f32.mrf.mxu0
    %v4991 = vadd.f32 0.0, %v4990
    %v4992 = vpop.f32.mrf.mxu0
    %v4993 = vadd.f32 0.0, %v4992
    %v4994 = vpop.f32.mrf.mxu0
    %v4995 = vadd.f32 0.0, %v4994
    %v4996 = vpop.f32.mrf.mxu0
    %v4997 = vadd.f32 0.0, %v4996
    %4998 = vmatprep.mubr.bf16.mxu0 %v4615
    %4999 = vmatmul.mubr.bf16.gmra.mxu0 %v4614
    %v5000 = vpop.f32.mrf.mxu0
    %v5001 = vadd.f32 0.0, %v5000
    %v5002 = vpop.f32.mrf.mxu0
    %v5003 = vadd.f32 0.0, %v5002
    %v5004 = vpop.f32.mrf.mxu0
    %v5005 = vadd.f32 0.0, %v5004
    %v5006 = vpop.f32.mrf.mxu0
    %v5007 = vadd.f32 0.0, %v5006
    %5008 = vmatprep.mubr.bf16.mxu0 %v4617
    %5009 = vmatmul.mubr.bf16.gmra.mxu0 %v4616
    %v5010 = vpop.f32.mrf.mxu0
    %v5011 = vadd.f32 0.0, %v5010
    %v5012 = vpop.f32.mrf.mxu0
    %v5013 = vadd.f32 0.0, %v5012
    %v5014 = vpop.f32.mrf.mxu0
    %v5015 = vpop.f32.mrf.mxu0
    %5016 = vdwg.mxu0
    %5017 = vmatprep.subr.bf16.mxu0 %v4849
    %5018 = vmatpush1.bf16.msra.mxu0 %v4848
    %5019 = vmatprep.subr.bf16.mxu0 %v4845
    %5020 = vmatpush1.bf16.msra.mxu0 %v4844
    %5021 = vmatprep.subr.bf16.mxu0 %v4841
    %5022 = vmatpush1.bf16.msra.mxu0 %v4840
    %5023 = vmatprep.subr.bf16.mxu0 %v4837
    %5024 = vmatpush1.bf16.msra.mxu0 %v4836
    %5025 = vmatprep.subr.bf16.mxu0 %v4833
    %5026 = vmatpush1.bf16.msra.mxu0 %v4832
    %5027 = vmatprep.subr.bf16.mxu0 %v4829
    %5028 = vmatpush1.bf16.msra.mxu0 %v4828
    %5029 = vmatprep.subr.bf16.mxu0 %v4825
    %5030 = vmatpush1.bf16.msra.mxu0 %v4824
    %5031 = vmatprep.subr.bf16.mxu0 %v4821
    %5032 = vmatpush1.bf16.msra.mxu0 %v4820
    %5033 = vmatprep.subr.bf16.mxu0 %v4881
    %5034 = vmatpush2.bf16.msra.mxu0 %v4880
    %5035 = vmatprep.subr.bf16.mxu0 %v4877
    %5036 = vmatpush2.bf16.msra.mxu0 %v4876
    %5037 = vmatprep.subr.bf16.mxu0 %v4873
    %5038 = vmatpush2.bf16.msra.mxu0 %v4872
    %5039 = vmatprep.subr.bf16.mxu0 %v4869
    %5040 = vmatpush2.bf16.msra.mxu0 %v4868
    %5041 = vmatprep.subr.bf16.mxu0 %v4865
    %5042 = vmatpush2.bf16.msra.mxu0 %v4864
    %5043 = vmatprep.subr.bf16.mxu0 %v4861
    %5044 = vmatpush2.bf16.msra.mxu0 %v4860
    %5045 = vmatprep.subr.bf16.mxu0 %v4857
    %5046 = vmatpush2.bf16.msra.mxu0 %v4856
    %5047 = vmatprep.subr.bf16.mxu0 %v4853
    %5048 = vmatpush2.bf16.msra.mxu0 %v4852
    %5049 = vmatprep.mubr.bf16.mxu0 %v4611
    %5050 = vmatmul.mubr.bf16.gmra.mxu0 %v4610
    %v5051 = vpop.f32.mrf.mxu0
    %v5052 = vadd.f32 0.0, %v5051
    %v5053 = vpop.f32.mrf.mxu0
    %v5054 = vadd.f32 0.0, %v5053
    %v5055 = vpop.f32.mrf.mxu0
    %v5056 = vadd.f32 0.0, %v5055
    %v5057 = vpop.f32.mrf.mxu0
    %v5058 = vadd.f32 0.0, %v5057
    %5059 = vmatprep.mubr.bf16.mxu0 %v4613
    %5060 = vmatmul.mubr.bf16.gmra.mxu0 %v4612
    %v5061 = vpop.f32.mrf.mxu0
    %v5062 = vadd.f32 0.0, %v5061
    %v5063 = vpop.f32.mrf.mxu0
    %v5064 = vadd.f32 0.0, %v5063
    %v5065 = vpop.f32.mrf.mxu0
    %v5066 = vadd.f32 0.0, %v5065
    %v5067 = vpop.f32.mrf.mxu0
    %v5068 = vadd.f32 0.0, %v5067
    %5069 = vmatprep.mubr.bf16.mxu0 %v4615
    %5070 = vmatmul.mubr.bf16.gmra.mxu0 %v4614
    %v5071 = vpop.f32.mrf.mxu0
    %v5072 = vadd.f32 0.0, %v5071
    %v5073 = vpop.f32.mrf.mxu0
    %v5074 = vadd.f32 0.0, %v5073
    %v5075 = vpop.f32.mrf.mxu0
    %v5076 = vadd.f32 0.0, %v5075
    %v5077 = vpop.f32.mrf.mxu0
    %v5078 = vadd.f32 0.0, %v5077
    %5079 = vmatprep.mubr.bf16.mxu0 %v4617
    %5080 = vmatmul.mubr.bf16.gmra.mxu0 %v4616
    %v5081 = vpop.f32.mrf.mxu0
    %v5082 = vadd.f32 0.0, %v5081
    %v5083 = vpop.f32.mrf.mxu0
    %v5084 = vadd.f32 0.0, %v5083
    %v5085 = vpop.f32.mrf.mxu0
    %v5086 = vpop.f32.mrf.mxu0
    %5087 = vdwg.mxu0
    %v5095 = vunpack.c.l.b16 %v4445
    %v5096 = vunpack.c.h.b16 %v4445
    %v5097 = vunpack.c.l.b16 %v4446
    %v5098 = vunpack.c.h.b16 %v4446
    %v5099 = vunpack.c.l.b16 %v4447
    %v5100 = vunpack.c.h.b16 %v4447
    %v5101 = vunpack.c.l.b16 %v4448
    %v5102 = vunpack.c.h.b16 %v4448
    %v5103 = vunpack.c.l.b16 %v4449
    %v5104 = vunpack.c.h.b16 %v4449
    %v5105 = vunpack.c.l.b16 %v4450
    %v5106 = vunpack.c.h.b16 %v4450
    %v5107 = vunpack.c.l.b16 %v4451
    %v5108 = vunpack.c.h.b16 %v4451
    %v5109 = vpack.c.b16 %v5097, %v5095
    %v5110 = vpack.c.b16 %v5098, %v5096
    %v5111 = vpack.c.b16 %v5101, %v5099
    %v5112 = vpack.c.b16 %v5102, %v5100
    %v5113 = vpack.c.b16 %v5105, %v5103
    %v5114 = vpack.c.b16 %v5106, %v5104
    %v5115 = vpack.c.b16 %v5107, %v5107
    %v5116 = vpack.c.b16 %v5108, %v5108
    %v5189 = vunpack.c.l.b16 %v4452
    %v5190 = vunpack.c.h.b16 %v4452
    %v5191 = vunpack.c.l.b16 %v4453
    %v5192 = vunpack.c.h.b16 %v4453
    %v5193 = vunpack.c.l.b16 %v4454
    %v5194 = vunpack.c.h.b16 %v4454
    %v5195 = vunpack.c.l.b16 %v4455
    %v5196 = vunpack.c.h.b16 %v4455
    %v5197 = vunpack.c.l.b16 %v4456
    %v5198 = vunpack.c.h.b16 %v4456
    %v5199 = vunpack.c.l.b16 %v4457
    %v5200 = vunpack.c.h.b16 %v4457
    %v5201 = vunpack.c.l.b16 %v4458
    %v5202 = vunpack.c.h.b16 %v4458
    %v5203 = vunpack.c.l.b16 %v4459
    %v5204 = vunpack.c.h.b16 %v4459
    %v5205 = vunpack.c.l.b16 %v4460
    %v5206 = vunpack.c.h.b16 %v4460
    %v5207 = vunpack.c.l.b16 %v4461
    %v5208 = vunpack.c.h.b16 %v4461
    %v5209 = vunpack.c.l.b16 %v4462
    %v5210 = vunpack.c.h.b16 %v4462
    %v5211 = vunpack.c.l.b16 %v4463
    %v5212 = vunpack.c.h.b16 %v4463
    %v5213 = vunpack.c.l.b16 %v4464
    %v5214 = vunpack.c.h.b16 %v4464
    %v5215 = vunpack.c.l.b16 %v4465
    %v5216 = vunpack.c.h.b16 %v4465
    %v5217 = vunpack.c.l.b16 %v4466
    %v5218 = vunpack.c.h.b16 %v4466
    %v5219 = vunpack.c.l.b16 %v4467
    %v5220 = vunpack.c.h.b16 %v4467
    %v5221 = vunpack.c.l.b16 %v4468
    %v5222 = vunpack.c.h.b16 %v4468
    %v5223 = vunpack.c.l.b16 %v4469
    %v5224 = vunpack.c.h.b16 %v4469
    %v5225 = vunpack.c.l.b16 %v4470
    %v5226 = vunpack.c.h.b16 %v4470
    %v5227 = vunpack.c.l.b16 %v4471
    %v5228 = vunpack.c.h.b16 %v4471
    %v5229 = vunpack.c.l.b16 %v4472
    %v5230 = vunpack.c.h.b16 %v4472
    %v5231 = vunpack.c.l.b16 %v4473
    %v5232 = vunpack.c.h.b16 %v4473
    %v5233 = vunpack.c.l.b16 %v4474
    %v5234 = vunpack.c.h.b16 %v4474
    %v5235 = vunpack.c.l.b16 %v4475
    %v5236 = vunpack.c.h.b16 %v4475
    %v5237 = vunpack.c.l.b16 %v4476
    %v5238 = vunpack.c.h.b16 %v4476
    %v5239 = vunpack.c.l.b16 %v4477
    %v5240 = vunpack.c.h.b16 %v4477
    %v5241 = vunpack.c.l.b16 %v4478
    %v5242 = vunpack.c.h.b16 %v4478
    %v5243 = vunpack.c.l.b16 %v4479
    %v5244 = vunpack.c.h.b16 %v4479
    %v5245 = vunpack.c.l.b16 %v4480
    %v5246 = vunpack.c.h.b16 %v4480
    %v5247 = vunpack.c.l.b16 %v4481
    %v5248 = vunpack.c.h.b16 %v4481
    %v5249 = vunpack.c.l.b16 %v4482
    %v5250 = vunpack.c.h.b16 %v4482
    %v5251 = vunpack.c.l.b16 %v4483
    %v5252 = vunpack.c.h.b16 %v4483
    %v5253 = vunpack.c.l.b16 %v4484
    %v5254 = vunpack.c.h.b16 %v4484
    %v5255 = vunpack.c.l.b16 %v4485
    %v5256 = vunpack.c.h.b16 %v4485
    %v5257 = vunpack.c.l.b16 %v4486
    %v5258 = vunpack.c.h.b16 %v4486
    %v5259 = vunpack.c.l.b16 %v4487
    %v5260 = vunpack.c.h.b16 %v4487
    %v5261 = vunpack.c.l.b16 %v4488
    %v5262 = vunpack.c.h.b16 %v4488
    %v5263 = vunpack.c.l.b16 %v4489
    %v5264 = vunpack.c.h.b16 %v4489
    %v5265 = vunpack.c.l.b16 %v4490
    %v5266 = vunpack.c.h.b16 %v4490
    %v5267 = vunpack.c.l.b16 %v4491
    %v5268 = vunpack.c.h.b16 %v4491
    %v5269 = vunpack.c.l.b16 %v4492
    %v5270 = vunpack.c.h.b16 %v4492
    %v5271 = vunpack.c.l.b16 %v4493
    %v5272 = vunpack.c.h.b16 %v4493
    %v5273 = vunpack.c.l.b16 %v4494
    %v5274 = vunpack.c.h.b16 %v4494
    %v5275 = vunpack.c.l.b16 %v4495
    %v5276 = vunpack.c.h.b16 %v4495
    %v5277 = vunpack.c.l.b16 %v4496
    %v5278 = vunpack.c.h.b16 %v4496
    %v5279 = vunpack.c.l.b16 %v4497
    %v5280 = vunpack.c.h.b16 %v4497
    %v5281 = vunpack.c.l.b16 %v4498
    %v5282 = vunpack.c.h.b16 %v4498
    %v5283 = vunpack.c.l.b16 %v4499
    %v5284 = vunpack.c.h.b16 %v4499
    %v5285 = vunpack.c.l.b16 %v4500
    %v5286 = vunpack.c.h.b16 %v4500
    %v5287 = vunpack.c.l.b16 %v4501
    %v5288 = vunpack.c.h.b16 %v4501
    %v5289 = vunpack.c.l.b16 %v4502
    %v5290 = vunpack.c.h.b16 %v4502
    %v5291 = vunpack.c.l.b16 %v4503
    %v5292 = vunpack.c.h.b16 %v4503
    %v5293 = vunpack.c.l.b16 %v4504
    %v5294 = vunpack.c.h.b16 %v4504
    %v5295 = vunpack.c.l.b16 %v4505
    %v5296 = vunpack.c.h.b16 %v4505
    %v5297 = vunpack.c.l.b16 %v4506
    %v5298 = vunpack.c.h.b16 %v4506
    %v5299 = vunpack.c.l.b16 %v4507
    %v5300 = vunpack.c.h.b16 %v4507
    %v5301 = vunpack.c.l.b16 %v4508
    %v5302 = vunpack.c.h.b16 %v4508
    %v5303 = vunpack.c.l.b16 %v4509
    %v5304 = vunpack.c.h.b16 %v4509
    %v5305 = vunpack.c.l.b16 %v4510
    %v5306 = vunpack.c.h.b16 %v4510
    %v5307 = vunpack.c.l.b16 %v4511
    %v5308 = vunpack.c.h.b16 %v4511
    %v5309 = vunpack.c.l.b16 %v4512
    %v5310 = vunpack.c.h.b16 %v4512
    %v5311 = vunpack.c.l.b16 %v4513
    %v5312 = vunpack.c.h.b16 %v4513
    %v5313 = vunpack.c.l.b16 %v4514
    %v5314 = vunpack.c.h.b16 %v4514
    %v5315 = vunpack.c.l.b16 %v4515
    %v5316 = vunpack.c.h.b16 %v4515
    %v5317 = vpack.c.b16 %v5193, %v5189
    %v5318 = vpack.c.b16 %v5194, %v5190
    %v5319 = vpack.c.b16 %v5195, %v5191
    %v5320 = vpack.c.b16 %v5196, %v5192
    %v5321 = vpack.c.b16 %v5201, %v5197
    %v5322 = vpack.c.b16 %v5202, %v5198
    %v5323 = vpack.c.b16 %v5203, %v5199
    %v5324 = vpack.c.b16 %v5204, %v5200
    %v5325 = vpack.c.b16 %v5209, %v5205
    %v5326 = vpack.c.b16 %v5210, %v5206
    %v5327 = vpack.c.b16 %v5211, %v5207
    %v5328 = vpack.c.b16 %v5212, %v5208
    %v5329 = vpack.c.b16 %v5217, %v5213
    %v5330 = vpack.c.b16 %v5218, %v5214
    %v5331 = vpack.c.b16 %v5219, %v5215
    %v5332 = vpack.c.b16 %v5220, %v5216
    %v5333 = vpack.c.b16 %v5225, %v5221
    %v5334 = vpack.c.b16 %v5226, %v5222
    %v5335 = vpack.c.b16 %v5227, %v5223
    %v5336 = vpack.c.b16 %v5228, %v5224
    %v5337 = vpack.c.b16 %v5233, %v5229
    %v5338 = vpack.c.b16 %v5234, %v5230
    %v5339 = vpack.c.b16 %v5235, %v5231
    %v5340 = vpack.c.b16 %v5236, %v5232
    %v5341 = vpack.c.b16 %v5241, %v5237
    %v5342 = vpack.c.b16 %v5242, %v5238
    %v5343 = vpack.c.b16 %v5243, %v5239
    %v5344 = vpack.c.b16 %v5244, %v5240
    %v5345 = vpack.c.b16 %v5249, %v5245
    %v5346 = vpack.c.b16 %v5250, %v5246
    %v5347 = vpack.c.b16 %v5251, %v5247
    %v5348 = vpack.c.b16 %v5252, %v5248
    %v5349 = vpack.c.b16 %v5257, %v5253
    %v5350 = vpack.c.b16 %v5258, %v5254
    %v5351 = vpack.c.b16 %v5259, %v5255
    %v5352 = vpack.c.b16 %v5260, %v5256
    %v5353 = vpack.c.b16 %v5265, %v5261
    %v5354 = vpack.c.b16 %v5266, %v5262
    %v5355 = vpack.c.b16 %v5267, %v5263
    %v5356 = vpack.c.b16 %v5268, %v5264
    %v5357 = vpack.c.b16 %v5273, %v5269
    %v5358 = vpack.c.b16 %v5274, %v5270
    %v5359 = vpack.c.b16 %v5275, %v5271
    %v5360 = vpack.c.b16 %v5276, %v5272
    %v5361 = vpack.c.b16 %v5281, %v5277
    %v5362 = vpack.c.b16 %v5282, %v5278
    %v5363 = vpack.c.b16 %v5283, %v5279
    %v5364 = vpack.c.b16 %v5284, %v5280
    %v5365 = vpack.c.b16 %v5289, %v5285
    %v5366 = vpack.c.b16 %v5290, %v5286
    %v5367 = vpack.c.b16 %v5291, %v5287
    %v5368 = vpack.c.b16 %v5292, %v5288
    %v5369 = vpack.c.b16 %v5297, %v5293
    %v5370 = vpack.c.b16 %v5298, %v5294
    %v5371 = vpack.c.b16 %v5299, %v5295
    %v5372 = vpack.c.b16 %v5300, %v5296
    %v5373 = vpack.c.b16 %v5305, %v5301
    %v5374 = vpack.c.b16 %v5306, %v5302
    %v5375 = vpack.c.b16 %v5307, %v5303
    %v5376 = vpack.c.b16 %v5308, %v5304
    %v5377 = vpack.c.b16 %v5313, %v5309
    %v5378 = vpack.c.b16 %v5314, %v5310
    %v5379 = vpack.c.b16 %v5315, %v5311
    %v5380 = vpack.c.b16 %v5316, %v5312
    %5445 = vmatprep.subr.bf16.mxu0 %v5346
    %5446 = vmatpush1.bf16.msra.mxu0 %v5345
    %5447 = vmatprep.subr.bf16.mxu0 %v5342
    %5448 = vmatpush1.bf16.msra.mxu0 %v5341
    %5449 = vmatprep.subr.bf16.mxu0 %v5338
    %5450 = vmatpush1.bf16.msra.mxu0 %v5337
    %5451 = vmatprep.subr.bf16.mxu0 %v5334
    %5452 = vmatpush1.bf16.msra.mxu0 %v5333
    %5453 = vmatprep.subr.bf16.mxu0 %v5330
    %5454 = vmatpush1.bf16.msra.mxu0 %v5329
    %5455 = vmatprep.subr.bf16.mxu0 %v5326
    %5456 = vmatpush1.bf16.msra.mxu0 %v5325
    %5457 = vmatprep.subr.bf16.mxu0 %v5322
    %5458 = vmatpush1.bf16.msra.mxu0 %v5321
    %5459 = vmatprep.subr.bf16.mxu0 %v5318
    %5460 = vmatpush1.bf16.msra.mxu0 %v5317
    %5461 = vmatprep.subr.bf16.mxu0 %v5378
    %5462 = vmatpush2.bf16.msra.mxu0 %v5377
    %5463 = vmatprep.subr.bf16.mxu0 %v5374
    %5464 = vmatpush2.bf16.msra.mxu0 %v5373
    %5465 = vmatprep.subr.bf16.mxu0 %v5370
    %5466 = vmatpush2.bf16.msra.mxu0 %v5369
    %5467 = vmatprep.subr.bf16.mxu0 %v5366
    %5468 = vmatpush2.bf16.msra.mxu0 %v5365
    %5469 = vmatprep.subr.bf16.mxu0 %v5362
    %5470 = vmatpush2.bf16.msra.mxu0 %v5361
    %5471 = vmatprep.subr.bf16.mxu0 %v5358
    %5472 = vmatpush2.bf16.msra.mxu0 %v5357
    %5473 = vmatprep.subr.bf16.mxu0 %v5354
    %5474 = vmatpush2.bf16.msra.mxu0 %v5353
    %5475 = vmatprep.subr.bf16.mxu0 %v5350
    %5476 = vmatpush2.bf16.msra.mxu0 %v5349
    %5477 = vmatprep.mubr.bf16.mxu0 %v5110
    %5478 = vmatmul.mubr.bf16.gmra.mxu0 %v5109
    %v5479 = vpop.f32.mrf.mxu0
    %v5480 = vadd.f32 %v4981, %v5479
    %v5481 = vpop.f32.mrf.mxu0
    %v5482 = vadd.f32 %v4983, %v5481
    %v5483 = vpop.f32.mrf.mxu0
    %v5484 = vadd.f32 %v4985, %v5483
    %v5485 = vpop.f32.mrf.mxu0
    %v5486 = vadd.f32 %v4987, %v5485
    %5487 = vmatprep.mubr.bf16.mxu0 %v5112
    %5488 = vmatmul.mubr.bf16.gmra.mxu0 %v5111
    %v5489 = vpop.f32.mrf.mxu0
    %v5490 = vadd.f32 %v4991, %v5489
    %v5491 = vpop.f32.mrf.mxu0
    %v5492 = vadd.f32 %v4993, %v5491
    %v5493 = vpop.f32.mrf.mxu0
    %v5494 = vadd.f32 %v4995, %v5493
    %v5495 = vpop.f32.mrf.mxu0
    %v5496 = vadd.f32 %v4997, %v5495
    %5497 = vmatprep.mubr.bf16.mxu0 %v5114
    %5498 = vmatmul.mubr.bf16.gmra.mxu0 %v5113
    %v5499 = vpop.f32.mrf.mxu0
    %v5500 = vadd.f32 %v5001, %v5499
    %v5501 = vpop.f32.mrf.mxu0
    %v5502 = vadd.f32 %v5003, %v5501
    %v5503 = vpop.f32.mrf.mxu0
    %v5504 = vadd.f32 %v5005, %v5503
    %v5505 = vpop.f32.mrf.mxu0
    %v5506 = vadd.f32 %v5007, %v5505
    %5507 = vmatprep.mubr.bf16.mxu0 %v5116
    %5508 = vmatmul.mubr.bf16.gmra.mxu0 %v5115
    %v5509 = vpop.f32.mrf.mxu0
    %v5510 = vadd.f32 %v5011, %v5509
    %v5511 = vpop.f32.mrf.mxu0
    %v5512 = vadd.f32 %v5013, %v5511
    %v5513 = vpop.f32.mrf.mxu0
    %v5514 = vpop.f32.mrf.mxu0
    %5515 = vdwg.mxu0
    %5516 = vmatprep.subr.bf16.mxu0 %v5348
    %5517 = vmatpush1.bf16.msra.mxu0 %v5347
    %5518 = vmatprep.subr.bf16.mxu0 %v5344
    %5519 = vmatpush1.bf16.msra.mxu0 %v5343
    %5520 = vmatprep.subr.bf16.mxu0 %v5340
    %5521 = vmatpush1.bf16.msra.mxu0 %v5339
    %5522 = vmatprep.subr.bf16.mxu0 %v5336
    %5523 = vmatpush1.bf16.msra.mxu0 %v5335
    %5524 = vmatprep.subr.bf16.mxu0 %v5332
    %5525 = vmatpush1.bf16.msra.mxu0 %v5331
    %5526 = vmatprep.subr.bf16.mxu0 %v5328
    %5527 = vmatpush1.bf16.msra.mxu0 %v5327
    %5528 = vmatprep.subr.bf16.mxu0 %v5324
    %5529 = vmatpush1.bf16.msra.mxu0 %v5323
    %5530 = vmatprep.subr.bf16.mxu0 %v5320
    %5531 = vmatpush1.bf16.msra.mxu0 %v5319
    %5532 = vmatprep.subr.bf16.mxu0 %v5380
    %5533 = vmatpush2.bf16.msra.mxu0 %v5379
    %5534 = vmatprep.subr.bf16.mxu0 %v5376
    %5535 = vmatpush2.bf16.msra.mxu0 %v5375
    %5536 = vmatprep.subr.bf16.mxu0 %v5372
    %5537 = vmatpush2.bf16.msra.mxu0 %v5371
    %5538 = vmatprep.subr.bf16.mxu0 %v5368
    %5539 = vmatpush2.bf16.msra.mxu0 %v5367
    %5540 = vmatprep.subr.bf16.mxu0 %v5364
    %5541 = vmatpush2.bf16.msra.mxu0 %v5363
    %5542 = vmatprep.subr.bf16.mxu0 %v5360
    %5543 = vmatpush2.bf16.msra.mxu0 %v5359
    %5544 = vmatprep.subr.bf16.mxu0 %v5356
    %5545 = vmatpush2.bf16.msra.mxu0 %v5355
    %5546 = vmatprep.subr.bf16.mxu0 %v5352
    %5547 = vmatpush2.bf16.msra.mxu0 %v5351
    %5548 = vmatprep.mubr.bf16.mxu0 %v5110
    %5549 = vmatmul.mubr.bf16.gmra.mxu0 %v5109
    %v5550 = vpop.f32.mrf.mxu0
    %v5551 = vadd.f32 %v5052, %v5550
    %v5552 = vpop.f32.mrf.mxu0
    %v5553 = vadd.f32 %v5054, %v5552
    %v5554 = vpop.f32.mrf.mxu0
    %v5555 = vadd.f32 %v5056, %v5554
    %v5556 = vpop.f32.mrf.mxu0
    %v5557 = vadd.f32 %v5058, %v5556
    %5558 = vmatprep.mubr.bf16.mxu0 %v5112
    %5559 = vmatmul.mubr.bf16.gmra.mxu0 %v5111
    %v5560 = vpop.f32.mrf.mxu0
    %v5561 = vadd.f32 %v5062, %v5560
    %v5562 = vpop.f32.mrf.mxu0
    %v5563 = vadd.f32 %v5064, %v5562
    %v5564 = vpop.f32.mrf.mxu0
    %v5565 = vadd.f32 %v5066, %v5564
    %v5566 = vpop.f32.mrf.mxu0
    %v5567 = vadd.f32 %v5068, %v5566
    %5568 = vmatprep.mubr.bf16.mxu0 %v5114
    %5569 = vmatmul.mubr.bf16.gmra.mxu0 %v5113
    %v5570 = vpop.f32.mrf.mxu0
    %v5571 = vadd.f32 %v5072, %v5570
    %v5572 = vpop.f32.mrf.mxu0
    %v5573 = vadd.f32 %v5074, %v5572
    %v5574 = vpop.f32.mrf.mxu0
    %v5575 = vadd.f32 %v5076, %v5574
    %v5576 = vpop.f32.mrf.mxu0
    %v5577 = vadd.f32 %v5078, %v5576
    %5578 = vmatprep.mubr.bf16.mxu0 %v5116
    %5579 = vmatmul.mubr.bf16.gmra.mxu0 %v5115
    %v5580 = vpop.f32.mrf.mxu0
    %v5581 = vadd.f32 %v5082, %v5580
    %v5582 = vpop.f32.mrf.mxu0
    %v5583 = vadd.f32 %v5084, %v5582
    %v5584 = vpop.f32.mrf.mxu0
    %v5585 = vpop.f32.mrf.mxu0
    %5586 = vdwg.mxu0
    %v5587 = vld [vmem:[%s2363] sm:$0xff]
    %v5588 = vld [vmem:[%s2363 + $0x8] sm:$0xff]
    %v5589 = vld [vmem:[%s2363 + $0x10] sm:$0xff]
    %v5590 = vld [vmem:[%s2363 + $0x18] sm:$0xff]
    %v5591 = vld [vmem:[%s2363 + $0x20] sm:$0xff]
    %v5592 = vld [vmem:[%s2363 + $0x28] sm:$0xff]
    %v5593 = vld [vmem:[%s2363 + $0x30] sm:$0xff]
    %s5594 = scalar_lea.vmem [#allocation7], 1024
    %v5595 = vld [vmem:[%s5594] sm:$0xff]
    %v5596 = vld [vmem:[%s5594 + $0x8] sm:$0xff]
    %v5597 = vld [vmem:[%s5594 + $0x10] sm:$0xff]
    %v5598 = vld [vmem:[%s5594 + $0x18] sm:$0xff]
    %v5599 = vld [vmem:[%s5594 + $0x20] sm:$0xff]
    %v5600 = vld [vmem:[%s5594 + $0x28] sm:$0xff]
    %v5601 = vld [vmem:[%s5594 + $0x30] sm:$0xff]
    %v5602 = vld [vmem:[%s5594 + $0x38] sm:$0xff]
    %v5603 = vld [vmem:[%s5594 + $0x40] sm:$0xff]
    %v5604 = vld [vmem:[%s5594 + $0x48] sm:$0xff]
    %v5605 = vld [vmem:[%s5594 + $0x50] sm:$0xff]
    %v5606 = vld [vmem:[%s5594 + $0x58] sm:$0xff]
    %v5607 = vld [vmem:[%s5594 + $0x60] sm:$0xff]
    %v5608 = vld [vmem:[%s5594 + $0x68] sm:$0xff]
    %v5609 = vld [vmem:[%s5594 + $0x70] sm:$0xff]
    %v5610 = vld [vmem:[%s5594 + $0x78] sm:$0xff]
    %v5611 = vld [vmem:[%s5594 + $0x80] sm:$0xff]
    %v5612 = vld [vmem:[%s5594 + $0x88] sm:$0xff]
    %v5613 = vld [vmem:[%s5594 + $0x90] sm:$0xff]
    %v5614 = vld [vmem:[%s5594 + $0x98] sm:$0xff]
    %v5615 = vld [vmem:[%s5594 + $0xa0] sm:$0xff]
    %v5616 = vld [vmem:[%s5594 + $0xa8] sm:$0xff]
    %v5617 = vld [vmem:[%s5594 + $0xb0] sm:$0xff]
    %v5618 = vld [vmem:[%s5594 + $0xb8] sm:$0xff]
    %v5619 = vld [vmem:[%s5594 + $0xc0] sm:$0xff]
    %v5620 = vld [vmem:[%s5594 + $0xc8] sm:$0xff]
    %v5621 = vld [vmem:[%s5594 + $0xd0] sm:$0xff]
    %v5622 = vld [vmem:[%s5594 + $0xd8] sm:$0xff]
    %v5623 = vld [vmem:[%s5594 + $0xe0] sm:$0xff]
    %v5624 = vld [vmem:[%s5594 + $0xe8] sm:$0xff]
    %v5625 = vld [vmem:[%s5594 + $0xf0] sm:$0xff]
    %v5626 = vld [vmem:[%s5594 + $0xf8] sm:$0xff]
    %v5627 = vld [vmem:[%s5594 + $0x100] sm:$0xff]
    %v5628 = vld [vmem:[%s5594 + $0x108] sm:$0xff]
    %v5629 = vld [vmem:[%s5594 + $0x110] sm:$0xff]
    %v5630 = vld [vmem:[%s5594 + $0x118] sm:$0xff]
    %v5631 = vld [vmem:[%s5594 + $0x120] sm:$0xff]
    %v5632 = vld [vmem:[%s5594 + $0x128] sm:$0xff]
    %v5633 = vld [vmem:[%s5594 + $0x130] sm:$0xff]
    %v5634 = vld [vmem:[%s5594 + $0x138] sm:$0xff]
    %v5635 = vld [vmem:[%s5594 + $0x140] sm:$0xff]
    %v5636 = vld [vmem:[%s5594 + $0x148] sm:$0xff]
    %v5637 = vld [vmem:[%s5594 + $0x150] sm:$0xff]
    %v5638 = vld [vmem:[%s5594 + $0x158] sm:$0xff]
    %v5639 = vld [vmem:[%s5594 + $0x160] sm:$0xff]
    %v5640 = vld [vmem:[%s5594 + $0x168] sm:$0xff]
    %v5641 = vld [vmem:[%s5594 + $0x170] sm:$0xff]
    %v5642 = vld [vmem:[%s5594 + $0x178] sm:$0xff]
    %v5643 = vld [vmem:[%s5594 + $0x180] sm:$0xff]
    %v5644 = vld [vmem:[%s5594 + $0x188] sm:$0xff]
    %v5645 = vld [vmem:[%s5594 + $0x190] sm:$0xff]
    %v5646 = vld [vmem:[%s5594 + $0x198] sm:$0xff]
    %v5647 = vld [vmem:[%s5594 + $0x1a0] sm:$0xff]
    %v5648 = vld [vmem:[%s5594 + $0x1a8] sm:$0xff]
    %v5649 = vld [vmem:[%s5594 + $0x1b0] sm:$0xff]
    %v5650 = vld [vmem:[%s5594 + $0x1b8] sm:$0xff]
    %v5651 = vld [vmem:[%s5594 + $0x1c0] sm:$0xff]
    %v5652 = vld [vmem:[%s5594 + $0x1c8] sm:$0xff]
    %v5653 = vld [vmem:[%s5594 + $0x1d0] sm:$0xff]
    %v5654 = vld [vmem:[%s5594 + $0x1d8] sm:$0xff]
    %v5655 = vld [vmem:[%s5594 + $0x1e0] sm:$0xff]
    %v5656 = vld [vmem:[%s5594 + $0x1e8] sm:$0xff]
    %v5657 = vld [vmem:[%s5594 + $0x1f0] sm:$0xff]
    %v5658 = vld [vmem:[%s5594 + $0x1f8] sm:$0xff]
    %v5666 = vunpack.c.l.b16 %v5587
    %v5667 = vunpack.c.h.b16 %v5587
    %v5668 = vunpack.c.l.b16 %v5588
    %v5669 = vunpack.c.h.b16 %v5588
    %v5670 = vunpack.c.l.b16 %v5589
    %v5671 = vunpack.c.h.b16 %v5589
    %v5672 = vunpack.c.l.b16 %v5590
    %v5673 = vunpack.c.h.b16 %v5590
    %v5674 = vunpack.c.l.b16 %v5591
    %v5675 = vunpack.c.h.b16 %v5591
    %v5676 = vunpack.c.l.b16 %v5592
    %v5677 = vunpack.c.h.b16 %v5592
    %v5678 = vunpack.c.l.b16 %v5593
    %v5679 = vunpack.c.h.b16 %v5593
    %v5680 = vpack.c.b16 %v5668, %v5666
    %v5681 = vpack.c.b16 %v5669, %v5667
    %v5682 = vpack.c.b16 %v5672, %v5670
    %v5683 = vpack.c.b16 %v5673, %v5671
    %v5684 = vpack.c.b16 %v5676, %v5674
    %v5685 = vpack.c.b16 %v5677, %v5675
    %v5686 = vpack.c.b16 %v5678, %v5678
    %v5687 = vpack.c.b16 %v5679, %v5679
    %v5760 = vunpack.c.l.b16 %v5595
    %v5761 = vunpack.c.h.b16 %v5595
    %v5762 = vunpack.c.l.b16 %v5596
    %v5763 = vunpack.c.h.b16 %v5596
    %v5764 = vunpack.c.l.b16 %v5597
    %v5765 = vunpack.c.h.b16 %v5597
    %v5766 = vunpack.c.l.b16 %v5598
    %v5767 = vunpack.c.h.b16 %v5598
    %v5768 = vunpack.c.l.b16 %v5599
    %v5769 = vunpack.c.h.b16 %v5599
    %v5770 = vunpack.c.l.b16 %v5600
    %v5771 = vunpack.c.h.b16 %v5600
    %v5772 = vunpack.c.l.b16 %v5601
    %v5773 = vunpack.c.h.b16 %v5601
    %v5774 = vunpack.c.l.b16 %v5602
    %v5775 = vunpack.c.h.b16 %v5602
    %v5776 = vunpack.c.l.b16 %v5603
    %v5777 = vunpack.c.h.b16 %v5603
    %v5778 = vunpack.c.l.b16 %v5604
    %v5779 = vunpack.c.h.b16 %v5604
    %v5780 = vunpack.c.l.b16 %v5605
    %v5781 = vunpack.c.h.b16 %v5605
    %v5782 = vunpack.c.l.b16 %v5606
    %v5783 = vunpack.c.h.b16 %v5606
    %v5784 = vunpack.c.l.b16 %v5607
    %v5785 = vunpack.c.h.b16 %v5607
    %v5786 = vunpack.c.l.b16 %v5608
    %v5787 = vunpack.c.h.b16 %v5608
    %v5788 = vunpack.c.l.b16 %v5609
    %v5789 = vunpack.c.h.b16 %v5609
    %v5790 = vunpack.c.l.b16 %v5610
    %v5791 = vunpack.c.h.b16 %v5610
    %v5792 = vunpack.c.l.b16 %v5611
    %v5793 = vunpack.c.h.b16 %v5611
    %v5794 = vunpack.c.l.b16 %v5612
    %v5795 = vunpack.c.h.b16 %v5612
    %v5796 = vunpack.c.l.b16 %v5613
    %v5797 = vunpack.c.h.b16 %v5613
    %v5798 = vunpack.c.l.b16 %v5614
    %v5799 = vunpack.c.h.b16 %v5614
    %v5800 = vunpack.c.l.b16 %v5615
    %v5801 = vunpack.c.h.b16 %v5615
    %v5802 = vunpack.c.l.b16 %v5616
    %v5803 = vunpack.c.h.b16 %v5616
    %v5804 = vunpack.c.l.b16 %v5617
    %v5805 = vunpack.c.h.b16 %v5617
    %v5806 = vunpack.c.l.b16 %v5618
    %v5807 = vunpack.c.h.b16 %v5618
    %v5808 = vunpack.c.l.b16 %v5619
    %v5809 = vunpack.c.h.b16 %v5619
    %v5810 = vunpack.c.l.b16 %v5620
    %v5811 = vunpack.c.h.b16 %v5620
    %v5812 = vunpack.c.l.b16 %v5621
    %v5813 = vunpack.c.h.b16 %v5621
    %v5814 = vunpack.c.l.b16 %v5622
    %v5815 = vunpack.c.h.b16 %v5622
    %v5816 = vunpack.c.l.b16 %v5623
    %v5817 = vunpack.c.h.b16 %v5623
    %v5818 = vunpack.c.l.b16 %v5624
    %v5819 = vunpack.c.h.b16 %v5624
    %v5820 = vunpack.c.l.b16 %v5625
    %v5821 = vunpack.c.h.b16 %v5625
    %v5822 = vunpack.c.l.b16 %v5626
    %v5823 = vunpack.c.h.b16 %v5626
    %v5824 = vunpack.c.l.b16 %v5627
    %v5825 = vunpack.c.h.b16 %v5627
    %v5826 = vunpack.c.l.b16 %v5628
    %v5827 = vunpack.c.h.b16 %v5628
    %v5828 = vunpack.c.l.b16 %v5629
    %v5829 = vunpack.c.h.b16 %v5629
    %v5830 = vunpack.c.l.b16 %v5630
    %v5831 = vunpack.c.h.b16 %v5630
    %v5832 = vunpack.c.l.b16 %v5631
    %v5833 = vunpack.c.h.b16 %v5631
    %v5834 = vunpack.c.l.b16 %v5632
    %v5835 = vunpack.c.h.b16 %v5632
    %v5836 = vunpack.c.l.b16 %v5633
    %v5837 = vunpack.c.h.b16 %v5633
    %v5838 = vunpack.c.l.b16 %v5634
    %v5839 = vunpack.c.h.b16 %v5634
    %v5840 = vunpack.c.l.b16 %v5635
    %v5841 = vunpack.c.h.b16 %v5635
    %v5842 = vunpack.c.l.b16 %v5636
    %v5843 = vunpack.c.h.b16 %v5636
    %v5844 = vunpack.c.l.b16 %v5637
    %v5845 = vunpack.c.h.b16 %v5637
    %v5846 = vunpack.c.l.b16 %v5638
    %v5847 = vunpack.c.h.b16 %v5638
    %v5848 = vunpack.c.l.b16 %v5639
    %v5849 = vunpack.c.h.b16 %v5639
    %v5850 = vunpack.c.l.b16 %v5640
    %v5851 = vunpack.c.h.b16 %v5640
    %v5852 = vunpack.c.l.b16 %v5641
    %v5853 = vunpack.c.h.b16 %v5641
    %v5854 = vunpack.c.l.b16 %v5642
    %v5855 = vunpack.c.h.b16 %v5642
    %v5856 = vunpack.c.l.b16 %v5643
    %v5857 = vunpack.c.h.b16 %v5643
    %v5858 = vunpack.c.l.b16 %v5644
    %v5859 = vunpack.c.h.b16 %v5644
    %v5860 = vunpack.c.l.b16 %v5645
    %v5861 = vunpack.c.h.b16 %v5645
    %v5862 = vunpack.c.l.b16 %v5646
    %v5863 = vunpack.c.h.b16 %v5646
    %v5864 = vunpack.c.l.b16 %v5647
    %v5865 = vunpack.c.h.b16 %v5647
    %v5866 = vunpack.c.l.b16 %v5648
    %v5867 = vunpack.c.h.b16 %v5648
    %v5868 = vunpack.c.l.b16 %v5649
    %v5869 = vunpack.c.h.b16 %v5649
    %v5870 = vunpack.c.l.b16 %v5650
    %v5871 = vunpack.c.h.b16 %v5650
    %v5872 = vunpack.c.l.b16 %v5651
    %v5873 = vunpack.c.h.b16 %v5651
    %v5874 = vunpack.c.l.b16 %v5652
    %v5875 = vunpack.c.h.b16 %v5652
    %v5876 = vunpack.c.l.b16 %v5653
    %v5877 = vunpack.c.h.b16 %v5653
    %v5878 = vunpack.c.l.b16 %v5654
    %v5879 = vunpack.c.h.b16 %v5654
    %v5880 = vunpack.c.l.b16 %v5655
    %v5881 = vunpack.c.h.b16 %v5655
    %v5882 = vunpack.c.l.b16 %v5656
    %v5883 = vunpack.c.h.b16 %v5656
    %v5884 = vunpack.c.l.b16 %v5657
    %v5885 = vunpack.c.h.b16 %v5657
    %v5886 = vunpack.c.l.b16 %v5658
    %v5887 = vunpack.c.h.b16 %v5658
    %v5888 = vpack.c.b16 %v5764, %v5760
    %v5889 = vpack.c.b16 %v5765, %v5761
    %v5890 = vpack.c.b16 %v5766, %v5762
    %v5891 = vpack.c.b16 %v5767, %v5763
    %v5892 = vpack.c.b16 %v5772, %v5768
    %v5893 = vpack.c.b16 %v5773, %v5769
    %v5894 = vpack.c.b16 %v5774, %v5770
    %v5895 = vpack.c.b16 %v5775, %v5771
    %v5896 = vpack.c.b16 %v5780, %v5776
    %v5897 = vpack.c.b16 %v5781, %v5777
    %v5898 = vpack.c.b16 %v5782, %v5778
    %v5899 = vpack.c.b16 %v5783, %v5779
    %v5900 = vpack.c.b16 %v5788, %v5784
    %v5901 = vpack.c.b16 %v5789, %v5785
    %v5902 = vpack.c.b16 %v5790, %v5786
    %v5903 = vpack.c.b16 %v5791, %v5787
    %v5904 = vpack.c.b16 %v5796, %v5792
    %v5905 = vpack.c.b16 %v5797, %v5793
    %v5906 = vpack.c.b16 %v5798, %v5794
    %v5907 = vpack.c.b16 %v5799, %v5795
    %v5908 = vpack.c.b16 %v5804, %v5800
    %v5909 = vpack.c.b16 %v5805, %v5801
    %v5910 = vpack.c.b16 %v5806, %v5802
    %v5911 = vpack.c.b16 %v5807, %v5803
    %v5912 = vpack.c.b16 %v5812, %v5808
    %v5913 = vpack.c.b16 %v5813, %v5809
    %v5914 = vpack.c.b16 %v5814, %v5810
    %v5915 = vpack.c.b16 %v5815, %v5811
    %v5916 = vpack.c.b16 %v5820, %v5816
    %v5917 = vpack.c.b16 %v5821, %v5817
    %v5918 = vpack.c.b16 %v5822, %v5818
    %v5919 = vpack.c.b16 %v5823, %v5819
    %v5920 = vpack.c.b16 %v5828, %v5824
    %v5921 = vpack.c.b16 %v5829, %v5825
    %v5922 = vpack.c.b16 %v5830, %v5826
    %v5923 = vpack.c.b16 %v5831, %v5827
    %v5924 = vpack.c.b16 %v5836, %v5832
    %v5925 = vpack.c.b16 %v5837, %v5833
    %v5926 = vpack.c.b16 %v5838, %v5834
    %v5927 = vpack.c.b16 %v5839, %v5835
    %v5928 = vpack.c.b16 %v5844, %v5840
    %v5929 = vpack.c.b16 %v5845, %v5841
    %v5930 = vpack.c.b16 %v5846, %v5842
    %v5931 = vpack.c.b16 %v5847, %v5843
    %v5932 = vpack.c.b16 %v5852, %v5848
    %v5933 = vpack.c.b16 %v5853, %v5849
    %v5934 = vpack.c.b16 %v5854, %v5850
    %v5935 = vpack.c.b16 %v5855, %v5851
    %v5936 = vpack.c.b16 %v5860, %v5856
    %v5937 = vpack.c.b16 %v5861, %v5857
    %v5938 = vpack.c.b16 %v5862, %v5858
    %v5939 = vpack.c.b16 %v5863, %v5859
    %v5940 = vpack.c.b16 %v5868, %v5864
    %v5941 = vpack.c.b16 %v5869, %v5865
    %v5942 = vpack.c.b16 %v5870, %v5866
    %v5943 = vpack.c.b16 %v5871, %v5867
    %v5944 = vpack.c.b16 %v5876, %v5872
    %v5945 = vpack.c.b16 %v5877, %v5873
    %v5946 = vpack.c.b16 %v5878, %v5874
    %v5947 = vpack.c.b16 %v5879, %v5875
    %v5948 = vpack.c.b16 %v5884, %v5880
    %v5949 = vpack.c.b16 %v5885, %v5881
    %v5950 = vpack.c.b16 %v5886, %v5882
    %v5951 = vpack.c.b16 %v5887, %v5883
    %6016 = vmatprep.subr.bf16.mxu0 %v5917
    %6017 = vmatpush1.bf16.msra.mxu0 %v5916
    %6018 = vmatprep.subr.bf16.mxu0 %v5913
    %6019 = vmatpush1.bf16.msra.mxu0 %v5912
    %6020 = vmatprep.subr.bf16.mxu0 %v5909
    %6021 = vmatpush1.bf16.msra.mxu0 %v5908
    %6022 = vmatprep.subr.bf16.mxu0 %v5905
    %6023 = vmatpush1.bf16.msra.mxu0 %v5904
    %6024 = vmatprep.subr.bf16.mxu0 %v5901
    %6025 = vmatpush1.bf16.msra.mxu0 %v5900
    %6026 = vmatprep.subr.bf16.mxu0 %v5897
    %6027 = vmatpush1.bf16.msra.mxu0 %v5896
    %6028 = vmatprep.subr.bf16.mxu0 %v5893
    %6029 = vmatpush1.bf16.msra.mxu0 %v5892
    %6030 = vmatprep.subr.bf16.mxu0 %v5889
    %6031 = vmatpush1.bf16.msra.mxu0 %v5888
    %6032 = vmatprep.subr.bf16.mxu0 %v5949
    %6033 = vmatpush2.bf16.msra.mxu0 %v5948
    %6034 = vmatprep.subr.bf16.mxu0 %v5945
    %6035 = vmatpush2.bf16.msra.mxu0 %v5944
    %6036 = vmatprep.subr.bf16.mxu0 %v5941
    %6037 = vmatpush2.bf16.msra.mxu0 %v5940
    %6038 = vmatprep.subr.bf16.mxu0 %v5937
    %6039 = vmatpush2.bf16.msra.mxu0 %v5936
    %6040 = vmatprep.subr.bf16.mxu0 %v5933
    %6041 = vmatpush2.bf16.msra.mxu0 %v5932
    %6042 = vmatprep.subr.bf16.mxu0 %v5929
    %6043 = vmatpush2.bf16.msra.mxu0 %v5928
    %6044 = vmatprep.subr.bf16.mxu0 %v5925
    %6045 = vmatpush2.bf16.msra.mxu0 %v5924
    %6046 = vmatprep.subr.bf16.mxu0 %v5921
    %6047 = vmatpush2.bf16.msra.mxu0 %v5920
    %6048 = vmatprep.mubr.bf16.mxu0 %v5681
    %6049 = vmatmul.mubr.bf16.gmra.mxu0 %v5680
    %v6050 = vpop.f32.mrf.mxu0
    %v6051 = vadd.f32 0.0, %v6050
    %v6052 = vpop.f32.mrf.mxu0
    %v6053 = vadd.f32 0.0, %v6052
    %v6054 = vpop.f32.mrf.mxu0
    %v6055 = vadd.f32 0.0, %v6054
    %v6056 = vpop.f32.mrf.mxu0
    %v6057 = vadd.f32 0.0, %v6056
    %6058 = vmatprep.mubr.bf16.mxu0 %v5683
    %6059 = vmatmul.mubr.bf16.gmra.mxu0 %v5682
    %v6060 = vpop.f32.mrf.mxu0
    %v6061 = vadd.f32 0.0, %v6060
    %v6062 = vpop.f32.mrf.mxu0
    %v6063 = vadd.f32 0.0, %v6062
    %v6064 = vpop.f32.mrf.mxu0
    %v6065 = vadd.f32 0.0, %v6064
    %v6066 = vpop.f32.mrf.mxu0
    %v6067 = vadd.f32 0.0, %v6066
    %6068 = vmatprep.mubr.bf16.mxu0 %v5685
    %6069 = vmatmul.mubr.bf16.gmra.mxu0 %v5684
    %v6070 = vpop.f32.mrf.mxu0
    %v6071 = vadd.f32 0.0, %v6070
    %v6072 = vpop.f32.mrf.mxu0
    %v6073 = vadd.f32 0.0, %v6072
    %v6074 = vpop.f32.mrf.mxu0
    %v6075 = vadd.f32 0.0, %v6074
    %v6076 = vpop.f32.mrf.mxu0
    %v6077 = vadd.f32 0.0, %v6076
    %6078 = vmatprep.mubr.bf16.mxu0 %v5687
    %6079 = vmatmul.mubr.bf16.gmra.mxu0 %v5686
    %v6080 = vpop.f32.mrf.mxu0
    %v6081 = vadd.f32 0.0, %v6080
    %v6082 = vpop.f32.mrf.mxu0
    %v6083 = vadd.f32 0.0, %v6082
    %v6084 = vpop.f32.mrf.mxu0
    %v6085 = vpop.f32.mrf.mxu0
    %6086 = vdwg.mxu0
    %6087 = vmatprep.subr.bf16.mxu0 %v5919
    %6088 = vmatpush1.bf16.msra.mxu0 %v5918
    %6089 = vmatprep.subr.bf16.mxu0 %v5915
    %6090 = vmatpush1.bf16.msra.mxu0 %v5914
    %6091 = vmatprep.subr.bf16.mxu0 %v5911
    %6092 = vmatpush1.bf16.msra.mxu0 %v5910
    %6093 = vmatprep.subr.bf16.mxu0 %v5907
    %6094 = vmatpush1.bf16.msra.mxu0 %v5906
    %6095 = vmatprep.subr.bf16.mxu0 %v5903
    %6096 = vmatpush1.bf16.msra.mxu0 %v5902
    %6097 = vmatprep.subr.bf16.mxu0 %v5899
    %6098 = vmatpush1.bf16.msra.mxu0 %v5898
    %6099 = vmatprep.subr.bf16.mxu0 %v5895
    %6100 = vmatpush1.bf16.msra.mxu0 %v5894
    %6101 = vmatprep.subr.bf16.mxu0 %v5891
    %6102 = vmatpush1.bf16.msra.mxu0 %v5890
    %6103 = vmatprep.subr.bf16.mxu0 %v5951
    %6104 = vmatpush2.bf16.msra.mxu0 %v5950
    %6105 = vmatprep.subr.bf16.mxu0 %v5947
    %6106 = vmatpush2.bf16.msra.mxu0 %v5946
    %6107 = vmatprep.subr.bf16.mxu0 %v5943
    %6108 = vmatpush2.bf16.msra.mxu0 %v5942
    %6109 = vmatprep.subr.bf16.mxu0 %v5939
    %6110 = vmatpush2.bf16.msra.mxu0 %v5938
    %6111 = vmatprep.subr.bf16.mxu0 %v5935
    %6112 = vmatpush2.bf16.msra.mxu0 %v5934
    %6113 = vmatprep.subr.bf16.mxu0 %v5931
    %6114 = vmatpush2.bf16.msra.mxu0 %v5930
    %6115 = vmatprep.subr.bf16.mxu0 %v5927
    %6116 = vmatpush2.bf16.msra.mxu0 %v5926
    %6117 = vmatprep.subr.bf16.mxu0 %v5923
    %6118 = vmatpush2.bf16.msra.mxu0 %v5922
    %6119 = vmatprep.mubr.bf16.mxu0 %v5681
    %6120 = vmatmul.mubr.bf16.gmra.mxu0 %v5680
    %v6121 = vpop.f32.mrf.mxu0
    %v6122 = vadd.f32 0.0, %v6121
    %v6123 = vpop.f32.mrf.mxu0
    %v6124 = vadd.f32 0.0, %v6123
    %v6125 = vpop.f32.mrf.mxu0
    %v6126 = vadd.f32 0.0, %v6125
    %v6127 = vpop.f32.mrf.mxu0
    %v6128 = vadd.f32 0.0, %v6127
    %6129 = vmatprep.mubr.bf16.mxu0 %v5683
    %6130 = vmatmul.mubr.bf16.gmra.mxu0 %v5682
    %v6131 = vpop.f32.mrf.mxu0
    %v6132 = vadd.f32 0.0, %v6131
    %v6133 = vpop.f32.mrf.mxu0
    %v6134 = vadd.f32 0.0, %v6133
    %v6135 = vpop.f32.mrf.mxu0
    %v6136 = vadd.f32 0.0, %v6135
    %v6137 = vpop.f32.mrf.mxu0
    %v6138 = vadd.f32 0.0, %v6137
    %6139 = vmatprep.mubr.bf16.mxu0 %v5685
    %6140 = vmatmul.mubr.bf16.gmra.mxu0 %v5684
    %v6141 = vpop.f32.mrf.mxu0
    %v6142 = vadd.f32 0.0, %v6141
    %v6143 = vpop.f32.mrf.mxu0
    %v6144 = vadd.f32 0.0, %v6143
    %v6145 = vpop.f32.mrf.mxu0
    %v6146 = vadd.f32 0.0, %v6145
    %v6147 = vpop.f32.mrf.mxu0
    %v6148 = vadd.f32 0.0, %v6147
    %6149 = vmatprep.mubr.bf16.mxu0 %v5687
    %6150 = vmatmul.mubr.bf16.gmra.mxu0 %v5686
    %v6151 = vpop.f32.mrf.mxu0
    %v6152 = vadd.f32 0.0, %v6151
    %v6153 = vpop.f32.mrf.mxu0
    %v6154 = vadd.f32 0.0, %v6153
    %v6155 = vpop.f32.mrf.mxu0
    %v6156 = vpop.f32.mrf.mxu0
    %6157 = vdwg.mxu0
    %v6158 = vadd.f32 %v5480, %v6051
    %v6159 = vadd.f32 %v5482, %v6053
    %v6160 = vadd.f32 %v5551, %v6122
    %v6161 = vadd.f32 %v5553, %v6124
    %v6162 = vadd.f32 %v5484, %v6055
    %v6163 = vadd.f32 %v5486, %v6057
    %v6164 = vadd.f32 %v5555, %v6126
    %v6165 = vadd.f32 %v5557, %v6128
    %v6166 = vadd.f32 %v5490, %v6061
    %v6167 = vadd.f32 %v5492, %v6063
    %v6168 = vadd.f32 %v5561, %v6132
    %v6169 = vadd.f32 %v5563, %v6134
    %v6170 = vadd.f32 %v5494, %v6065
    %v6171 = vadd.f32 %v5496, %v6067
    %v6172 = vadd.f32 %v5565, %v6136
    %v6173 = vadd.f32 %v5567, %v6138
    %v6174 = vadd.f32 %v5500, %v6071
    %v6175 = vadd.f32 %v5502, %v6073
    %v6176 = vadd.f32 %v5571, %v6142
    %v6177 = vadd.f32 %v5573, %v6144
    %v6178 = vadd.f32 %v5504, %v6075
    %v6179 = vadd.f32 %v5506, %v6077
    %v6180 = vadd.f32 %v5575, %v6146
    %v6181 = vadd.f32 %v5577, %v6148
    %v6182 = vadd.f32 %v5510, %v6081
    %v6183 = vadd.f32 %v5512, %v6083
    %v6184 = vadd.f32 %v5581, %v6152
    %v6185 = vadd.f32 %v5583, %v6154
    %v6186 = vld [vmem:[%s4437] sm:$0xff]
    %v6187 = vld [vmem:[%s4437 + $0x8] sm:$0xff]
    %v6188 = vld [vmem:[%s4437 + $0x10] sm:$0xff]
    %v6189 = vld [vmem:[%s4437 + $0x18] sm:$0xff]
    %v6190 = vld [vmem:[%s4437 + $0x20] sm:$0xff]
    %v6191 = vld [vmem:[%s4437 + $0x28] sm:$0xff]
    %v6192 = vld [vmem:[%s4437 + $0x30] sm:$0xff]
    %s6193 = scalar_lea.vmem [#allocation7], 1536
    %v6194 = vld [vmem:[%s6193] sm:$0xff]
    %v6195 = vld [vmem:[%s6193 + $0x8] sm:$0xff]
    %v6196 = vld [vmem:[%s6193 + $0x10] sm:$0xff]
    %v6197 = vld [vmem:[%s6193 + $0x18] sm:$0xff]
    %v6198 = vld [vmem:[%s6193 + $0x20] sm:$0xff]
    %v6199 = vld [vmem:[%s6193 + $0x28] sm:$0xff]
    %v6200 = vld [vmem:[%s6193 + $0x30] sm:$0xff]
    %v6201 = vld [vmem:[%s6193 + $0x38] sm:$0xff]
    %v6202 = vld [vmem:[%s6193 + $0x40] sm:$0xff]
    %v6203 = vld [vmem:[%s6193 + $0x48] sm:$0xff]
    %v6204 = vld [vmem:[%s6193 + $0x50] sm:$0xff]
    %v6205 = vld [vmem:[%s6193 + $0x58] sm:$0xff]
    %v6206 = vld [vmem:[%s6193 + $0x60] sm:$0xff]
    %v6207 = vld [vmem:[%s6193 + $0x68] sm:$0xff]
    %v6208 = vld [vmem:[%s6193 + $0x70] sm:$0xff]
    %v6209 = vld [vmem:[%s6193 + $0x78] sm:$0xff]
    %v6210 = vld [vmem:[%s6193 + $0x80] sm:$0xff]
    %v6211 = vld [vmem:[%s6193 + $0x88] sm:$0xff]
    %v6212 = vld [vmem:[%s6193 + $0x90] sm:$0xff]
    %v6213 = vld [vmem:[%s6193 + $0x98] sm:$0xff]
    %v6214 = vld [vmem:[%s6193 + $0xa0] sm:$0xff]
    %v6215 = vld [vmem:[%s6193 + $0xa8] sm:$0xff]
    %v6216 = vld [vmem:[%s6193 + $0xb0] sm:$0xff]
    %v6217 = vld [vmem:[%s6193 + $0xb8] sm:$0xff]
    %v6218 = vld [vmem:[%s6193 + $0xc0] sm:$0xff]
    %v6219 = vld [vmem:[%s6193 + $0xc8] sm:$0xff]
    %v6220 = vld [vmem:[%s6193 + $0xd0] sm:$0xff]
    %v6221 = vld [vmem:[%s6193 + $0xd8] sm:$0xff]
    %v6222 = vld [vmem:[%s6193 + $0xe0] sm:$0xff]
    %v6223 = vld [vmem:[%s6193 + $0xe8] sm:$0xff]
    %v6224 = vld [vmem:[%s6193 + $0xf0] sm:$0xff]
    %v6225 = vld [vmem:[%s6193 + $0xf8] sm:$0xff]
    %v6226 = vld [vmem:[%s6193 + $0x100] sm:$0xff]
    %v6227 = vld [vmem:[%s6193 + $0x108] sm:$0xff]
    %v6228 = vld [vmem:[%s6193 + $0x110] sm:$0xff]
    %v6229 = vld [vmem:[%s6193 + $0x118] sm:$0xff]
    %v6230 = vld [vmem:[%s6193 + $0x120] sm:$0xff]
    %v6231 = vld [vmem:[%s6193 + $0x128] sm:$0xff]
    %v6232 = vld [vmem:[%s6193 + $0x130] sm:$0xff]
    %v6233 = vld [vmem:[%s6193 + $0x138] sm:$0xff]
    %v6234 = vld [vmem:[%s6193 + $0x140] sm:$0xff]
    %v6235 = vld [vmem:[%s6193 + $0x148] sm:$0xff]
    %v6236 = vld [vmem:[%s6193 + $0x150] sm:$0xff]
    %v6237 = vld [vmem:[%s6193 + $0x158] sm:$0xff]
    %v6238 = vld [vmem:[%s6193 + $0x160] sm:$0xff]
    %v6239 = vld [vmem:[%s6193 + $0x168] sm:$0xff]
    %v6240 = vld [vmem:[%s6193 + $0x170] sm:$0xff]
    %v6241 = vld [vmem:[%s6193 + $0x178] sm:$0xff]
    %v6242 = vld [vmem:[%s6193 + $0x180] sm:$0xff]
    %v6243 = vld [vmem:[%s6193 + $0x188] sm:$0xff]
    %v6244 = vld [vmem:[%s6193 + $0x190] sm:$0xff]
    %v6245 = vld [vmem:[%s6193 + $0x198] sm:$0xff]
    %v6246 = vld [vmem:[%s6193 + $0x1a0] sm:$0xff]
    %v6247 = vld [vmem:[%s6193 + $0x1a8] sm:$0xff]
    %v6248 = vld [vmem:[%s6193 + $0x1b0] sm:$0xff]
    %v6249 = vld [vmem:[%s6193 + $0x1b8] sm:$0xff]
    %v6250 = vld [vmem:[%s6193 + $0x1c0] sm:$0xff]
    %v6251 = vld [vmem:[%s6193 + $0x1c8] sm:$0xff]
    %v6252 = vld [vmem:[%s6193 + $0x1d0] sm:$0xff]
    %v6253 = vld [vmem:[%s6193 + $0x1d8] sm:$0xff]
    %v6254 = vld [vmem:[%s6193 + $0x1e0] sm:$0xff]
    %v6255 = vld [vmem:[%s6193 + $0x1e8] sm:$0xff]
    %v6256 = vld [vmem:[%s6193 + $0x1f0] sm:$0xff]
    %v6257 = vld [vmem:[%s6193 + $0x1f8] sm:$0xff]
    %v6265 = vunpack.c.l.b16 %v6186
    %v6266 = vunpack.c.h.b16 %v6186
    %v6267 = vunpack.c.l.b16 %v6187
    %v6268 = vunpack.c.h.b16 %v6187
    %v6269 = vunpack.c.l.b16 %v6188
    %v6270 = vunpack.c.h.b16 %v6188
    %v6271 = vunpack.c.l.b16 %v6189
    %v6272 = vunpack.c.h.b16 %v6189
    %v6273 = vunpack.c.l.b16 %v6190
    %v6274 = vunpack.c.h.b16 %v6190
    %v6275 = vunpack.c.l.b16 %v6191
    %v6276 = vunpack.c.h.b16 %v6191
    %v6277 = vunpack.c.l.b16 %v6192
    %v6278 = vunpack.c.h.b16 %v6192
    %v6279 = vpack.c.b16 %v6267, %v6265
    %v6280 = vpack.c.b16 %v6268, %v6266
    %v6281 = vpack.c.b16 %v6271, %v6269
    %v6282 = vpack.c.b16 %v6272, %v6270
    %v6283 = vpack.c.b16 %v6275, %v6273
    %v6284 = vpack.c.b16 %v6276, %v6274
    %v6285 = vpack.c.b16 %v6277, %v6277
    %v6286 = vpack.c.b16 %v6278, %v6278
    %v6359 = vunpack.c.l.b16 %v6194
    %v6360 = vunpack.c.h.b16 %v6194
    %v6361 = vunpack.c.l.b16 %v6195
    %v6362 = vunpack.c.h.b16 %v6195
    %v6363 = vunpack.c.l.b16 %v6196
    %v6364 = vunpack.c.h.b16 %v6196
    %v6365 = vunpack.c.l.b16 %v6197
    %v6366 = vunpack.c.h.b16 %v6197
    %v6367 = vunpack.c.l.b16 %v6198
    %v6368 = vunpack.c.h.b16 %v6198
    %v6369 = vunpack.c.l.b16 %v6199
    %v6370 = vunpack.c.h.b16 %v6199
    %v6371 = vunpack.c.l.b16 %v6200
    %v6372 = vunpack.c.h.b16 %v6200
    %v6373 = vunpack.c.l.b16 %v6201
    %v6374 = vunpack.c.h.b16 %v6201
    %v6375 = vunpack.c.l.b16 %v6202
    %v6376 = vunpack.c.h.b16 %v6202
    %v6377 = vunpack.c.l.b16 %v6203
    %v6378 = vunpack.c.h.b16 %v6203
    %v6379 = vunpack.c.l.b16 %v6204
    %v6380 = vunpack.c.h.b16 %v6204
    %v6381 = vunpack.c.l.b16 %v6205
    %v6382 = vunpack.c.h.b16 %v6205
    %v6383 = vunpack.c.l.b16 %v6206
    %v6384 = vunpack.c.h.b16 %v6206
    %v6385 = vunpack.c.l.b16 %v6207
    %v6386 = vunpack.c.h.b16 %v6207
    %v6387 = vunpack.c.l.b16 %v6208
    %v6388 = vunpack.c.h.b16 %v6208
    %v6389 = vunpack.c.l.b16 %v6209
    %v6390 = vunpack.c.h.b16 %v6209
    %v6391 = vunpack.c.l.b16 %v6210
    %v6392 = vunpack.c.h.b16 %v6210
    %v6393 = vunpack.c.l.b16 %v6211
    %v6394 = vunpack.c.h.b16 %v6211
    %v6395 = vunpack.c.l.b16 %v6212
    %v6396 = vunpack.c.h.b16 %v6212
    %v6397 = vunpack.c.l.b16 %v6213
    %v6398 = vunpack.c.h.b16 %v6213
    %v6399 = vunpack.c.l.b16 %v6214
    %v6400 = vunpack.c.h.b16 %v6214
    %v6401 = vunpack.c.l.b16 %v6215
    %v6402 = vunpack.c.h.b16 %v6215
    %v6403 = vunpack.c.l.b16 %v6216
    %v6404 = vunpack.c.h.b16 %v6216
    %v6405 = vunpack.c.l.b16 %v6217
    %v6406 = vunpack.c.h.b16 %v6217
    %v6407 = vunpack.c.l.b16 %v6218
    %v6408 = vunpack.c.h.b16 %v6218
    %v6409 = vunpack.c.l.b16 %v6219
    %v6410 = vunpack.c.h.b16 %v6219
    %v6411 = vunpack.c.l.b16 %v6220
    %v6412 = vunpack.c.h.b16 %v6220
    %v6413 = vunpack.c.l.b16 %v6221
    %v6414 = vunpack.c.h.b16 %v6221
    %v6415 = vunpack.c.l.b16 %v6222
    %v6416 = vunpack.c.h.b16 %v6222
    %v6417 = vunpack.c.l.b16 %v6223
    %v6418 = vunpack.c.h.b16 %v6223
    %v6419 = vunpack.c.l.b16 %v6224
    %v6420 = vunpack.c.h.b16 %v6224
    %v6421 = vunpack.c.l.b16 %v6225
    %v6422 = vunpack.c.h.b16 %v6225
    %v6423 = vunpack.c.l.b16 %v6226
    %v6424 = vunpack.c.h.b16 %v6226
    %v6425 = vunpack.c.l.b16 %v6227
    %v6426 = vunpack.c.h.b16 %v6227
    %v6427 = vunpack.c.l.b16 %v6228
    %v6428 = vunpack.c.h.b16 %v6228
    %v6429 = vunpack.c.l.b16 %v6229
    %v6430 = vunpack.c.h.b16 %v6229
    %v6431 = vunpack.c.l.b16 %v6230
    %v6432 = vunpack.c.h.b16 %v6230
    %v6433 = vunpack.c.l.b16 %v6231
    %v6434 = vunpack.c.h.b16 %v6231
    %v6435 = vunpack.c.l.b16 %v6232
    %v6436 = vunpack.c.h.b16 %v6232
    %v6437 = vunpack.c.l.b16 %v6233
    %v6438 = vunpack.c.h.b16 %v6233
    %v6439 = vunpack.c.l.b16 %v6234
    %v6440 = vunpack.c.h.b16 %v6234
    %v6441 = vunpack.c.l.b16 %v6235
    %v6442 = vunpack.c.h.b16 %v6235
    %v6443 = vunpack.c.l.b16 %v6236
    %v6444 = vunpack.c.h.b16 %v6236
    %v6445 = vunpack.c.l.b16 %v6237
    %v6446 = vunpack.c.h.b16 %v6237
    %v6447 = vunpack.c.l.b16 %v6238
    %v6448 = vunpack.c.h.b16 %v6238
    %v6449 = vunpack.c.l.b16 %v6239
    %v6450 = vunpack.c.h.b16 %v6239
    %v6451 = vunpack.c.l.b16 %v6240
    %v6452 = vunpack.c.h.b16 %v6240
    %v6453 = vunpack.c.l.b16 %v6241
    %v6454 = vunpack.c.h.b16 %v6241
    %v6455 = vunpack.c.l.b16 %v6242
    %v6456 = vunpack.c.h.b16 %v6242
    %v6457 = vunpack.c.l.b16 %v6243
    %v6458 = vunpack.c.h.b16 %v6243
    %v6459 = vunpack.c.l.b16 %v6244
    %v6460 = vunpack.c.h.b16 %v6244
    %v6461 = vunpack.c.l.b16 %v6245
    %v6462 = vunpack.c.h.b16 %v6245
    %v6463 = vunpack.c.l.b16 %v6246
    %v6464 = vunpack.c.h.b16 %v6246
    %v6465 = vunpack.c.l.b16 %v6247
    %v6466 = vunpack.c.h.b16 %v6247
    %v6467 = vunpack.c.l.b16 %v6248
    %v6468 = vunpack.c.h.b16 %v6248
    %v6469 = vunpack.c.l.b16 %v6249
    %v6470 = vunpack.c.h.b16 %v6249
    %v6471 = vunpack.c.l.b16 %v6250
    %v6472 = vunpack.c.h.b16 %v6250
    %v6473 = vunpack.c.l.b16 %v6251
    %v6474 = vunpack.c.h.b16 %v6251
    %v6475 = vunpack.c.l.b16 %v6252
    %v6476 = vunpack.c.h.b16 %v6252
    %v6477 = vunpack.c.l.b16 %v6253
    %v6478 = vunpack.c.h.b16 %v6253
    %v6479 = vunpack.c.l.b16 %v6254
    %v6480 = vunpack.c.h.b16 %v6254
    %v6481 = vunpack.c.l.b16 %v6255
    %v6482 = vunpack.c.h.b16 %v6255
    %v6483 = vunpack.c.l.b16 %v6256
    %v6484 = vunpack.c.h.b16 %v6256
    %v6485 = vunpack.c.l.b16 %v6257
    %v6486 = vunpack.c.h.b16 %v6257
    %v6487 = vpack.c.b16 %v6363, %v6359
    %v6488 = vpack.c.b16 %v6364, %v6360
    %v6489 = vpack.c.b16 %v6365, %v6361
    %v6490 = vpack.c.b16 %v6366, %v6362
    %v6491 = vpack.c.b16 %v6371, %v6367
    %v6492 = vpack.c.b16 %v6372, %v6368
    %v6493 = vpack.c.b16 %v6373, %v6369
    %v6494 = vpack.c.b16 %v6374, %v6370
    %v6495 = vpack.c.b16 %v6379, %v6375
    %v6496 = vpack.c.b16 %v6380, %v6376
    %v6497 = vpack.c.b16 %v6381, %v6377
    %v6498 = vpack.c.b16 %v6382, %v6378
    %v6499 = vpack.c.b16 %v6387, %v6383
    %v6500 = vpack.c.b16 %v6388, %v6384
    %v6501 = vpack.c.b16 %v6389, %v6385
    %v6502 = vpack.c.b16 %v6390, %v6386
    %v6503 = vpack.c.b16 %v6395, %v6391
    %v6504 = vpack.c.b16 %v6396, %v6392
    %v6505 = vpack.c.b16 %v6397, %v6393
    %v6506 = vpack.c.b16 %v6398, %v6394
    %v6507 = vpack.c.b16 %v6403, %v6399
    %v6508 = vpack.c.b16 %v6404, %v6400
    %v6509 = vpack.c.b16 %v6405, %v6401
    %v6510 = vpack.c.b16 %v6406, %v6402
    %v6511 = vpack.c.b16 %v6411, %v6407
    %v6512 = vpack.c.b16 %v6412, %v6408
    %v6513 = vpack.c.b16 %v6413, %v6409
    %v6514 = vpack.c.b16 %v6414, %v6410
    %v6515 = vpack.c.b16 %v6419, %v6415
    %v6516 = vpack.c.b16 %v6420, %v6416
    %v6517 = vpack.c.b16 %v6421, %v6417
    %v6518 = vpack.c.b16 %v6422, %v6418
    %v6519 = vpack.c.b16 %v6427, %v6423
    %v6520 = vpack.c.b16 %v6428, %v6424
    %v6521 = vpack.c.b16 %v6429, %v6425
    %v6522 = vpack.c.b16 %v6430, %v6426
    %v6523 = vpack.c.b16 %v6435, %v6431
    %v6524 = vpack.c.b16 %v6436, %v6432
    %v6525 = vpack.c.b16 %v6437, %v6433
    %v6526 = vpack.c.b16 %v6438, %v6434
    %v6527 = vpack.c.b16 %v6443, %v6439
    %v6528 = vpack.c.b16 %v6444, %v6440
    %v6529 = vpack.c.b16 %v6445, %v6441
    %v6530 = vpack.c.b16 %v6446, %v6442
    %v6531 = vpack.c.b16 %v6451, %v6447
    %v6532 = vpack.c.b16 %v6452, %v6448
    %v6533 = vpack.c.b16 %v6453, %v6449
    %v6534 = vpack.c.b16 %v6454, %v6450
    %v6535 = vpack.c.b16 %v6459, %v6455
    %v6536 = vpack.c.b16 %v6460, %v6456
    %v6537 = vpack.c.b16 %v6461, %v6457
    %v6538 = vpack.c.b16 %v6462, %v6458
    %v6539 = vpack.c.b16 %v6467, %v6463
    %v6540 = vpack.c.b16 %v6468, %v6464
    %v6541 = vpack.c.b16 %v6469, %v6465
    %v6542 = vpack.c.b16 %v6470, %v6466
    %v6543 = vpack.c.b16 %v6475, %v6471
    %v6544 = vpack.c.b16 %v6476, %v6472
    %v6545 = vpack.c.b16 %v6477, %v6473
    %v6546 = vpack.c.b16 %v6478, %v6474
    %v6547 = vpack.c.b16 %v6483, %v6479
    %v6548 = vpack.c.b16 %v6484, %v6480
    %v6549 = vpack.c.b16 %v6485, %v6481
    %v6550 = vpack.c.b16 %v6486, %v6482
    %6615 = vmatprep.subr.bf16.mxu0 %v6516
    %6616 = vmatpush1.bf16.msra.mxu0 %v6515
    %6617 = vmatprep.subr.bf16.mxu0 %v6512
    %6618 = vmatpush1.bf16.msra.mxu0 %v6511
    %6619 = vmatprep.subr.bf16.mxu0 %v6508
    %6620 = vmatpush1.bf16.msra.mxu0 %v6507
    %6621 = vmatprep.subr.bf16.mxu0 %v6504
    %6622 = vmatpush1.bf16.msra.mxu0 %v6503
    %6623 = vmatprep.subr.bf16.mxu0 %v6500
    %6624 = vmatpush1.bf16.msra.mxu0 %v6499
    %6625 = vmatprep.subr.bf16.mxu0 %v6496
    %6626 = vmatpush1.bf16.msra.mxu0 %v6495
    %6627 = vmatprep.subr.bf16.mxu0 %v6492
    %6628 = vmatpush1.bf16.msra.mxu0 %v6491
    %6629 = vmatprep.subr.bf16.mxu0 %v6488
    %6630 = vmatpush1.bf16.msra.mxu0 %v6487
    %6631 = vmatprep.subr.bf16.mxu0 %v6548
    %6632 = vmatpush2.bf16.msra.mxu0 %v6547
    %6633 = vmatprep.subr.bf16.mxu0 %v6544
    %6634 = vmatpush2.bf16.msra.mxu0 %v6543
    %6635 = vmatprep.subr.bf16.mxu0 %v6540
    %6636 = vmatpush2.bf16.msra.mxu0 %v6539
    %6637 = vmatprep.subr.bf16.mxu0 %v6536
    %6638 = vmatpush2.bf16.msra.mxu0 %v6535
    %6639 = vmatprep.subr.bf16.mxu0 %v6532
    %6640 = vmatpush2.bf16.msra.mxu0 %v6531
    %6641 = vmatprep.subr.bf16.mxu0 %v6528
    %6642 = vmatpush2.bf16.msra.mxu0 %v6527
    %6643 = vmatprep.subr.bf16.mxu0 %v6524
    %6644 = vmatpush2.bf16.msra.mxu0 %v6523
    %6645 = vmatprep.subr.bf16.mxu0 %v6520
    %6646 = vmatpush2.bf16.msra.mxu0 %v6519
    %6647 = vmatprep.mubr.bf16.mxu0 %v6280
    %6648 = vmatmul.mubr.bf16.gmra.mxu0 %v6279
    %v6649 = vpop.f32.mrf.mxu0
    %v6650 = vadd.f32 0.0, %v6649
    %v6651 = vpop.f32.mrf.mxu0
    %v6652 = vadd.f32 0.0, %v6651
    %v6653 = vpop.f32.mrf.mxu0
    %v6654 = vadd.f32 0.0, %v6653
    %v6655 = vpop.f32.mrf.mxu0
    %v6656 = vadd.f32 0.0, %v6655
    %6657 = vmatprep.mubr.bf16.mxu0 %v6282
    %6658 = vmatmul.mubr.bf16.gmra.mxu0 %v6281
    %v6659 = vpop.f32.mrf.mxu0
    %v6660 = vadd.f32 0.0, %v6659
    %v6661 = vpop.f32.mrf.mxu0
    %v6662 = vadd.f32 0.0, %v6661
    %v6663 = vpop.f32.mrf.mxu0
    %v6664 = vadd.f32 0.0, %v6663
    %v6665 = vpop.f32.mrf.mxu0
    %v6666 = vadd.f32 0.0, %v6665
    %6667 = vmatprep.mubr.bf16.mxu0 %v6284
    %6668 = vmatmul.mubr.bf16.gmra.mxu0 %v6283
    %v6669 = vpop.f32.mrf.mxu0
    %v6670 = vadd.f32 0.0, %v6669
    %v6671 = vpop.f32.mrf.mxu0
    %v6672 = vadd.f32 0.0, %v6671
    %v6673 = vpop.f32.mrf.mxu0
    %v6674 = vadd.f32 0.0, %v6673
    %v6675 = vpop.f32.mrf.mxu0
    %v6676 = vadd.f32 0.0, %v6675
    %6677 = vmatprep.mubr.bf16.mxu0 %v6286
    %6678 = vmatmul.mubr.bf16.gmra.mxu0 %v6285
    %v6679 = vpop.f32.mrf.mxu0
    %v6680 = vadd.f32 0.0, %v6679
    %v6681 = vpop.f32.mrf.mxu0
    %v6682 = vadd.f32 0.0, %v6681
    %v6683 = vpop.f32.mrf.mxu0
    %v6684 = vpop.f32.mrf.mxu0
    %6685 = vdwg.mxu0
    %6686 = vmatprep.subr.bf16.mxu0 %v6518
    %6687 = vmatpush1.bf16.msra.mxu0 %v6517
    %6688 = vmatprep.subr.bf16.mxu0 %v6514
    %6689 = vmatpush1.bf16.msra.mxu0 %v6513
    %6690 = vmatprep.subr.bf16.mxu0 %v6510
    %6691 = vmatpush1.bf16.msra.mxu0 %v6509
    %6692 = vmatprep.subr.bf16.mxu0 %v6506
    %6693 = vmatpush1.bf16.msra.mxu0 %v6505
    %6694 = vmatprep.subr.bf16.mxu0 %v6502
    %6695 = vmatpush1.bf16.msra.mxu0 %v6501
    %6696 = vmatprep.subr.bf16.mxu0 %v6498
    %6697 = vmatpush1.bf16.msra.mxu0 %v6497
    %6698 = vmatprep.subr.bf16.mxu0 %v6494
    %6699 = vmatpush1.bf16.msra.mxu0 %v6493
    %6700 = vmatprep.subr.bf16.mxu0 %v6490
    %6701 = vmatpush1.bf16.msra.mxu0 %v6489
    %6702 = vmatprep.subr.bf16.mxu0 %v6550
    %6703 = vmatpush2.bf16.msra.mxu0 %v6549
    %6704 = vmatprep.subr.bf16.mxu0 %v6546
    %6705 = vmatpush2.bf16.msra.mxu0 %v6545
    %6706 = vmatprep.subr.bf16.mxu0 %v6542
    %6707 = vmatpush2.bf16.msra.mxu0 %v6541
    %6708 = vmatprep.subr.bf16.mxu0 %v6538
    %6709 = vmatpush2.bf16.msra.mxu0 %v6537
    %6710 = vmatprep.subr.bf16.mxu0 %v6534
    %6711 = vmatpush2.bf16.msra.mxu0 %v6533
    %6712 = vmatprep.subr.bf16.mxu0 %v6530
    %6713 = vmatpush2.bf16.msra.mxu0 %v6529
    %6714 = vmatprep.subr.bf16.mxu0 %v6526
    %6715 = vmatpush2.bf16.msra.mxu0 %v6525
    %6716 = vmatprep.subr.bf16.mxu0 %v6522
    %6717 = vmatpush2.bf16.msra.mxu0 %v6521
    %6718 = vmatprep.mubr.bf16.mxu0 %v6280
    %6719 = vmatmul.mubr.bf16.gmra.mxu0 %v6279
    %v6720 = vpop.f32.mrf.mxu0
    %v6721 = vadd.f32 0.0, %v6720
    %v6722 = vpop.f32.mrf.mxu0
    %v6723 = vadd.f32 0.0, %v6722
    %v6724 = vpop.f32.mrf.mxu0
    %v6725 = vadd.f32 0.0, %v6724
    %v6726 = vpop.f32.mrf.mxu0
    %v6727 = vadd.f32 0.0, %v6726
    %6728 = vmatprep.mubr.bf16.mxu0 %v6282
    %6729 = vmatmul.mubr.bf16.gmra.mxu0 %v6281
    %v6730 = vpop.f32.mrf.mxu0
    %v6731 = vadd.f32 0.0, %v6730
    %v6732 = vpop.f32.mrf.mxu0
    %v6733 = vadd.f32 0.0, %v6732
    %v6734 = vpop.f32.mrf.mxu0
    %v6735 = vadd.f32 0.0, %v6734
    %v6736 = vpop.f32.mrf.mxu0
    %v6737 = vadd.f32 0.0, %v6736
    %6738 = vmatprep.mubr.bf16.mxu0 %v6284
    %6739 = vmatmul.mubr.bf16.gmra.mxu0 %v6283
    %v6740 = vpop.f32.mrf.mxu0
    %v6741 = vadd.f32 0.0, %v6740
    %v6742 = vpop.f32.mrf.mxu0
    %v6743 = vadd.f32 0.0, %v6742
    %v6744 = vpop.f32.mrf.mxu0
    %v6745 = vadd.f32 0.0, %v6744
    %v6746 = vpop.f32.mrf.mxu0
    %v6747 = vadd.f32 0.0, %v6746
    %6748 = vmatprep.mubr.bf16.mxu0 %v6286
    %6749 = vmatmul.mubr.bf16.gmra.mxu0 %v6285
    %v6750 = vpop.f32.mrf.mxu0
    %v6751 = vadd.f32 0.0, %v6750
    %v6752 = vpop.f32.mrf.mxu0
    %v6753 = vadd.f32 0.0, %v6752
    %v6754 = vpop.f32.mrf.mxu0
    %v6755 = vpop.f32.mrf.mxu0
    %6756 = vdwg.mxu0
    %v6757 = vadd.f32 %v6158, %v6650
    %v6758 = vadd.f32 %v6159, %v6652
    %v6759 = vadd.f32 %v6160, %v6721
    %v6760 = vadd.f32 %v6161, %v6723
    %v6761 = vadd.f32 %v6162, %v6654
    %v6762 = vadd.f32 %v6163, %v6656
    %v6763 = vadd.f32 %v6164, %v6725
    %v6764 = vadd.f32 %v6165, %v6727
    %v6765 = vadd.f32 %v6166, %v6660
    %v6766 = vadd.f32 %v6167, %v6662
    %v6767 = vadd.f32 %v6168, %v6731
    %v6768 = vadd.f32 %v6169, %v6733
    %v6769 = vadd.f32 %v6170, %v6664
    %v6770 = vadd.f32 %v6171, %v6666
    %v6771 = vadd.f32 %v6172, %v6735
    %v6772 = vadd.f32 %v6173, %v6737
    %v6773 = vadd.f32 %v6174, %v6670
    %v6774 = vadd.f32 %v6175, %v6672
    %v6775 = vadd.f32 %v6176, %v6741
    %v6776 = vadd.f32 %v6177, %v6743
    %v6777 = vadd.f32 %v6178, %v6674
    %v6778 = vadd.f32 %v6179, %v6676
    %v6779 = vadd.f32 %v6180, %v6745
    %v6780 = vadd.f32 %v6181, %v6747
    %v6781 = vadd.f32 %v6182, %v6680
    %v6782 = vadd.f32 %v6183, %v6682
    %v6783 = vadd.f32 %v6184, %v6751
    %v6784 = vadd.f32 %v6185, %v6753
    %s6785 = scalar_lea.vmem [#allocation2], 16
    %v6786 = vld [vmem:[%s6785] sm:$0xff]
    %v6787 = vld [vmem:[%s6785 + $0x8] sm:$0xff]
    %v6788 = vld [vmem:[%s6785 + $0x10] sm:$0xff]
    %v6789 = vld [vmem:[%s6785 + $0x18] sm:$0xff]
    %v6790 = vld [vmem:[%s6785 + $0x20] sm:$0xff]
    %v6791 = vld [vmem:[%s6785 + $0x28] sm:$0xff]
    %v6792 = vld [vmem:[%s6785 + $0x30] sm:$0xff]
    %s6793 = scalar_lea.vmem [#allocation7], 2048
    %v6794 = vld [vmem:[%s6793] sm:$0xff]
    %v6795 = vld [vmem:[%s6793 + $0x8] sm:$0xff]
    %v6796 = vld [vmem:[%s6793 + $0x10] sm:$0xff]
    %v6797 = vld [vmem:[%s6793 + $0x18] sm:$0xff]
    %v6798 = vld [vmem:[%s6793 + $0x20] sm:$0xff]
    %v6799 = vld [vmem:[%s6793 + $0x28] sm:$0xff]
    %v6800 = vld [vmem:[%s6793 + $0x30] sm:$0xff]
    %v6801 = vld [vmem:[%s6793 + $0x38] sm:$0xff]
    %v6802 = vld [vmem:[%s6793 + $0x40] sm:$0xff]
    %v6803 = vld [vmem:[%s6793 + $0x48] sm:$0xff]
    %v6804 = vld [vmem:[%s6793 + $0x50] sm:$0xff]
    %v6805 = vld [vmem:[%s6793 + $0x58] sm:$0xff]
    %v6806 = vld [vmem:[%s6793 + $0x60] sm:$0xff]
    %v6807 = vld [vmem:[%s6793 + $0x68] sm:$0xff]
    %v6808 = vld [vmem:[%s6793 + $0x70] sm:$0xff]
    %v6809 = vld [vmem:[%s6793 + $0x78] sm:$0xff]
    %v6810 = vld [vmem:[%s6793 + $0x80] sm:$0xff]
    %v6811 = vld [vmem:[%s6793 + $0x88] sm:$0xff]
    %v6812 = vld [vmem:[%s6793 + $0x90] sm:$0xff]
    %v6813 = vld [vmem:[%s6793 + $0x98] sm:$0xff]
    %v6814 = vld [vmem:[%s6793 + $0xa0] sm:$0xff]
    %v6815 = vld [vmem:[%s6793 + $0xa8] sm:$0xff]
    %v6816 = vld [vmem:[%s6793 + $0xb0] sm:$0xff]
    %v6817 = vld [vmem:[%s6793 + $0xb8] sm:$0xff]
    %v6818 = vld [vmem:[%s6793 + $0xc0] sm:$0xff]
    %v6819 = vld [vmem:[%s6793 + $0xc8] sm:$0xff]
    %v6820 = vld [vmem:[%s6793 + $0xd0] sm:$0xff]
    %v6821 = vld [vmem:[%s6793 + $0xd8] sm:$0xff]
    %v6822 = vld [vmem:[%s6793 + $0xe0] sm:$0xff]
    %v6823 = vld [vmem:[%s6793 + $0xe8] sm:$0xff]
    %v6824 = vld [vmem:[%s6793 + $0xf0] sm:$0xff]
    %v6825 = vld [vmem:[%s6793 + $0xf8] sm:$0xff]
    %v6826 = vld [vmem:[%s6793 + $0x100] sm:$0xff]
    %v6827 = vld [vmem:[%s6793 + $0x108] sm:$0xff]
    %v6828 = vld [vmem:[%s6793 + $0x110] sm:$0xff]
    %v6829 = vld [vmem:[%s6793 + $0x118] sm:$0xff]
    %v6830 = vld [vmem:[%s6793 + $0x120] sm:$0xff]
    %v6831 = vld [vmem:[%s6793 + $0x128] sm:$0xff]
    %v6832 = vld [vmem:[%s6793 + $0x130] sm:$0xff]
    %v6833 = vld [vmem:[%s6793 + $0x138] sm:$0xff]
    %v6834 = vld [vmem:[%s6793 + $0x140] sm:$0xff]
    %v6835 = vld [vmem:[%s6793 + $0x148] sm:$0xff]
    %v6836 = vld [vmem:[%s6793 + $0x150] sm:$0xff]
    %v6837 = vld [vmem:[%s6793 + $0x158] sm:$0xff]
    %v6838 = vld [vmem:[%s6793 + $0x160] sm:$0xff]
    %v6839 = vld [vmem:[%s6793 + $0x168] sm:$0xff]
    %v6840 = vld [vmem:[%s6793 + $0x170] sm:$0xff]
    %v6841 = vld [vmem:[%s6793 + $0x178] sm:$0xff]
    %v6842 = vld [vmem:[%s6793 + $0x180] sm:$0xff]
    %v6843 = vld [vmem:[%s6793 + $0x188] sm:$0xff]
    %v6844 = vld [vmem:[%s6793 + $0x190] sm:$0xff]
    %v6845 = vld [vmem:[%s6793 + $0x198] sm:$0xff]
    %v6846 = vld [vmem:[%s6793 + $0x1a0] sm:$0xff]
    %v6847 = vld [vmem:[%s6793 + $0x1a8] sm:$0xff]
    %v6848 = vld [vmem:[%s6793 + $0x1b0] sm:$0xff]
    %v6849 = vld [vmem:[%s6793 + $0x1b8] sm:$0xff]
    %v6850 = vld [vmem:[%s6793 + $0x1c0] sm:$0xff]
    %v6851 = vld [vmem:[%s6793 + $0x1c8] sm:$0xff]
    %v6852 = vld [vmem:[%s6793 + $0x1d0] sm:$0xff]
    %v6853 = vld [vmem:[%s6793 + $0x1d8] sm:$0xff]
    %v6854 = vld [vmem:[%s6793 + $0x1e0] sm:$0xff]
    %v6855 = vld [vmem:[%s6793 + $0x1e8] sm:$0xff]
    %v6856 = vld [vmem:[%s6793 + $0x1f0] sm:$0xff]
    %v6857 = vld [vmem:[%s6793 + $0x1f8] sm:$0xff]
    %v6865 = vunpack.c.l.b16 %v6786
    %v6866 = vunpack.c.h.b16 %v6786
    %v6867 = vunpack.c.l.b16 %v6787
    %v6868 = vunpack.c.h.b16 %v6787
    %v6869 = vunpack.c.l.b16 %v6788
    %v6870 = vunpack.c.h.b16 %v6788
    %v6871 = vunpack.c.l.b16 %v6789
    %v6872 = vunpack.c.h.b16 %v6789
    %v6873 = vunpack.c.l.b16 %v6790
    %v6874 = vunpack.c.h.b16 %v6790
    %v6875 = vunpack.c.l.b16 %v6791
    %v6876 = vunpack.c.h.b16 %v6791
    %v6877 = vunpack.c.l.b16 %v6792
    %v6878 = vunpack.c.h.b16 %v6792
    %v6879 = vpack.c.b16 %v6867, %v6865
    %v6880 = vpack.c.b16 %v6868, %v6866
    %v6881 = vpack.c.b16 %v6871, %v6869
    %v6882 = vpack.c.b16 %v6872, %v6870
    %v6883 = vpack.c.b16 %v6875, %v6873
    %v6884 = vpack.c.b16 %v6876, %v6874
    %v6885 = vpack.c.b16 %v6877, %v6877
    %v6886 = vpack.c.b16 %v6878, %v6878
    %v6959 = vunpack.c.l.b16 %v6794
    %v6960 = vunpack.c.h.b16 %v6794
    %v6961 = vunpack.c.l.b16 %v6795
    %v6962 = vunpack.c.h.b16 %v6795
    %v6963 = vunpack.c.l.b16 %v6796
    %v6964 = vunpack.c.h.b16 %v6796
    %v6965 = vunpack.c.l.b16 %v6797
    %v6966 = vunpack.c.h.b16 %v6797
    %v6967 = vunpack.c.l.b16 %v6798
    %v6968 = vunpack.c.h.b16 %v6798
    %v6969 = vunpack.c.l.b16 %v6799
    %v6970 = vunpack.c.h.b16 %v6799
    %v6971 = vunpack.c.l.b16 %v6800
    %v6972 = vunpack.c.h.b16 %v6800
    %v6973 = vunpack.c.l.b16 %v6801
    %v6974 = vunpack.c.h.b16 %v6801
    %v6975 = vunpack.c.l.b16 %v6802
    %v6976 = vunpack.c.h.b16 %v6802
    %v6977 = vunpack.c.l.b16 %v6803
    %v6978 = vunpack.c.h.b16 %v6803
    %v6979 = vunpack.c.l.b16 %v6804
    %v6980 = vunpack.c.h.b16 %v6804
    %v6981 = vunpack.c.l.b16 %v6805
    %v6982 = vunpack.c.h.b16 %v6805
    %v6983 = vunpack.c.l.b16 %v6806
    %v6984 = vunpack.c.h.b16 %v6806
    %v6985 = vunpack.c.l.b16 %v6807
    %v6986 = vunpack.c.h.b16 %v6807
    %v6987 = vunpack.c.l.b16 %v6808
    %v6988 = vunpack.c.h.b16 %v6808
    %v6989 = vunpack.c.l.b16 %v6809
    %v6990 = vunpack.c.h.b16 %v6809
    %v6991 = vunpack.c.l.b16 %v6810
    %v6992 = vunpack.c.h.b16 %v6810
    %v6993 = vunpack.c.l.b16 %v6811
    %v6994 = vunpack.c.h.b16 %v6811
    %v6995 = vunpack.c.l.b16 %v6812
    %v6996 = vunpack.c.h.b16 %v6812
    %v6997 = vunpack.c.l.b16 %v6813
    %v6998 = vunpack.c.h.b16 %v6813
    %v6999 = vunpack.c.l.b16 %v6814
    %v7000 = vunpack.c.h.b16 %v6814
    %v7001 = vunpack.c.l.b16 %v6815
    %v7002 = vunpack.c.h.b16 %v6815
    %v7003 = vunpack.c.l.b16 %v6816
    %v7004 = vunpack.c.h.b16 %v6816
    %v7005 = vunpack.c.l.b16 %v6817
    %v7006 = vunpack.c.h.b16 %v6817
    %v7007 = vunpack.c.l.b16 %v6818
    %v7008 = vunpack.c.h.b16 %v6818
    %v7009 = vunpack.c.l.b16 %v6819
    %v7010 = vunpack.c.h.b16 %v6819
    %v7011 = vunpack.c.l.b16 %v6820
    %v7012 = vunpack.c.h.b16 %v6820
    %v7013 = vunpack.c.l.b16 %v6821
    %v7014 = vunpack.c.h.b16 %v6821
    %v7015 = vunpack.c.l.b16 %v6822
    %v7016 = vunpack.c.h.b16 %v6822
    %v7017 = vunpack.c.l.b16 %v6823
    %v7018 = vunpack.c.h.b16 %v6823
    %v7019 = vunpack.c.l.b16 %v6824
    %v7020 = vunpack.c.h.b16 %v6824
    %v7021 = vunpack.c.l.b16 %v6825
    %v7022 = vunpack.c.h.b16 %v6825
    %v7023 = vunpack.c.l.b16 %v6826
    %v7024 = vunpack.c.h.b16 %v6826
    %v7025 = vunpack.c.l.b16 %v6827
    %v7026 = vunpack.c.h.b16 %v6827
    %v7027 = vunpack.c.l.b16 %v6828
    %v7028 = vunpack.c.h.b16 %v6828
    %v7029 = vunpack.c.l.b16 %v6829
    %v7030 = vunpack.c.h.b16 %v6829
    %v7031 = vunpack.c.l.b16 %v6830
    %v7032 = vunpack.c.h.b16 %v6830
    %v7033 = vunpack.c.l.b16 %v6831
    %v7034 = vunpack.c.h.b16 %v6831
    %v7035 = vunpack.c.l.b16 %v6832
    %v7036 = vunpack.c.h.b16 %v6832
    %v7037 = vunpack.c.l.b16 %v6833
    %v7038 = vunpack.c.h.b16 %v6833
    %v7039 = vunpack.c.l.b16 %v6834
    %v7040 = vunpack.c.h.b16 %v6834
    %v7041 = vunpack.c.l.b16 %v6835
    %v7042 = vunpack.c.h.b16 %v6835
    %v7043 = vunpack.c.l.b16 %v6836
    %v7044 = vunpack.c.h.b16 %v6836
    %v7045 = vunpack.c.l.b16 %v6837
    %v7046 = vunpack.c.h.b16 %v6837
    %v7047 = vunpack.c.l.b16 %v6838
    %v7048 = vunpack.c.h.b16 %v6838
    %v7049 = vunpack.c.l.b16 %v6839
    %v7050 = vunpack.c.h.b16 %v6839
    %v7051 = vunpack.c.l.b16 %v6840
    %v7052 = vunpack.c.h.b16 %v6840
    %v7053 = vunpack.c.l.b16 %v6841
    %v7054 = vunpack.c.h.b16 %v6841
    %v7055 = vunpack.c.l.b16 %v6842
    %v7056 = vunpack.c.h.b16 %v6842
    %v7057 = vunpack.c.l.b16 %v6843
    %v7058 = vunpack.c.h.b16 %v6843
    %v7059 = vunpack.c.l.b16 %v6844
    %v7060 = vunpack.c.h.b16 %v6844
    %v7061 = vunpack.c.l.b16 %v6845
    %v7062 = vunpack.c.h.b16 %v6845
    %v7063 = vunpack.c.l.b16 %v6846
    %v7064 = vunpack.c.h.b16 %v6846
    %v7065 = vunpack.c.l.b16 %v6847
    %v7066 = vunpack.c.h.b16 %v6847
    %v7067 = vunpack.c.l.b16 %v6848
    %v7068 = vunpack.c.h.b16 %v6848
    %v7069 = vunpack.c.l.b16 %v6849
    %v7070 = vunpack.c.h.b16 %v6849
    %v7071 = vunpack.c.l.b16 %v6850
    %v7072 = vunpack.c.h.b16 %v6850
    %v7073 = vunpack.c.l.b16 %v6851
    %v7074 = vunpack.c.h.b16 %v6851
    %v7075 = vunpack.c.l.b16 %v6852
    %v7076 = vunpack.c.h.b16 %v6852
    %v7077 = vunpack.c.l.b16 %v6853
    %v7078 = vunpack.c.h.b16 %v6853
    %v7079 = vunpack.c.l.b16 %v6854
    %v7080 = vunpack.c.h.b16 %v6854
    %v7081 = vunpack.c.l.b16 %v6855
    %v7082 = vunpack.c.h.b16 %v6855
    %v7083 = vunpack.c.l.b16 %v6856
    %v7084 = vunpack.c.h.b16 %v6856
    %v7085 = vunpack.c.l.b16 %v6857
    %v7086 = vunpack.c.h.b16 %v6857
    %v7087 = vpack.c.b16 %v6963, %v6959
    %v7088 = vpack.c.b16 %v6964, %v6960
    %v7089 = vpack.c.b16 %v6965, %v6961
    %v7090 = vpack.c.b16 %v6966, %v6962
    %v7091 = vpack.c.b16 %v6971, %v6967
    %v7092 = vpack.c.b16 %v6972, %v6968
    %v7093 = vpack.c.b16 %v6973, %v6969
    %v7094 = vpack.c.b16 %v6974, %v6970
    %v7095 = vpack.c.b16 %v6979, %v6975
    %v7096 = vpack.c.b16 %v6980, %v6976
    %v7097 = vpack.c.b16 %v6981, %v6977
    %v7098 = vpack.c.b16 %v6982, %v6978
    %v7099 = vpack.c.b16 %v6987, %v6983
    %v7100 = vpack.c.b16 %v6988, %v6984
    %v7101 = vpack.c.b16 %v6989, %v6985
    %v7102 = vpack.c.b16 %v6990, %v6986
    %v7103 = vpack.c.b16 %v6995, %v6991
    %v7104 = vpack.c.b16 %v6996, %v6992
    %v7105 = vpack.c.b16 %v6997, %v6993
    %v7106 = vpack.c.b16 %v6998, %v6994
    %v7107 = vpack.c.b16 %v7003, %v6999
    %v7108 = vpack.c.b16 %v7004, %v7000
    %v7109 = vpack.c.b16 %v7005, %v7001
    %v7110 = vpack.c.b16 %v7006, %v7002
    %v7111 = vpack.c.b16 %v7011, %v7007
    %v7112 = vpack.c.b16 %v7012, %v7008
    %v7113 = vpack.c.b16 %v7013, %v7009
    %v7114 = vpack.c.b16 %v7014, %v7010
    %v7115 = vpack.c.b16 %v7019, %v7015
    %v7116 = vpack.c.b16 %v7020, %v7016
    %v7117 = vpack.c.b16 %v7021, %v7017
    %v7118 = vpack.c.b16 %v7022, %v7018
    %v7119 = vpack.c.b16 %v7027, %v7023
    %v7120 = vpack.c.b16 %v7028, %v7024
    %v7121 = vpack.c.b16 %v7029, %v7025
    %v7122 = vpack.c.b16 %v7030, %v7026
    %v7123 = vpack.c.b16 %v7035, %v7031
    %v7124 = vpack.c.b16 %v7036, %v7032
    %v7125 = vpack.c.b16 %v7037, %v7033
    %v7126 = vpack.c.b16 %v7038, %v7034
    %v7127 = vpack.c.b16 %v7043, %v7039
    %v7128 = vpack.c.b16 %v7044, %v7040
    %v7129 = vpack.c.b16 %v7045, %v7041
    %v7130 = vpack.c.b16 %v7046, %v7042
    %v7131 = vpack.c.b16 %v7051, %v7047
    %v7132 = vpack.c.b16 %v7052, %v7048
    %v7133 = vpack.c.b16 %v7053, %v7049
    %v7134 = vpack.c.b16 %v7054, %v7050
    %v7135 = vpack.c.b16 %v7059, %v7055
    %v7136 = vpack.c.b16 %v7060, %v7056
    %v7137 = vpack.c.b16 %v7061, %v7057
    %v7138 = vpack.c.b16 %v7062, %v7058
    %v7139 = vpack.c.b16 %v7067, %v7063
    %v7140 = vpack.c.b16 %v7068, %v7064
    %v7141 = vpack.c.b16 %v7069, %v7065
    %v7142 = vpack.c.b16 %v7070, %v7066
    %v7143 = vpack.c.b16 %v7075, %v7071
    %v7144 = vpack.c.b16 %v7076, %v7072
    %v7145 = vpack.c.b16 %v7077, %v7073
    %v7146 = vpack.c.b16 %v7078, %v7074
    %v7147 = vpack.c.b16 %v7083, %v7079
    %v7148 = vpack.c.b16 %v7084, %v7080
    %v7149 = vpack.c.b16 %v7085, %v7081
    %v7150 = vpack.c.b16 %v7086, %v7082
    %7215 = vmatprep.subr.bf16.mxu0 %v7116
    %7216 = vmatpush1.bf16.msra.mxu0 %v7115
    %7217 = vmatprep.subr.bf16.mxu0 %v7112
    %7218 = vmatpush1.bf16.msra.mxu0 %v7111
    %7219 = vmatprep.subr.bf16.mxu0 %v7108
    %7220 = vmatpush1.bf16.msra.mxu0 %v7107
    %7221 = vmatprep.subr.bf16.mxu0 %v7104
    %7222 = vmatpush1.bf16.msra.mxu0 %v7103
    %7223 = vmatprep.subr.bf16.mxu0 %v7100
    %7224 = vmatpush1.bf16.msra.mxu0 %v7099
    %7225 = vmatprep.subr.bf16.mxu0 %v7096
    %7226 = vmatpush1.bf16.msra.mxu0 %v7095
    %7227 = vmatprep.subr.bf16.mxu0 %v7092
    %7228 = vmatpush1.bf16.msra.mxu0 %v7091
    %7229 = vmatprep.subr.bf16.mxu0 %v7088
    %7230 = vmatpush1.bf16.msra.mxu0 %v7087
    %7231 = vmatprep.subr.bf16.mxu0 %v7148
    %7232 = vmatpush2.bf16.msra.mxu0 %v7147
    %7233 = vmatprep.subr.bf16.mxu0 %v7144
    %7234 = vmatpush2.bf16.msra.mxu0 %v7143
    %7235 = vmatprep.subr.bf16.mxu0 %v7140
    %7236 = vmatpush2.bf16.msra.mxu0 %v7139
    %7237 = vmatprep.subr.bf16.mxu0 %v7136
    %7238 = vmatpush2.bf16.msra.mxu0 %v7135
    %7239 = vmatprep.subr.bf16.mxu0 %v7132
    %7240 = vmatpush2.bf16.msra.mxu0 %v7131
    %7241 = vmatprep.subr.bf16.mxu0 %v7128
    %7242 = vmatpush2.bf16.msra.mxu0 %v7127
    %7243 = vmatprep.subr.bf16.mxu0 %v7124
    %7244 = vmatpush2.bf16.msra.mxu0 %v7123
    %7245 = vmatprep.subr.bf16.mxu0 %v7120
    %7246 = vmatpush2.bf16.msra.mxu0 %v7119
    %7247 = vmatprep.mubr.bf16.mxu0 %v6880
    %7248 = vmatmul.mubr.bf16.gmra.mxu0 %v6879
    %v7249 = vpop.f32.mrf.mxu0
    %v7250 = vadd.f32 0.0, %v7249
    %v7251 = vpop.f32.mrf.mxu0
    %v7252 = vadd.f32 0.0, %v7251
    %v7253 = vpop.f32.mrf.mxu0
    %v7254 = vadd.f32 0.0, %v7253
    %v7255 = vpop.f32.mrf.mxu0
    %v7256 = vadd.f32 0.0, %v7255
    %7257 = vmatprep.mubr.bf16.mxu0 %v6882
    %7258 = vmatmul.mubr.bf16.gmra.mxu0 %v6881
    %v7259 = vpop.f32.mrf.mxu0
    %v7260 = vadd.f32 0.0, %v7259
    %v7261 = vpop.f32.mrf.mxu0
    %v7262 = vadd.f32 0.0, %v7261
    %v7263 = vpop.f32.mrf.mxu0
    %v7264 = vadd.f32 0.0, %v7263
    %v7265 = vpop.f32.mrf.mxu0
    %v7266 = vadd.f32 0.0, %v7265
    %7267 = vmatprep.mubr.bf16.mxu0 %v6884
    %7268 = vmatmul.mubr.bf16.gmra.mxu0 %v6883
    %v7269 = vpop.f32.mrf.mxu0
    %v7270 = vadd.f32 0.0, %v7269
    %v7271 = vpop.f32.mrf.mxu0
    %v7272 = vadd.f32 0.0, %v7271
    %v7273 = vpop.f32.mrf.mxu0
    %v7274 = vadd.f32 0.0, %v7273
    %v7275 = vpop.f32.mrf.mxu0
    %v7276 = vadd.f32 0.0, %v7275
    %7277 = vmatprep.mubr.bf16.mxu0 %v6886
    %7278 = vmatmul.mubr.bf16.gmra.mxu0 %v6885
    %v7279 = vpop.f32.mrf.mxu0
    %v7280 = vadd.f32 0.0, %v7279
    %v7281 = vpop.f32.mrf.mxu0
    %v7282 = vadd.f32 0.0, %v7281
    %v7283 = vpop.f32.mrf.mxu0
    %v7284 = vpop.f32.mrf.mxu0
    %7285 = vdwg.mxu0
    %7286 = vmatprep.subr.bf16.mxu0 %v7118
    %7287 = vmatpush1.bf16.msra.mxu0 %v7117
    %7288 = vmatprep.subr.bf16.mxu0 %v7114
    %7289 = vmatpush1.bf16.msra.mxu0 %v7113
    %7290 = vmatprep.subr.bf16.mxu0 %v7110
    %7291 = vmatpush1.bf16.msra.mxu0 %v7109
    %7292 = vmatprep.subr.bf16.mxu0 %v7106
    %7293 = vmatpush1.bf16.msra.mxu0 %v7105
    %7294 = vmatprep.subr.bf16.mxu0 %v7102
    %7295 = vmatpush1.bf16.msra.mxu0 %v7101
    %7296 = vmatprep.subr.bf16.mxu0 %v7098
    %7297 = vmatpush1.bf16.msra.mxu0 %v7097
    %7298 = vmatprep.subr.bf16.mxu0 %v7094
    %7299 = vmatpush1.bf16.msra.mxu0 %v7093
    %7300 = vmatprep.subr.bf16.mxu0 %v7090
    %7301 = vmatpush1.bf16.msra.mxu0 %v7089
    %7302 = vmatprep.subr.bf16.mxu0 %v7150
    %7303 = vmatpush2.bf16.msra.mxu0 %v7149
    %7304 = vmatprep.subr.bf16.mxu0 %v7146
    %7305 = vmatpush2.bf16.msra.mxu0 %v7145
    %7306 = vmatprep.subr.bf16.mxu0 %v7142
    %7307 = vmatpush2.bf16.msra.mxu0 %v7141
    %7308 = vmatprep.subr.bf16.mxu0 %v7138
    %7309 = vmatpush2.bf16.msra.mxu0 %v7137
    %7310 = vmatprep.subr.bf16.mxu0 %v7134
    %7311 = vmatpush2.bf16.msra.mxu0 %v7133
    %7312 = vmatprep.subr.bf16.mxu0 %v7130
    %7313 = vmatpush2.bf16.msra.mxu0 %v7129
    %7314 = vmatprep.subr.bf16.mxu0 %v7126
    %7315 = vmatpush2.bf16.msra.mxu0 %v7125
    %7316 = vmatprep.subr.bf16.mxu0 %v7122
    %7317 = vmatpush2.bf16.msra.mxu0 %v7121
    %7318 = vmatprep.mubr.bf16.mxu0 %v6880
    %7319 = vmatmul.mubr.bf16.gmra.mxu0 %v6879
    %v7320 = vpop.f32.mrf.mxu0
    %v7321 = vadd.f32 0.0, %v7320
    %v7322 = vpop.f32.mrf.mxu0
    %v7323 = vadd.f32 0.0, %v7322
    %v7324 = vpop.f32.mrf.mxu0
    %v7325 = vadd.f32 0.0, %v7324
    %v7326 = vpop.f32.mrf.mxu0
    %v7327 = vadd.f32 0.0, %v7326
    %7328 = vmatprep.mubr.bf16.mxu0 %v6882
    %7329 = vmatmul.mubr.bf16.gmra.mxu0 %v6881
    %v7330 = vpop.f32.mrf.mxu0
    %v7331 = vadd.f32 0.0, %v7330
    %v7332 = vpop.f32.mrf.mxu0
    %v7333 = vadd.f32 0.0, %v7332
    %v7334 = vpop.f32.mrf.mxu0
    %v7335 = vadd.f32 0.0, %v7334
    %v7336 = vpop.f32.mrf.mxu0
    %v7337 = vadd.f32 0.0, %v7336
    %7338 = vmatprep.mubr.bf16.mxu0 %v6884
    %7339 = vmatmul.mubr.bf16.gmra.mxu0 %v6883
    %v7340 = vpop.f32.mrf.mxu0
    %v7341 = vadd.f32 0.0, %v7340
    %v7342 = vpop.f32.mrf.mxu0
    %v7343 = vadd.f32 0.0, %v7342
    %v7344 = vpop.f32.mrf.mxu0
    %v7345 = vadd.f32 0.0, %v7344
    %v7346 = vpop.f32.mrf.mxu0
    %v7347 = vadd.f32 0.0, %v7346
    %7348 = vmatprep.mubr.bf16.mxu0 %v6886
    %7349 = vmatmul.mubr.bf16.gmra.mxu0 %v6885
    %v7350 = vpop.f32.mrf.mxu0
    %v7351 = vadd.f32 0.0, %v7350
    %v7352 = vpop.f32.mrf.mxu0
    %v7353 = vadd.f32 0.0, %v7352
    %v7354 = vpop.f32.mrf.mxu0
    %v7355 = vpop.f32.mrf.mxu0
    %7356 = vdwg.mxu0
    %v7357 = vadd.f32 %v6757, %v7250
    %v7358 = vadd.f32 %v6758, %v7252
    %v7359 = vadd.f32 %v6759, %v7321
    %v7360 = vadd.f32 %v6760, %v7323
    %v7361 = vadd.f32 %v6761, %v7254
    %v7362 = vadd.f32 %v6762, %v7256
    %v7363 = vadd.f32 %v6763, %v7325
    %v7364 = vadd.f32 %v6764, %v7327
    %v7365 = vadd.f32 %v6765, %v7260
    %v7366 = vadd.f32 %v6766, %v7262
    %v7367 = vadd.f32 %v6767, %v7331
    %v7368 = vadd.f32 %v6768, %v7333
    %v7369 = vadd.f32 %v6769, %v7264
    %v7370 = vadd.f32 %v6770, %v7266
    %v7371 = vadd.f32 %v6771, %v7335
    %v7372 = vadd.f32 %v6772, %v7337
    %v7373 = vadd.f32 %v6773, %v7270
    %v7374 = vadd.f32 %v6774, %v7272
    %v7375 = vadd.f32 %v6775, %v7341
    %v7376 = vadd.f32 %v6776, %v7343
    %v7377 = vadd.f32 %v6777, %v7274
    %v7378 = vadd.f32 %v6778, %v7276
    %v7379 = vadd.f32 %v6779, %v7345
    %v7380 = vadd.f32 %v6780, %v7347
    %v7381 = vadd.f32 %v6781, %v7280
    %v7382 = vadd.f32 %v6782, %v7282
    %v7383 = vadd.f32 %v6783, %v7351
    %v7384 = vadd.f32 %v6784, %v7353
    %v7385 = vmax.f32 %v7357, %v7359
    %v7386 = vmax.f32 %v7358, %v7360
    %v7387 = vmax.f32 %v7361, %v7363
    %v7388 = vmax.f32 %v7362, %v7364
    %v7389 = vmax.f32 %v7365, %v7367
    %v7390 = vmax.f32 %v7366, %v7368
    %v7391 = vmax.f32 %v7369, %v7371
    %v7392 = vmax.f32 %v7370, %v7372
    %v7393 = vmax.f32 %v7373, %v7375
    %v7394 = vmax.f32 %v7374, %v7376
    %v7395 = vmax.f32 %v7377, %v7379
    %v7396 = vmax.f32 %v7378, %v7380
    %v7397 = vmax.f32 %v7381, %v7383
    %v7398 = vmax.f32 %v7382, %v7384
    %7399 = vmatprep.subr.bf16.mxu0 %v4847
    %7400 = vmatpush1.bf16.msra.mxu0 %v4846
    %7401 = vmatprep.subr.bf16.mxu0 %v4843
    %7402 = vmatpush1.bf16.msra.mxu0 %v4842
    %7403 = vmatprep.subr.bf16.mxu0 %v4839
    %7404 = vmatpush1.bf16.msra.mxu0 %v4838
    %7405 = vmatprep.subr.bf16.mxu0 %v4835
    %7406 = vmatpush1.bf16.msra.mxu0 %v4834
    %7407 = vmatprep.subr.bf16.mxu0 %v4831
    %7408 = vmatpush1.bf16.msra.mxu0 %v4830
    %7409 = vmatprep.subr.bf16.mxu0 %v4827
    %7410 = vmatpush1.bf16.msra.mxu0 %v4826
    %7411 = vmatprep.subr.bf16.mxu0 %v4823
    %7412 = vmatpush1.bf16.msra.mxu0 %v4822
    %7413 = vmatprep.subr.bf16.mxu0 %v4819
    %7414 = vmatpush1.bf16.msra.mxu0 %v4818
    %7415 = vmatprep.subr.bf16.mxu0 %v4879
    %7416 = vmatpush2.bf16.msra.mxu0 %v4878
    %7417 = vmatprep.subr.bf16.mxu0 %v4875
    %7418 = vmatpush2.bf16.msra.mxu0 %v4874
    %7419 = vmatprep.subr.bf16.mxu0 %v4871
    %7420 = vmatpush2.bf16.msra.mxu0 %v4870
    %7421 = vmatprep.subr.bf16.mxu0 %v4867
    %7422 = vmatpush2.bf16.msra.mxu0 %v4866
    %7423 = vmatprep.subr.bf16.mxu0 %v4863
    %7424 = vmatpush2.bf16.msra.mxu0 %v4862
    %7425 = vmatprep.subr.bf16.mxu0 %v4859
    %7426 = vmatpush2.bf16.msra.mxu0 %v4858
    %7427 = vmatprep.subr.bf16.mxu0 %v4855
    %7428 = vmatpush2.bf16.msra.mxu0 %v4854
    %7429 = vmatprep.subr.bf16.mxu0 %v4851
    %7430 = vmatpush2.bf16.msra.mxu0 %v4850
    %7431 = vmatprep.mubr.bf16.mxu0 %v5681
    %7432 = vmatmul.mubr.bf16.gmra.mxu0 %v5680
    %v7433 = vpop.f32.mrf.mxu0
    %v7434 = vadd.f32 0.0, %v7433
    %v7435 = vpop.f32.mrf.mxu0
    %v7436 = vadd.f32 0.0, %v7435
    %v7437 = vpop.f32.mrf.mxu0
    %v7438 = vadd.f32 0.0, %v7437
    %v7439 = vpop.f32.mrf.mxu0
    %v7440 = vadd.f32 0.0, %v7439
    %7441 = vmatprep.mubr.bf16.mxu0 %v5683
    %7442 = vmatmul.mubr.bf16.gmra.mxu0 %v5682
    %v7443 = vpop.f32.mrf.mxu0
    %v7444 = vadd.f32 0.0, %v7443
    %v7445 = vpop.f32.mrf.mxu0
    %v7446 = vadd.f32 0.0, %v7445
    %v7447 = vpop.f32.mrf.mxu0
    %v7448 = vadd.f32 0.0, %v7447
    %v7449 = vpop.f32.mrf.mxu0
    %v7450 = vadd.f32 0.0, %v7449
    %7451 = vmatprep.mubr.bf16.mxu0 %v5685
    %7452 = vmatmul.mubr.bf16.gmra.mxu0 %v5684
    %v7453 = vpop.f32.mrf.mxu0
    %v7454 = vadd.f32 0.0, %v7453
    %v7455 = vpop.f32.mrf.mxu0
    %v7456 = vadd.f32 0.0, %v7455
    %v7457 = vpop.f32.mrf.mxu0
    %v7458 = vadd.f32 0.0, %v7457
    %v7459 = vpop.f32.mrf.mxu0
    %v7460 = vadd.f32 0.0, %v7459
    %7461 = vmatprep.mubr.bf16.mxu0 %v5687
    %7462 = vmatmul.mubr.bf16.gmra.mxu0 %v5686
    %v7463 = vpop.f32.mrf.mxu0
    %v7464 = vadd.f32 0.0, %v7463
    %v7465 = vpop.f32.mrf.mxu0
    %v7466 = vadd.f32 0.0, %v7465
    %v7467 = vpop.f32.mrf.mxu0
    %v7468 = vpop.f32.mrf.mxu0
    %7469 = vdwg.mxu0
    %7470 = vmatprep.subr.bf16.mxu0 %v4849
    %7471 = vmatpush1.bf16.msra.mxu0 %v4848
    %7472 = vmatprep.subr.bf16.mxu0 %v4845
    %7473 = vmatpush1.bf16.msra.mxu0 %v4844
    %7474 = vmatprep.subr.bf16.mxu0 %v4841
    %7475 = vmatpush1.bf16.msra.mxu0 %v4840
    %7476 = vmatprep.subr.bf16.mxu0 %v4837
    %7477 = vmatpush1.bf16.msra.mxu0 %v4836
    %7478 = vmatprep.subr.bf16.mxu0 %v4833
    %7479 = vmatpush1.bf16.msra.mxu0 %v4832
    %7480 = vmatprep.subr.bf16.mxu0 %v4829
    %7481 = vmatpush1.bf16.msra.mxu0 %v4828
    %7482 = vmatprep.subr.bf16.mxu0 %v4825
    %7483 = vmatpush1.bf16.msra.mxu0 %v4824
    %7484 = vmatprep.subr.bf16.mxu0 %v4821
    %7485 = vmatpush1.bf16.msra.mxu0 %v4820
    %7486 = vmatprep.subr.bf16.mxu0 %v4881
    %7487 = vmatpush2.bf16.msra.mxu0 %v4880
    %7488 = vmatprep.subr.bf16.mxu0 %v4877
    %7489 = vmatpush2.bf16.msra.mxu0 %v4876
    %7490 = vmatprep.subr.bf16.mxu0 %v4873
    %7491 = vmatpush2.bf16.msra.mxu0 %v4872
    %7492 = vmatprep.subr.bf16.mxu0 %v4869
    %7493 = vmatpush2.bf16.msra.mxu0 %v4868
    %7494 = vmatprep.subr.bf16.mxu0 %v4865
    %7495 = vmatpush2.bf16.msra.mxu0 %v4864
    %7496 = vmatprep.subr.bf16.mxu0 %v4861
    %7497 = vmatpush2.bf16.msra.mxu0 %v4860
    %7498 = vmatprep.subr.bf16.mxu0 %v4857
    %7499 = vmatpush2.bf16.msra.mxu0 %v4856
    %7500 = vmatprep.subr.bf16.mxu0 %v4853
    %7501 = vmatpush2.bf16.msra.mxu0 %v4852
    %7502 = vmatprep.mubr.bf16.mxu0 %v5681
    %7503 = vmatmul.mubr.bf16.gmra.mxu0 %v5680
    %v7504 = vpop.f32.mrf.mxu0
    %v7505 = vadd.f32 0.0, %v7504
    %v7506 = vpop.f32.mrf.mxu0
    %v7507 = vadd.f32 0.0, %v7506
    %v7508 = vpop.f32.mrf.mxu0
    %v7509 = vadd.f32 0.0, %v7508
    %v7510 = vpop.f32.mrf.mxu0
    %v7511 = vadd.f32 0.0, %v7510
    %7512 = vmatprep.mubr.bf16.mxu0 %v5683
    %7513 = vmatmul.mubr.bf16.gmra.mxu0 %v5682
    %v7514 = vpop.f32.mrf.mxu0
    %v7515 = vadd.f32 0.0, %v7514
    %v7516 = vpop.f32.mrf.mxu0
    %v7517 = vadd.f32 0.0, %v7516
    %v7518 = vpop.f32.mrf.mxu0
    %v7519 = vadd.f32 0.0, %v7518
    %v7520 = vpop.f32.mrf.mxu0
    %v7521 = vadd.f32 0.0, %v7520
    %7522 = vmatprep.mubr.bf16.mxu0 %v5685
    %7523 = vmatmul.mubr.bf16.gmra.mxu0 %v5684
    %v7524 = vpop.f32.mrf.mxu0
    %v7525 = vadd.f32 0.0, %v7524
    %v7526 = vpop.f32.mrf.mxu0
    %v7527 = vadd.f32 0.0, %v7526
    %v7528 = vpop.f32.mrf.mxu0
    %v7529 = vadd.f32 0.0, %v7528
    %v7530 = vpop.f32.mrf.mxu0
    %v7531 = vadd.f32 0.0, %v7530
    %7532 = vmatprep.mubr.bf16.mxu0 %v5687
    %7533 = vmatmul.mubr.bf16.gmra.mxu0 %v5686
    %v7534 = vpop.f32.mrf.mxu0
    %v7535 = vadd.f32 0.0, %v7534
    %v7536 = vpop.f32.mrf.mxu0
    %v7537 = vadd.f32 0.0, %v7536
    %v7538 = vpop.f32.mrf.mxu0
    %v7539 = vpop.f32.mrf.mxu0
    %7540 = vdwg.mxu0
    %7541 = vmatprep.subr.bf16.mxu0 %v5346
    %7542 = vmatpush1.bf16.msra.mxu0 %v5345
    %7543 = vmatprep.subr.bf16.mxu0 %v5342
    %7544 = vmatpush1.bf16.msra.mxu0 %v5341
    %7545 = vmatprep.subr.bf16.mxu0 %v5338
    %7546 = vmatpush1.bf16.msra.mxu0 %v5337
    %7547 = vmatprep.subr.bf16.mxu0 %v5334
    %7548 = vmatpush1.bf16.msra.mxu0 %v5333
    %7549 = vmatprep.subr.bf16.mxu0 %v5330
    %7550 = vmatpush1.bf16.msra.mxu0 %v5329
    %7551 = vmatprep.subr.bf16.mxu0 %v5326
    %7552 = vmatpush1.bf16.msra.mxu0 %v5325
    %7553 = vmatprep.subr.bf16.mxu0 %v5322
    %7554 = vmatpush1.bf16.msra.mxu0 %v5321
    %7555 = vmatprep.subr.bf16.mxu0 %v5318
    %7556 = vmatpush1.bf16.msra.mxu0 %v5317
    %7557 = vmatprep.subr.bf16.mxu0 %v5378
    %7558 = vmatpush2.bf16.msra.mxu0 %v5377
    %7559 = vmatprep.subr.bf16.mxu0 %v5374
    %7560 = vmatpush2.bf16.msra.mxu0 %v5373
    %7561 = vmatprep.subr.bf16.mxu0 %v5370
    %7562 = vmatpush2.bf16.msra.mxu0 %v5369
    %7563 = vmatprep.subr.bf16.mxu0 %v5366
    %7564 = vmatpush2.bf16.msra.mxu0 %v5365
    %7565 = vmatprep.subr.bf16.mxu0 %v5362
    %7566 = vmatpush2.bf16.msra.mxu0 %v5361
    %7567 = vmatprep.subr.bf16.mxu0 %v5358
    %7568 = vmatpush2.bf16.msra.mxu0 %v5357
    %7569 = vmatprep.subr.bf16.mxu0 %v5354
    %7570 = vmatpush2.bf16.msra.mxu0 %v5353
    %7571 = vmatprep.subr.bf16.mxu0 %v5350
    %7572 = vmatpush2.bf16.msra.mxu0 %v5349
    %7573 = vmatprep.mubr.bf16.mxu0 %v4611
    %7574 = vmatmul.mubr.bf16.gmra.mxu0 %v4610
    %v7575 = vpop.f32.mrf.mxu0
    %v7576 = vadd.f32 %v7434, %v7575
    %v7577 = vpop.f32.mrf.mxu0
    %v7578 = vadd.f32 %v7436, %v7577
    %v7579 = vpop.f32.mrf.mxu0
    %v7580 = vadd.f32 %v7438, %v7579
    %v7581 = vpop.f32.mrf.mxu0
    %v7582 = vadd.f32 %v7440, %v7581
    %7583 = vmatprep.mubr.bf16.mxu0 %v4613
    %7584 = vmatmul.mubr.bf16.gmra.mxu0 %v4612
    %v7585 = vpop.f32.mrf.mxu0
    %v7586 = vadd.f32 %v7444, %v7585
    %v7587 = vpop.f32.mrf.mxu0
    %v7588 = vadd.f32 %v7446, %v7587
    %v7589 = vpop.f32.mrf.mxu0
    %v7590 = vadd.f32 %v7448, %v7589
    %v7591 = vpop.f32.mrf.mxu0
    %v7592 = vadd.f32 %v7450, %v7591
    %7593 = vmatprep.mubr.bf16.mxu0 %v4615
    %7594 = vmatmul.mubr.bf16.gmra.mxu0 %v4614
    %v7595 = vpop.f32.mrf.mxu0
    %v7596 = vadd.f32 %v7454, %v7595
    %v7597 = vpop.f32.mrf.mxu0
    %v7598 = vadd.f32 %v7456, %v7597
    %v7599 = vpop.f32.mrf.mxu0
    %v7600 = vadd.f32 %v7458, %v7599
    %v7601 = vpop.f32.mrf.mxu0
    %v7602 = vadd.f32 %v7460, %v7601
    %7603 = vmatprep.mubr.bf16.mxu0 %v4617
    %7604 = vmatmul.mubr.bf16.gmra.mxu0 %v4616
    %v7605 = vpop.f32.mrf.mxu0
    %v7606 = vadd.f32 %v7464, %v7605
    %v7607 = vpop.f32.mrf.mxu0
    %v7608 = vadd.f32 %v7466, %v7607
    %v7609 = vpop.f32.mrf.mxu0
    %v7610 = vpop.f32.mrf.mxu0
    %7611 = vdwg.mxu0
    %7612 = vmatprep.subr.bf16.mxu0 %v5348
    %7613 = vmatpush1.bf16.msra.mxu0 %v5347
    %7614 = vmatprep.subr.bf16.mxu0 %v5344
    %7615 = vmatpush1.bf16.msra.mxu0 %v5343
    %7616 = vmatprep.subr.bf16.mxu0 %v5340
    %7617 = vmatpush1.bf16.msra.mxu0 %v5339
    %7618 = vmatprep.subr.bf16.mxu0 %v5336
    %7619 = vmatpush1.bf16.msra.mxu0 %v5335
    %7620 = vmatprep.subr.bf16.mxu0 %v5332
    %7621 = vmatpush1.bf16.msra.mxu0 %v5331
    %7622 = vmatprep.subr.bf16.mxu0 %v5328
    %7623 = vmatpush1.bf16.msra.mxu0 %v5327
    %7624 = vmatprep.subr.bf16.mxu0 %v5324
    %7625 = vmatpush1.bf16.msra.mxu0 %v5323
    %7626 = vmatprep.subr.bf16.mxu0 %v5320
    %7627 = vmatpush1.bf16.msra.mxu0 %v5319
    %7628 = vmatprep.subr.bf16.mxu0 %v5380
    %7629 = vmatpush2.bf16.msra.mxu0 %v5379
    %7630 = vmatprep.subr.bf16.mxu0 %v5376
    %7631 = vmatpush2.bf16.msra.mxu0 %v5375
    %7632 = vmatprep.subr.bf16.mxu0 %v5372
    %7633 = vmatpush2.bf16.msra.mxu0 %v5371
    %7634 = vmatprep.subr.bf16.mxu0 %v5368
    %7635 = vmatpush2.bf16.msra.mxu0 %v5367
    %7636 = vmatprep.subr.bf16.mxu0 %v5364
    %7637 = vmatpush2.bf16.msra.mxu0 %v5363
    %7638 = vmatprep.subr.bf16.mxu0 %v5360
    %7639 = vmatpush2.bf16.msra.mxu0 %v5359
    %7640 = vmatprep.subr.bf16.mxu0 %v5356
    %7641 = vmatpush2.bf16.msra.mxu0 %v5355
    %7642 = vmatprep.subr.bf16.mxu0 %v5352
    %7643 = vmatpush2.bf16.msra.mxu0 %v5351
    %7644 = vmatprep.mubr.bf16.mxu0 %v4611
    %7645 = vmatmul.mubr.bf16.gmra.mxu0 %v4610
    %v7646 = vpop.f32.mrf.mxu0
    %v7647 = vadd.f32 %v7505, %v7646
    %v7648 = vpop.f32.mrf.mxu0
    %v7649 = vadd.f32 %v7507, %v7648
    %v7650 = vpop.f32.mrf.mxu0
    %v7651 = vadd.f32 %v7509, %v7650
    %v7652 = vpop.f32.mrf.mxu0
    %v7653 = vadd.f32 %v7511, %v7652
    %7654 = vmatprep.mubr.bf16.mxu0 %v4613
    %7655 = vmatmul.mubr.bf16.gmra.mxu0 %v4612
    %v7656 = vpop.f32.mrf.mxu0
    %v7657 = vadd.f32 %v7515, %v7656
    %v7658 = vpop.f32.mrf.mxu0
    %v7659 = vadd.f32 %v7517, %v7658
    %v7660 = vpop.f32.mrf.mxu0
    %v7661 = vadd.f32 %v7519, %v7660
    %v7662 = vpop.f32.mrf.mxu0
    %v7663 = vadd.f32 %v7521, %v7662
    %7664 = vmatprep.mubr.bf16.mxu0 %v4615
    %7665 = vmatmul.mubr.bf16.gmra.mxu0 %v4614
    %v7666 = vpop.f32.mrf.mxu0
    %v7667 = vadd.f32 %v7525, %v7666
    %v7668 = vpop.f32.mrf.mxu0
    %v7669 = vadd.f32 %v7527, %v7668
    %v7670 = vpop.f32.mrf.mxu0
    %v7671 = vadd.f32 %v7529, %v7670
    %v7672 = vpop.f32.mrf.mxu0
    %v7673 = vadd.f32 %v7531, %v7672
    %7674 = vmatprep.mubr.bf16.mxu0 %v4617
    %7675 = vmatmul.mubr.bf16.gmra.mxu0 %v4616
    %v7676 = vpop.f32.mrf.mxu0
    %v7677 = vadd.f32 %v7535, %v7676
    %v7678 = vpop.f32.mrf.mxu0
    %v7679 = vadd.f32 %v7537, %v7678
    %v7680 = vpop.f32.mrf.mxu0
    %v7681 = vpop.f32.mrf.mxu0
    %7682 = vdwg.mxu0
    %7683 = vmatprep.subr.bf16.mxu0 %v5917
    %7684 = vmatpush1.bf16.msra.mxu0 %v5916
    %7685 = vmatprep.subr.bf16.mxu0 %v5913
    %7686 = vmatpush1.bf16.msra.mxu0 %v5912
    %7687 = vmatprep.subr.bf16.mxu0 %v5909
    %7688 = vmatpush1.bf16.msra.mxu0 %v5908
    %7689 = vmatprep.subr.bf16.mxu0 %v5905
    %7690 = vmatpush1.bf16.msra.mxu0 %v5904
    %7691 = vmatprep.subr.bf16.mxu0 %v5901
    %7692 = vmatpush1.bf16.msra.mxu0 %v5900
    %7693 = vmatprep.subr.bf16.mxu0 %v5897
    %7694 = vmatpush1.bf16.msra.mxu0 %v5896
    %7695 = vmatprep.subr.bf16.mxu0 %v5893
    %7696 = vmatpush1.bf16.msra.mxu0 %v5892
    %7697 = vmatprep.subr.bf16.mxu0 %v5889
    %7698 = vmatpush1.bf16.msra.mxu0 %v5888
    %7699 = vmatprep.subr.bf16.mxu0 %v5949
    %7700 = vmatpush2.bf16.msra.mxu0 %v5948
    %7701 = vmatprep.subr.bf16.mxu0 %v5945
    %7702 = vmatpush2.bf16.msra.mxu0 %v5944
    %7703 = vmatprep.subr.bf16.mxu0 %v5941
    %7704 = vmatpush2.bf16.msra.mxu0 %v5940
    %7705 = vmatprep.subr.bf16.mxu0 %v5937
    %7706 = vmatpush2.bf16.msra.mxu0 %v5936
    %7707 = vmatprep.subr.bf16.mxu0 %v5933
    %7708 = vmatpush2.bf16.msra.mxu0 %v5932
    %7709 = vmatprep.subr.bf16.mxu0 %v5929
    %7710 = vmatpush2.bf16.msra.mxu0 %v5928
    %7711 = vmatprep.subr.bf16.mxu0 %v5925
    %7712 = vmatpush2.bf16.msra.mxu0 %v5924
    %7713 = vmatprep.subr.bf16.mxu0 %v5921
    %7714 = vmatpush2.bf16.msra.mxu0 %v5920
    %7715 = vmatprep.mubr.bf16.mxu0 %v6280
    %7716 = vmatmul.mubr.bf16.gmra.mxu0 %v6279
    %v7717 = vpop.f32.mrf.mxu0
    %v7718 = vadd.f32 0.0, %v7717
    %v7719 = vpop.f32.mrf.mxu0
    %v7720 = vadd.f32 0.0, %v7719
    %v7721 = vpop.f32.mrf.mxu0
    %v7722 = vadd.f32 0.0, %v7721
    %v7723 = vpop.f32.mrf.mxu0
    %v7724 = vadd.f32 0.0, %v7723
    %7725 = vmatprep.mubr.bf16.mxu0 %v6282
    %7726 = vmatmul.mubr.bf16.gmra.mxu0 %v6281
    %v7727 = vpop.f32.mrf.mxu0
    %v7728 = vadd.f32 0.0, %v7727
    %v7729 = vpop.f32.mrf.mxu0
    %v7730 = vadd.f32 0.0, %v7729
    %v7731 = vpop.f32.mrf.mxu0
    %v7732 = vadd.f32 0.0, %v7731
    %v7733 = vpop.f32.mrf.mxu0
    %v7734 = vadd.f32 0.0, %v7733
    %7735 = vmatprep.mubr.bf16.mxu0 %v6284
    %7736 = vmatmul.mubr.bf16.gmra.mxu0 %v6283
    %v7737 = vpop.f32.mrf.mxu0
    %v7738 = vadd.f32 0.0, %v7737
    %v7739 = vpop.f32.mrf.mxu0
    %v7740 = vadd.f32 0.0, %v7739
    %v7741 = vpop.f32.mrf.mxu0
    %v7742 = vadd.f32 0.0, %v7741
    %v7743 = vpop.f32.mrf.mxu0
    %v7744 = vadd.f32 0.0, %v7743
    %7745 = vmatprep.mubr.bf16.mxu0 %v6286
    %7746 = vmatmul.mubr.bf16.gmra.mxu0 %v6285
    %v7747 = vpop.f32.mrf.mxu0
    %v7748 = vadd.f32 0.0, %v7747
    %v7749 = vpop.f32.mrf.mxu0
    %v7750 = vadd.f32 0.0, %v7749
    %v7751 = vpop.f32.mrf.mxu0
    %v7752 = vpop.f32.mrf.mxu0
    %7753 = vdwg.mxu0
    %7754 = vmatprep.subr.bf16.mxu0 %v5919
    %7755 = vmatpush1.bf16.msra.mxu0 %v5918
    %7756 = vmatprep.subr.bf16.mxu0 %v5915
    %7757 = vmatpush1.bf16.msra.mxu0 %v5914
    %7758 = vmatprep.subr.bf16.mxu0 %v5911
    %7759 = vmatpush1.bf16.msra.mxu0 %v5910
    %7760 = vmatprep.subr.bf16.mxu0 %v5907
    %7761 = vmatpush1.bf16.msra.mxu0 %v5906
    %7762 = vmatprep.subr.bf16.mxu0 %v5903
    %7763 = vmatpush1.bf16.msra.mxu0 %v5902
    %7764 = vmatprep.subr.bf16.mxu0 %v5899
    %7765 = vmatpush1.bf16.msra.mxu0 %v5898
    %7766 = vmatprep.subr.bf16.mxu0 %v5895
    %7767 = vmatpush1.bf16.msra.mxu0 %v5894
    %7768 = vmatprep.subr.bf16.mxu0 %v5891
    %7769 = vmatpush1.bf16.msra.mxu0 %v5890
    %7770 = vmatprep.subr.bf16.mxu0 %v5951
    %7771 = vmatpush2.bf16.msra.mxu0 %v5950
    %7772 = vmatprep.subr.bf16.mxu0 %v5947
    %7773 = vmatpush2.bf16.msra.mxu0 %v5946
    %7774 = vmatprep.subr.bf16.mxu0 %v5943
    %7775 = vmatpush2.bf16.msra.mxu0 %v5942
    %7776 = vmatprep.subr.bf16.mxu0 %v5939
    %7777 = vmatpush2.bf16.msra.mxu0 %v5938
    %7778 = vmatprep.subr.bf16.mxu0 %v5935
    %7779 = vmatpush2.bf16.msra.mxu0 %v5934
    %7780 = vmatprep.subr.bf16.mxu0 %v5931
    %7781 = vmatpush2.bf16.msra.mxu0 %v5930
    %7782 = vmatprep.subr.bf16.mxu0 %v5927
    %7783 = vmatpush2.bf16.msra.mxu0 %v5926
    %7784 = vmatprep.subr.bf16.mxu0 %v5923
    %7785 = vmatpush2.bf16.msra.mxu0 %v5922
    %7786 = vmatprep.mubr.bf16.mxu0 %v6280
    %7787 = vmatmul.mubr.bf16.gmra.mxu0 %v6279
    %v7788 = vpop.f32.mrf.mxu0
    %v7789 = vadd.f32 0.0, %v7788
    %v7790 = vpop.f32.mrf.mxu0
    %v7791 = vadd.f32 0.0, %v7790
    %v7792 = vpop.f32.mrf.mxu0
    %v7793 = vadd.f32 0.0, %v7792
    %v7794 = vpop.f32.mrf.mxu0
    %v7795 = vadd.f32 0.0, %v7794
    %7796 = vmatprep.mubr.bf16.mxu0 %v6282
    %7797 = vmatmul.mubr.bf16.gmra.mxu0 %v6281
    %v7798 = vpop.f32.mrf.mxu0
    %v7799 = vadd.f32 0.0, %v7798
    %v7800 = vpop.f32.mrf.mxu0
    %v7801 = vadd.f32 0.0, %v7800
    %v7802 = vpop.f32.mrf.mxu0
    %v7803 = vadd.f32 0.0, %v7802
    %v7804 = vpop.f32.mrf.mxu0
    %v7805 = vadd.f32 0.0, %v7804
    %7806 = vmatprep.mubr.bf16.mxu0 %v6284
    %7807 = vmatmul.mubr.bf16.gmra.mxu0 %v6283
    %v7808 = vpop.f32.mrf.mxu0
    %v7809 = vadd.f32 0.0, %v7808
    %v7810 = vpop.f32.mrf.mxu0
    %v7811 = vadd.f32 0.0, %v7810
    %v7812 = vpop.f32.mrf.mxu0
    %v7813 = vadd.f32 0.0, %v7812
    %v7814 = vpop.f32.mrf.mxu0
    %v7815 = vadd.f32 0.0, %v7814
    %7816 = vmatprep.mubr.bf16.mxu0 %v6286
    %7817 = vmatmul.mubr.bf16.gmra.mxu0 %v6285
    %v7818 = vpop.f32.mrf.mxu0
    %v7819 = vadd.f32 0.0, %v7818
    %v7820 = vpop.f32.mrf.mxu0
    %v7821 = vadd.f32 0.0, %v7820
    %v7822 = vpop.f32.mrf.mxu0
    %v7823 = vpop.f32.mrf.mxu0
    %7824 = vdwg.mxu0
    %v7825 = vadd.f32 %v7576, %v7718
    %v7826 = vadd.f32 %v7578, %v7720
    %v7827 = vadd.f32 %v7647, %v7789
    %v7828 = vadd.f32 %v7649, %v7791
    %v7829 = vadd.f32 %v7580, %v7722
    %v7830 = vadd.f32 %v7582, %v7724
    %v7831 = vadd.f32 %v7651, %v7793
    %v7832 = vadd.f32 %v7653, %v7795
    %v7833 = vadd.f32 %v7586, %v7728
    %v7834 = vadd.f32 %v7588, %v7730
    %v7835 = vadd.f32 %v7657, %v7799
    %v7836 = vadd.f32 %v7659, %v7801
    %v7837 = vadd.f32 %v7590, %v7732
    %v7838 = vadd.f32 %v7592, %v7734
    %v7839 = vadd.f32 %v7661, %v7803
    %v7840 = vadd.f32 %v7663, %v7805
    %v7841 = vadd.f32 %v7596, %v7738
    %v7842 = vadd.f32 %v7598, %v7740
    %v7843 = vadd.f32 %v7667, %v7809
    %v7844 = vadd.f32 %v7669, %v7811
    %v7845 = vadd.f32 %v7600, %v7742
    %v7846 = vadd.f32 %v7602, %v7744
    %v7847 = vadd.f32 %v7671, %v7813
    %v7848 = vadd.f32 %v7673, %v7815
    %v7849 = vadd.f32 %v7606, %v7748
    %v7850 = vadd.f32 %v7608, %v7750
    %v7851 = vadd.f32 %v7677, %v7819
    %v7852 = vadd.f32 %v7679, %v7821
    %7853 = vmatprep.subr.bf16.mxu0 %v6516
    %7854 = vmatpush1.bf16.msra.mxu0 %v6515
    %7855 = vmatprep.subr.bf16.mxu0 %v6512
    %7856 = vmatpush1.bf16.msra.mxu0 %v6511
    %7857 = vmatprep.subr.bf16.mxu0 %v6508
    %7858 = vmatpush1.bf16.msra.mxu0 %v6507
    %7859 = vmatprep.subr.bf16.mxu0 %v6504
    %7860 = vmatpush1.bf16.msra.mxu0 %v6503
    %7861 = vmatprep.subr.bf16.mxu0 %v6500
    %7862 = vmatpush1.bf16.msra.mxu0 %v6499
    %7863 = vmatprep.subr.bf16.mxu0 %v6496
    %7864 = vmatpush1.bf16.msra.mxu0 %v6495
    %7865 = vmatprep.subr.bf16.mxu0 %v6492
    %7866 = vmatpush1.bf16.msra.mxu0 %v6491
    %7867 = vmatprep.subr.bf16.mxu0 %v6488
    %7868 = vmatpush1.bf16.msra.mxu0 %v6487
    %7869 = vmatprep.subr.bf16.mxu0 %v6548
    %7870 = vmatpush2.bf16.msra.mxu0 %v6547
    %7871 = vmatprep.subr.bf16.mxu0 %v6544
    %7872 = vmatpush2.bf16.msra.mxu0 %v6543
    %7873 = vmatprep.subr.bf16.mxu0 %v6540
    %7874 = vmatpush2.bf16.msra.mxu0 %v6539
    %7875 = vmatprep.subr.bf16.mxu0 %v6536
    %7876 = vmatpush2.bf16.msra.mxu0 %v6535
    %7877 = vmatprep.subr.bf16.mxu0 %v6532
    %7878 = vmatpush2.bf16.msra.mxu0 %v6531
    %7879 = vmatprep.subr.bf16.mxu0 %v6528
    %7880 = vmatpush2.bf16.msra.mxu0 %v6527
    %7881 = vmatprep.subr.bf16.mxu0 %v6524
    %7882 = vmatpush2.bf16.msra.mxu0 %v6523
    %7883 = vmatprep.subr.bf16.mxu0 %v6520
    %7884 = vmatpush2.bf16.msra.mxu0 %v6519
    %7885 = vmatprep.mubr.bf16.mxu0 %v6880
    %7886 = vmatmul.mubr.bf16.gmra.mxu0 %v6879
    %v7887 = vpop.f32.mrf.mxu0
    %v7888 = vadd.f32 0.0, %v7887
    %v7889 = vpop.f32.mrf.mxu0
    %v7890 = vadd.f32 0.0, %v7889
    %v7891 = vpop.f32.mrf.mxu0
    %v7892 = vadd.f32 0.0, %v7891
    %v7893 = vpop.f32.mrf.mxu0
    %v7894 = vadd.f32 0.0, %v7893
    %7895 = vmatprep.mubr.bf16.mxu0 %v6882
    %7896 = vmatmul.mubr.bf16.gmra.mxu0 %v6881
    %v7897 = vpop.f32.mrf.mxu0
    %v7898 = vadd.f32 0.0, %v7897
    %v7899 = vpop.f32.mrf.mxu0
    %v7900 = vadd.f32 0.0, %v7899
    %v7901 = vpop.f32.mrf.mxu0
    %v7902 = vadd.f32 0.0, %v7901
    %v7903 = vpop.f32.mrf.mxu0
    %v7904 = vadd.f32 0.0, %v7903
    %7905 = vmatprep.mubr.bf16.mxu0 %v6884
    %7906 = vmatmul.mubr.bf16.gmra.mxu0 %v6883
    %v7907 = vpop.f32.mrf.mxu0
    %v7908 = vadd.f32 0.0, %v7907
    %v7909 = vpop.f32.mrf.mxu0
    %v7910 = vadd.f32 0.0, %v7909
    %v7911 = vpop.f32.mrf.mxu0
    %v7912 = vadd.f32 0.0, %v7911
    %v7913 = vpop.f32.mrf.mxu0
    %v7914 = vadd.f32 0.0, %v7913
    %7915 = vmatprep.mubr.bf16.mxu0 %v6886
    %7916 = vmatmul.mubr.bf16.gmra.mxu0 %v6885
    %v7917 = vpop.f32.mrf.mxu0
    %v7918 = vadd.f32 0.0, %v7917
    %v7919 = vpop.f32.mrf.mxu0
    %v7920 = vadd.f32 0.0, %v7919
    %v7921 = vpop.f32.mrf.mxu0
    %v7922 = vpop.f32.mrf.mxu0
    %7923 = vdwg.mxu0
    %7924 = vmatprep.subr.bf16.mxu0 %v6518
    %7925 = vmatpush1.bf16.msra.mxu0 %v6517
    %7926 = vmatprep.subr.bf16.mxu0 %v6514
    %7927 = vmatpush1.bf16.msra.mxu0 %v6513
    %7928 = vmatprep.subr.bf16.mxu0 %v6510
    %7929 = vmatpush1.bf16.msra.mxu0 %v6509
    %7930 = vmatprep.subr.bf16.mxu0 %v6506
    %7931 = vmatpush1.bf16.msra.mxu0 %v6505
    %7932 = vmatprep.subr.bf16.mxu0 %v6502
    %7933 = vmatpush1.bf16.msra.mxu0 %v6501
    %7934 = vmatprep.subr.bf16.mxu0 %v6498
    %7935 = vmatpush1.bf16.msra.mxu0 %v6497
    %7936 = vmatprep.subr.bf16.mxu0 %v6494
    %7937 = vmatpush1.bf16.msra.mxu0 %v6493
    %7938 = vmatprep.subr.bf16.mxu0 %v6490
    %7939 = vmatpush1.bf16.msra.mxu0 %v6489
    %7940 = vmatprep.subr.bf16.mxu0 %v6550
    %7941 = vmatpush2.bf16.msra.mxu0 %v6549
    %7942 = vmatprep.subr.bf16.mxu0 %v6546
    %7943 = vmatpush2.bf16.msra.mxu0 %v6545
    %7944 = vmatprep.subr.bf16.mxu0 %v6542
    %7945 = vmatpush2.bf16.msra.mxu0 %v6541
    %7946 = vmatprep.subr.bf16.mxu0 %v6538
    %7947 = vmatpush2.bf16.msra.mxu0 %v6537
    %7948 = vmatprep.subr.bf16.mxu0 %v6534
    %7949 = vmatpush2.bf16.msra.mxu0 %v6533
    %7950 = vmatprep.subr.bf16.mxu0 %v6530
    %7951 = vmatpush2.bf16.msra.mxu0 %v6529
    %7952 = vmatprep.subr.bf16.mxu0 %v6526
    %7953 = vmatpush2.bf16.msra.mxu0 %v6525
    %7954 = vmatprep.subr.bf16.mxu0 %v6522
    %7955 = vmatpush2.bf16.msra.mxu0 %v6521
    %7956 = vmatprep.mubr.bf16.mxu0 %v6880
    %7957 = vmatmul.mubr.bf16.gmra.mxu0 %v6879
    %v7958 = vpop.f32.mrf.mxu0
    %v7959 = vadd.f32 0.0, %v7958
    %v7960 = vpop.f32.mrf.mxu0
    %v7961 = vadd.f32 0.0, %v7960
    %v7962 = vpop.f32.mrf.mxu0
    %v7963 = vadd.f32 0.0, %v7962
    %v7964 = vpop.f32.mrf.mxu0
    %v7965 = vadd.f32 0.0, %v7964
    %7966 = vmatprep.mubr.bf16.mxu0 %v6882
    %7967 = vmatmul.mubr.bf16.gmra.mxu0 %v6881
    %v7968 = vpop.f32.mrf.mxu0
    %v7969 = vadd.f32 0.0, %v7968
    %v7970 = vpop.f32.mrf.mxu0
    %v7971 = vadd.f32 0.0, %v7970
    %v7972 = vpop.f32.mrf.mxu0
    %v7973 = vadd.f32 0.0, %v7972
    %v7974 = vpop.f32.mrf.mxu0
    %v7975 = vadd.f32 0.0, %v7974
    %7976 = vmatprep.mubr.bf16.mxu0 %v6884
    %7977 = vmatmul.mubr.bf16.gmra.mxu0 %v6883
    %v7978 = vpop.f32.mrf.mxu0
    %v7979 = vadd.f32 0.0, %v7978
    %v7980 = vpop.f32.mrf.mxu0
    %v7981 = vadd.f32 0.0, %v7980
    %v7982 = vpop.f32.mrf.mxu0
    %v7983 = vadd.f32 0.0, %v7982
    %v7984 = vpop.f32.mrf.mxu0
    %v7985 = vadd.f32 0.0, %v7984
    %7986 = vmatprep.mubr.bf16.mxu0 %v6886
    %7987 = vmatmul.mubr.bf16.gmra.mxu0 %v6885
    %v7988 = vpop.f32.mrf.mxu0
    %v7989 = vadd.f32 0.0, %v7988
    %v7990 = vpop.f32.mrf.mxu0
    %v7991 = vadd.f32 0.0, %v7990
    %v7992 = vpop.f32.mrf.mxu0
    %v7993 = vpop.f32.mrf.mxu0
    %7994 = vdwg.mxu0
    %v7995 = vadd.f32 %v7825, %v7888
    %v7996 = vadd.f32 %v7826, %v7890
    %v7997 = vadd.f32 %v7827, %v7959
    %v7998 = vadd.f32 %v7828, %v7961
    %v7999 = vadd.f32 %v7829, %v7892
    %v8000 = vadd.f32 %v7830, %v7894
    %v8001 = vadd.f32 %v7831, %v7963
    %v8002 = vadd.f32 %v7832, %v7965
    %v8003 = vadd.f32 %v7833, %v7898
    %v8004 = vadd.f32 %v7834, %v7900
    %v8005 = vadd.f32 %v7835, %v7969
    %v8006 = vadd.f32 %v7836, %v7971
    %v8007 = vadd.f32 %v7837, %v7902
    %v8008 = vadd.f32 %v7838, %v7904
    %v8009 = vadd.f32 %v7839, %v7973
    %v8010 = vadd.f32 %v7840, %v7975
    %v8011 = vadd.f32 %v7841, %v7908
    %v8012 = vadd.f32 %v7842, %v7910
    %v8013 = vadd.f32 %v7843, %v7979
    %v8014 = vadd.f32 %v7844, %v7981
    %v8015 = vadd.f32 %v7845, %v7912
    %v8016 = vadd.f32 %v7846, %v7914
    %v8017 = vadd.f32 %v7847, %v7983
    %v8018 = vadd.f32 %v7848, %v7985
    %v8019 = vadd.f32 %v7849, %v7918
    %v8020 = vadd.f32 %v7850, %v7920
    %v8021 = vadd.f32 %v7851, %v7989
    %v8022 = vadd.f32 %v7852, %v7991
    %s8023 = scalar_lea.vmem [#allocation2], 88
    %v8024 = vld [vmem:[%s8023] sm:$0xff]
    %v8025 = vld [vmem:[%s8023 + $0x8] sm:$0xff]
    %v8026 = vld [vmem:[%s8023 + $0x10] sm:$0xff]
    %v8027 = vld [vmem:[%s8023 + $0x18] sm:$0xff]
    %v8028 = vld [vmem:[%s8023 + $0x20] sm:$0xff]
    %v8029 = vld [vmem:[%s8023 + $0x28] sm:$0xff]
    %v8030 = vld [vmem:[%s8023 + $0x30] sm:$0xff]
    %v8038 = vunpack.c.l.b16 %v8024
    %v8039 = vunpack.c.h.b16 %v8024
    %v8040 = vunpack.c.l.b16 %v8025
    %v8041 = vunpack.c.h.b16 %v8025
    %v8042 = vunpack.c.l.b16 %v8026
    %v8043 = vunpack.c.h.b16 %v8026
    %v8044 = vunpack.c.l.b16 %v8027
    %v8045 = vunpack.c.h.b16 %v8027
    %v8046 = vunpack.c.l.b16 %v8028
    %v8047 = vunpack.c.h.b16 %v8028
    %v8048 = vunpack.c.l.b16 %v8029
    %v8049 = vunpack.c.h.b16 %v8029
    %v8050 = vunpack.c.l.b16 %v8030
    %v8051 = vunpack.c.h.b16 %v8030
    %v8052 = vpack.c.b16 %v8040, %v8038
    %v8053 = vpack.c.b16 %v8041, %v8039
    %v8054 = vpack.c.b16 %v8044, %v8042
    %v8055 = vpack.c.b16 %v8045, %v8043
    %v8056 = vpack.c.b16 %v8048, %v8046
    %v8057 = vpack.c.b16 %v8049, %v8047
    %v8058 = vpack.c.b16 %v8050, %v8050
    %v8059 = vpack.c.b16 %v8051, %v8051
    %8068 = vmatprep.subr.bf16.mxu0 %v7116
    %8069 = vmatpush1.bf16.msra.mxu0 %v7115
    %8070 = vmatprep.subr.bf16.mxu0 %v7112
    %8071 = vmatpush1.bf16.msra.mxu0 %v7111
    %8072 = vmatprep.subr.bf16.mxu0 %v7108
    %8073 = vmatpush1.bf16.msra.mxu0 %v7107
    %8074 = vmatprep.subr.bf16.mxu0 %v7104
    %8075 = vmatpush1.bf16.msra.mxu0 %v7103
    %8076 = vmatprep.subr.bf16.mxu0 %v7100
    %8077 = vmatpush1.bf16.msra.mxu0 %v7099
    %8078 = vmatprep.subr.bf16.mxu0 %v7096
    %8079 = vmatpush1.bf16.msra.mxu0 %v7095
    %8080 = vmatprep.subr.bf16.mxu0 %v7092
    %8081 = vmatpush1.bf16.msra.mxu0 %v7091
    %8082 = vmatprep.subr.bf16.mxu0 %v7088
    %8083 = vmatpush1.bf16.msra.mxu0 %v7087
    %8084 = vmatprep.subr.bf16.mxu0 %v7148
    %8085 = vmatpush2.bf16.msra.mxu0 %v7147
    %8086 = vmatprep.subr.bf16.mxu0 %v7144
    %8087 = vmatpush2.bf16.msra.mxu0 %v7143
    %8088 = vmatprep.subr.bf16.mxu0 %v7140
    %8089 = vmatpush2.bf16.msra.mxu0 %v7139
    %8090 = vmatprep.subr.bf16.mxu0 %v7136
    %8091 = vmatpush2.bf16.msra.mxu0 %v7135
    %8092 = vmatprep.subr.bf16.mxu0 %v7132
    %8093 = vmatpush2.bf16.msra.mxu0 %v7131
    %8094 = vmatprep.subr.bf16.mxu0 %v7128
    %8095 = vmatpush2.bf16.msra.mxu0 %v7127
    %8096 = vmatprep.subr.bf16.mxu0 %v7124
    %8097 = vmatpush2.bf16.msra.mxu0 %v7123
    %8098 = vmatprep.subr.bf16.mxu0 %v7120
    %8099 = vmatpush2.bf16.msra.mxu0 %v7119
    %8100 = vmatprep.mubr.bf16.mxu0 %v8053
    %8101 = vmatmul.mubr.bf16.gmra.mxu0 %v8052
    %v8102 = vpop.f32.mrf.mxu0
    %v8103 = vadd.f32 0.0, %v8102
    %v8104 = vpop.f32.mrf.mxu0
    %v8105 = vadd.f32 0.0, %v8104
    %v8106 = vpop.f32.mrf.mxu0
    %v8107 = vadd.f32 0.0, %v8106
    %v8108 = vpop.f32.mrf.mxu0
    %v8109 = vadd.f32 0.0, %v8108
    %8110 = vmatprep.mubr.bf16.mxu0 %v8055
    %8111 = vmatmul.mubr.bf16.gmra.mxu0 %v8054
    %v8112 = vpop.f32.mrf.mxu0
    %v8113 = vadd.f32 0.0, %v8112
    %v8114 = vpop.f32.mrf.mxu0
    %v8115 = vadd.f32 0.0, %v8114
    %v8116 = vpop.f32.mrf.mxu0
    %v8117 = vadd.f32 0.0, %v8116
    %v8118 = vpop.f32.mrf.mxu0
    %v8119 = vadd.f32 0.0, %v8118
    %8120 = vmatprep.mubr.bf16.mxu0 %v8057
    %8121 = vmatmul.mubr.bf16.gmra.mxu0 %v8056
    %v8122 = vpop.f32.mrf.mxu0
    %v8123 = vadd.f32 0.0, %v8122
    %v8124 = vpop.f32.mrf.mxu0
    %v8125 = vadd.f32 0.0, %v8124
    %v8126 = vpop.f32.mrf.mxu0
    %v8127 = vadd.f32 0.0, %v8126
    %v8128 = vpop.f32.mrf.mxu0
    %v8129 = vadd.f32 0.0, %v8128
    %8130 = vmatprep.mubr.bf16.mxu0 %v8059
    %8131 = vmatmul.mubr.bf16.gmra.mxu0 %v8058
    %v8132 = vpop.f32.mrf.mxu0
    %v8133 = vadd.f32 0.0, %v8132
    %v8134 = vpop.f32.mrf.mxu0
    %v8135 = vadd.f32 0.0, %v8134
    %v8136 = vpop.f32.mrf.mxu0
    %v8137 = vpop.f32.mrf.mxu0
    %8138 = vdwg.mxu0
    %8139 = vmatprep.subr.bf16.mxu0 %v7118
    %8140 = vmatpush1.bf16.msra.mxu0 %v7117
    %8141 = vmatprep.subr.bf16.mxu0 %v7114
    %8142 = vmatpush1.bf16.msra.mxu0 %v7113
    %8143 = vmatprep.subr.bf16.mxu0 %v7110
    %8144 = vmatpush1.bf16.msra.mxu0 %v7109
    %8145 = vmatprep.subr.bf16.mxu0 %v7106
    %8146 = vmatpush1.bf16.msra.mxu0 %v7105
    %8147 = vmatprep.subr.bf16.mxu0 %v7102
    %8148 = vmatpush1.bf16.msra.mxu0 %v7101
    %8149 = vmatprep.subr.bf16.mxu0 %v7098
    %8150 = vmatpush1.bf16.msra.mxu0 %v7097
    %8151 = vmatprep.subr.bf16.mxu0 %v7094
    %8152 = vmatpush1.bf16.msra.mxu0 %v7093
    %8153 = vmatprep.subr.bf16.mxu0 %v7090
    %8154 = vmatpush1.bf16.msra.mxu0 %v7089
    %8155 = vmatprep.subr.bf16.mxu0 %v7150
    %8156 = vmatpush2.bf16.msra.mxu0 %v7149
    %8157 = vmatprep.subr.bf16.mxu0 %v7146
    %8158 = vmatpush2.bf16.msra.mxu0 %v7145
    %8159 = vmatprep.subr.bf16.mxu0 %v7142
    %8160 = vmatpush2.bf16.msra.mxu0 %v7141
    %8161 = vmatprep.subr.bf16.mxu0 %v7138
    %8162 = vmatpush2.bf16.msra.mxu0 %v7137
    %8163 = vmatprep.subr.bf16.mxu0 %v7134
    %8164 = vmatpush2.bf16.msra.mxu0 %v7133
    %8165 = vmatprep.subr.bf16.mxu0 %v7130
    %8166 = vmatpush2.bf16.msra.mxu0 %v7129
    %8167 = vmatprep.subr.bf16.mxu0 %v7126
    %8168 = vmatpush2.bf16.msra.mxu0 %v7125
    %8169 = vmatprep.subr.bf16.mxu0 %v7122
    %8170 = vmatpush2.bf16.msra.mxu0 %v7121
    %8171 = vmatprep.mubr.bf16.mxu0 %v8053
    %8172 = vmatmul.mubr.bf16.gmra.mxu0 %v8052
    %v8173 = vpop.f32.mrf.mxu0
    %v8174 = vadd.f32 0.0, %v8173
    %v8175 = vpop.f32.mrf.mxu0
    %v8176 = vadd.f32 0.0, %v8175
    %v8177 = vpop.f32.mrf.mxu0
    %v8178 = vadd.f32 0.0, %v8177
    %v8179 = vpop.f32.mrf.mxu0
    %v8180 = vadd.f32 0.0, %v8179
    %8181 = vmatprep.mubr.bf16.mxu0 %v8055
    %8182 = vmatmul.mubr.bf16.gmra.mxu0 %v8054
    %v8183 = vpop.f32.mrf.mxu0
    %v8184 = vadd.f32 0.0, %v8183
    %v8185 = vpop.f32.mrf.mxu0
    %v8186 = vadd.f32 0.0, %v8185
    %v8187 = vpop.f32.mrf.mxu0
    %v8188 = vadd.f32 0.0, %v8187
    %v8189 = vpop.f32.mrf.mxu0
    %v8190 = vadd.f32 0.0, %v8189
    %8191 = vmatprep.mubr.bf16.mxu0 %v8057
    %8192 = vmatmul.mubr.bf16.gmra.mxu0 %v8056
    %v8193 = vpop.f32.mrf.mxu0
    %v8194 = vadd.f32 0.0, %v8193
    %v8195 = vpop.f32.mrf.mxu0
    %v8196 = vadd.f32 0.0, %v8195
    %v8197 = vpop.f32.mrf.mxu0
    %v8198 = vadd.f32 0.0, %v8197
    %v8199 = vpop.f32.mrf.mxu0
    %v8200 = vadd.f32 0.0, %v8199
    %8201 = vmatprep.mubr.bf16.mxu0 %v8059
    %8202 = vmatmul.mubr.bf16.gmra.mxu0 %v8058
    %v8203 = vpop.f32.mrf.mxu0
    %v8204 = vadd.f32 0.0, %v8203
    %v8205 = vpop.f32.mrf.mxu0
    %v8206 = vadd.f32 0.0, %v8205
    %v8207 = vpop.f32.mrf.mxu0
    %v8208 = vpop.f32.mrf.mxu0
    %8209 = vdwg.mxu0
    %v8210 = vadd.f32 %v7995, %v8103
    %v8211 = vadd.f32 %v7996, %v8105
    %v8212 = vadd.f32 %v7997, %v8174
    %v8213 = vadd.f32 %v7998, %v8176
    %v8214 = vadd.f32 %v7999, %v8107
    %v8215 = vadd.f32 %v8000, %v8109
    %v8216 = vadd.f32 %v8001, %v8178
    %v8217 = vadd.f32 %v8002, %v8180
    %v8218 = vadd.f32 %v8003, %v8113
    %v8219 = vadd.f32 %v8004, %v8115
    %v8220 = vadd.f32 %v8005, %v8184
    %v8221 = vadd.f32 %v8006, %v8186
    %v8222 = vadd.f32 %v8007, %v8117
    %v8223 = vadd.f32 %v8008, %v8119
    %v8224 = vadd.f32 %v8009, %v8188
    %v8225 = vadd.f32 %v8010, %v8190
    %v8226 = vadd.f32 %v8011, %v8123
    %v8227 = vadd.f32 %v8012, %v8125
    %v8228 = vadd.f32 %v8013, %v8194
    %v8229 = vadd.f32 %v8014, %v8196
    %v8230 = vadd.f32 %v8015, %v8127
    %v8231 = vadd.f32 %v8016, %v8129
    %v8232 = vadd.f32 %v8017, %v8198
    %v8233 = vadd.f32 %v8018, %v8200
    %v8234 = vadd.f32 %v8019, %v8133
    %v8235 = vadd.f32 %v8020, %v8135
    %v8236 = vadd.f32 %v8021, %v8204
    %v8237 = vadd.f32 %v8022, %v8206
    %v8238 = vmax.f32 %v8210, %v8212
    %v8239 = vmax.f32 %v8211, %v8213
    %v8240 = vmax.f32 %v8214, %v8216
    %v8241 = vmax.f32 %v8215, %v8217
    %v8242 = vmax.f32 %v8218, %v8220
    %v8243 = vmax.f32 %v8219, %v8221
    %v8244 = vmax.f32 %v8222, %v8224
    %v8245 = vmax.f32 %v8223, %v8225
    %v8246 = vmax.f32 %v8226, %v8228
    %v8247 = vmax.f32 %v8227, %v8229
    %v8248 = vmax.f32 %v8230, %v8232
    %v8249 = vmax.f32 %v8231, %v8233
    %v8250 = vmax.f32 %v8234, %v8236
    %v8251 = vmax.f32 %v8235, %v8237
    %v8252 = vmax.f32 %v7385, %v8238
    %v8253 = vmax.f32 %v7386, %v8239
    %v8254 = vmax.f32 %v7387, %v8240
    %v8255 = vmax.f32 %v7388, %v8241
    %v8256 = vmax.f32 %v7389, %v8242
    %v8257 = vmax.f32 %v7390, %v8243
    %v8258 = vmax.f32 %v7391, %v8244
    %v8259 = vmax.f32 %v7392, %v8245
    %v8260 = vmax.f32 %v7393, %v8246
    %v8261 = vmax.f32 %v7394, %v8247
    %v8262 = vmax.f32 %v7395, %v8248
    %v8263 = vmax.f32 %v7396, %v8249
    %v8264 = vmax.f32 %v7397, %v8250
    %v8265 = vmax.f32 %v7398, %v8251
    %v8266 = vld [vmem:[#allocation8] sm:$0x3]
    %v8268 = vlaneseq
    %v8269 = vshrl.u32 %v8268, 7
    %v8270 = vsub.s32 0, %v8269
    %v8271 = vrot.slane %v8266, %v8270
    %v8272 = vlaneseq
    %v8273 = vshrl.u32 %v8272, 7
    %v8274 = vsub.s32 1, %v8273
    %v8275 = vrot.slane %v8266, %v8274
    %v8278 = vadd.f32 %v8252, %v8271
    %v8279 = vadd.f32 %v8253, %v8275
    %v8280 = vadd.f32 %v8254, %v8271
    %v8281 = vadd.f32 %v8255, %v8275
    %v8282 = vadd.f32 %v8256, %v8271
    %v8283 = vadd.f32 %v8257, %v8275
    %v8284 = vadd.f32 %v8258, %v8271
    %v8285 = vadd.f32 %v8259, %v8275
    %v8286 = vadd.f32 %v8260, %v8271
    %v8287 = vadd.f32 %v8261, %v8275
    %v8288 = vadd.f32 %v8262, %v8271
    %v8289 = vadd.f32 %v8263, %v8275
    %v8290 = vadd.f32 %v8264, %v8271
    %v8291 = vadd.f32 %v8265, %v8275
    %v8292 = vmax.f32 %v8278, 0.0
    %v8293 = vmax.f32 %v8279, 0.0
    %v8294 = vmax.f32 %v8280, 0.0
    %v8295 = vmax.f32 %v8281, 0.0
    %v8296 = vmax.f32 %v8282, 0.0
    %v8297 = vmax.f32 %v8283, 0.0
    %v8298 = vmax.f32 %v8284, 0.0
    %v8299 = vmax.f32 %v8285, 0.0
    %v8300 = vmax.f32 %v8286, 0.0
    %v8301 = vmax.f32 %v8287, 0.0
    %v8302 = vmax.f32 %v8288, 0.0
    %v8303 = vmax.f32 %v8289, 0.0
    %v8304 = vmax.f32 %v8290, 0.0
    %v8305 = vmax.f32 %v8291, 0.0
    %v8306 = vpack.c.bf16 %v8294, %v8292
    %v8307 = vpack.c.bf16 %v8295, %v8293
    %v8308 = vpack.c.bf16 %v8298, %v8296
    %v8309 = vpack.c.bf16 %v8299, %v8297
    %v8310 = vpack.c.bf16 %v8302, %v8300
    %v8311 = vpack.c.bf16 %v8303, %v8301
    %v8312 = vpack.c.bf16 %v8304, %v8304
    %v8313 = vpack.c.bf16 %v8305, %v8305
    %v8322 = vunpack.c.l.b16 %v8306
    %v8323 = vunpack.c.l.b16 %v8307
    %v8324 = vunpack.c.h.b16 %v8306
    %v8325 = vunpack.c.h.b16 %v8307
    %v8326 = vunpack.c.l.b16 %v8308
    %v8327 = vunpack.c.l.b16 %v8309
    %v8328 = vunpack.c.h.b16 %v8308
    %v8329 = vunpack.c.h.b16 %v8309
    %v8330 = vunpack.c.l.b16 %v8310
    %v8331 = vunpack.c.l.b16 %v8311
    %v8332 = vunpack.c.h.b16 %v8310
    %v8333 = vunpack.c.h.b16 %v8311
    %v8334 = vunpack.c.l.b16 %v8312
    %v8335 = vunpack.c.l.b16 %v8313
    %v8336 = vld [vmem:[#allocation10] sm:$0xf]
    %v8337 = vld [vmem:[#allocation10 + $0x4] sm:$0xf]
    %v8338 = vld [vmem:[#allocation10 + $0x8] sm:$0xf]
    %v8339 = vld [vmem:[#allocation10 + $0xc] sm:$0xf]
    %v8340 = vld [vmem:[#allocation10 + $0x10] sm:$0xf]
    %v8341 = vld [vmem:[#allocation10 + $0x14] sm:$0xf]
    %v8342 = vld [vmem:[#allocation10 + $0x18] sm:$0xf]
    %v8343 = vld [vmem:[#allocation10 + $0x1c] sm:$0xf]
    %v8344 = vld [vmem:[#allocation10 + $0x20] sm:$0xf]
    %v8345 = vld [vmem:[#allocation10 + $0x24] sm:$0xf]
    %v8346 = vld [vmem:[#allocation10 + $0x28] sm:$0xf]
    %v8347 = vld [vmem:[#allocation10 + $0x2c] sm:$0xf]
    %v8348 = vld [vmem:[#allocation10 + $0x30] sm:$0xf]
    %v8349 = vld [vmem:[#allocation10 + $0x34] sm:$0xf]
    %v8350 = vld [vmem:[#allocation10 + $0x38] sm:$0xf]
    %v8351 = vld [vmem:[#allocation10 + $0x3c] sm:$0xf]
    %v8352 = vld [vmem:[#allocation10 + $0x40] sm:$0xf]
    %v8353 = vld [vmem:[#allocation10 + $0x44] sm:$0xf]
    %v8354 = vld [vmem:[#allocation10 + $0x48] sm:$0xf]
    %v8355 = vld [vmem:[#allocation10 + $0x4c] sm:$0xf]
    %v8356 = vld [vmem:[#allocation10 + $0x50] sm:$0xf]
    %v8357 = vld [vmem:[#allocation10 + $0x54] sm:$0xf]
    %v8358 = vld [vmem:[#allocation10 + $0x58] sm:$0xf]
    %v8359 = vld [vmem:[#allocation10 + $0x5c] sm:$0xf]
    %v8360 = vld [vmem:[#allocation10 + $0x60] sm:$0xf]
    %v8361 = vld [vmem:[#allocation10 + $0x64] sm:$0xf]
    %v8362 = vld [vmem:[#allocation10 + $0x68] sm:$0xf]
    %v8363 = vld [vmem:[#allocation10 + $0x6c] sm:$0xf]
    %v8364 = vld [vmem:[#allocation10 + $0x70] sm:$0xf]
    %v8365 = vld [vmem:[#allocation10 + $0x74] sm:$0xf]
    %v8366 = vld [vmem:[#allocation10 + $0x78] sm:$0xf]
    %v8367 = vld [vmem:[#allocation10 + $0x7c] sm:$0xf]
    %s8368 = scalar_lea.vmem [#allocation10], 128
    %v8369 = vld [vmem:[%s8368] sm:$0xf]
    %v8370 = vld [vmem:[%s8368 + $0x4] sm:$0xf]
    %v8371 = vld [vmem:[%s8368 + $0x8] sm:$0xf]
    %v8372 = vld [vmem:[%s8368 + $0xc] sm:$0xf]
    %v8373 = vld [vmem:[%s8368 + $0x10] sm:$0xf]
    %v8374 = vld [vmem:[%s8368 + $0x14] sm:$0xf]
    %v8375 = vld [vmem:[%s8368 + $0x18] sm:$0xf]
    %v8376 = vld [vmem:[%s8368 + $0x1c] sm:$0xf]
    %v8377 = vld [vmem:[%s8368 + $0x20] sm:$0xf]
    %v8378 = vld [vmem:[%s8368 + $0x24] sm:$0xf]
    %v8379 = vld [vmem:[%s8368 + $0x28] sm:$0xf]
    %v8380 = vld [vmem:[%s8368 + $0x2c] sm:$0xf]
    %v8381 = vld [vmem:[%s8368 + $0x30] sm:$0xf]
    %v8382 = vld [vmem:[%s8368 + $0x34] sm:$0xf]
    %v8383 = vld [vmem:[%s8368 + $0x38] sm:$0xf]
    %v8384 = vld [vmem:[%s8368 + $0x3c] sm:$0xf]
    %v8385 = vld [vmem:[%s8368 + $0x40] sm:$0xf]
    %v8386 = vld [vmem:[%s8368 + $0x44] sm:$0xf]
    %v8387 = vld [vmem:[%s8368 + $0x48] sm:$0xf]
    %v8388 = vld [vmem:[%s8368 + $0x4c] sm:$0xf]
    %v8389 = vld [vmem:[%s8368 + $0x50] sm:$0xf]
    %v8390 = vld [vmem:[%s8368 + $0x54] sm:$0xf]
    %v8391 = vld [vmem:[%s8368 + $0x58] sm:$0xf]
    %v8392 = vld [vmem:[%s8368 + $0x5c] sm:$0xf]
    %v8393 = vld [vmem:[%s8368 + $0x60] sm:$0xf]
    %v8394 = vld [vmem:[%s8368 + $0x64] sm:$0xf]
    %v8395 = vld [vmem:[%s8368 + $0x68] sm:$0xf]
    %v8396 = vld [vmem:[%s8368 + $0x6c] sm:$0xf]
    %v8397 = vld [vmem:[%s8368 + $0x70] sm:$0xf]
    %v8398 = vld [vmem:[%s8368 + $0x74] sm:$0xf]
    %v8399 = vld [vmem:[%s8368 + $0x78] sm:$0xf]
    %v8400 = vld [vmem:[%s8368 + $0x7c] sm:$0xf]
    %v8401 = vpack.c.b16 %v8324, %v8324
    %v8402 = vpack.c.b16 %v8325, %v8325
    %v8437 = vunpack.c.l.b16 %v8369
    %v8438 = vunpack.c.l.b16 %v8370
    %v8439 = vunpack.c.l.b16 %v8371
    %v8440 = vunpack.c.l.b16 %v8372
    %v8441 = vunpack.c.l.b16 %v8373
    %v8442 = vunpack.c.l.b16 %v8374
    %v8443 = vunpack.c.l.b16 %v8375
    %v8444 = vunpack.c.l.b16 %v8376
    %v8445 = vunpack.c.l.b16 %v8377
    %v8446 = vunpack.c.l.b16 %v8378
    %v8447 = vunpack.c.l.b16 %v8379
    %v8448 = vunpack.c.l.b16 %v8380
    %v8449 = vunpack.c.l.b16 %v8381
    %v8450 = vunpack.c.l.b16 %v8382
    %v8451 = vunpack.c.l.b16 %v8383
    %v8452 = vunpack.c.l.b16 %v8384
    %v8453 = vunpack.c.l.b16 %v8385
    %v8454 = vunpack.c.l.b16 %v8386
    %v8455 = vunpack.c.l.b16 %v8387
    %v8456 = vunpack.c.l.b16 %v8388
    %v8457 = vunpack.c.l.b16 %v8389
    %v8458 = vunpack.c.l.b16 %v8390
    %v8459 = vunpack.c.l.b16 %v8391
    %v8460 = vunpack.c.l.b16 %v8392
    %v8461 = vunpack.c.l.b16 %v8393
    %v8462 = vunpack.c.l.b16 %v8394
    %v8463 = vunpack.c.l.b16 %v8395
    %v8464 = vunpack.c.l.b16 %v8396
    %v8465 = vunpack.c.l.b16 %v8397
    %v8466 = vunpack.c.l.b16 %v8398
    %v8467 = vunpack.c.l.b16 %v8399
    %v8468 = vunpack.c.l.b16 %v8400
    %v8469 = vpack.c.b16 %v8438, %v8437
    %v8470 = vpack.c.b16 %v8440, %v8439
    %v8471 = vpack.c.b16 %v8442, %v8441
    %v8472 = vpack.c.b16 %v8444, %v8443
    %v8473 = vpack.c.b16 %v8446, %v8445
    %v8474 = vpack.c.b16 %v8448, %v8447
    %v8475 = vpack.c.b16 %v8450, %v8449
    %v8476 = vpack.c.b16 %v8452, %v8451
    %v8477 = vpack.c.b16 %v8454, %v8453
    %v8478 = vpack.c.b16 %v8456, %v8455
    %v8479 = vpack.c.b16 %v8458, %v8457
    %v8480 = vpack.c.b16 %v8460, %v8459
    %v8481 = vpack.c.b16 %v8462, %v8461
    %v8482 = vpack.c.b16 %v8464, %v8463
    %v8483 = vpack.c.b16 %v8466, %v8465
    %v8484 = vpack.c.b16 %v8468, %v8467
    %8501 = vmatprep.subr.bf16.mxu0 0
    %8502 = vmatpush1.bf16.msra.mxu0 %v8476
    %8503 = vmatprep.subr.bf16.mxu0 0
    %8504 = vmatpush1.bf16.msra.mxu0 %v8475
    %8505 = vmatprep.subr.bf16.mxu0 0
    %8506 = vmatpush1.bf16.msra.mxu0 %v8474
    %8507 = vmatprep.subr.bf16.mxu0 0
    %8508 = vmatpush1.bf16.msra.mxu0 %v8473
    %8509 = vmatprep.subr.bf16.mxu0 0
    %8510 = vmatpush1.bf16.msra.mxu0 %v8472
    %8511 = vmatprep.subr.bf16.mxu0 0
    %8512 = vmatpush1.bf16.msra.mxu0 %v8471
    %8513 = vmatprep.subr.bf16.mxu0 0
    %8514 = vmatpush1.bf16.msra.mxu0 %v8470
    %8515 = vmatprep.subr.bf16.mxu0 0
    %8516 = vmatpush1.bf16.msra.mxu0 %v8469
    %8517 = vmatprep.subr.bf16.mxu0 0
    %8518 = vmatpush2.bf16.msra.mxu0 %v8484
    %8519 = vmatprep.subr.bf16.mxu0 0
    %8520 = vmatpush2.bf16.msra.mxu0 %v8483
    %8521 = vmatprep.subr.bf16.mxu0 0
    %8522 = vmatpush2.bf16.msra.mxu0 %v8482
    %8523 = vmatprep.subr.bf16.mxu0 0
    %8524 = vmatpush2.bf16.msra.mxu0 %v8481
    %8525 = vmatprep.subr.bf16.mxu0 0
    %8526 = vmatpush2.bf16.msra.mxu0 %v8480
    %8527 = vmatprep.subr.bf16.mxu0 0
    %8528 = vmatpush2.bf16.msra.mxu0 %v8479
    %8529 = vmatprep.subr.bf16.mxu0 0
    %8530 = vmatpush2.bf16.msra.mxu0 %v8478
    %8531 = vmatprep.subr.bf16.mxu0 0
    %8532 = vmatpush2.bf16.msra.mxu0 %v8477
    %8533 = vmatprep.mubr.bf16.mxu0 %v8402
    %8534 = vmatmul.mubr.bf16.gmra.mxu0 %v8401
    %v8535 = vpop.f32.mrf.mxu0
    %v8536 = vadd.f32 0.0, %v8535
    %v8537 = vpop.f32.mrf.mxu0
    %v8538 = vpop.f32.mrf.mxu0
    %v8539 = vpop.f32.mrf.mxu0
    %8540 = vdwg.mxu0
    %v8541 = vpack.c.b16 %v8322, %v8322
    %v8542 = vpack.c.b16 %v8323, %v8323
    %v8577 = vunpack.c.l.b16 %v8336
    %v8578 = vunpack.c.l.b16 %v8337
    %v8579 = vunpack.c.l.b16 %v8338
    %v8580 = vunpack.c.l.b16 %v8339
    %v8581 = vunpack.c.l.b16 %v8340
    %v8582 = vunpack.c.l.b16 %v8341
    %v8583 = vunpack.c.l.b16 %v8342
    %v8584 = vunpack.c.l.b16 %v8343
    %v8585 = vunpack.c.l.b16 %v8344
    %v8586 = vunpack.c.l.b16 %v8345
    %v8587 = vunpack.c.l.b16 %v8346
    %v8588 = vunpack.c.l.b16 %v8347
    %v8589 = vunpack.c.l.b16 %v8348
    %v8590 = vunpack.c.l.b16 %v8349
    %v8591 = vunpack.c.l.b16 %v8350
    %v8592 = vunpack.c.l.b16 %v8351
    %v8593 = vunpack.c.l.b16 %v8352
    %v8594 = vunpack.c.l.b16 %v8353
    %v8595 = vunpack.c.l.b16 %v8354
    %v8596 = vunpack.c.l.b16 %v8355
    %v8597 = vunpack.c.l.b16 %v8356
    %v8598 = vunpack.c.l.b16 %v8357
    %v8599 = vunpack.c.l.b16 %v8358
    %v8600 = vunpack.c.l.b16 %v8359
    %v8601 = vunpack.c.l.b16 %v8360
    %v8602 = vunpack.c.l.b16 %v8361
    %v8603 = vunpack.c.l.b16 %v8362
    %v8604 = vunpack.c.l.b16 %v8363
    %v8605 = vunpack.c.l.b16 %v8364
    %v8606 = vunpack.c.l.b16 %v8365
    %v8607 = vunpack.c.l.b16 %v8366
    %v8608 = vunpack.c.l.b16 %v8367
    %v8609 = vpack.c.b16 %v8578, %v8577
    %v8610 = vpack.c.b16 %v8580, %v8579
    %v8611 = vpack.c.b16 %v8582, %v8581
    %v8612 = vpack.c.b16 %v8584, %v8583
    %v8613 = vpack.c.b16 %v8586, %v8585
    %v8614 = vpack.c.b16 %v8588, %v8587
    %v8615 = vpack.c.b16 %v8590, %v8589
    %v8616 = vpack.c.b16 %v8592, %v8591
    %v8617 = vpack.c.b16 %v8594, %v8593
    %v8618 = vpack.c.b16 %v8596, %v8595
    %v8619 = vpack.c.b16 %v8598, %v8597
    %v8620 = vpack.c.b16 %v8600, %v8599
    %v8621 = vpack.c.b16 %v8602, %v8601
    %v8622 = vpack.c.b16 %v8604, %v8603
    %v8623 = vpack.c.b16 %v8606, %v8605
    %v8624 = vpack.c.b16 %v8608, %v8607
    %8641 = vmatprep.subr.bf16.mxu0 0
    %8642 = vmatpush1.bf16.msra.mxu0 %v8616
    %8643 = vmatprep.subr.bf16.mxu0 0
    %8644 = vmatpush1.bf16.msra.mxu0 %v8615
    %8645 = vmatprep.subr.bf16.mxu0 0
    %8646 = vmatpush1.bf16.msra.mxu0 %v8614
    %8647 = vmatprep.subr.bf16.mxu0 0
    %8648 = vmatpush1.bf16.msra.mxu0 %v8613
    %8649 = vmatprep.subr.bf16.mxu0 0
    %8650 = vmatpush1.bf16.msra.mxu0 %v8612
    %8651 = vmatprep.subr.bf16.mxu0 0
    %8652 = vmatpush1.bf16.msra.mxu0 %v8611
    %8653 = vmatprep.subr.bf16.mxu0 0
    %8654 = vmatpush1.bf16.msra.mxu0 %v8610
    %8655 = vmatprep.subr.bf16.mxu0 0
    %8656 = vmatpush1.bf16.msra.mxu0 %v8609
    %8657 = vmatprep.subr.bf16.mxu0 0
    %8658 = vmatpush2.bf16.msra.mxu0 %v8624
    %8659 = vmatprep.subr.bf16.mxu0 0
    %8660 = vmatpush2.bf16.msra.mxu0 %v8623
    %8661 = vmatprep.subr.bf16.mxu0 0
    %8662 = vmatpush2.bf16.msra.mxu0 %v8622
    %8663 = vmatprep.subr.bf16.mxu0 0
    %8664 = vmatpush2.bf16.msra.mxu0 %v8621
    %8665 = vmatprep.subr.bf16.mxu0 0
    %8666 = vmatpush2.bf16.msra.mxu0 %v8620
    %8667 = vmatprep.subr.bf16.mxu0 0
    %8668 = vmatpush2.bf16.msra.mxu0 %v8619
    %8669 = vmatprep.subr.bf16.mxu0 0
    %8670 = vmatpush2.bf16.msra.mxu0 %v8618
    %8671 = vmatprep.subr.bf16.mxu0 0
    %8672 = vmatpush2.bf16.msra.mxu0 %v8617
    %8673 = vmatprep.mubr.bf16.mxu0 %v8542
    %8674 = vmatmul.mubr.bf16.gmra.mxu0 %v8541
    %v8675 = vpop.f32.mrf.mxu0
    %v8676 = vadd.f32 %v8536, %v8675
    %v8677 = vpop.f32.mrf.mxu0
    %v8678 = vpop.f32.mrf.mxu0
    %v8679 = vpop.f32.mrf.mxu0
    %8680 = vdwg.mxu0
    %s8681 = scalar_lea.vmem [#allocation10], 256
    %v8682 = vld [vmem:[%s8681] sm:$0xf]
    %v8683 = vld [vmem:[%s8681 + $0x4] sm:$0xf]
    %v8684 = vld [vmem:[%s8681 + $0x8] sm:$0xf]
    %v8685 = vld [vmem:[%s8681 + $0xc] sm:$0xf]
    %v8686 = vld [vmem:[%s8681 + $0x10] sm:$0xf]
    %v8687 = vld [vmem:[%s8681 + $0x14] sm:$0xf]
    %v8688 = vld [vmem:[%s8681 + $0x18] sm:$0xf]
    %v8689 = vld [vmem:[%s8681 + $0x1c] sm:$0xf]
    %v8690 = vld [vmem:[%s8681 + $0x20] sm:$0xf]
    %v8691 = vld [vmem:[%s8681 + $0x24] sm:$0xf]
    %v8692 = vld [vmem:[%s8681 + $0x28] sm:$0xf]
    %v8693 = vld [vmem:[%s8681 + $0x2c] sm:$0xf]
    %v8694 = vld [vmem:[%s8681 + $0x30] sm:$0xf]
    %v8695 = vld [vmem:[%s8681 + $0x34] sm:$0xf]
    %v8696 = vld [vmem:[%s8681 + $0x38] sm:$0xf]
    %v8697 = vld [vmem:[%s8681 + $0x3c] sm:$0xf]
    %v8698 = vld [vmem:[%s8681 + $0x40] sm:$0xf]
    %v8699 = vld [vmem:[%s8681 + $0x44] sm:$0xf]
    %v8700 = vld [vmem:[%s8681 + $0x48] sm:$0xf]
    %v8701 = vld [vmem:[%s8681 + $0x4c] sm:$0xf]
    %v8702 = vld [vmem:[%s8681 + $0x50] sm:$0xf]
    %v8703 = vld [vmem:[%s8681 + $0x54] sm:$0xf]
    %v8704 = vld [vmem:[%s8681 + $0x58] sm:$0xf]
    %v8705 = vld [vmem:[%s8681 + $0x5c] sm:$0xf]
    %v8706 = vld [vmem:[%s8681 + $0x60] sm:$0xf]
    %v8707 = vld [vmem:[%s8681 + $0x64] sm:$0xf]
    %v8708 = vld [vmem:[%s8681 + $0x68] sm:$0xf]
    %v8709 = vld [vmem:[%s8681 + $0x6c] sm:$0xf]
    %v8710 = vld [vmem:[%s8681 + $0x70] sm:$0xf]
    %v8711 = vld [vmem:[%s8681 + $0x74] sm:$0xf]
    %v8712 = vld [vmem:[%s8681 + $0x78] sm:$0xf]
    %v8713 = vld [vmem:[%s8681 + $0x7c] sm:$0xf]
    %v8714 = vpack.c.b16 %v8326, %v8326
    %v8715 = vpack.c.b16 %v8327, %v8327
    %v8750 = vunpack.c.l.b16 %v8682
    %v8751 = vunpack.c.l.b16 %v8683
    %v8752 = vunpack.c.l.b16 %v8684
    %v8753 = vunpack.c.l.b16 %v8685
    %v8754 = vunpack.c.l.b16 %v8686
    %v8755 = vunpack.c.l.b16 %v8687
    %v8756 = vunpack.c.l.b16 %v8688
    %v8757 = vunpack.c.l.b16 %v8689
    %v8758 = vunpack.c.l.b16 %v8690
    %v8759 = vunpack.c.l.b16 %v8691
    %v8760 = vunpack.c.l.b16 %v8692
    %v8761 = vunpack.c.l.b16 %v8693
    %v8762 = vunpack.c.l.b16 %v8694
    %v8763 = vunpack.c.l.b16 %v8695
    %v8764 = vunpack.c.l.b16 %v8696
    %v8765 = vunpack.c.l.b16 %v8697
    %v8766 = vunpack.c.l.b16 %v8698
    %v8767 = vunpack.c.l.b16 %v8699
    %v8768 = vunpack.c.l.b16 %v8700
    %v8769 = vunpack.c.l.b16 %v8701
    %v8770 = vunpack.c.l.b16 %v8702
    %v8771 = vunpack.c.l.b16 %v8703
    %v8772 = vunpack.c.l.b16 %v8704
    %v8773 = vunpack.c.l.b16 %v8705
    %v8774 = vunpack.c.l.b16 %v8706
    %v8775 = vunpack.c.l.b16 %v8707
    %v8776 = vunpack.c.l.b16 %v8708
    %v8777 = vunpack.c.l.b16 %v8709
    %v8778 = vunpack.c.l.b16 %v8710
    %v8779 = vunpack.c.l.b16 %v8711
    %v8780 = vunpack.c.l.b16 %v8712
    %v8781 = vunpack.c.l.b16 %v8713
    %v8782 = vpack.c.b16 %v8751, %v8750
    %v8783 = vpack.c.b16 %v8753, %v8752
    %v8784 = vpack.c.b16 %v8755, %v8754
    %v8785 = vpack.c.b16 %v8757, %v8756
    %v8786 = vpack.c.b16 %v8759, %v8758
    %v8787 = vpack.c.b16 %v8761, %v8760
    %v8788 = vpack.c.b16 %v8763, %v8762
    %v8789 = vpack.c.b16 %v8765, %v8764
    %v8790 = vpack.c.b16 %v8767, %v8766
    %v8791 = vpack.c.b16 %v8769, %v8768
    %v8792 = vpack.c.b16 %v8771, %v8770
    %v8793 = vpack.c.b16 %v8773, %v8772
    %v8794 = vpack.c.b16 %v8775, %v8774
    %v8795 = vpack.c.b16 %v8777, %v8776
    %v8796 = vpack.c.b16 %v8779, %v8778
    %v8797 = vpack.c.b16 %v8781, %v8780
    %8814 = vmatprep.subr.bf16.mxu0 0
    %8815 = vmatpush1.bf16.msra.mxu0 %v8789
    %8816 = vmatprep.subr.bf16.mxu0 0
    %8817 = vmatpush1.bf16.msra.mxu0 %v8788
    %8818 = vmatprep.subr.bf16.mxu0 0
    %8819 = vmatpush1.bf16.msra.mxu0 %v8787
    %8820 = vmatprep.subr.bf16.mxu0 0
    %8821 = vmatpush1.bf16.msra.mxu0 %v8786
    %8822 = vmatprep.subr.bf16.mxu0 0
    %8823 = vmatpush1.bf16.msra.mxu0 %v8785
    %8824 = vmatprep.subr.bf16.mxu0 0
    %8825 = vmatpush1.bf16.msra.mxu0 %v8784
    %8826 = vmatprep.subr.bf16.mxu0 0
    %8827 = vmatpush1.bf16.msra.mxu0 %v8783
    %8828 = vmatprep.subr.bf16.mxu0 0
    %8829 = vmatpush1.bf16.msra.mxu0 %v8782
    %8830 = vmatprep.subr.bf16.mxu0 0
    %8831 = vmatpush2.bf16.msra.mxu0 %v8797
    %8832 = vmatprep.subr.bf16.mxu0 0
    %8833 = vmatpush2.bf16.msra.mxu0 %v8796
    %8834 = vmatprep.subr.bf16.mxu0 0
    %8835 = vmatpush2.bf16.msra.mxu0 %v8795
    %8836 = vmatprep.subr.bf16.mxu0 0
    %8837 = vmatpush2.bf16.msra.mxu0 %v8794
    %8838 = vmatprep.subr.bf16.mxu0 0
    %8839 = vmatpush2.bf16.msra.mxu0 %v8793
    %8840 = vmatprep.subr.bf16.mxu0 0
    %8841 = vmatpush2.bf16.msra.mxu0 %v8792
    %8842 = vmatprep.subr.bf16.mxu0 0
    %8843 = vmatpush2.bf16.msra.mxu0 %v8791
    %8844 = vmatprep.subr.bf16.mxu0 0
    %8845 = vmatpush2.bf16.msra.mxu0 %v8790
    %8846 = vmatprep.mubr.bf16.mxu0 %v8715
    %8847 = vmatmul.mubr.bf16.gmra.mxu0 %v8714
    %v8848 = vpop.f32.mrf.mxu0
    %v8849 = vadd.f32 0.0, %v8848
    %v8850 = vpop.f32.mrf.mxu0
    %v8851 = vpop.f32.mrf.mxu0
    %v8852 = vpop.f32.mrf.mxu0
    %8853 = vdwg.mxu0
    %v8854 = vadd.f32 %v8676, %v8849
    %s8855 = scalar_lea.vmem [#allocation10], 384
    %v8856 = vld [vmem:[%s8855] sm:$0xf]
    %v8857 = vld [vmem:[%s8855 + $0x4] sm:$0xf]
    %v8858 = vld [vmem:[%s8855 + $0x8] sm:$0xf]
    %v8859 = vld [vmem:[%s8855 + $0xc] sm:$0xf]
    %v8860 = vld [vmem:[%s8855 + $0x10] sm:$0xf]
    %v8861 = vld [vmem:[%s8855 + $0x14] sm:$0xf]
    %v8862 = vld [vmem:[%s8855 + $0x18] sm:$0xf]
    %v8863 = vld [vmem:[%s8855 + $0x1c] sm:$0xf]
    %v8864 = vld [vmem:[%s8855 + $0x20] sm:$0xf]
    %v8865 = vld [vmem:[%s8855 + $0x24] sm:$0xf]
    %v8866 = vld [vmem:[%s8855 + $0x28] sm:$0xf]
    %v8867 = vld [vmem:[%s8855 + $0x2c] sm:$0xf]
    %v8868 = vld [vmem:[%s8855 + $0x30] sm:$0xf]
    %v8869 = vld [vmem:[%s8855 + $0x34] sm:$0xf]
    %v8870 = vld [vmem:[%s8855 + $0x38] sm:$0xf]
    %v8871 = vld [vmem:[%s8855 + $0x3c] sm:$0xf]
    %v8872 = vld [vmem:[%s8855 + $0x40] sm:$0xf]
    %v8873 = vld [vmem:[%s8855 + $0x44] sm:$0xf]
    %v8874 = vld [vmem:[%s8855 + $0x48] sm:$0xf]
    %v8875 = vld [vmem:[%s8855 + $0x4c] sm:$0xf]
    %v8876 = vld [vmem:[%s8855 + $0x50] sm:$0xf]
    %v8877 = vld [vmem:[%s8855 + $0x54] sm:$0xf]
    %v8878 = vld [vmem:[%s8855 + $0x58] sm:$0xf]
    %v8879 = vld [vmem:[%s8855 + $0x5c] sm:$0xf]
    %v8880 = vld [vmem:[%s8855 + $0x60] sm:$0xf]
    %v8881 = vld [vmem:[%s8855 + $0x64] sm:$0xf]
    %v8882 = vld [vmem:[%s8855 + $0x68] sm:$0xf]
    %v8883 = vld [vmem:[%s8855 + $0x6c] sm:$0xf]
    %v8884 = vld [vmem:[%s8855 + $0x70] sm:$0xf]
    %v8885 = vld [vmem:[%s8855 + $0x74] sm:$0xf]
    %v8886 = vld [vmem:[%s8855 + $0x78] sm:$0xf]
    %v8887 = vld [vmem:[%s8855 + $0x7c] sm:$0xf]
    %v8888 = vpack.c.b16 %v8328, %v8328
    %v8889 = vpack.c.b16 %v8329, %v8329
    %v8924 = vunpack.c.l.b16 %v8856
    %v8925 = vunpack.c.l.b16 %v8857
    %v8926 = vunpack.c.l.b16 %v8858
    %v8927 = vunpack.c.l.b16 %v8859
    %v8928 = vunpack.c.l.b16 %v8860
    %v8929 = vunpack.c.l.b16 %v8861
    %v8930 = vunpack.c.l.b16 %v8862
    %v8931 = vunpack.c.l.b16 %v8863
    %v8932 = vunpack.c.l.b16 %v8864
    %v8933 = vunpack.c.l.b16 %v8865
    %v8934 = vunpack.c.l.b16 %v8866
    %v8935 = vunpack.c.l.b16 %v8867
    %v8936 = vunpack.c.l.b16 %v8868
    %v8937 = vunpack.c.l.b16 %v8869
    %v8938 = vunpack.c.l.b16 %v8870
    %v8939 = vunpack.c.l.b16 %v8871
    %v8940 = vunpack.c.l.b16 %v8872
    %v8941 = vunpack.c.l.b16 %v8873
    %v8942 = vunpack.c.l.b16 %v8874
    %v8943 = vunpack.c.l.b16 %v8875
    %v8944 = vunpack.c.l.b16 %v8876
    %v8945 = vunpack.c.l.b16 %v8877
    %v8946 = vunpack.c.l.b16 %v8878
    %v8947 = vunpack.c.l.b16 %v8879
    %v8948 = vunpack.c.l.b16 %v8880
    %v8949 = vunpack.c.l.b16 %v8881
    %v8950 = vunpack.c.l.b16 %v8882
    %v8951 = vunpack.c.l.b16 %v8883
    %v8952 = vunpack.c.l.b16 %v8884
    %v8953 = vunpack.c.l.b16 %v8885
    %v8954 = vunpack.c.l.b16 %v8886
    %v8955 = vunpack.c.l.b16 %v8887
    %v8956 = vpack.c.b16 %v8925, %v8924
    %v8957 = vpack.c.b16 %v8927, %v8926
    %v8958 = vpack.c.b16 %v8929, %v8928
    %v8959 = vpack.c.b16 %v8931, %v8930
    %v8960 = vpack.c.b16 %v8933, %v8932
    %v8961 = vpack.c.b16 %v8935, %v8934
    %v8962 = vpack.c.b16 %v8937, %v8936
    %v8963 = vpack.c.b16 %v8939, %v8938
    %v8964 = vpack.c.b16 %v8941, %v8940
    %v8965 = vpack.c.b16 %v8943, %v8942
    %v8966 = vpack.c.b16 %v8945, %v8944
    %v8967 = vpack.c.b16 %v8947, %v8946
    %v8968 = vpack.c.b16 %v8949, %v8948
    %v8969 = vpack.c.b16 %v8951, %v8950
    %v8970 = vpack.c.b16 %v8953, %v8952
    %v8971 = vpack.c.b16 %v8955, %v8954
    %8988 = vmatprep.subr.bf16.mxu0 0
    %8989 = vmatpush1.bf16.msra.mxu0 %v8963
    %8990 = vmatprep.subr.bf16.mxu0 0
    %8991 = vmatpush1.bf16.msra.mxu0 %v8962
    %8992 = vmatprep.subr.bf16.mxu0 0
    %8993 = vmatpush1.bf16.msra.mxu0 %v8961
    %8994 = vmatprep.subr.bf16.mxu0 0
    %8995 = vmatpush1.bf16.msra.mxu0 %v8960
    %8996 = vmatprep.subr.bf16.mxu0 0
    %8997 = vmatpush1.bf16.msra.mxu0 %v8959
    %8998 = vmatprep.subr.bf16.mxu0 0
    %8999 = vmatpush1.bf16.msra.mxu0 %v8958
    %9000 = vmatprep.subr.bf16.mxu0 0
    %9001 = vmatpush1.bf16.msra.mxu0 %v8957
    %9002 = vmatprep.subr.bf16.mxu0 0
    %9003 = vmatpush1.bf16.msra.mxu0 %v8956
    %9004 = vmatprep.subr.bf16.mxu0 0
    %9005 = vmatpush2.bf16.msra.mxu0 %v8971
    %9006 = vmatprep.subr.bf16.mxu0 0
    %9007 = vmatpush2.bf16.msra.mxu0 %v8970
    %9008 = vmatprep.subr.bf16.mxu0 0
    %9009 = vmatpush2.bf16.msra.mxu0 %v8969
    %9010 = vmatprep.subr.bf16.mxu0 0
    %9011 = vmatpush2.bf16.msra.mxu0 %v8968
    %9012 = vmatprep.subr.bf16.mxu0 0
    %9013 = vmatpush2.bf16.msra.mxu0 %v8967
    %9014 = vmatprep.subr.bf16.mxu0 0
    %9015 = vmatpush2.bf16.msra.mxu0 %v8966
    %9016 = vmatprep.subr.bf16.mxu0 0
    %9017 = vmatpush2.bf16.msra.mxu0 %v8965
    %9018 = vmatprep.subr.bf16.mxu0 0
    %9019 = vmatpush2.bf16.msra.mxu0 %v8964
    %9020 = vmatprep.mubr.bf16.mxu0 %v8889
    %9021 = vmatmul.mubr.bf16.gmra.mxu0 %v8888
    %v9022 = vpop.f32.mrf.mxu0
    %v9023 = vadd.f32 0.0, %v9022
    %v9024 = vpop.f32.mrf.mxu0
    %v9025 = vpop.f32.mrf.mxu0
    %v9026 = vpop.f32.mrf.mxu0
    %9027 = vdwg.mxu0
    %v9028 = vadd.f32 %v8854, %v9023
    %s9029 = scalar_lea.vmem [#allocation10], 512
    %v9030 = vld [vmem:[%s9029] sm:$0xf]
    %v9031 = vld [vmem:[%s9029 + $0x4] sm:$0xf]
    %v9032 = vld [vmem:[%s9029 + $0x8] sm:$0xf]
    %v9033 = vld [vmem:[%s9029 + $0xc] sm:$0xf]
    %v9034 = vld [vmem:[%s9029 + $0x10] sm:$0xf]
    %v9035 = vld [vmem:[%s9029 + $0x14] sm:$0xf]
    %v9036 = vld [vmem:[%s9029 + $0x18] sm:$0xf]
    %v9037 = vld [vmem:[%s9029 + $0x1c] sm:$0xf]
    %v9038 = vld [vmem:[%s9029 + $0x20] sm:$0xf]
    %v9039 = vld [vmem:[%s9029 + $0x24] sm:$0xf]
    %v9040 = vld [vmem:[%s9029 + $0x28] sm:$0xf]
    %v9041 = vld [vmem:[%s9029 + $0x2c] sm:$0xf]
    %v9042 = vld [vmem:[%s9029 + $0x30] sm:$0xf]
    %v9043 = vld [vmem:[%s9029 + $0x34] sm:$0xf]
    %v9044 = vld [vmem:[%s9029 + $0x38] sm:$0xf]
    %v9045 = vld [vmem:[%s9029 + $0x3c] sm:$0xf]
    %v9046 = vld [vmem:[%s9029 + $0x40] sm:$0xf]
    %v9047 = vld [vmem:[%s9029 + $0x44] sm:$0xf]
    %v9048 = vld [vmem:[%s9029 + $0x48] sm:$0xf]
    %v9049 = vld [vmem:[%s9029 + $0x4c] sm:$0xf]
    %v9050 = vld [vmem:[%s9029 + $0x50] sm:$0xf]
    %v9051 = vld [vmem:[%s9029 + $0x54] sm:$0xf]
    %v9052 = vld [vmem:[%s9029 + $0x58] sm:$0xf]
    %v9053 = vld [vmem:[%s9029 + $0x5c] sm:$0xf]
    %v9054 = vld [vmem:[%s9029 + $0x60] sm:$0xf]
    %v9055 = vld [vmem:[%s9029 + $0x64] sm:$0xf]
    %v9056 = vld [vmem:[%s9029 + $0x68] sm:$0xf]
    %v9057 = vld [vmem:[%s9029 + $0x6c] sm:$0xf]
    %v9058 = vld [vmem:[%s9029 + $0x70] sm:$0xf]
    %v9059 = vld [vmem:[%s9029 + $0x74] sm:$0xf]
    %v9060 = vld [vmem:[%s9029 + $0x78] sm:$0xf]
    %v9061 = vld [vmem:[%s9029 + $0x7c] sm:$0xf]
    %v9062 = vpack.c.b16 %v8330, %v8330
    %v9063 = vpack.c.b16 %v8331, %v8331
    %v9098 = vunpack.c.l.b16 %v9030
    %v9099 = vunpack.c.l.b16 %v9031
    %v9100 = vunpack.c.l.b16 %v9032
    %v9101 = vunpack.c.l.b16 %v9033
    %v9102 = vunpack.c.l.b16 %v9034
    %v9103 = vunpack.c.l.b16 %v9035
    %v9104 = vunpack.c.l.b16 %v9036
    %v9105 = vunpack.c.l.b16 %v9037
    %v9106 = vunpack.c.l.b16 %v9038
    %v9107 = vunpack.c.l.b16 %v9039
    %v9108 = vunpack.c.l.b16 %v9040
    %v9109 = vunpack.c.l.b16 %v9041
    %v9110 = vunpack.c.l.b16 %v9042
    %v9111 = vunpack.c.l.b16 %v9043
    %v9112 = vunpack.c.l.b16 %v9044
    %v9113 = vunpack.c.l.b16 %v9045
    %v9114 = vunpack.c.l.b16 %v9046
    %v9115 = vunpack.c.l.b16 %v9047
    %v9116 = vunpack.c.l.b16 %v9048
    %v9117 = vunpack.c.l.b16 %v9049
    %v9118 = vunpack.c.l.b16 %v9050
    %v9119 = vunpack.c.l.b16 %v9051
    %v9120 = vunpack.c.l.b16 %v9052
    %v9121 = vunpack.c.l.b16 %v9053
    %v9122 = vunpack.c.l.b16 %v9054
    %v9123 = vunpack.c.l.b16 %v9055
    %v9124 = vunpack.c.l.b16 %v9056
    %v9125 = vunpack.c.l.b16 %v9057
    %v9126 = vunpack.c.l.b16 %v9058
    %v9127 = vunpack.c.l.b16 %v9059
    %v9128 = vunpack.c.l.b16 %v9060
    %v9129 = vunpack.c.l.b16 %v9061
    %v9130 = vpack.c.b16 %v9099, %v9098
    %v9131 = vpack.c.b16 %v9101, %v9100
    %v9132 = vpack.c.b16 %v9103, %v9102
    %v9133 = vpack.c.b16 %v9105, %v9104
    %v9134 = vpack.c.b16 %v9107, %v9106
    %v9135 = vpack.c.b16 %v9109, %v9108
    %v9136 = vpack.c.b16 %v9111, %v9110
    %v9137 = vpack.c.b16 %v9113, %v9112
    %v9138 = vpack.c.b16 %v9115, %v9114
    %v9139 = vpack.c.b16 %v9117, %v9116
    %v9140 = vpack.c.b16 %v9119, %v9118
    %v9141 = vpack.c.b16 %v9121, %v9120
    %v9142 = vpack.c.b16 %v9123, %v9122
    %v9143 = vpack.c.b16 %v9125, %v9124
    %v9144 = vpack.c.b16 %v9127, %v9126
    %v9145 = vpack.c.b16 %v9129, %v9128
    %9162 = vmatprep.subr.bf16.mxu0 0
    %9163 = vmatpush1.bf16.msra.mxu0 %v9137
    %9164 = vmatprep.subr.bf16.mxu0 0
    %9165 = vmatpush1.bf16.msra.mxu0 %v9136
    %9166 = vmatprep.subr.bf16.mxu0 0
    %9167 = vmatpush1.bf16.msra.mxu0 %v9135
    %9168 = vmatprep.subr.bf16.mxu0 0
    %9169 = vmatpush1.bf16.msra.mxu0 %v9134
    %9170 = vmatprep.subr.bf16.mxu0 0
    %9171 = vmatpush1.bf16.msra.mxu0 %v9133
    %9172 = vmatprep.subr.bf16.mxu0 0
    %9173 = vmatpush1.bf16.msra.mxu0 %v9132
    %9174 = vmatprep.subr.bf16.mxu0 0
    %9175 = vmatpush1.bf16.msra.mxu0 %v9131
    %9176 = vmatprep.subr.bf16.mxu0 0
    %9177 = vmatpush1.bf16.msra.mxu0 %v9130
    %9178 = vmatprep.subr.bf16.mxu0 0
    %9179 = vmatpush2.bf16.msra.mxu0 %v9145
    %9180 = vmatprep.subr.bf16.mxu0 0
    %9181 = vmatpush2.bf16.msra.mxu0 %v9144
    %9182 = vmatprep.subr.bf16.mxu0 0
    %9183 = vmatpush2.bf16.msra.mxu0 %v9143
    %9184 = vmatprep.subr.bf16.mxu0 0
    %9185 = vmatpush2.bf16.msra.mxu0 %v9142
    %9186 = vmatprep.subr.bf16.mxu0 0
    %9187 = vmatpush2.bf16.msra.mxu0 %v9141
    %9188 = vmatprep.subr.bf16.mxu0 0
    %9189 = vmatpush2.bf16.msra.mxu0 %v9140
    %9190 = vmatprep.subr.bf16.mxu0 0
    %9191 = vmatpush2.bf16.msra.mxu0 %v9139
    %9192 = vmatprep.subr.bf16.mxu0 0
    %9193 = vmatpush2.bf16.msra.mxu0 %v9138
    %9194 = vmatprep.mubr.bf16.mxu0 %v9063
    %9195 = vmatmul.mubr.bf16.gmra.mxu0 %v9062
    %v9196 = vpop.f32.mrf.mxu0
    %v9197 = vadd.f32 0.0, %v9196
    %v9198 = vpop.f32.mrf.mxu0
    %v9199 = vpop.f32.mrf.mxu0
    %v9200 = vpop.f32.mrf.mxu0
    %9201 = vdwg.mxu0
    %v9202 = vadd.f32 %v9028, %v9197
    %s9203 = scalar_lea.vmem [#allocation10], 640
    %v9204 = vld [vmem:[%s9203] sm:$0xf]
    %v9205 = vld [vmem:[%s9203 + $0x4] sm:$0xf]
    %v9206 = vld [vmem:[%s9203 + $0x8] sm:$0xf]
    %v9207 = vld [vmem:[%s9203 + $0xc] sm:$0xf]
    %v9208 = vld [vmem:[%s9203 + $0x10] sm:$0xf]
    %v9209 = vld [vmem:[%s9203 + $0x14] sm:$0xf]
    %v9210 = vld [vmem:[%s9203 + $0x18] sm:$0xf]
    %v9211 = vld [vmem:[%s9203 + $0x1c] sm:$0xf]
    %v9212 = vld [vmem:[%s9203 + $0x20] sm:$0xf]
    %v9213 = vld [vmem:[%s9203 + $0x24] sm:$0xf]
    %v9214 = vld [vmem:[%s9203 + $0x28] sm:$0xf]
    %v9215 = vld [vmem:[%s9203 + $0x2c] sm:$0xf]
    %v9216 = vld [vmem:[%s9203 + $0x30] sm:$0xf]
    %v9217 = vld [vmem:[%s9203 + $0x34] sm:$0xf]
    %v9218 = vld [vmem:[%s9203 + $0x38] sm:$0xf]
    %v9219 = vld [vmem:[%s9203 + $0x3c] sm:$0xf]
    %v9220 = vld [vmem:[%s9203 + $0x40] sm:$0xf]
    %v9221 = vld [vmem:[%s9203 + $0x44] sm:$0xf]
    %v9222 = vld [vmem:[%s9203 + $0x48] sm:$0xf]
    %v9223 = vld [vmem:[%s9203 + $0x4c] sm:$0xf]
    %v9224 = vld [vmem:[%s9203 + $0x50] sm:$0xf]
    %v9225 = vld [vmem:[%s9203 + $0x54] sm:$0xf]
    %v9226 = vld [vmem:[%s9203 + $0x58] sm:$0xf]
    %v9227 = vld [vmem:[%s9203 + $0x5c] sm:$0xf]
    %v9228 = vld [vmem:[%s9203 + $0x60] sm:$0xf]
    %v9229 = vld [vmem:[%s9203 + $0x64] sm:$0xf]
    %v9230 = vld [vmem:[%s9203 + $0x68] sm:$0xf]
    %v9231 = vld [vmem:[%s9203 + $0x6c] sm:$0xf]
    %v9232 = vld [vmem:[%s9203 + $0x70] sm:$0xf]
    %v9233 = vld [vmem:[%s9203 + $0x74] sm:$0xf]
    %v9234 = vld [vmem:[%s9203 + $0x78] sm:$0xf]
    %v9235 = vld [vmem:[%s9203 + $0x7c] sm:$0xf]
    %v9236 = vpack.c.b16 %v8332, %v8332
    %v9237 = vpack.c.b16 %v8333, %v8333
    %v9272 = vunpack.c.l.b16 %v9204
    %v9273 = vunpack.c.l.b16 %v9205
    %v9274 = vunpack.c.l.b16 %v9206
    %v9275 = vunpack.c.l.b16 %v9207
    %v9276 = vunpack.c.l.b16 %v9208
    %v9277 = vunpack.c.l.b16 %v9209
    %v9278 = vunpack.c.l.b16 %v9210
    %v9279 = vunpack.c.l.b16 %v9211
    %v9280 = vunpack.c.l.b16 %v9212
    %v9281 = vunpack.c.l.b16 %v9213
    %v9282 = vunpack.c.l.b16 %v9214
    %v9283 = vunpack.c.l.b16 %v9215
    %v9284 = vunpack.c.l.b16 %v9216
    %v9285 = vunpack.c.l.b16 %v9217
    %v9286 = vunpack.c.l.b16 %v9218
    %v9287 = vunpack.c.l.b16 %v9219
    %v9288 = vunpack.c.l.b16 %v9220
    %v9289 = vunpack.c.l.b16 %v9221
    %v9290 = vunpack.c.l.b16 %v9222
    %v9291 = vunpack.c.l.b16 %v9223
    %v9292 = vunpack.c.l.b16 %v9224
    %v9293 = vunpack.c.l.b16 %v9225
    %v9294 = vunpack.c.l.b16 %v9226
    %v9295 = vunpack.c.l.b16 %v9227
    %v9296 = vunpack.c.l.b16 %v9228
    %v9297 = vunpack.c.l.b16 %v9229
    %v9298 = vunpack.c.l.b16 %v9230
    %v9299 = vunpack.c.l.b16 %v9231
    %v9300 = vunpack.c.l.b16 %v9232
    %v9301 = vunpack.c.l.b16 %v9233
    %v9302 = vunpack.c.l.b16 %v9234
    %v9303 = vunpack.c.l.b16 %v9235
    %v9304 = vpack.c.b16 %v9273, %v9272
    %v9305 = vpack.c.b16 %v9275, %v9274
    %v9306 = vpack.c.b16 %v9277, %v9276
    %v9307 = vpack.c.b16 %v9279, %v9278
    %v9308 = vpack.c.b16 %v9281, %v9280
    %v9309 = vpack.c.b16 %v9283, %v9282
    %v9310 = vpack.c.b16 %v9285, %v9284
    %v9311 = vpack.c.b16 %v9287, %v9286
    %v9312 = vpack.c.b16 %v9289, %v9288
    %v9313 = vpack.c.b16 %v9291, %v9290
    %v9314 = vpack.c.b16 %v9293, %v9292
    %v9315 = vpack.c.b16 %v9295, %v9294
    %v9316 = vpack.c.b16 %v9297, %v9296
    %v9317 = vpack.c.b16 %v9299, %v9298
    %v9318 = vpack.c.b16 %v9301, %v9300
    %v9319 = vpack.c.b16 %v9303, %v9302
    %9336 = vmatprep.subr.bf16.mxu0 0
    %9337 = vmatpush1.bf16.msra.mxu0 %v9311
    %9338 = vmatprep.subr.bf16.mxu0 0
    %9339 = vmatpush1.bf16.msra.mxu0 %v9310
    %9340 = vmatprep.subr.bf16.mxu0 0
    %9341 = vmatpush1.bf16.msra.mxu0 %v9309
    %9342 = vmatprep.subr.bf16.mxu0 0
    %9343 = vmatpush1.bf16.msra.mxu0 %v9308
    %9344 = vmatprep.subr.bf16.mxu0 0
    %9345 = vmatpush1.bf16.msra.mxu0 %v9307
    %9346 = vmatprep.subr.bf16.mxu0 0
    %9347 = vmatpush1.bf16.msra.mxu0 %v9306
    %9348 = vmatprep.subr.bf16.mxu0 0
    %9349 = vmatpush1.bf16.msra.mxu0 %v9305
    %9350 = vmatprep.subr.bf16.mxu0 0
    %9351 = vmatpush1.bf16.msra.mxu0 %v9304
    %9352 = vmatprep.subr.bf16.mxu0 0
    %9353 = vmatpush2.bf16.msra.mxu0 %v9319
    %9354 = vmatprep.subr.bf16.mxu0 0
    %9355 = vmatpush2.bf16.msra.mxu0 %v9318
    %9356 = vmatprep.subr.bf16.mxu0 0
    %9357 = vmatpush2.bf16.msra.mxu0 %v9317
    %9358 = vmatprep.subr.bf16.mxu0 0
    %9359 = vmatpush2.bf16.msra.mxu0 %v9316
    %9360 = vmatprep.subr.bf16.mxu0 0
    %9361 = vmatpush2.bf16.msra.mxu0 %v9315
    %9362 = vmatprep.subr.bf16.mxu0 0
    %9363 = vmatpush2.bf16.msra.mxu0 %v9314
    %9364 = vmatprep.subr.bf16.mxu0 0
    %9365 = vmatpush2.bf16.msra.mxu0 %v9313
    %9366 = vmatprep.subr.bf16.mxu0 0
    %9367 = vmatpush2.bf16.msra.mxu0 %v9312
    %9368 = vmatprep.mubr.bf16.mxu0 %v9237
    %9369 = vmatmul.mubr.bf16.gmra.mxu0 %v9236
    %v9370 = vpop.f32.mrf.mxu0
    %v9371 = vadd.f32 0.0, %v9370
    %v9372 = vpop.f32.mrf.mxu0
    %v9373 = vpop.f32.mrf.mxu0
    %v9374 = vpop.f32.mrf.mxu0
    %9375 = vdwg.mxu0
    %v9376 = vadd.f32 %v9202, %v9371
    %s9377 = scalar_lea.vmem [#allocation10], 768
    %v9378 = vld [vmem:[%s9377] sm:$0xf]
    %v9379 = vld [vmem:[%s9377 + $0x4] sm:$0xf]
    %v9380 = vld [vmem:[%s9377 + $0x8] sm:$0xf]
    %v9381 = vld [vmem:[%s9377 + $0xc] sm:$0xf]
    %v9382 = vld [vmem:[%s9377 + $0x10] sm:$0xf]
    %v9383 = vld [vmem:[%s9377 + $0x14] sm:$0xf]
    %v9384 = vld [vmem:[%s9377 + $0x18] sm:$0xf]
    %v9385 = vld [vmem:[%s9377 + $0x1c] sm:$0xf]
    %v9386 = vld [vmem:[%s9377 + $0x20] sm:$0xf]
    %v9387 = vld [vmem:[%s9377 + $0x24] sm:$0xf]
    %v9388 = vld [vmem:[%s9377 + $0x28] sm:$0xf]
    %v9389 = vld [vmem:[%s9377 + $0x2c] sm:$0xf]
    %v9390 = vld [vmem:[%s9377 + $0x30] sm:$0xf]
    %v9391 = vld [vmem:[%s9377 + $0x34] sm:$0xf]
    %v9392 = vld [vmem:[%s9377 + $0x38] sm:$0xf]
    %v9393 = vld [vmem:[%s9377 + $0x3c] sm:$0xf]
    %v9394 = vld [vmem:[%s9377 + $0x40] sm:$0xf]
    %v9395 = vld [vmem:[%s9377 + $0x44] sm:$0xf]
    %v9396 = vld [vmem:[%s9377 + $0x48] sm:$0xf]
    %v9397 = vld [vmem:[%s9377 + $0x4c] sm:$0xf]
    %v9398 = vld [vmem:[%s9377 + $0x50] sm:$0xf]
    %v9399 = vld [vmem:[%s9377 + $0x54] sm:$0xf]
    %v9400 = vld [vmem:[%s9377 + $0x58] sm:$0xf]
    %v9401 = vld [vmem:[%s9377 + $0x5c] sm:$0xf]
    %v9402 = vld [vmem:[%s9377 + $0x60] sm:$0xf]
    %v9403 = vld [vmem:[%s9377 + $0x64] sm:$0xf]
    %v9404 = vld [vmem:[%s9377 + $0x68] sm:$0xf]
    %v9405 = vld [vmem:[%s9377 + $0x6c] sm:$0xf]
    %v9406 = vld [vmem:[%s9377 + $0x70] sm:$0xf]
    %v9407 = vld [vmem:[%s9377 + $0x74] sm:$0xf]
    %v9408 = vld [vmem:[%s9377 + $0x78] sm:$0xf]
    %v9409 = vld [vmem:[%s9377 + $0x7c] sm:$0xf]
    %v9410 = vpack.c.b16 %v8334, %v8334
    %v9411 = vpack.c.b16 %v8335, %v8335
    %v9446 = vunpack.c.l.b16 %v9378
    %v9447 = vunpack.c.l.b16 %v9379
    %v9448 = vunpack.c.l.b16 %v9380
    %v9449 = vunpack.c.l.b16 %v9381
    %v9450 = vunpack.c.l.b16 %v9382
    %v9451 = vunpack.c.l.b16 %v9383
    %v9452 = vunpack.c.l.b16 %v9384
    %v9453 = vunpack.c.l.b16 %v9385
    %v9454 = vunpack.c.l.b16 %v9386
    %v9455 = vunpack.c.l.b16 %v9387
    %v9456 = vunpack.c.l.b16 %v9388
    %v9457 = vunpack.c.l.b16 %v9389
    %v9458 = vunpack.c.l.b16 %v9390
    %v9459 = vunpack.c.l.b16 %v9391
    %v9460 = vunpack.c.l.b16 %v9392
    %v9461 = vunpack.c.l.b16 %v9393
    %v9462 = vunpack.c.l.b16 %v9394
    %v9463 = vunpack.c.l.b16 %v9395
    %v9464 = vunpack.c.l.b16 %v9396
    %v9465 = vunpack.c.l.b16 %v9397
    %v9466 = vunpack.c.l.b16 %v9398
    %v9467 = vunpack.c.l.b16 %v9399
    %v9468 = vunpack.c.l.b16 %v9400
    %v9469 = vunpack.c.l.b16 %v9401
    %v9470 = vunpack.c.l.b16 %v9402
    %v9471 = vunpack.c.l.b16 %v9403
    %v9472 = vunpack.c.l.b16 %v9404
    %v9473 = vunpack.c.l.b16 %v9405
    %v9474 = vunpack.c.l.b16 %v9406
    %v9475 = vunpack.c.l.b16 %v9407
    %v9476 = vunpack.c.l.b16 %v9408
    %v9477 = vunpack.c.l.b16 %v9409
    %v9478 = vpack.c.b16 %v9447, %v9446
    %v9479 = vpack.c.b16 %v9449, %v9448
    %v9480 = vpack.c.b16 %v9451, %v9450
    %v9481 = vpack.c.b16 %v9453, %v9452
    %v9482 = vpack.c.b16 %v9455, %v9454
    %v9483 = vpack.c.b16 %v9457, %v9456
    %v9484 = vpack.c.b16 %v9459, %v9458
    %v9485 = vpack.c.b16 %v9461, %v9460
    %v9486 = vpack.c.b16 %v9463, %v9462
    %v9487 = vpack.c.b16 %v9465, %v9464
    %v9488 = vpack.c.b16 %v9467, %v9466
    %v9489 = vpack.c.b16 %v9469, %v9468
    %v9490 = vpack.c.b16 %v9471, %v9470
    %v9491 = vpack.c.b16 %v9473, %v9472
    %v9492 = vpack.c.b16 %v9475, %v9474
    %v9493 = vpack.c.b16 %v9477, %v9476
    %9510 = vmatprep.subr.bf16.mxu0 0
    %9511 = vmatpush1.bf16.msra.mxu0 %v9485
    %9512 = vmatprep.subr.bf16.mxu0 0
    %9513 = vmatpush1.bf16.msra.mxu0 %v9484
    %9514 = vmatprep.subr.bf16.mxu0 0
    %9515 = vmatpush1.bf16.msra.mxu0 %v9483
    %9516 = vmatprep.subr.bf16.mxu0 0
    %9517 = vmatpush1.bf16.msra.mxu0 %v9482
    %9518 = vmatprep.subr.bf16.mxu0 0
    %9519 = vmatpush1.bf16.msra.mxu0 %v9481
    %9520 = vmatprep.subr.bf16.mxu0 0
    %9521 = vmatpush1.bf16.msra.mxu0 %v9480
    %9522 = vmatprep.subr.bf16.mxu0 0
    %9523 = vmatpush1.bf16.msra.mxu0 %v9479
    %9524 = vmatprep.subr.bf16.mxu0 0
    %9525 = vmatpush1.bf16.msra.mxu0 %v9478
    %9526 = vmatprep.subr.bf16.mxu0 0
    %9527 = vmatpush2.bf16.msra.mxu0 %v9493
    %9528 = vmatprep.subr.bf16.mxu0 0
    %9529 = vmatpush2.bf16.msra.mxu0 %v9492
    %9530 = vmatprep.subr.bf16.mxu0 0
    %9531 = vmatpush2.bf16.msra.mxu0 %v9491
    %9532 = vmatprep.subr.bf16.mxu0 0
    %9533 = vmatpush2.bf16.msra.mxu0 %v9490
    %9534 = vmatprep.subr.bf16.mxu0 0
    %9535 = vmatpush2.bf16.msra.mxu0 %v9489
    %9536 = vmatprep.subr.bf16.mxu0 0
    %9537 = vmatpush2.bf16.msra.mxu0 %v9488
    %9538 = vmatprep.subr.bf16.mxu0 0
    %9539 = vmatpush2.bf16.msra.mxu0 %v9487
    %9540 = vmatprep.subr.bf16.mxu0 0
    %9541 = vmatpush2.bf16.msra.mxu0 %v9486
    %9542 = vmatprep.mubr.bf16.mxu0 %v9411
    %9543 = vmatmul.mubr.bf16.gmra.mxu0 %v9410
    %v9544 = vpop.f32.mrf.mxu0
    %v9545 = vadd.f32 0.0, %v9544
    %v9546 = vpop.f32.mrf.mxu0
    %v9547 = vpop.f32.mrf.mxu0
    %v9548 = vpop.f32.mrf.mxu0
    %9549 = vdwg.mxu0
    %v9550 = vadd.f32 %v9376, %v9545
    %v9551 = vld [vmem:[#allocation11] sm:$0x1]
    %v9553 = vlaneseq
    %v9554 = vshrl.u32 %v9553, 7
    %v9555 = vsub.s32 0, %v9554
    %v9556 = vrot.slane %v9551, %v9555
    %v9558 = vadd.f32 %v9550, %v9556
    %9559 = vst [vmem:[%s7] sm:$0xff] %v9558
    // Predicated region
    $region54: #{cnn_forward.1} parent=1 // pred_check
      _
    $region55: #{cnn_forward.1} parent=1 // pred_check_branch
      %9561 = sbr.rel (0) target = $region57
    $region56: #{cnn_forward.1} parent=1 // pred_region
      _
    $region57: #{cnn_forward.1} parent=1 // pred_fallthru
      _
    // Predicated region
    $region58: #{cnn_forward.1} parent=1 // pred_check
      _
    $region59: #{cnn_forward.1} parent=1 // pred_check_branch
      %9563 = sbr.rel (0) target = $region61
    $region60: #{cnn_forward.1} parent=1 // pred_region
      _
    $region61: #{cnn_forward.1} parent=1 // pred_fallthru
      _
    %9564 = vsyncpa [#allocation4], 1
    %9565 = vsyncpa [#allocation6], 1
    %9566 = vsyncpa [#allocation9], 1
    %9567 = vsyncpa [#allocation12], 1

</llo_original>
